<compile_context>
chip_gen: v5e
topology: v5e:2x2
jax: 0.10.0
libtpu: 0.0.40
codegen_flags: <defaults>
</compile_context>

<pallas_src>
import math

import jax
import jax.numpy as jnp
from jax import lax
from jax.experimental import pallas as pl
from jax.experimental.pallas import tpu as pltpu

# Flip to jnp.bfloat16 on v6e / v7x for ~2-4x MXU throughput (f32 accumulation kept).
MXU_DTYPE = jnp.float32
C_PAD = 128  # classes padded to one full lane tile for the fc2 matmul / log_softmax


def _nbytes(a):
    return int(a.size) * int(a.dtype.itemsize)


# ---------------------------------------------------------------------------
# Fused conv1 -> relu -> conv2 -> relu -> maxpool(2).  grid=(B,), one image per
# grid step; conv1 activation lives in a VMEM scratch, everything else in vregs.
# ---------------------------------------------------------------------------
def _conv_pool_kernel(x_ref, w1_ref, b1_ref, w2_ref, b2_ref, o_ref, a1_ref):
    # x_ref : (1, 28, 28)       single-channel image
    # w1_ref: (3, 3, 32)        conv1 weights (Cin squeezed)
    # b1_ref: (1, 32)
    # w2_ref: (3, 3, 32, 64)    conv2 weights (HWIO)
    # b2_ref: (1, 64)
    # o_ref : (1, 12, 12, 64)   pooled NHWC output
    # a1_ref: (26, 26, 32)      VMEM scratch for the conv1 activation

    # ---- conv1 (1->32, VALID) + relu : VPU broadcast-multiply over 9 taps ----
    xb = jnp.broadcast_to(x_ref[0][:, :, None], (28, 28, 32))  # hoisted broadcast
    acc1 = jnp.zeros((26, 26, 32), jnp.float32)
    for dy in range(3):
        for dx in range(3):
            acc1 = acc1 + xb[dy:dy + 26, dx:dx + 26, :] * w1_ref[dy:dy + 1, dx:dx + 1, :]
    a1_ref[...] = jnp.maximum(acc1 + b1_ref[...], 0.0)

    # ---- conv2 (32->64, VALID) + relu : 9 x (576,32)@(32,64) MXU matmuls ----
    acc2 = jnp.zeros((24 * 24, 64), jnp.float32)
    for dy in range(3):
        for dx in range(3):
            patch = a1_ref[dy:dy + 24, dx:dx + 24, :].reshape(24 * 24, 32)
            acc2 = acc2 + jnp.dot(patch.astype(MXU_DTYPE),
                                  w2_ref[dy, dx].astype(MXU_DTYPE),
                                  preferred_element_type=jnp.float32)
    y = jnp.maximum(acc2 + b2_ref[...], 0.0)        # (576, 64), rows = h*24 + w

    # ---- max_pool2d(2): pool H via a leading-dim reshape+reduce, then W pairs ----
    yh = jnp.max(y.reshape(12, 2, 24, 64), axis=1)  # (12, 24, 64)
    for j in range(12):                             # unrolled column-pair max
        o_ref[0, :, j, :] = jnp.max(yh[:, 2 * j:2 * j + 2, :], axis=1)


def fused_conv_pool(x, w1, b1, w2, b2):
    B = x.shape[0]
    flops = B * 2 * (26 * 26 * 9 * 32 + 24 * 24 * 9 * 32 * 64)
    bytes_accessed = (_nbytes(x) + _nbytes(w1) + _nbytes(b1) + _nbytes(w2)
                      + _nbytes(b2) + B * 12 * 12 * 64 * 4)
    return pl.pallas_call(
        _conv_pool_kernel,
        out_shape=jax.ShapeDtypeStruct((B, 12, 12, 64), jnp.float32),
        grid=(B,),
        in_specs=[
            pl.BlockSpec((1, 28, 28), lambda b: (b, 0, 0)),
            pl.BlockSpec((3, 3, 32), lambda b: (0, 0, 0)),
            pl.BlockSpec((1, 32), lambda b: (0, 0)),
            pl.BlockSpec((3, 3, 32, 64), lambda b: (0, 0, 0, 0)),
            pl.BlockSpec((1, 64), lambda b: (0, 0)),
        ],
        out_specs=pl.BlockSpec((1, 12, 12, 64), lambda b: (b, 0, 0, 0)),
        scratch_shapes=[pltpu.VMEM((26, 26, 32), jnp.float32)],
        compiler_params=pltpu.CompilerParams(
            dimension_semantics=("parallel",)),         # v7x: one image per TC
        cost_estimate=pl.CostEstimate(
            flops=flops, transcendentals=0, bytes_accessed=bytes_accessed),
    )(x, w1, b1, w2, b2)


# ---------------------------------------------------------------------------
# fc1 + relu + fc2 + log_softmax fused.  Weights (~4.7 MB f32) fit in VMEM;
# classes dim pre-padded to 128 lanes (pad bias = -1e30) for full-lane math.
# ---------------------------------------------------------------------------
def _fc_head_kernel(x_ref, w1_ref, b1_ref, w2_ref, b2_ref, o_ref):
    h = jnp.dot(x_ref[...].astype(MXU_DTYPE), w1_ref[...].astype(MXU_DTYPE),
                preferred_element_type=jnp.float32) + b1_ref[...]
    h = jnp.maximum(h, 0.0)                                   # relu (dropout2 = identity)
    logits = jnp.dot(h.astype(MXU_DTYPE), w2_ref[...].astype(MXU_DTYPE),
                     preferred_element_type=jnp.float32) + b2_ref[...]   # (B, C_PAD)
    m = jnp.max(logits, axis=-1, keepdims=True)
    lse = jnp.log(jnp.sum(jnp.exp(logits - m), axis=-1, keepdims=True)) + m
    o_ref[...] = logits[:, :o_ref.shape[-1]] - lse            # log_softmax, drop pads


def fc_head(xf, w1, b1, w2, b2, classes):
    B = xf.shape[0]
    flops = 2 * B * (9216 * 128 + 128 * C_PAD)
    bytes_accessed = (_nbytes(xf) + _nbytes(w1) + _nbytes(b1) + _nbytes(w2)
                      + _nbytes(b2) + B * classes * 4)
    vmem_spec = pl.BlockSpec(memory_space=pltpu.MemorySpace.VMEM)
    return pl.pallas_call(
        _fc_head_kernel,
        out_shape=jax.ShapeDtypeStruct((B, classes), jnp.float32),
        in_specs=[vmem_spec] * 5,
        out_specs=vmem_spec,
        cost_estimate=pl.CostEstimate(
            flops=flops, transcendentals=B * C_PAD, bytes_accessed=bytes_accessed),
    )(xf, w1, b1, w2, b2)


# ---------------------------------------------------------------------------
# One-time parameter preparation (outside the hot path):
#   * squeeze conv1's Cin=1,
#   * permute fc1 rows from NCHW-flatten order (c*144+h*12+w) to NHWC order
#     (h*768+w*64+c) so no runtime transpose is needed before flatten,
#   * pad fc2 to 128 output lanes (zero weights, -1e30 bias in pad lanes),
#   * cast the MXU-facing weights to MXU_DTYPE (no-op for f32).
# ---------------------------------------------------------------------------
def prepare_params(p):
    classes = p["w_f2"].shape[1]
    assert classes <= C_PAD
    w_f1_nhwc = (p["w_f1"].reshape(64, 12, 12, 128)
                 .transpose(1, 2, 0, 3).reshape(9216, 128))
    w_f2_pad = jnp.zeros((128, C_PAD), jnp.float32).at[:, :classes].set(p["w_f2"])
    b_f2_pad = jnp.full((1, C_PAD), -1e30, jnp.float32).at[:, :classes].set(p["b_f2"])
    return {
        "w_c1": p["w_c1"][:, :, 0, :],                 # (3,3,32), VPU path stays f32
        "b_c1": p["b_c1"],
        "w_c2": p["w_c2"].astype(MXU_DTYPE),
        "b_c2": p["b_c2"],
        "w_f1": w_f1_nhwc.astype(MXU_DTYPE),
        "b_f1": p["b_f1"],
        "w_f2": w_f2_pad.astype(MXU_DTYPE),
        "b_f2": b_f2_pad,
    }


def net_forward(x_nchw, p, classes):
    B = x_nchw.shape[0]
    x = x_nchw.reshape(B, 28, 28)                      # Cin == 1
    pooled = fused_conv_pool(x, p["w_c1"], p["b_c1"], p["w_c2"], p["b_c2"])
    xf = pooled.reshape(B, 12 * 12 * 64)               # free row-major NHWC flatten
    # dropout1 / dropout2 are identity at inference.
    # TODO(synk): train-mode dropout (pltpu.prng_seed / prng_random_bits mask) not implemented.
    return fc_head(xf, p["w_f1"], p["b_f1"], p["w_f2"], p["b_f2"], classes)


# Pure-JAX reference (numerical verification against the ORIGINAL parameters).
def reference_forward(x_nchw, p):
    x = jnp.transpose(x_nchw, (0, 2, 3, 1))
    dn = ("NHWC", "HWIO", "NHWC")
    y = lax.conv_general_dilated(x, p["w_c1"], (1, 1), "VALID",
                                 dimension_numbers=dn,
                                 precision=lax.Precision.HIGHEST) + p["b_c1"][0]
    y = jax.nn.relu(y)
    y = lax.conv_general_dilated(y, p["w_c2"], (1, 1), "VALID",
                                 dimension_numbers=dn,
                                 precision=lax.Precision.HIGHEST) + p["b_c2"][0]
    y = jax.nn.relu(y)
    B, H, W, C = y.shape
    y = jnp.max(y.reshape(B, H // 2, 2, W // 2, 2, C), axis=(2, 4))
    xf = jnp.transpose(y, (0, 3, 1, 2)).reshape(B, -1)      # NCHW flatten (torch order)
    h = jax.nn.relu(xf @ p["w_f1"] + p["b_f1"][0])
    logits = h @ p["w_f2"] + p["b_f2"][0]
    return jax.nn.log_softmax(logits, axis=-1)


if __name__ == "__main__":
    classes = 2
    key = jax.random.PRNGKey(0)
    ks = jax.random.split(key, 9)

    # 28x28 single-channel input is required by fc1 (64*12*12 = 9216).
    x = jax.random.normal(ks[0], (2, 1, 28, 28), jnp.float32)

    params = {
        "w_c1": jax.random.normal(ks[1], (3, 3, 1, 32), jnp.float32) / math.sqrt(9.0),
        "b_c1": jax.random.normal(ks[2], (1, 32), jnp.float32) * 0.1,
        "w_c2": jax.random.normal(ks[3], (3, 3, 32, 64), jnp.float32) / math.sqrt(288.0),
        "b_c2": jax.random.normal(ks[4], (1, 64), jnp.float32) * 0.1,
        "w_f1": jax.random.normal(ks[5], (9216, 128), jnp.float32) / math.sqrt(9216.0),
        "b_f1": jax.random.normal(ks[6], (1, 128), jnp.float32) * 0.1,
        "w_f2": jax.random.normal(ks[7], (128, classes), jnp.float32) / math.sqrt(128.0),
        "b_f2": jax.random.normal(ks[8], (1, classes), jnp.float32) * 0.1,
    }

    prepared = prepare_params(params)
    out = jax.block_until_ready(net_forward(x, prepared, classes))
    assert out.shape == (2, classes) and bool(jnp.all(jnp.isfinite(out)))

    ref = jax.block_until_ready(reference_forward(x, params))
    err = float(jnp.max(jnp.abs(out - ref)))
    tol = 1e-3 if MXU_DTYPE == jnp.float32 else 7e-2
    assert err < tol, f"mismatch vs reference: {err}"

    print("KERNEL_OK")
</pallas_src>

<mosaic_0001>
module attributes {stable_mosaic.version = 11 : i64} {
  func.func @_conv_pool_kernel(%arg0: i32, %arg1: memref<1x28x28xf32, #tpu.memory_space<vmem>>, %arg2: memref<3x3x32xf32, #tpu.memory_space<vmem>>, %arg3: memref<1x32xf32, #tpu.memory_space<vmem>>, %arg4: memref<3x3x32x64xf32, #tpu.memory_space<vmem>>, %arg5: memref<1x64xf32, #tpu.memory_space<vmem>>, %arg6: memref<1x12x12x64xf32, #tpu.memory_space<vmem>>, %arg7: memref<26x26x32xf32, #tpu.memory_space<vmem>>) attributes {dimension_semantics = [#tpu.dimension_semantics<parallel>], iteration_bounds = array<i64: 2>, scalar_prefetch = 0 : i64, scratch_operands = 1 : i64, tpu.core_type = #tpu.core_type<tc>, window_params = [{transform_indices = @transform_0, window_bounds = array<i64: 1, 28, 28>}, {pipeline_mode = #tpu.pipeline_mode<synchronous>, transform_indices = @transform_1, window_bounds = array<i64: 3, 3, 32>}, {pipeline_mode = #tpu.pipeline_mode<synchronous>, transform_indices = @transform_2, window_bounds = array<i64: 1, 32>}, {pipeline_mode = #tpu.pipeline_mode<synchronous>, transform_indices = @transform_3, window_bounds = array<i64: 3, 3, 32, 64>}, {pipeline_mode = #tpu.pipeline_mode<synchronous>, transform_indices = @transform_4, window_bounds = array<i64: 1, 64>}, {transform_indices = @transform_5, window_bounds = array<i64: 1, 12, 12, 64>}]} {
    %c0 = arith.constant 0 : index
    %c0_0 = arith.constant 0 : index
    %c0_1 = arith.constant 0 : index
    %0 = vector.load %arg1[%c0, %c0_0, %c0_1] : memref<1x28x28xf32, #tpu.memory_space<vmem>>, vector<1x28x28xf32>
    %1 = vector.shape_cast %0 : vector<1x28x28xf32> to vector<28x28xf32>
    %2 = vector.shape_cast %1 : vector<28x28xf32> to vector<28x28x1xf32>
    %3 = vector.shape_cast %2 : vector<28x28x1xf32> to vector<28x28x1xf32>
    %4 = vector.broadcast %3 : vector<28x28x1xf32> to vector<28x28x32xf32>
    %cst = arith.constant 0.000000e+00 : f32
    %5 = vector.broadcast %cst : f32 to vector<26x26x32xf32>
    %6 = vector.extract_strided_slice %4 {offsets = [0, 0, 0], sizes = [26, 26, 32], strides = [1, 1, 1]} : vector<28x28x32xf32> to vector<26x26x32xf32>
    %c0_2 = arith.constant 0 : index
    %c0_3 = arith.constant 0 : index
    %c0_4 = arith.constant 0 : index
    %7 = vector.load %arg2[%c0_2, %c0_3, %c0_4] : memref<3x3x32xf32, #tpu.memory_space<vmem>>, vector<1x1x32xf32>
    %8 = vector.broadcast %7 : vector<1x1x32xf32> to vector<26x26x32xf32>
    %9 = arith.mulf %6, %8 : vector<26x26x32xf32>
    %10 = arith.addf %5, %9 : vector<26x26x32xf32>
    %11 = vector.extract_strided_slice %4 {offsets = [0, 1, 0], sizes = [26, 26, 32], strides = [1, 1, 1]} : vector<28x28x32xf32> to vector<26x26x32xf32>
    %c0_5 = arith.constant 0 : index
    %c1 = arith.constant 1 : index
    %c0_6 = arith.constant 0 : index
    %12 = vector.load %arg2[%c0_5, %c1, %c0_6] : memref<3x3x32xf32, #tpu.memory_space<vmem>>, vector<1x1x32xf32>
    %13 = vector.broadcast %12 : vector<1x1x32xf32> to vector<26x26x32xf32>
    %14 = arith.mulf %11, %13 : vector<26x26x32xf32>
    %15 = arith.addf %10, %14 : vector<26x26x32xf32>
    %16 = vector.extract_strided_slice %4 {offsets = [0, 2, 0], sizes = [26, 26, 32], strides = [1, 1, 1]} : vector<28x28x32xf32> to vector<26x26x32xf32>
    %c0_7 = arith.constant 0 : index
    %c2 = arith.constant 2 : index
    %c0_8 = arith.constant 0 : index
    %17 = vector.load %arg2[%c0_7, %c2, %c0_8] : memref<3x3x32xf32, #tpu.memory_space<vmem>>, vector<1x1x32xf32>
    %18 = vector.broadcast %17 : vector<1x1x32xf32> to vector<26x26x32xf32>
    %19 = arith.mulf %16, %18 : vector<26x26x32xf32>
    %20 = arith.addf %15, %19 : vector<26x26x32xf32>
    %21 = vector.extract_strided_slice %4 {offsets = [1, 0, 0], sizes = [26, 26, 32], strides = [1, 1, 1]} : vector<28x28x32xf32> to vector<26x26x32xf32>
    %c1_9 = arith.constant 1 : index
    %c0_10 = arith.constant 0 : index
    %c0_11 = arith.constant 0 : index
    %22 = vector.load %arg2[%c1_9, %c0_10, %c0_11] : memref<3x3x32xf32, #tpu.memory_space<vmem>>, vector<1x1x32xf32>
    %23 = vector.broadcast %22 : vector<1x1x32xf32> to vector<26x26x32xf32>
    %24 = arith.mulf %21, %23 : vector<26x26x32xf32>
    %25 = arith.addf %20, %24 : vector<26x26x32xf32>
    %26 = vector.extract_strided_slice %4 {offsets = [1, 1, 0], sizes = [26, 26, 32], strides = [1, 1, 1]} : vector<28x28x32xf32> to vector<26x26x32xf32>
    %c1_12 = arith.constant 1 : index
    %c1_13 = arith.constant 1 : index
    %c0_14 = arith.constant 0 : index
    %27 = vector.load %arg2[%c1_12, %c1_13, %c0_14] : memref<3x3x32xf32, #tpu.memory_space<vmem>>, vector<1x1x32xf32>
    %28 = vector.broadcast %27 : vector<1x1x32xf32> to vector<26x26x32xf32>
    %29 = arith.mulf %26, %28 : vector<26x26x32xf32>
    %30 = arith.addf %25, %29 : vector<26x26x32xf32>
    %31 = vector.extract_strided_slice %4 {offsets = [1, 2, 0], sizes = [26, 26, 32], strides = [1, 1, 1]} : vector<28x28x32xf32> to vector<26x26x32xf32>
    %c1_15 = arith.constant 1 : index
    %c2_16 = arith.constant 2 : index
    %c0_17 = arith.constant 0 : index
    %32 = vector.load %arg2[%c1_15, %c2_16, %c0_17] : memref<3x3x32xf32, #tpu.memory_space<vmem>>, vector<1x1x32xf32>
    %33 = vector.broadcast %32 : vector<1x1x32xf32> to vector<26x26x32xf32>
    %34 = arith.mulf %31, %33 : vector<26x26x32xf32>
    %35 = arith.addf %30, %34 : vector<26x26x32xf32>
    %36 = vector.extract_strided_slice %4 {offsets = [2, 0, 0], sizes = [26, 26, 32], strides = [1, 1, 1]} : vector<28x28x32xf32> to vector<26x26x32xf32>
    %c2_18 = arith.constant 2 : index
    %c0_19 = arith.constant 0 : index
    %c0_20 = arith.constant 0 : index
    %37 = vector.load %arg2[%c2_18, %c0_19, %c0_20] : memref<3x3x32xf32, #tpu.memory_space<vmem>>, vector<1x1x32xf32>
    %38 = vector.broadcast %37 : vector<1x1x32xf32> to vector<26x26x32xf32>
    %39 = arith.mulf %36, %38 : vector<26x26x32xf32>
    %40 = arith.addf %35, %39 : vector<26x26x32xf32>
    %41 = vector.extract_strided_slice %4 {offsets = [2, 1, 0], sizes = [26, 26, 32], strides = [1, 1, 1]} : vector<28x28x32xf32> to vector<26x26x32xf32>
    %c2_21 = arith.constant 2 : index
    %c1_22 = arith.constant 1 : index
    %c0_23 = arith.constant 0 : index
    %42 = vector.load %arg2[%c2_21, %c1_22, %c0_23] : memref<3x3x32xf32, #tpu.memory_space<vmem>>, vector<1x1x32xf32>
    %43 = vector.broadcast %42 : vector<1x1x32xf32> to vector<26x26x32xf32>
    %44 = arith.mulf %41, %43 : vector<26x26x32xf32>
    %45 = arith.addf %40, %44 : vector<26x26x32xf32>
    %46 = vector.extract_strided_slice %4 {offsets = [2, 2, 0], sizes = [26, 26, 32], strides = [1, 1, 1]} : vector<28x28x32xf32> to vector<26x26x32xf32>
    %c2_24 = arith.constant 2 : index
    %c2_25 = arith.constant 2 : index
    %c0_26 = arith.constant 0 : index
    %47 = vector.load %arg2[%c2_24, %c2_25, %c0_26] : memref<3x3x32xf32, #tpu.memory_space<vmem>>, vector<1x1x32xf32>
    %48 = vector.broadcast %47 : vector<1x1x32xf32> to vector<26x26x32xf32>
    %49 = arith.mulf %46, %48 : vector<26x26x32xf32>
    %50 = arith.addf %45, %49 : vector<26x26x32xf32>
    %c0_27 = arith.constant 0 : index
    %c0_28 = arith.constant 0 : index
    %51 = vector.load %arg3[%c0_27, %c0_28] : memref<1x32xf32, #tpu.memory_space<vmem>>, vector<1x32xf32>
    %52 = vector.shape_cast %51 : vector<1x32xf32> to vector<1x1x32xf32>
    %53 = vector.broadcast %52 : vector<1x1x32xf32> to vector<26x26x32xf32>
    %54 = arith.addf %50, %53 : vector<26x26x32xf32>
    %cst_29 = arith.constant 0.000000e+00 : f32
    %55 = vector.broadcast %cst_29 : f32 to vector<26x26x32xf32>
    %56 = arith.maximumf %54, %55 : vector<26x26x32xf32>
    %c0_30 = arith.constant 0 : index
    %c0_31 = arith.constant 0 : index
    %c0_32 = arith.constant 0 : index
    %57 = vector.load %arg7[%c0_30, %c0_31, %c0_32] : memref<26x26x32xf32, #tpu.memory_space<vmem>>, vector<26x26x32xf32>
    tpu.vector_store %arg7[%c0_30, %c0_31, %c0_32], %56 {strides = array<i32>} : memref<26x26x32xf32, #tpu.memory_space<vmem>>, vector<26x26x32xf32>,
    %cst_33 = arith.constant 0.000000e+00 : f32
    %58 = vector.broadcast %cst_33 : f32 to vector<576x64xf32>
    %c0_34 = arith.constant 0 : index
    %c0_35 = arith.constant 0 : index
    %c0_36 = arith.constant 0 : index
    %59 = vector.load %arg7[%c0_34, %c0_35, %c0_36] : memref<26x26x32xf32, #tpu.memory_space<vmem>>, vector<24x24x32xf32>
    %60 = vector.shape_cast %59 : vector<24x24x32xf32> to vector<576x32xf32>
    %c0_37 = arith.constant 0 : index
    %c0_38 = arith.constant 0 : index
    %c0_39 = arith.constant 0 : index
    %c0_40 = arith.constant 0 : index
    %61 = vector.load %arg4[%c0_37, %c0_38, %c0_39, %c0_40] : memref<3x3x32x64xf32, #tpu.memory_space<vmem>>, vector<1x1x32x64xf32>
    %62 = vector.shape_cast %61 : vector<1x1x32x64xf32> to vector<32x64xf32>
    %cst_41 = arith.constant dense<0.000000e+00> : vector<576x64xf32>
    %63 = tpu.matmul %60, %62, %cst_41 {dimension_numbers = #tpu.dot_dimension_numbers<[1], [0], [0], [1], [0, 0, 1, 1], [], []>} : vector<576x32xf32>, vector<32x64xf32>, vector<576x64xf32> -> vector<576x64xf32>
    %64 = arith.addf %58, %63 : vector<576x64xf32>
    %c0_42 = arith.constant 0 : index
    %c1_43 = arith.constant 1 : index
    %c0_44 = arith.constant 0 : index
    %65 = vector.load %arg7[%c0_42, %c1_43, %c0_44] : memref<26x26x32xf32, #tpu.memory_space<vmem>>, vector<24x24x32xf32>
    %66 = vector.shape_cast %65 : vector<24x24x32xf32> to vector<576x32xf32>
    %c0_45 = arith.constant 0 : index
    %c1_46 = arith.constant 1 : index
    %c0_47 = arith.constant 0 : index
    %c0_48 = arith.constant 0 : index
    %67 = vector.load %arg4[%c0_45, %c1_46, %c0_47, %c0_48] : memref<3x3x32x64xf32, #tpu.memory_space<vmem>>, vector<1x1x32x64xf32>
    %68 = vector.shape_cast %67 : vector<1x1x32x64xf32> to vector<32x64xf32>
    %cst_49 = arith.constant dense<0.000000e+00> : vector<576x64xf32>
    %69 = tpu.matmul %66, %68, %cst_49 {dimension_numbers = #tpu.dot_dimension_numbers<[1], [0], [0], [1], [0, 0, 1, 1], [], []>} : vector<576x32xf32>, vector<32x64xf32>, vector<576x64xf32> -> vector<576x64xf32>
    %70 = arith.addf %64, %69 : vector<576x64xf32>
    %c0_50 = arith.constant 0 : index
    %c2_51 = arith.constant 2 : index
    %c0_52 = arith.constant 0 : index
    %71 = vector.load %arg7[%c0_50, %c2_51, %c0_52] : memref<26x26x32xf32, #tpu.memory_space<vmem>>, vector<24x24x32xf32>
    %72 = vector.shape_cast %71 : vector<24x24x32xf32> to vector<576x32xf32>
    %c0_53 = arith.constant 0 : index
    %c2_54 = arith.constant 2 : index
    %c0_55 = arith.constant 0 : index
    %c0_56 = arith.constant 0 : index
    %73 = vector.load %arg4[%c0_53, %c2_54, %c0_55, %c0_56] : memref<3x3x32x64xf32, #tpu.memory_space<vmem>>, vector<1x1x32x64xf32>
    %74 = vector.shape_cast %73 : vector<1x1x32x64xf32> to vector<32x64xf32>
    %cst_57 = arith.constant dense<0.000000e+00> : vector<576x64xf32>
    %75 = tpu.matmul %72, %74, %cst_57 {dimension_numbers = #tpu.dot_dimension_numbers<[1], [0], [0], [1], [0, 0, 1, 1], [], []>} : vector<576x32xf32>, vector<32x64xf32>, vector<576x64xf32> -> vector<576x64xf32>
    %76 = arith.addf %70, %75 : vector<576x64xf32>
    %c1_58 = arith.constant 1 : index
    %c0_59 = arith.constant 0 : index
    %c0_60 = arith.constant 0 : index
    %77 = vector.load %arg7[%c1_58, %c0_59, %c0_60] : memref<26x26x32xf32, #tpu.memory_space<vmem>>, vector<24x24x32xf32>
    %78 = vector.shape_cast %77 : vector<24x24x32xf32> to vector<576x32xf32>
    %c1_61 = arith.constant 1 : index
    %c0_62 = arith.constant 0 : index
    %c0_63 = arith.constant 0 : index
    %c0_64 = arith.constant 0 : index
    %79 = vector.load %arg4[%c1_61, %c0_62, %c0_63, %c0_64] : memref<3x3x32x64xf32, #tpu.memory_space<vmem>>, vector<1x1x32x64xf32>
    %80 = vector.shape_cast %79 : vector<1x1x32x64xf32> to vector<32x64xf32>
    %cst_65 = arith.constant dense<0.000000e+00> : vector<576x64xf32>
    %81 = tpu.matmul %78, %80, %cst_65 {dimension_numbers = #tpu.dot_dimension_numbers<[1], [0], [0], [1], [0, 0, 1, 1], [], []>} : vector<576x32xf32>, vector<32x64xf32>, vector<576x64xf32> -> vector<576x64xf32>
    %82 = arith.addf %76, %81 : vector<576x64xf32>
    %c1_66 = arith.constant 1 : index
    %c1_67 = arith.constant 1 : index
    %c0_68 = arith.constant 0 : index
    %83 = vector.load %arg7[%c1_66, %c1_67, %c0_68] : memref<26x26x32xf32, #tpu.memory_space<vmem>>, vector<24x24x32xf32>
    %84 = vector.shape_cast %83 : vector<24x24x32xf32> to vector<576x32xf32>
    %c1_69 = arith.constant 1 : index
    %c1_70 = arith.constant 1 : index
    %c0_71 = arith.constant 0 : index
    %c0_72 = arith.constant 0 : index
    %85 = vector.load %arg4[%c1_69, %c1_70, %c0_71, %c0_72] : memref<3x3x32x64xf32, #tpu.memory_space<vmem>>, vector<1x1x32x64xf32>
    %86 = vector.shape_cast %85 : vector<1x1x32x64xf32> to vector<32x64xf32>
    %cst_73 = arith.constant dense<0.000000e+00> : vector<576x64xf32>
    %87 = tpu.matmul %84, %86, %cst_73 {dimension_numbers = #tpu.dot_dimension_numbers<[1], [0], [0], [1], [0, 0, 1, 1], [], []>} : vector<576x32xf32>, vector<32x64xf32>, vector<576x64xf32> -> vector<576x64xf32>
    %88 = arith.addf %82, %87 : vector<576x64xf32>
    %c1_74 = arith.constant 1 : index
    %c2_75 = arith.constant 2 : index
    %c0_76 = arith.constant 0 : index
    %89 = vector.load %arg7[%c1_74, %c2_75, %c0_76] : memref<26x26x32xf32, #tpu.memory_space<vmem>>, vector<24x24x32xf32>
    %90 = vector.shape_cast %89 : vector<24x24x32xf32> to vector<576x32xf32>
    %c1_77 = arith.constant 1 : index
    %c2_78 = arith.constant 2 : index
    %c0_79 = arith.constant 0 : index
    %c0_80 = arith.constant 0 : index
    %91 = vector.load %arg4[%c1_77, %c2_78, %c0_79, %c0_80] : memref<3x3x32x64xf32, #tpu.memory_space<vmem>>, vector<1x1x32x64xf32>
    %92 = vector.shape_cast %91 : vector<1x1x32x64xf32> to vector<32x64xf32>
    %cst_81 = arith.constant dense<0.000000e+00> : vector<576x64xf32>
    %93 = tpu.matmul %90, %92, %cst_81 {dimension_numbers = #tpu.dot_dimension_numbers<[1], [0], [0], [1], [0, 0, 1, 1], [], []>} : vector<576x32xf32>, vector<32x64xf32>, vector<576x64xf32> -> vector<576x64xf32>
    %94 = arith.addf %88, %93 : vector<576x64xf32>
    %c2_82 = arith.constant 2 : index
    %c0_83 = arith.constant 0 : index
    %c0_84 = arith.constant 0 : index
    %95 = vector.load %arg7[%c2_82, %c0_83, %c0_84] : memref<26x26x32xf32, #tpu.memory_space<vmem>>, vector<24x24x32xf32>
    %96 = vector.shape_cast %95 : vector<24x24x32xf32> to vector<576x32xf32>
    %c2_85 = arith.constant 2 : index
    %c0_86 = arith.constant 0 : index
    %c0_87 = arith.constant 0 : index
    %c0_88 = arith.constant 0 : index
    %97 = vector.load %arg4[%c2_85, %c0_86, %c0_87, %c0_88] : memref<3x3x32x64xf32, #tpu.memory_space<vmem>>, vector<1x1x32x64xf32>
    %98 = vector.shape_cast %97 : vector<1x1x32x64xf32> to vector<32x64xf32>
    %cst_89 = arith.constant dense<0.000000e+00> : vector<576x64xf32>
    %99 = tpu.matmul %96, %98, %cst_89 {dimension_numbers = #tpu.dot_dimension_numbers<[1], [0], [0], [1], [0, 0, 1, 1], [], []>} : vector<576x32xf32>, vector<32x64xf32>, vector<576x64xf32> -> vector<576x64xf32>
    %100 = arith.addf %94, %99 : vector<576x64xf32>
    %c2_90 = arith.constant 2 : index
    %c1_91 = arith.constant 1 : index
    %c0_92 = arith.constant 0 : index
    %101 = vector.load %arg7[%c2_90, %c1_91, %c0_92] : memref<26x26x32xf32, #tpu.memory_space<vmem>>, vector<24x24x32xf32>
    %102 = vector.shape_cast %101 : vector<24x24x32xf32> to vector<576x32xf32>
    %c2_93 = arith.constant 2 : index
    %c1_94 = arith.constant 1 : index
    %c0_95 = arith.constant 0 : index
    %c0_96 = arith.constant 0 : index
    %103 = vector.load %arg4[%c2_93, %c1_94, %c0_95, %c0_96] : memref<3x3x32x64xf32, #tpu.memory_space<vmem>>, vector<1x1x32x64xf32>
    %104 = vector.shape_cast %103 : vector<1x1x32x64xf32> to vector<32x64xf32>
    %cst_97 = arith.constant dense<0.000000e+00> : vector<576x64xf32>
    %105 = tpu.matmul %102, %104, %cst_97 {dimension_numbers = #tpu.dot_dimension_numbers<[1], [0], [0], [1], [0, 0, 1, 1], [], []>} : vector<576x32xf32>, vector<32x64xf32>, vector<576x64xf32> -> vector<576x64xf32>
    %106 = arith.addf %100, %105 : vector<576x64xf32>
    %c2_98 = arith.constant 2 : index
    %c2_99 = arith.constant 2 : index
    %c0_100 = arith.constant 0 : index
    %107 = vector.load %arg7[%c2_98, %c2_99, %c0_100] : memref<26x26x32xf32, #tpu.memory_space<vmem>>, vector<24x24x32xf32>
    %108 = vector.shape_cast %107 : vector<24x24x32xf32> to vector<576x32xf32>
    %c2_101 = arith.constant 2 : index
    %c2_102 = arith.constant 2 : index
    %c0_103 = arith.constant 0 : index
    %c0_104 = arith.constant 0 : index
    %109 = vector.load %arg4[%c2_101, %c2_102, %c0_103, %c0_104] : memref<3x3x32x64xf32, #tpu.memory_space<vmem>>, vector<1x1x32x64xf32>
    %110 = vector.shape_cast %109 : vector<1x1x32x64xf32> to vector<32x64xf32>
    %cst_105 = arith.constant dense<0.000000e+00> : vector<576x64xf32>
    %111 = tpu.matmul %108, %110, %cst_105 {dimension_numbers = #tpu.dot_dimension_numbers<[1], [0], [0], [1], [0, 0, 1, 1], [], []>} : vector<576x32xf32>, vector<32x64xf32>, vector<576x64xf32> -> vector<576x64xf32>
    %112 = arith.addf %106, %111 : vector<576x64xf32>
    %c0_106 = arith.constant 0 : index
    %c0_107 = arith.constant 0 : index
    %113 = vector.load %arg5[%c0_106, %c0_107] : memref<1x64xf32, #tpu.memory_space<vmem>>, vector<1x64xf32>
    %114 = vector.broadcast %113 : vector<1x64xf32> to vector<576x64xf32>
    %115 = arith.addf %112, %114 : vector<576x64xf32>
    %cst_108 = arith.constant 0.000000e+00 : f32
    %116 = vector.broadcast %cst_108 : f32 to vector<576x64xf32>
    %117 = arith.maximumf %115, %116 : vector<576x64xf32>
    %118 = vector.shape_cast %117 : vector<576x64xf32> to vector<12x2x24x64xf32>
    %cst_109 = arith.constant dense<0xFF800000> : vector<12x24x64xf32>
    %119 = vector.multi_reduction <maximumf>, %118, %cst_109 [1] : vector<12x2x24x64xf32> to vector<12x24x64xf32>
    %120 = vector.extract_strided_slice %119 {offsets = [0, 0, 0], sizes = [12, 2, 64], strides = [1, 1, 1]} : vector<12x24x64xf32> to vector<12x2x64xf32>
    %cst_110 = arith.constant dense<0xFF800000> : vector<12x64xf32>
    %121 = vector.multi_reduction <maximumf>, %120, %cst_110 [1] : vector<12x2x64xf32> to vector<12x64xf32>
    %c0_111 = arith.constant 0 : index
    %c0_112 = arith.constant 0 : index
    %c0_113 = arith.constant 0 : index
    %c0_114 = arith.constant 0 : index
    %122 = vector.load %arg6[%c0_111, %c0_112, %c0_113, %c0_114] : memref<1x12x12x64xf32, #tpu.memory_space<vmem>>, vector<1x12x1x64xf32>
    %123 = vector.shape_cast %122 : vector<1x12x1x64xf32> to vector<12x64xf32>
    %124 = vector.shape_cast %121 : vector<12x64xf32> to vector<1x12x1x64xf32>
    tpu.vector_store %arg6[%c0_111, %c0_112, %c0_113, %c0_114], %124 {strides = array<i32>} : memref<1x12x12x64xf32, #tpu.memory_space<vmem>>, vector<1x12x1x64xf32>,
    %125 = vector.extract_strided_slice %119 {offsets = [0, 2, 0], sizes = [12, 2, 64], strides = [1, 1, 1]} : vector<12x24x64xf32> to vector<12x2x64xf32>
    %cst_115 = arith.constant dense<0xFF800000> : vector<12x64xf32>
    %126 = vector.multi_reduction <maximumf>, %125, %cst_115 [1] : vector<12x2x64xf32> to vector<12x64xf32>
    %c0_116 = arith.constant 0 : index
    %c0_117 = arith.constant 0 : index
    %c1_118 = arith.constant 1 : index
    %c0_119 = arith.constant 0 : index
    %127 = vector.load %arg6[%c0_116, %c0_117, %c1_118, %c0_119] : memref<1x12x12x64xf32, #tpu.memory_space<vmem>>, vector<1x12x1x64xf32>
    %128 = vector.shape_cast %127 : vector<1x12x1x64xf32> to vector<12x64xf32>
    %129 = vector.shape_cast %126 : vector<12x64xf32> to vector<1x12x1x64xf32>
    tpu.vector_store %arg6[%c0_116, %c0_117, %c1_118, %c0_119], %129 {strides = array<i32>} : memref<1x12x12x64xf32, #tpu.memory_space<vmem>>, vector<1x12x1x64xf32>,
    %130 = vector.extract_strided_slice %119 {offsets = [0, 4, 0], sizes = [12, 2, 64], strides = [1, 1, 1]} : vector<12x24x64xf32> to vector<12x2x64xf32>
    %cst_120 = arith.constant dense<0xFF800000> : vector<12x64xf32>
    %131 = vector.multi_reduction <maximumf>, %130, %cst_120 [1] : vector<12x2x64xf32> to vector<12x64xf32>
    %c0_121 = arith.constant 0 : index
    %c0_122 = arith.constant 0 : index
    %c2_123 = arith.constant 2 : index
    %c0_124 = arith.constant 0 : index
    %132 = vector.load %arg6[%c0_121, %c0_122, %c2_123, %c0_124] : memref<1x12x12x64xf32, #tpu.memory_space<vmem>>, vector<1x12x1x64xf32>
    %133 = vector.shape_cast %132 : vector<1x12x1x64xf32> to vector<12x64xf32>
    %134 = vector.shape_cast %131 : vector<12x64xf32> to vector<1x12x1x64xf32>
    tpu.vector_store %arg6[%c0_121, %c0_122, %c2_123, %c0_124], %134 {strides = array<i32>} : memref<1x12x12x64xf32, #tpu.memory_space<vmem>>, vector<1x12x1x64xf32>,
    %135 = vector.extract_strided_slice %119 {offsets = [0, 6, 0], sizes = [12, 2, 64], strides = [1, 1, 1]} : vector<12x24x64xf32> to vector<12x2x64xf32>
    %cst_125 = arith.constant dense<0xFF800000> : vector<12x64xf32>
    %136 = vector.multi_reduction <maximumf>, %135, %cst_125 [1] : vector<12x2x64xf32> to vector<12x64xf32>
    %c0_126 = arith.constant 0 : index
    %c0_127 = arith.constant 0 : index
    %c3 = arith.constant 3 : index
    %c0_128 = arith.constant 0 : index
    %137 = vector.load %arg6[%c0_126, %c0_127, %c3, %c0_128] : memref<1x12x12x64xf32, #tpu.memory_space<vmem>>, vector<1x12x1x64xf32>
    %138 = vector.shape_cast %137 : vector<1x12x1x64xf32> to vector<12x64xf32>
    %139 = vector.shape_cast %136 : vector<12x64xf32> to vector<1x12x1x64xf32>
    tpu.vector_store %arg6[%c0_126, %c0_127, %c3, %c0_128], %139 {strides = array<i32>} : memref<1x12x12x64xf32, #tpu.memory_space<vmem>>, vector<1x12x1x64xf32>,
    %140 = vector.extract_strided_slice %119 {offsets = [0, 8, 0], sizes = [12, 2, 64], strides = [1, 1, 1]} : vector<12x24x64xf32> to vector<12x2x64xf32>
    %cst_129 = arith.constant dense<0xFF800000> : vector<12x64xf32>
    %141 = vector.multi_reduction <maximumf>, %140, %cst_129 [1] : vector<12x2x64xf32> to vector<12x64xf32>
    %c0_130 = arith.constant 0 : index
    %c0_131 = arith.constant 0 : index
    %c4 = arith.constant 4 : index
    %c0_132 = arith.constant 0 : index
    %142 = vector.load %arg6[%c0_130, %c0_131, %c4, %c0_132] : memref<1x12x12x64xf32, #tpu.memory_space<vmem>>, vector<1x12x1x64xf32>
    %143 = vector.shape_cast %142 : vector<1x12x1x64xf32> to vector<12x64xf32>
    %144 = vector.shape_cast %141 : vector<12x64xf32> to vector<1x12x1x64xf32>
    tpu.vector_store %arg6[%c0_130, %c0_131, %c4, %c0_132], %144 {strides = array<i32>} : memref<1x12x12x64xf32, #tpu.memory_space<vmem>>, vector<1x12x1x64xf32>,
    %145 = vector.extract_strided_slice %119 {offsets = [0, 10, 0], sizes = [12, 2, 64], strides = [1, 1, 1]} : vector<12x24x64xf32> to vector<12x2x64xf32>
    %cst_133 = arith.constant dense<0xFF800000> : vector<12x64xf32>
    %146 = vector.multi_reduction <maximumf>, %145, %cst_133 [1] : vector<12x2x64xf32> to vector<12x64xf32>
    %c0_134 = arith.constant 0 : index
    %c0_135 = arith.constant 0 : index
    %c5 = arith.constant 5 : index
    %c0_136 = arith.constant 0 : index
    %147 = vector.load %arg6[%c0_134, %c0_135, %c5, %c0_136] : memref<1x12x12x64xf32, #tpu.memory_space<vmem>>, vector<1x12x1x64xf32>
    %148 = vector.shape_cast %147 : vector<1x12x1x64xf32> to vector<12x64xf32>
    %149 = vector.shape_cast %146 : vector<12x64xf32> to vector<1x12x1x64xf32>
    tpu.vector_store %arg6[%c0_134, %c0_135, %c5, %c0_136], %149 {strides = array<i32>} : memref<1x12x12x64xf32, #tpu.memory_space<vmem>>, vector<1x12x1x64xf32>,
    %150 = vector.extract_strided_slice %119 {offsets = [0, 12, 0], sizes = [12, 2, 64], strides = [1, 1, 1]} : vector<12x24x64xf32> to vector<12x2x64xf32>
    %cst_137 = arith.constant dense<0xFF800000> : vector<12x64xf32>
    %151 = vector.multi_reduction <maximumf>, %150, %cst_137 [1] : vector<12x2x64xf32> to vector<12x64xf32>
    %c0_138 = arith.constant 0 : index
    %c0_139 = arith.constant 0 : index
    %c6 = arith.constant 6 : index
    %c0_140 = arith.constant 0 : index
    %152 = vector.load %arg6[%c0_138, %c0_139, %c6, %c0_140] : memref<1x12x12x64xf32, #tpu.memory_space<vmem>>, vector<1x12x1x64xf32>
    %153 = vector.shape_cast %152 : vector<1x12x1x64xf32> to vector<12x64xf32>
    %154 = vector.shape_cast %151 : vector<12x64xf32> to vector<1x12x1x64xf32>
    tpu.vector_store %arg6[%c0_138, %c0_139, %c6, %c0_140], %154 {strides = array<i32>} : memref<1x12x12x64xf32, #tpu.memory_space<vmem>>, vector<1x12x1x64xf32>,
    %155 = vector.extract_strided_slice %119 {offsets = [0, 14, 0], sizes = [12, 2, 64], strides = [1, 1, 1]} : vector<12x24x64xf32> to vector<12x2x64xf32>
    %cst_141 = arith.constant dense<0xFF800000> : vector<12x64xf32>
    %156 = vector.multi_reduction <maximumf>, %155, %cst_141 [1] : vector<12x2x64xf32> to vector<12x64xf32>
    %c0_142 = arith.constant 0 : index
    %c0_143 = arith.constant 0 : index
    %c7 = arith.constant 7 : index
    %c0_144 = arith.constant 0 : index
    %157 = vector.load %arg6[%c0_142, %c0_143, %c7, %c0_144] : memref<1x12x12x64xf32, #tpu.memory_space<vmem>>, vector<1x12x1x64xf32>
    %158 = vector.shape_cast %157 : vector<1x12x1x64xf32> to vector<12x64xf32>
    %159 = vector.shape_cast %156 : vector<12x64xf32> to vector<1x12x1x64xf32>
    tpu.vector_store %arg6[%c0_142, %c0_143, %c7, %c0_144], %159 {strides = array<i32>} : memref<1x12x12x64xf32, #tpu.memory_space<vmem>>, vector<1x12x1x64xf32>,
    %160 = vector.extract_strided_slice %119 {offsets = [0, 16, 0], sizes = [12, 2, 64], strides = [1, 1, 1]} : vector<12x24x64xf32> to vector<12x2x64xf32>
    %cst_145 = arith.constant dense<0xFF800000> : vector<12x64xf32>
    %161 = vector.multi_reduction <maximumf>, %160, %cst_145 [1] : vector<12x2x64xf32> to vector<12x64xf32>
    %c0_146 = arith.constant 0 : index
    %c0_147 = arith.constant 0 : index
    %c8 = arith.constant 8 : index
    %c0_148 = arith.constant 0 : index
    %162 = vector.load %arg6[%c0_146, %c0_147, %c8, %c0_148] : memref<1x12x12x64xf32, #tpu.memory_space<vmem>>, vector<1x12x1x64xf32>
    %163 = vector.shape_cast %162 : vector<1x12x1x64xf32> to vector<12x64xf32>
    %164 = vector.shape_cast %161 : vector<12x64xf32> to vector<1x12x1x64xf32>
    tpu.vector_store %arg6[%c0_146, %c0_147, %c8, %c0_148], %164 {strides = array<i32>} : memref<1x12x12x64xf32, #tpu.memory_space<vmem>>, vector<1x12x1x64xf32>,
    %165 = vector.extract_strided_slice %119 {offsets = [0, 18, 0], sizes = [12, 2, 64], strides = [1, 1, 1]} : vector<12x24x64xf32> to vector<12x2x64xf32>
    %cst_149 = arith.constant dense<0xFF800000> : vector<12x64xf32>
    %166 = vector.multi_reduction <maximumf>, %165, %cst_149 [1] : vector<12x2x64xf32> to vector<12x64xf32>
    %c0_150 = arith.constant 0 : index
    %c0_151 = arith.constant 0 : index
    %c9 = arith.constant 9 : index
    %c0_152 = arith.constant 0 : index
    %167 = vector.load %arg6[%c0_150, %c0_151, %c9, %c0_152] : memref<1x12x12x64xf32, #tpu.memory_space<vmem>>, vector<1x12x1x64xf32>
    %168 = vector.shape_cast %167 : vector<1x12x1x64xf32> to vector<12x64xf32>
    %169 = vector.shape_cast %166 : vector<12x64xf32> to vector<1x12x1x64xf32>
    tpu.vector_store %arg6[%c0_150, %c0_151, %c9, %c0_152], %169 {strides = array<i32>} : memref<1x12x12x64xf32, #tpu.memory_space<vmem>>, vector<1x12x1x64xf32>,
    %170 = vector.extract_strided_slice %119 {offsets = [0, 20, 0], sizes = [12, 2, 64], strides = [1, 1, 1]} : vector<12x24x64xf32> to vector<12x2x64xf32>
    %cst_153 = arith.constant dense<0xFF800000> : vector<12x64xf32>
    %171 = vector.multi_reduction <maximumf>, %170, %cst_153 [1] : vector<12x2x64xf32> to vector<12x64xf32>
    %c0_154 = arith.constant 0 : index
    %c0_155 = arith.constant 0 : index
    %c10 = arith.constant 10 : index
    %c0_156 = arith.constant 0 : index
    %172 = vector.load %arg6[%c0_154, %c0_155, %c10, %c0_156] : memref<1x12x12x64xf32, #tpu.memory_space<vmem>>, vector<1x12x1x64xf32>
    %173 = vector.shape_cast %172 : vector<1x12x1x64xf32> to vector<12x64xf32>
    %174 = vector.shape_cast %171 : vector<12x64xf32> to vector<1x12x1x64xf32>
    tpu.vector_store %arg6[%c0_154, %c0_155, %c10, %c0_156], %174 {strides = array<i32>} : memref<1x12x12x64xf32, #tpu.memory_space<vmem>>, vector<1x12x1x64xf32>,
    %175 = vector.extract_strided_slice %119 {offsets = [0, 22, 0], sizes = [12, 2, 64], strides = [1, 1, 1]} : vector<12x24x64xf32> to vector<12x2x64xf32>
    %cst_157 = arith.constant dense<0xFF800000> : vector<12x64xf32>
    %176 = vector.multi_reduction <maximumf>, %175, %cst_157 [1] : vector<12x2x64xf32> to vector<12x64xf32>
    %c0_158 = arith.constant 0 : index
    %c0_159 = arith.constant 0 : index
    %c11 = arith.constant 11 : index
    %c0_160 = arith.constant 0 : index
    %177 = vector.load %arg6[%c0_158, %c0_159, %c11, %c0_160] : memref<1x12x12x64xf32, #tpu.memory_space<vmem>>, vector<1x12x1x64xf32>
    %178 = vector.shape_cast %177 : vector<1x12x1x64xf32> to vector<12x64xf32>
    %179 = vector.shape_cast %176 : vector<12x64xf32> to vector<1x12x1x64xf32>
    tpu.vector_store %arg6[%c0_158, %c0_159, %c11, %c0_160], %179 {strides = array<i32>} : memref<1x12x12x64xf32, #tpu.memory_space<vmem>>, vector<1x12x1x64xf32>,
    return
  }
  func.func @transform_0(%arg0: i32) -> (i32, i32, i32) {
    %c0_i32 = arith.constant 0 : i32
    %c0_i32_0 = arith.constant 0 : i32
    %c0_i32_1 = arith.constant 0 : i32
    return %arg0, %c0_i32, %c0_i32_0 : i32, i32, i32
  }
  func.func @transform_1(%arg0: i32) -> (i32, i32, i32) {
    %c0_i32 = arith.constant 0 : i32
    %c0_i32_0 = arith.constant 0 : i32
    %c0_i32_1 = arith.constant 0 : i32
    %c0_i32_2 = arith.constant 0 : i32
    return %c0_i32, %c0_i32_0, %c0_i32_1 : i32, i32, i32
  }
  func.func @transform_2(%arg0: i32) -> (i32, i32) {
    %c0_i32 = arith.constant 0 : i32
    %c0_i32_0 = arith.constant 0 : i32
    %c0_i32_1 = arith.constant 0 : i32
    return %c0_i32, %c0_i32_0 : i32, i32
  }
  func.func @transform_3(%arg0: i32) -> (i32, i32, i32, i32) {
    %c0_i32 = arith.constant 0 : i32
    %c0_i32_0 = arith.constant 0 : i32
    %c0_i32_1 = arith.constant 0 : i32
    %c0_i32_2 = arith.constant 0 : i32
    %c0_i32_3 = arith.constant 0 : i32
    return %c0_i32, %c0_i32_0, %c0_i32_1, %c0_i32_2 : i32, i32, i32, i32
  }
  func.func @transform_4(%arg0: i32) -> (i32, i32) {
    %c0_i32 = arith.constant 0 : i32
    %c0_i32_0 = arith.constant 0 : i32
    %c0_i32_1 = arith.constant 0 : i32
    return %c0_i32, %c0_i32_0 : i32, i32
  }
  func.func @transform_5(%arg0: i32) -> (i32, i32, i32, i32) {
    %c0_i32 = arith.constant 0 : i32
    %c0_i32_0 = arith.constant 0 : i32
    %c0_i32_1 = arith.constant 0 : i32
    %c0_i32_2 = arith.constant 0 : i32
    return %arg0, %c0_i32, %c0_i32_0, %c0_i32_1 : i32, i32, i32, i32
  }
}

</mosaic_0001>

<llo_original>
// kernel: tpu_custom_call.1
$region0: #{tpu_custom_call.1}
  #allocation0 [shape = 'u32[]', space=smem, size = 0x4, offset = 0x4, fixed_abs, tag = 'smem constant byte address 0x4 - core index']
  #allocation1 [shape = 'u32[72,128]{1,0:T(1,128)}', space=vmem, size = 0x9000, scoped, tag = 'internal scratch']
  #allocation2 [shape = 'f32[26,26,32]{2,1,0:T(8,128)}', space=vmem, size = 0x68000, scoped, tag = 'scratch operand']
  %s0 = inlined_call_operand.vmem [shape: f32[2,28,28], index: 0, kind: input, shape index: {}]
  %s1 = inlined_call_operand.vmem [shape: f32[3,3,32], index: 1, kind: input, shape index: {}]
  %s2 = inlined_call_operand.vmem [shape: f32[1,32], index: 2, kind: input, shape index: {}]
  %s3 = inlined_call_operand.hbm [shape: f32[3,3,32,64], index: 3, kind: input, shape index: {}]
  %s4 = inlined_call_operand.vmem [shape: f32[1,64], index: 4, kind: input, shape index: {}]
  %s5 = inlined_call_operand.vmem [shape: f32[2,12,12,64], index: 5, kind: output, shape index: {}]
  %s6 = sld [smem:[#allocation0]]
  $region57: #{tpu_custom_call.1} parent=0
    _
  %s8 = ssub.s32 1, %s6
  %s9 = scalar_select 0, %s8, %s6
  $region1: #{tpu_custom_call.1} parent=0
    #allocation3 [shape = 'u8[147456]{0}', space=vmem, size = 0x24000, scoped, tag = 'input window, operand 3, single buffered']
    #allocation4 [shape = 's32[2]{0}', space=sflag, size = 0x8, scoped, tag = 'scoped memory for tpu_custom_call.1']
    %10 = vsyncpa [#allocation4], 0
    loop: start=0, step=1, limit=4
    $region2: #{tpu_custom_call.1} parent=1 // loop_pre_header
      _
    $region3: #{tpu_custom_call.1} parent=1 // loop_header
      %s12 = sphi 0, %s16
      %p13 = scmp.ge.s32.totalorder %s12, 4
      %s22 = sphi 0, %s24
      %s25 = sphi 0, %s22
      %s26 = sphi 0, %s25
      %s42 = sphi 0, %s26
      %s46 = sphi 0, %s46
      %s48 = sphi 0, %s46
      %s49 = sphi 0, %s48
      %s63 = sphi 0, %s49
      %s67 = sphi 0, %s67
      %s69 = sphi 0, %s67
      %s70 = sphi 0, %s69
      %s84 = sphi 0, %s70
      %s88 = sphi 0, %s88
      %s90 = sphi 0, %s88
      %s91 = sphi 0, %s90
      %s105 = sphi 0, %s91
      %s109 = sphi 0, %s109
      %s111 = sphi 0, %s109
      %s112 = sphi 0, %s111
      %s126 = sphi 0, %s112
      %s132 = sphi 0, %s134
      %s135 = sphi 0, %s132
      %s136 = sphi 0, %s135
      %s152 = sphi 0, %s136
    $region4: #{tpu_custom_call.1} parent=1 // loop_header_branch
      %15 = sbr.rel (%p13) target = $region8
    $region5: #{tpu_custom_call.1} parent=1 // loop_body
      %s17 = ssub.s32 %s12, 1
      %s18 = ssub.s32 %s12, 2
      %s19 = sadd.s32 %s12, 1
      %s20 = ssub.s32 %s12, %s19
      %p21 = scmp.eq.s32.totalorder %s20, 0
      %s23 = sadd.s32 %s22, 1
      %s24 = scalar_select %p21, %s22, %s23
      %p27 = pneg %p21
      %p28 = scmp.eq.s32.totalorder %s12, 1
      %p29 = por %p27, %p28
      %p30 = scmp.ne.s32.totalorder %s22, %s25
      %p31 = scmp.eq.s32.totalorder %s12, 0
      %p32 = por %p30, %p31
      %p33 = scmp.ne.s32.totalorder %s22, %s25
      %p34 = scmp.eq.s32.totalorder %s17, 1
      %p35 = por %p33, %p34
      %p36 = scmp.ne.s32.totalorder %s25, %s26
      %p37 = scmp.eq.s32.totalorder %s17, 0
      %p38 = por %p36, %p37
      %p39 = scmp.ne.s32.totalorder %s25, %s26
      %p40 = scmp.eq.s32.totalorder %s18, 1
      %p41 = por %p39, %p40
      %p43 = scmp.ne.s32.totalorder %s26, %s42
      %p44 = scmp.eq.s32.totalorder %s18, 0
      %p45 = por %p43, %p44
      %s47 = sadd.s32 %s46, 1
      %p50 = scmp.eq.s32.totalorder %s12, 1
      %p51 = scmp.ne.s32.totalorder %s46, %s48
      %p52 = scmp.eq.s32.totalorder %s12, 0
      %p53 = por %p51, %p52
      %p54 = scmp.ne.s32.totalorder %s46, %s48
      %p55 = scmp.eq.s32.totalorder %s17, 1
      %p56 = por %p54, %p55
      %p57 = scmp.ne.s32.totalorder %s48, %s49
      %p58 = scmp.eq.s32.totalorder %s17, 0
      %p59 = por %p57, %p58
      %p60 = scmp.ne.s32.totalorder %s48, %s49
      %p61 = scmp.eq.s32.totalorder %s18, 1
      %p62 = por %p60, %p61
      %p64 = scmp.ne.s32.totalorder %s49, %s63
      %p65 = scmp.eq.s32.totalorder %s18, 0
      %p66 = por %p64, %p65
      %s68 = sadd.s32 %s67, 1
      %p71 = scmp.eq.s32.totalorder %s12, 1
      %p72 = scmp.ne.s32.totalorder %s67, %s69
      %p73 = scmp.eq.s32.totalorder %s12, 0
      %p74 = por %p72, %p73
      %p75 = scmp.ne.s32.totalorder %s67, %s69
      %p76 = scmp.eq.s32.totalorder %s17, 1
      %p77 = por %p75, %p76
      %p78 = scmp.ne.s32.totalorder %s69, %s70
      %p79 = scmp.eq.s32.totalorder %s17, 0
      %p80 = por %p78, %p79
      %p81 = scmp.ne.s32.totalorder %s69, %s70
      %p82 = scmp.eq.s32.totalorder %s18, 1
      %p83 = por %p81, %p82
      %p85 = scmp.ne.s32.totalorder %s70, %s84
      %p86 = scmp.eq.s32.totalorder %s18, 0
      %p87 = por %p85, %p86
      %s89 = sadd.s32 %s88, 1
      %p92 = scmp.eq.s32.totalorder %s12, 1
      %p93 = scmp.ne.s32.totalorder %s88, %s90
      %p94 = scmp.eq.s32.totalorder %s12, 0
      %p95 = por %p93, %p94
      %p96 = scmp.ne.s32.totalorder %s88, %s90
      %p97 = scmp.eq.s32.totalorder %s17, 1
      %p98 = por %p96, %p97
      %p99 = scmp.ne.s32.totalorder %s90, %s91
      %p100 = scmp.eq.s32.totalorder %s17, 0
      %p101 = por %p99, %p100
      %p102 = scmp.ne.s32.totalorder %s90, %s91
      %p103 = scmp.eq.s32.totalorder %s18, 1
      %p104 = por %p102, %p103
      %p106 = scmp.ne.s32.totalorder %s91, %s105
      %p107 = scmp.eq.s32.totalorder %s18, 0
      %p108 = por %p106, %p107
      %s110 = sadd.s32 %s109, 1
      %p113 = scmp.eq.s32.totalorder %s12, 1
      %p114 = scmp.ne.s32.totalorder %s109, %s111
      %p115 = scmp.eq.s32.totalorder %s12, 0
      %p116 = por %p114, %p115
      %p117 = scmp.ne.s32.totalorder %s109, %s111
      %p118 = scmp.eq.s32.totalorder %s17, 1
      %p119 = por %p117, %p118
      %p120 = scmp.ne.s32.totalorder %s111, %s112
      %p121 = scmp.eq.s32.totalorder %s17, 0
      %p122 = por %p120, %p121
      %p123 = scmp.ne.s32.totalorder %s111, %s112
      %p124 = scmp.eq.s32.totalorder %s18, 1
      %p125 = por %p123, %p124
      %p127 = scmp.ne.s32.totalorder %s112, %s126
      %p128 = scmp.eq.s32.totalorder %s18, 0
      %p129 = por %p127, %p128
      %s130 = ssub.s32 %s12, %s19
      %p131 = scmp.eq.s32.totalorder %s130, 0
      %s133 = sadd.s32 %s132, 1
      %s134 = scalar_select %p131, %s132, %s133
      %p137 = pneg %p131
      %p138 = scmp.eq.s32.totalorder %s12, 1
      %p139 = por %p137, %p138
      %p140 = scmp.ne.s32.totalorder %s132, %s135
      %p141 = scmp.eq.s32.totalorder %s12, 0
      %p142 = por %p140, %p141
      %p143 = scmp.ne.s32.totalorder %s132, %s135
      %p144 = scmp.eq.s32.totalorder %s17, 1
      %p145 = por %p143, %p144
      %p146 = scmp.ne.s32.totalorder %s135, %s136
      %p147 = scmp.eq.s32.totalorder %s17, 0
      %p148 = por %p146, %p147
      %p149 = scmp.ne.s32.totalorder %s135, %s136
      %p150 = scmp.eq.s32.totalorder %s18, 1
      %p151 = por %p149, %p150
      %p153 = scmp.ne.s32.totalorder %s136, %s152
      %p154 = scmp.eq.s32.totalorder %s18, 0
      %p155 = por %p153, %p154
      %p156 = scmp.le.s32.totalorder 1, %s12
      %p157 = scmp.lt.s32.totalorder %s12, 3
      %p158 = pnand %p156, %p157
      %p159 = pneg %p158
      // Predicated region
      $region9: #{tpu_custom_call.1} parent=5 // pred_check
        _
      $region10: #{tpu_custom_call.1} parent=5 // pred_check_branch
        %161 = sbr.rel (%p158) target = $region12
      $region11: #{tpu_custom_call.1} parent=5 // pred_region
        %s162 = ssub.s32 %s12, 1
        // Predicated region
        $region13: #{tpu_custom_call.1} parent=11 // pred_check
          %p163 = pneg %p59
        $region14: #{tpu_custom_call.1} parent=11 // pred_check_branch
          %165 = sbr.rel (%p163) target = $region16
        $region15: #{tpu_custom_call.1} parent=11 // pred_region
          _
        $region16: #{tpu_custom_call.1} parent=11 // pred_fallthru
          _
        // Predicated region
        $region17: #{tpu_custom_call.1} parent=11 // pred_check
          %p166 = pneg %p80
        $region18: #{tpu_custom_call.1} parent=11 // pred_check_branch
          %168 = sbr.rel (%p166) target = $region20
        $region19: #{tpu_custom_call.1} parent=11 // pred_region
          _
        $region20: #{tpu_custom_call.1} parent=11 // pred_fallthru
          _
        // Predicated region
        $region21: #{tpu_custom_call.1} parent=11 // pred_check
          %p169 = pneg %p101
        $region22: #{tpu_custom_call.1} parent=11 // pred_check_branch
          %171 = sbr.rel (%p169) target = $region24
        $region23: #{tpu_custom_call.1} parent=11 // pred_region
          %173 = vsyncadd [#allocation4], 0
          %s174 = sshll.u32 %s3, 4
          %s175 = int_to_ptr.hbm [resolvable:$true] %s174
          %s176 = sshll.u32 [#allocation3], 4
          %s177 = int_to_ptr.vmem [resolvable:$true] %s176
          %182 = dma.hbm_to_vmem [thread:$0]  %s175, 4608, %s177, [#allocation4], 128, 128, 8
        $region24: #{tpu_custom_call.1} parent=11 // pred_fallthru
          _
        // Predicated region
        $region25: #{tpu_custom_call.1} parent=11 // pred_check
          %p183 = pneg %p122
        $region26: #{tpu_custom_call.1} parent=11 // pred_check_branch
          %185 = sbr.rel (%p183) target = $region28
        $region27: #{tpu_custom_call.1} parent=11 // pred_region
          _
        $region28: #{tpu_custom_call.1} parent=11 // pred_fallthru
          _
      $region12: #{tpu_custom_call.1} parent=5 // pred_fallthru
        _
      %p186 = scmp.lt.s32.totalorder %s12, 2
      // Predicated region
      $region29: #{tpu_custom_call.1} parent=5 // pred_check
        %p187 = pneg %p186
      $region30: #{tpu_custom_call.1} parent=5 // pred_check_branch
        %189 = sbr.rel (%p187) target = $region32
      $region31: #{tpu_custom_call.1} parent=5 // pred_region
        // Predicated region
        $region33: #{tpu_custom_call.1} parent=31 // pred_check
          %p190 = pneg %p32
        $region34: #{tpu_custom_call.1} parent=31 // pred_check_branch
          %192 = sbr.rel (%p190) target = $region36
        $region35: #{tpu_custom_call.1} parent=31 // pred_region
          %p193 = scmp.lt.s32.totalorder %s12, 1
          %s194 = scalar_select %p193, %s12, 1
          %s195 = smul.addr %s194, 4
          %s196 = smul.addr %s195, 8
          %s197 = scalar_lea.vmem %s0, %s196
        $region36: #{tpu_custom_call.1} parent=31 // pred_fallthru
          _
      $region32: #{tpu_custom_call.1} parent=5 // pred_fallthru
        _
      %p198 = scmp.le.s32.totalorder 1, %s12
      %p199 = scmp.lt.s32.totalorder %s12, 3
      %p200 = pnand %p198, %p199
      %p201 = pneg %p200
      // Predicated region
      $region37: #{tpu_custom_call.1} parent=5 // pred_check
        _
      $region38: #{tpu_custom_call.1} parent=5 // pred_check_branch
        %203 = sbr.rel (%p200) target = $region40
      $region39: #{tpu_custom_call.1} parent=5 // pred_region
        %s204 = ssub.s32 %s12, 1
        // Predicated region
        $region41: #{tpu_custom_call.1} parent=39 // pred_check
          %p205 = pneg %p101
        $region42: #{tpu_custom_call.1} parent=39 // pred_check_branch
          %207 = sbr.rel (%p205) target = $region44
        $region43: #{tpu_custom_call.1} parent=39 // pred_region
          %209 = dma.done [#allocation4], 4608
        $region44: #{tpu_custom_call.1} parent=39 // pred_fallthru
          _
        %p210 = scmp.lt.s32.totalorder %s17, 1
        %s211 = scalar_select %p210, %s17, 1
        %s212 = smul.addr %s211, 4
        %s213 = smul.addr %s212, 8
        %s214 = scalar_lea.vmem %s0, %s213
        %p215 = pneg %p38
        %p216 = pneg %p35
        %p217 = pneg %p59
        %p218 = pneg %p56
        %p219 = pneg %p80
        %p220 = pneg %p77
        %p221 = pneg %p101
        %p222 = pneg %p98
        %p223 = pneg %p122
        %p224 = pneg %p119
        %p225 = pneg %p148
        %p226 = pneg %p145
        %p227 = scmp.lt.s32.totalorder %s17, 1
        %s228 = scalar_select %p227, %s17, 1
        %s229 = smul.addr %s228, 24
        %s230 = smul.addr %s229, 8
        %s231 = scalar_lea.vmem %s5, %s230
        %p232 = scmp.lt.s32.totalorder %s17, 1
        %s233 = scalar_select %p232, %s17, 1
        %s234 = smul.addr %s233, 4
        %s235 = smul.addr %s234, 8
        %s236 = scalar_lea.vmem %s0, %s235
        %p237 = scmp.lt.s32.totalorder %s17, 1
        %s238 = scalar_select %p237, %s17, 1
        %s239 = smul.addr %s238, 24
        %s240 = smul.addr %s239, 8
        %s241 = scalar_lea.vmem %s5, %s240
        %v242 = vld [vmem:[%s236] sm:$0xff]
        %v243 = vld [vmem:[%s236 + $0x8] sm:$0xff]
        %v244 = vld [vmem:[%s236 + $0x10] sm:$0xff]
        %v245 = vld [vmem:[%s236 + $0x18] sm:$0xf]
        %v246 = vperm.slane %v242, 0
        %v247 = vlaneseq
        %v248 = vshrl.u32 %v247, 7
        %250 = vset.pattern.permute.xlu0 %v248
        %251 = vperm.xlu0 %250, %v246
        %v252 = vpop.permute.xlu0 %251
        %v253 = vlaneseq
        %v254 = vshrl.u32 %v253, 7
        %v255 = vadd.s32 %v254, 8
        %256 = vset.pattern.permute.xlu0 %v255
        %257 = vperm.xlu0 %256, %v246
        %v258 = vpop.permute.xlu0 %257
        %v259 = vlaneseq
        %v260 = vshrl.u32 %v259, 7
        %v261 = vadd.s32 %v260, 16
        %262 = vset.pattern.permute.xlu0 %v261
        %263 = vperm.xlu0 %262, %v246
        %v264 = vpop.permute.xlu0 %263
        %v265 = vlaneseq
        %v266 = vshrl.u32 %v265, 7
        %v267 = vadd.s32 %v266, 24
        %268 = vset.pattern.permute.xlu0 %v267
        %269 = vperm.xlu0 %268, %v246
        %v270 = vpop.permute.xlu0 %269
        %v271 = vperm.slane %v242, 1
        %v272 = vlaneseq
        %v273 = vshrl.u32 %v272, 7
        %275 = vset.pattern.permute.xlu0 %v273
        %276 = vperm.xlu0 %275, %v271
        %v277 = vpop.permute.xlu0 %276
        %v278 = vlaneseq
        %v279 = vshrl.u32 %v278, 7
        %v280 = vadd.s32 %v279, 8
        %281 = vset.pattern.permute.xlu0 %v280
        %282 = vperm.xlu0 %281, %v271
        %v283 = vpop.permute.xlu0 %282
        %v284 = vlaneseq
        %v285 = vshrl.u32 %v284, 7
        %v286 = vadd.s32 %v285, 16
        %287 = vset.pattern.permute.xlu0 %v286
        %288 = vperm.xlu0 %287, %v271
        %v289 = vpop.permute.xlu0 %288
        %v290 = vlaneseq
        %v291 = vshrl.u32 %v290, 7
        %v292 = vadd.s32 %v291, 24
        %293 = vset.pattern.permute.xlu0 %v292
        %294 = vperm.xlu0 %293, %v271
        %v295 = vpop.permute.xlu0 %294
        %v296 = vperm.slane %v242, 2
        %v297 = vlaneseq
        %v298 = vshrl.u32 %v297, 7
        %300 = vset.pattern.permute.xlu0 %v298
        %301 = vperm.xlu0 %300, %v296
        %v302 = vpop.permute.xlu0 %301
        %v303 = vlaneseq
        %v304 = vshrl.u32 %v303, 7
        %v305 = vadd.s32 %v304, 8
        %306 = vset.pattern.permute.xlu0 %v305
        %307 = vperm.xlu0 %306, %v296
        %v308 = vpop.permute.xlu0 %307
        %v309 = vlaneseq
        %v310 = vshrl.u32 %v309, 7
        %v311 = vadd.s32 %v310, 16
        %312 = vset.pattern.permute.xlu0 %v311
        %313 = vperm.xlu0 %312, %v296
        %v314 = vpop.permute.xlu0 %313
        %v315 = vlaneseq
        %v316 = vshrl.u32 %v315, 7
        %v317 = vadd.s32 %v316, 24
        %318 = vset.pattern.permute.xlu0 %v317
        %319 = vperm.xlu0 %318, %v296
        %v320 = vpop.permute.xlu0 %319
        %v321 = vperm.slane %v242, 3
        %v322 = vlaneseq
        %v323 = vshrl.u32 %v322, 7
        %325 = vset.pattern.permute.xlu0 %v323
        %326 = vperm.xlu0 %325, %v321
        %v327 = vpop.permute.xlu0 %326
        %v328 = vlaneseq
        %v329 = vshrl.u32 %v328, 7
        %v330 = vadd.s32 %v329, 8
        %331 = vset.pattern.permute.xlu0 %v330
        %332 = vperm.xlu0 %331, %v321
        %v333 = vpop.permute.xlu0 %332
        %v334 = vlaneseq
        %v335 = vshrl.u32 %v334, 7
        %v336 = vadd.s32 %v335, 16
        %337 = vset.pattern.permute.xlu0 %v336
        %338 = vperm.xlu0 %337, %v321
        %v339 = vpop.permute.xlu0 %338
        %v340 = vlaneseq
        %v341 = vshrl.u32 %v340, 7
        %v342 = vadd.s32 %v341, 24
        %343 = vset.pattern.permute.xlu0 %v342
        %344 = vperm.xlu0 %343, %v321
        %v345 = vpop.permute.xlu0 %344
        %v346 = vperm.slane %v242, 4
        %v347 = vlaneseq
        %v348 = vshrl.u32 %v347, 7
        %350 = vset.pattern.permute.xlu0 %v348
        %351 = vperm.xlu0 %350, %v346
        %v352 = vpop.permute.xlu0 %351
        %v353 = vlaneseq
        %v354 = vshrl.u32 %v353, 7
        %v355 = vadd.s32 %v354, 8
        %356 = vset.pattern.permute.xlu0 %v355
        %357 = vperm.xlu0 %356, %v346
        %v358 = vpop.permute.xlu0 %357
        %v359 = vlaneseq
        %v360 = vshrl.u32 %v359, 7
        %v361 = vadd.s32 %v360, 16
        %362 = vset.pattern.permute.xlu0 %v361
        %363 = vperm.xlu0 %362, %v346
        %v364 = vpop.permute.xlu0 %363
        %v365 = vlaneseq
        %v366 = vshrl.u32 %v365, 7
        %v367 = vadd.s32 %v366, 24
        %368 = vset.pattern.permute.xlu0 %v367
        %369 = vperm.xlu0 %368, %v346
        %v370 = vpop.permute.xlu0 %369
        %v371 = vperm.slane %v242, 5
        %v372 = vlaneseq
        %v373 = vshrl.u32 %v372, 7
        %375 = vset.pattern.permute.xlu0 %v373
        %376 = vperm.xlu0 %375, %v371
        %v377 = vpop.permute.xlu0 %376
        %v378 = vlaneseq
        %v379 = vshrl.u32 %v378, 7
        %v380 = vadd.s32 %v379, 8
        %381 = vset.pattern.permute.xlu0 %v380
        %382 = vperm.xlu0 %381, %v371
        %v383 = vpop.permute.xlu0 %382
        %v384 = vlaneseq
        %v385 = vshrl.u32 %v384, 7
        %v386 = vadd.s32 %v385, 16
        %387 = vset.pattern.permute.xlu0 %v386
        %388 = vperm.xlu0 %387, %v371
        %v389 = vpop.permute.xlu0 %388
        %v390 = vlaneseq
        %v391 = vshrl.u32 %v390, 7
        %v392 = vadd.s32 %v391, 24
        %393 = vset.pattern.permute.xlu0 %v392
        %394 = vperm.xlu0 %393, %v371
        %v395 = vpop.permute.xlu0 %394
        %v396 = vperm.slane %v242, 6
        %v397 = vlaneseq
        %v398 = vshrl.u32 %v397, 7
        %400 = vset.pattern.permute.xlu0 %v398
        %401 = vperm.xlu0 %400, %v396
        %v402 = vpop.permute.xlu0 %401
        %v403 = vlaneseq
        %v404 = vshrl.u32 %v403, 7
        %v405 = vadd.s32 %v404, 8
        %406 = vset.pattern.permute.xlu0 %v405
        %407 = vperm.xlu0 %406, %v396
        %v408 = vpop.permute.xlu0 %407
        %v409 = vlaneseq
        %v410 = vshrl.u32 %v409, 7
        %v411 = vadd.s32 %v410, 16
        %412 = vset.pattern.permute.xlu0 %v411
        %413 = vperm.xlu0 %412, %v396
        %v414 = vpop.permute.xlu0 %413
        %v415 = vlaneseq
        %v416 = vshrl.u32 %v415, 7
        %v417 = vadd.s32 %v416, 24
        %418 = vset.pattern.permute.xlu0 %v417
        %419 = vperm.xlu0 %418, %v396
        %v420 = vpop.permute.xlu0 %419
        %v421 = vperm.slane %v242, 7
        %v422 = vlaneseq
        %v423 = vshrl.u32 %v422, 7
        %425 = vset.pattern.permute.xlu0 %v423
        %426 = vperm.xlu0 %425, %v421
        %v427 = vpop.permute.xlu0 %426
        %v428 = vlaneseq
        %v429 = vshrl.u32 %v428, 7
        %v430 = vadd.s32 %v429, 8
        %431 = vset.pattern.permute.xlu0 %v430
        %432 = vperm.xlu0 %431, %v421
        %v433 = vpop.permute.xlu0 %432
        %v434 = vlaneseq
        %v435 = vshrl.u32 %v434, 7
        %v436 = vadd.s32 %v435, 16
        %437 = vset.pattern.permute.xlu0 %v436
        %438 = vperm.xlu0 %437, %v421
        %v439 = vpop.permute.xlu0 %438
        %v440 = vlaneseq
        %v441 = vshrl.u32 %v440, 7
        %v442 = vadd.s32 %v441, 24
        %443 = vset.pattern.permute.xlu0 %v442
        %444 = vperm.xlu0 %443, %v421
        %v445 = vpop.permute.xlu0 %444
        %v446 = vperm.slane %v243, 0
        %v447 = vlaneseq
        %v448 = vshrl.u32 %v447, 7
        %450 = vset.pattern.permute.xlu0 %v448
        %451 = vperm.xlu0 %450, %v446
        %v452 = vpop.permute.xlu0 %451
        %v453 = vlaneseq
        %v454 = vshrl.u32 %v453, 7
        %v455 = vadd.s32 %v454, 8
        %456 = vset.pattern.permute.xlu0 %v455
        %457 = vperm.xlu0 %456, %v446
        %v458 = vpop.permute.xlu0 %457
        %v459 = vlaneseq
        %v460 = vshrl.u32 %v459, 7
        %v461 = vadd.s32 %v460, 16
        %462 = vset.pattern.permute.xlu0 %v461
        %463 = vperm.xlu0 %462, %v446
        %v464 = vpop.permute.xlu0 %463
        %v465 = vlaneseq
        %v466 = vshrl.u32 %v465, 7
        %v467 = vadd.s32 %v466, 24
        %468 = vset.pattern.permute.xlu0 %v467
        %469 = vperm.xlu0 %468, %v446
        %v470 = vpop.permute.xlu0 %469
        %v471 = vperm.slane %v243, 1
        %v472 = vlaneseq
        %v473 = vshrl.u32 %v472, 7
        %475 = vset.pattern.permute.xlu0 %v473
        %476 = vperm.xlu0 %475, %v471
        %v477 = vpop.permute.xlu0 %476
        %v478 = vlaneseq
        %v479 = vshrl.u32 %v478, 7
        %v480 = vadd.s32 %v479, 8
        %481 = vset.pattern.permute.xlu0 %v480
        %482 = vperm.xlu0 %481, %v471
        %v483 = vpop.permute.xlu0 %482
        %v484 = vlaneseq
        %v485 = vshrl.u32 %v484, 7
        %v486 = vadd.s32 %v485, 16
        %487 = vset.pattern.permute.xlu0 %v486
        %488 = vperm.xlu0 %487, %v471
        %v489 = vpop.permute.xlu0 %488
        %v490 = vlaneseq
        %v491 = vshrl.u32 %v490, 7
        %v492 = vadd.s32 %v491, 24
        %493 = vset.pattern.permute.xlu0 %v492
        %494 = vperm.xlu0 %493, %v471
        %v495 = vpop.permute.xlu0 %494
        %v496 = vperm.slane %v243, 2
        %v497 = vlaneseq
        %v498 = vshrl.u32 %v497, 7
        %500 = vset.pattern.permute.xlu0 %v498
        %501 = vperm.xlu0 %500, %v496
        %v502 = vpop.permute.xlu0 %501
        %v503 = vlaneseq
        %v504 = vshrl.u32 %v503, 7
        %v505 = vadd.s32 %v504, 8
        %506 = vset.pattern.permute.xlu0 %v505
        %507 = vperm.xlu0 %506, %v496
        %v508 = vpop.permute.xlu0 %507
        %v509 = vlaneseq
        %v510 = vshrl.u32 %v509, 7
        %v511 = vadd.s32 %v510, 16
        %512 = vset.pattern.permute.xlu0 %v511
        %513 = vperm.xlu0 %512, %v496
        %v514 = vpop.permute.xlu0 %513
        %v515 = vlaneseq
        %v516 = vshrl.u32 %v515, 7
        %v517 = vadd.s32 %v516, 24
        %518 = vset.pattern.permute.xlu0 %v517
        %519 = vperm.xlu0 %518, %v496
        %v520 = vpop.permute.xlu0 %519
        %v521 = vperm.slane %v243, 3
        %v522 = vlaneseq
        %v523 = vshrl.u32 %v522, 7
        %525 = vset.pattern.permute.xlu0 %v523
        %526 = vperm.xlu0 %525, %v521
        %v527 = vpop.permute.xlu0 %526
        %v528 = vlaneseq
        %v529 = vshrl.u32 %v528, 7
        %v530 = vadd.s32 %v529, 8
        %531 = vset.pattern.permute.xlu0 %v530
        %532 = vperm.xlu0 %531, %v521
        %v533 = vpop.permute.xlu0 %532
        %v534 = vlaneseq
        %v535 = vshrl.u32 %v534, 7
        %v536 = vadd.s32 %v535, 16
        %537 = vset.pattern.permute.xlu0 %v536
        %538 = vperm.xlu0 %537, %v521
        %v539 = vpop.permute.xlu0 %538
        %v540 = vlaneseq
        %v541 = vshrl.u32 %v540, 7
        %v542 = vadd.s32 %v541, 24
        %543 = vset.pattern.permute.xlu0 %v542
        %544 = vperm.xlu0 %543, %v521
        %v545 = vpop.permute.xlu0 %544
        %v546 = vperm.slane %v243, 4
        %v547 = vlaneseq
        %v548 = vshrl.u32 %v547, 7
        %550 = vset.pattern.permute.xlu0 %v548
        %551 = vperm.xlu0 %550, %v546
        %v552 = vpop.permute.xlu0 %551
        %v553 = vlaneseq
        %v554 = vshrl.u32 %v553, 7
        %v555 = vadd.s32 %v554, 8
        %556 = vset.pattern.permute.xlu0 %v555
        %557 = vperm.xlu0 %556, %v546
        %v558 = vpop.permute.xlu0 %557
        %v559 = vlaneseq
        %v560 = vshrl.u32 %v559, 7
        %v561 = vadd.s32 %v560, 16
        %562 = vset.pattern.permute.xlu0 %v561
        %563 = vperm.xlu0 %562, %v546
        %v564 = vpop.permute.xlu0 %563
        %v565 = vlaneseq
        %v566 = vshrl.u32 %v565, 7
        %v567 = vadd.s32 %v566, 24
        %568 = vset.pattern.permute.xlu0 %v567
        %569 = vperm.xlu0 %568, %v546
        %v570 = vpop.permute.xlu0 %569
        %v571 = vperm.slane %v243, 5
        %v572 = vlaneseq
        %v573 = vshrl.u32 %v572, 7
        %575 = vset.pattern.permute.xlu0 %v573
        %576 = vperm.xlu0 %575, %v571
        %v577 = vpop.permute.xlu0 %576
        %v578 = vlaneseq
        %v579 = vshrl.u32 %v578, 7
        %v580 = vadd.s32 %v579, 8
        %581 = vset.pattern.permute.xlu0 %v580
        %582 = vperm.xlu0 %581, %v571
        %v583 = vpop.permute.xlu0 %582
        %v584 = vlaneseq
        %v585 = vshrl.u32 %v584, 7
        %v586 = vadd.s32 %v585, 16
        %587 = vset.pattern.permute.xlu0 %v586
        %588 = vperm.xlu0 %587, %v571
        %v589 = vpop.permute.xlu0 %588
        %v590 = vlaneseq
        %v591 = vshrl.u32 %v590, 7
        %v592 = vadd.s32 %v591, 24
        %593 = vset.pattern.permute.xlu0 %v592
        %594 = vperm.xlu0 %593, %v571
        %v595 = vpop.permute.xlu0 %594
        %v596 = vperm.slane %v243, 6
        %v597 = vlaneseq
        %v598 = vshrl.u32 %v597, 7
        %600 = vset.pattern.permute.xlu0 %v598
        %601 = vperm.xlu0 %600, %v596
        %v602 = vpop.permute.xlu0 %601
        %v603 = vlaneseq
        %v604 = vshrl.u32 %v603, 7
        %v605 = vadd.s32 %v604, 8
        %606 = vset.pattern.permute.xlu0 %v605
        %607 = vperm.xlu0 %606, %v596
        %v608 = vpop.permute.xlu0 %607
        %v609 = vlaneseq
        %v610 = vshrl.u32 %v609, 7
        %v611 = vadd.s32 %v610, 16
        %612 = vset.pattern.permute.xlu0 %v611
        %613 = vperm.xlu0 %612, %v596
        %v614 = vpop.permute.xlu0 %613
        %v615 = vlaneseq
        %v616 = vshrl.u32 %v615, 7
        %v617 = vadd.s32 %v616, 24
        %618 = vset.pattern.permute.xlu0 %v617
        %619 = vperm.xlu0 %618, %v596
        %v620 = vpop.permute.xlu0 %619
        %v621 = vperm.slane %v243, 7
        %v622 = vlaneseq
        %v623 = vshrl.u32 %v622, 7
        %625 = vset.pattern.permute.xlu0 %v623
        %626 = vperm.xlu0 %625, %v621
        %v627 = vpop.permute.xlu0 %626
        %v628 = vlaneseq
        %v629 = vshrl.u32 %v628, 7
        %v630 = vadd.s32 %v629, 8
        %631 = vset.pattern.permute.xlu0 %v630
        %632 = vperm.xlu0 %631, %v621
        %v633 = vpop.permute.xlu0 %632
        %v634 = vlaneseq
        %v635 = vshrl.u32 %v634, 7
        %v636 = vadd.s32 %v635, 16
        %637 = vset.pattern.permute.xlu0 %v636
        %638 = vperm.xlu0 %637, %v621
        %v639 = vpop.permute.xlu0 %638
        %v640 = vlaneseq
        %v641 = vshrl.u32 %v640, 7
        %v642 = vadd.s32 %v641, 24
        %643 = vset.pattern.permute.xlu0 %v642
        %644 = vperm.xlu0 %643, %v621
        %v645 = vpop.permute.xlu0 %644
        %v646 = vperm.slane %v244, 0
        %v647 = vlaneseq
        %v648 = vshrl.u32 %v647, 7
        %650 = vset.pattern.permute.xlu0 %v648
        %651 = vperm.xlu0 %650, %v646
        %v652 = vpop.permute.xlu0 %651
        %v653 = vlaneseq
        %v654 = vshrl.u32 %v653, 7
        %v655 = vadd.s32 %v654, 8
        %656 = vset.pattern.permute.xlu0 %v655
        %657 = vperm.xlu0 %656, %v646
        %v658 = vpop.permute.xlu0 %657
        %v659 = vlaneseq
        %v660 = vshrl.u32 %v659, 7
        %v661 = vadd.s32 %v660, 16
        %662 = vset.pattern.permute.xlu0 %v661
        %663 = vperm.xlu0 %662, %v646
        %v664 = vpop.permute.xlu0 %663
        %v665 = vlaneseq
        %v666 = vshrl.u32 %v665, 7
        %v667 = vadd.s32 %v666, 24
        %668 = vset.pattern.permute.xlu0 %v667
        %669 = vperm.xlu0 %668, %v646
        %v670 = vpop.permute.xlu0 %669
        %v671 = vperm.slane %v244, 1
        %v672 = vlaneseq
        %v673 = vshrl.u32 %v672, 7
        %675 = vset.pattern.permute.xlu0 %v673
        %676 = vperm.xlu0 %675, %v671
        %v677 = vpop.permute.xlu0 %676
        %v678 = vlaneseq
        %v679 = vshrl.u32 %v678, 7
        %v680 = vadd.s32 %v679, 8
        %681 = vset.pattern.permute.xlu0 %v680
        %682 = vperm.xlu0 %681, %v671
        %v683 = vpop.permute.xlu0 %682
        %v684 = vlaneseq
        %v685 = vshrl.u32 %v684, 7
        %v686 = vadd.s32 %v685, 16
        %687 = vset.pattern.permute.xlu0 %v686
        %688 = vperm.xlu0 %687, %v671
        %v689 = vpop.permute.xlu0 %688
        %v690 = vlaneseq
        %v691 = vshrl.u32 %v690, 7
        %v692 = vadd.s32 %v691, 24
        %693 = vset.pattern.permute.xlu0 %v692
        %694 = vperm.xlu0 %693, %v671
        %v695 = vpop.permute.xlu0 %694
        %v696 = vperm.slane %v244, 2
        %v697 = vlaneseq
        %v698 = vshrl.u32 %v697, 7
        %700 = vset.pattern.permute.xlu0 %v698
        %701 = vperm.xlu0 %700, %v696
        %v702 = vpop.permute.xlu0 %701
        %v703 = vlaneseq
        %v704 = vshrl.u32 %v703, 7
        %v705 = vadd.s32 %v704, 8
        %706 = vset.pattern.permute.xlu0 %v705
        %707 = vperm.xlu0 %706, %v696
        %v708 = vpop.permute.xlu0 %707
        %v709 = vlaneseq
        %v710 = vshrl.u32 %v709, 7
        %v711 = vadd.s32 %v710, 16
        %712 = vset.pattern.permute.xlu0 %v711
        %713 = vperm.xlu0 %712, %v696
        %v714 = vpop.permute.xlu0 %713
        %v715 = vlaneseq
        %v716 = vshrl.u32 %v715, 7
        %v717 = vadd.s32 %v716, 24
        %718 = vset.pattern.permute.xlu0 %v717
        %719 = vperm.xlu0 %718, %v696
        %v720 = vpop.permute.xlu0 %719
        %v721 = vperm.slane %v244, 3
        %v722 = vlaneseq
        %v723 = vshrl.u32 %v722, 7
        %725 = vset.pattern.permute.xlu0 %v723
        %726 = vperm.xlu0 %725, %v721
        %v727 = vpop.permute.xlu0 %726
        %v728 = vlaneseq
        %v729 = vshrl.u32 %v728, 7
        %v730 = vadd.s32 %v729, 8
        %731 = vset.pattern.permute.xlu0 %v730
        %732 = vperm.xlu0 %731, %v721
        %v733 = vpop.permute.xlu0 %732
        %v734 = vlaneseq
        %v735 = vshrl.u32 %v734, 7
        %v736 = vadd.s32 %v735, 16
        %737 = vset.pattern.permute.xlu0 %v736
        %738 = vperm.xlu0 %737, %v721
        %v739 = vpop.permute.xlu0 %738
        %v740 = vlaneseq
        %v741 = vshrl.u32 %v740, 7
        %v742 = vadd.s32 %v741, 24
        %743 = vset.pattern.permute.xlu0 %v742
        %744 = vperm.xlu0 %743, %v721
        %v745 = vpop.permute.xlu0 %744
        %v746 = vperm.slane %v244, 4
        %v747 = vlaneseq
        %v748 = vshrl.u32 %v747, 7
        %750 = vset.pattern.permute.xlu0 %v748
        %751 = vperm.xlu0 %750, %v746
        %v752 = vpop.permute.xlu0 %751
        %v753 = vlaneseq
        %v754 = vshrl.u32 %v753, 7
        %v755 = vadd.s32 %v754, 8
        %756 = vset.pattern.permute.xlu0 %v755
        %757 = vperm.xlu0 %756, %v746
        %v758 = vpop.permute.xlu0 %757
        %v759 = vlaneseq
        %v760 = vshrl.u32 %v759, 7
        %v761 = vadd.s32 %v760, 16
        %762 = vset.pattern.permute.xlu0 %v761
        %763 = vperm.xlu0 %762, %v746
        %v764 = vpop.permute.xlu0 %763
        %v765 = vlaneseq
        %v766 = vshrl.u32 %v765, 7
        %v767 = vadd.s32 %v766, 24
        %768 = vset.pattern.permute.xlu0 %v767
        %769 = vperm.xlu0 %768, %v746
        %v770 = vpop.permute.xlu0 %769
        %v771 = vperm.slane %v244, 5
        %v772 = vlaneseq
        %v773 = vshrl.u32 %v772, 7
        %775 = vset.pattern.permute.xlu0 %v773
        %776 = vperm.xlu0 %775, %v771
        %v777 = vpop.permute.xlu0 %776
        %v778 = vlaneseq
        %v779 = vshrl.u32 %v778, 7
        %v780 = vadd.s32 %v779, 8
        %781 = vset.pattern.permute.xlu0 %v780
        %782 = vperm.xlu0 %781, %v771
        %v783 = vpop.permute.xlu0 %782
        %v784 = vlaneseq
        %v785 = vshrl.u32 %v784, 7
        %v786 = vadd.s32 %v785, 16
        %787 = vset.pattern.permute.xlu0 %v786
        %788 = vperm.xlu0 %787, %v771
        %v789 = vpop.permute.xlu0 %788
        %v790 = vlaneseq
        %v791 = vshrl.u32 %v790, 7
        %v792 = vadd.s32 %v791, 24
        %793 = vset.pattern.permute.xlu0 %v792
        %794 = vperm.xlu0 %793, %v771
        %v795 = vpop.permute.xlu0 %794
        %v796 = vperm.slane %v244, 6
        %v797 = vlaneseq
        %v798 = vshrl.u32 %v797, 7
        %800 = vset.pattern.permute.xlu0 %v798
        %801 = vperm.xlu0 %800, %v796
        %v802 = vpop.permute.xlu0 %801
        %v803 = vlaneseq
        %v804 = vshrl.u32 %v803, 7
        %v805 = vadd.s32 %v804, 8
        %806 = vset.pattern.permute.xlu0 %v805
        %807 = vperm.xlu0 %806, %v796
        %v808 = vpop.permute.xlu0 %807
        %v809 = vlaneseq
        %v810 = vshrl.u32 %v809, 7
        %v811 = vadd.s32 %v810, 16
        %812 = vset.pattern.permute.xlu0 %v811
        %813 = vperm.xlu0 %812, %v796
        %v814 = vpop.permute.xlu0 %813
        %v815 = vlaneseq
        %v816 = vshrl.u32 %v815, 7
        %v817 = vadd.s32 %v816, 24
        %818 = vset.pattern.permute.xlu0 %v817
        %819 = vperm.xlu0 %818, %v796
        %v820 = vpop.permute.xlu0 %819
        %v821 = vperm.slane %v244, 7
        %v822 = vlaneseq
        %v823 = vshrl.u32 %v822, 7
        %825 = vset.pattern.permute.xlu0 %v823
        %826 = vperm.xlu0 %825, %v821
        %v827 = vpop.permute.xlu0 %826
        %v828 = vlaneseq
        %v829 = vshrl.u32 %v828, 7
        %v830 = vadd.s32 %v829, 8
        %831 = vset.pattern.permute.xlu0 %v830
        %832 = vperm.xlu0 %831, %v821
        %v833 = vpop.permute.xlu0 %832
        %v834 = vlaneseq
        %v835 = vshrl.u32 %v834, 7
        %v836 = vadd.s32 %v835, 16
        %837 = vset.pattern.permute.xlu0 %v836
        %838 = vperm.xlu0 %837, %v821
        %v839 = vpop.permute.xlu0 %838
        %v840 = vlaneseq
        %v841 = vshrl.u32 %v840, 7
        %v842 = vadd.s32 %v841, 24
        %843 = vset.pattern.permute.xlu0 %v842
        %844 = vperm.xlu0 %843, %v821
        %v845 = vpop.permute.xlu0 %844
        %v846 = vperm.slane %v245, 0
        %v847 = vlaneseq
        %v848 = vshrl.u32 %v847, 7
        %850 = vset.pattern.permute.xlu0 %v848
        %851 = vperm.xlu0 %850, %v846
        %v852 = vpop.permute.xlu0 %851
        %v853 = vlaneseq
        %v854 = vshrl.u32 %v853, 7
        %v855 = vadd.s32 %v854, 8
        %856 = vset.pattern.permute.xlu0 %v855
        %857 = vperm.xlu0 %856, %v846
        %v858 = vpop.permute.xlu0 %857
        %v859 = vlaneseq
        %v860 = vshrl.u32 %v859, 7
        %v861 = vadd.s32 %v860, 16
        %862 = vset.pattern.permute.xlu0 %v861
        %863 = vperm.xlu0 %862, %v846
        %v864 = vpop.permute.xlu0 %863
        %v865 = vlaneseq
        %v866 = vshrl.u32 %v865, 7
        %v867 = vadd.s32 %v866, 24
        %868 = vset.pattern.permute.xlu0 %v867
        %869 = vperm.xlu0 %868, %v846
        %v870 = vpop.permute.xlu0 %869
        %v871 = vperm.slane %v245, 1
        %v872 = vlaneseq
        %v873 = vshrl.u32 %v872, 7
        %875 = vset.pattern.permute.xlu0 %v873
        %876 = vperm.xlu0 %875, %v871
        %v877 = vpop.permute.xlu0 %876
        %v878 = vlaneseq
        %v879 = vshrl.u32 %v878, 7
        %v880 = vadd.s32 %v879, 8
        %881 = vset.pattern.permute.xlu0 %v880
        %882 = vperm.xlu0 %881, %v871
        %v883 = vpop.permute.xlu0 %882
        %v884 = vlaneseq
        %v885 = vshrl.u32 %v884, 7
        %v886 = vadd.s32 %v885, 16
        %887 = vset.pattern.permute.xlu0 %v886
        %888 = vperm.xlu0 %887, %v871
        %v889 = vpop.permute.xlu0 %888
        %v890 = vlaneseq
        %v891 = vshrl.u32 %v890, 7
        %v892 = vadd.s32 %v891, 24
        %893 = vset.pattern.permute.xlu0 %v892
        %894 = vperm.xlu0 %893, %v871
        %v895 = vpop.permute.xlu0 %894
        %v896 = vperm.slane %v245, 2
        %v897 = vlaneseq
        %v898 = vshrl.u32 %v897, 7
        %900 = vset.pattern.permute.xlu0 %v898
        %901 = vperm.xlu0 %900, %v896
        %v902 = vpop.permute.xlu0 %901
        %v903 = vlaneseq
        %v904 = vshrl.u32 %v903, 7
        %v905 = vadd.s32 %v904, 8
        %906 = vset.pattern.permute.xlu0 %v905
        %907 = vperm.xlu0 %906, %v896
        %v908 = vpop.permute.xlu0 %907
        %v909 = vlaneseq
        %v910 = vshrl.u32 %v909, 7
        %v911 = vadd.s32 %v910, 16
        %912 = vset.pattern.permute.xlu0 %v911
        %913 = vperm.xlu0 %912, %v896
        %v914 = vpop.permute.xlu0 %913
        %v915 = vlaneseq
        %v916 = vshrl.u32 %v915, 7
        %v917 = vadd.s32 %v916, 24
        %918 = vset.pattern.permute.xlu0 %v917
        %919 = vperm.xlu0 %918, %v896
        %v920 = vpop.permute.xlu0 %919
        %v921 = vperm.slane %v245, 3
        %v922 = vlaneseq
        %v923 = vshrl.u32 %v922, 7
        %925 = vset.pattern.permute.xlu0 %v923
        %926 = vperm.xlu0 %925, %v921
        %v927 = vpop.permute.xlu0 %926
        %v928 = vlaneseq
        %v929 = vshrl.u32 %v928, 7
        %v930 = vadd.s32 %v929, 8
        %931 = vset.pattern.permute.xlu0 %v930
        %932 = vperm.xlu0 %931, %v921
        %v933 = vpop.permute.xlu0 %932
        %v934 = vlaneseq
        %v935 = vshrl.u32 %v934, 7
        %v936 = vadd.s32 %v935, 16
        %937 = vset.pattern.permute.xlu0 %v936
        %938 = vperm.xlu0 %937, %v921
        %v939 = vpop.permute.xlu0 %938
        %v940 = vlaneseq
        %v941 = vshrl.u32 %v940, 7
        %v942 = vadd.s32 %v941, 24
        %943 = vset.pattern.permute.xlu0 %v942
        %944 = vperm.xlu0 %943, %v921
        %v945 = vpop.permute.xlu0 %944
        %v946 = vld [vmem:[%s1] sm:$0x1]
        %v947 = vperm.slane %v946, 0
        %v948 = vmul.f32 %v252, %v947
        %v949 = vmul.f32 %v258, %v947
        %v950 = vmul.f32 %v264, %v947
        %v951 = vmul.f32 %v270, %v947
        %v952 = vmul.f32 %v277, %v947
        %v953 = vmul.f32 %v283, %v947
        %v954 = vmul.f32 %v289, %v947
        %v955 = vmul.f32 %v295, %v947
        %v956 = vmul.f32 %v302, %v947
        %v957 = vmul.f32 %v308, %v947
        %v958 = vmul.f32 %v314, %v947
        %v959 = vmul.f32 %v320, %v947
        %v960 = vmul.f32 %v327, %v947
        %v961 = vmul.f32 %v333, %v947
        %v962 = vmul.f32 %v339, %v947
        %v963 = vmul.f32 %v345, %v947
        %v964 = vmul.f32 %v352, %v947
        %v965 = vmul.f32 %v358, %v947
        %v966 = vmul.f32 %v364, %v947
        %v967 = vmul.f32 %v370, %v947
        %v968 = vmul.f32 %v377, %v947
        %v969 = vmul.f32 %v383, %v947
        %v970 = vmul.f32 %v389, %v947
        %v971 = vmul.f32 %v395, %v947
        %v972 = vmul.f32 %v402, %v947
        %v973 = vmul.f32 %v408, %v947
        %v974 = vmul.f32 %v414, %v947
        %v975 = vmul.f32 %v420, %v947
        %v976 = vmul.f32 %v427, %v947
        %v977 = vmul.f32 %v433, %v947
        %v978 = vmul.f32 %v439, %v947
        %v979 = vmul.f32 %v445, %v947
        %v980 = vmul.f32 %v452, %v947
        %v981 = vmul.f32 %v458, %v947
        %v982 = vmul.f32 %v464, %v947
        %v983 = vmul.f32 %v470, %v947
        %v984 = vmul.f32 %v477, %v947
        %v985 = vmul.f32 %v483, %v947
        %v986 = vmul.f32 %v489, %v947
        %v987 = vmul.f32 %v495, %v947
        %v988 = vmul.f32 %v502, %v947
        %v989 = vmul.f32 %v508, %v947
        %v990 = vmul.f32 %v514, %v947
        %v991 = vmul.f32 %v520, %v947
        %v992 = vmul.f32 %v527, %v947
        %v993 = vmul.f32 %v533, %v947
        %v994 = vmul.f32 %v539, %v947
        %v995 = vmul.f32 %v545, %v947
        %v996 = vmul.f32 %v552, %v947
        %v997 = vmul.f32 %v558, %v947
        %v998 = vmul.f32 %v564, %v947
        %v999 = vmul.f32 %v570, %v947
        %v1000 = vmul.f32 %v577, %v947
        %v1001 = vmul.f32 %v583, %v947
        %v1002 = vmul.f32 %v589, %v947
        %v1003 = vmul.f32 %v595, %v947
        %v1004 = vmul.f32 %v602, %v947
        %v1005 = vmul.f32 %v608, %v947
        %v1006 = vmul.f32 %v614, %v947
        %v1007 = vmul.f32 %v620, %v947
        %v1008 = vmul.f32 %v627, %v947
        %v1009 = vmul.f32 %v633, %v947
        %v1010 = vmul.f32 %v639, %v947
        %v1011 = vmul.f32 %v645, %v947
        %v1012 = vmul.f32 %v652, %v947
        %v1013 = vmul.f32 %v658, %v947
        %v1014 = vmul.f32 %v664, %v947
        %v1015 = vmul.f32 %v670, %v947
        %v1016 = vmul.f32 %v677, %v947
        %v1017 = vmul.f32 %v683, %v947
        %v1018 = vmul.f32 %v689, %v947
        %v1019 = vmul.f32 %v695, %v947
        %v1020 = vmul.f32 %v702, %v947
        %v1021 = vmul.f32 %v708, %v947
        %v1022 = vmul.f32 %v714, %v947
        %v1023 = vmul.f32 %v720, %v947
        %v1024 = vmul.f32 %v727, %v947
        %v1025 = vmul.f32 %v733, %v947
        %v1026 = vmul.f32 %v739, %v947
        %v1027 = vmul.f32 %v745, %v947
        %v1028 = vmul.f32 %v752, %v947
        %v1029 = vmul.f32 %v758, %v947
        %v1030 = vmul.f32 %v764, %v947
        %v1031 = vmul.f32 %v770, %v947
        %v1032 = vmul.f32 %v777, %v947
        %v1033 = vmul.f32 %v783, %v947
        %v1034 = vmul.f32 %v789, %v947
        %v1035 = vmul.f32 %v795, %v947
        %v1036 = vmul.f32 %v802, %v947
        %v1037 = vmul.f32 %v808, %v947
        %v1038 = vmul.f32 %v814, %v947
        %v1039 = vmul.f32 %v820, %v947
        %v1040 = vmul.f32 %v827, %v947
        %v1041 = vmul.f32 %v833, %v947
        %v1042 = vmul.f32 %v839, %v947
        %v1043 = vmul.f32 %v845, %v947
        %v1044 = vmul.f32 %v852, %v947
        %v1045 = vmul.f32 %v858, %v947
        %v1046 = vmul.f32 %v864, %v947
        %v1047 = vmul.f32 %v870, %v947
        %v1048 = vmul.f32 %v877, %v947
        %v1049 = vmul.f32 %v883, %v947
        %v1050 = vmul.f32 %v889, %v947
        %v1051 = vmul.f32 %v895, %v947
        %v1052 = vadd.f32 %v948, 0.0
        %v1053 = vadd.f32 %v949, 0.0
        %v1054 = vadd.f32 %v950, 0.0
        %v1055 = vadd.f32 %v951, 0.0
        %v1056 = vadd.f32 %v952, 0.0
        %v1057 = vadd.f32 %v953, 0.0
        %v1058 = vadd.f32 %v954, 0.0
        %v1059 = vadd.f32 %v955, 0.0
        %v1060 = vadd.f32 %v956, 0.0
        %v1061 = vadd.f32 %v957, 0.0
        %v1062 = vadd.f32 %v958, 0.0
        %v1063 = vadd.f32 %v959, 0.0
        %v1064 = vadd.f32 %v960, 0.0
        %v1065 = vadd.f32 %v961, 0.0
        %v1066 = vadd.f32 %v962, 0.0
        %v1067 = vadd.f32 %v963, 0.0
        %v1068 = vadd.f32 %v964, 0.0
        %v1069 = vadd.f32 %v965, 0.0
        %v1070 = vadd.f32 %v966, 0.0
        %v1071 = vadd.f32 %v967, 0.0
        %v1072 = vadd.f32 %v968, 0.0
        %v1073 = vadd.f32 %v969, 0.0
        %v1074 = vadd.f32 %v970, 0.0
        %v1075 = vadd.f32 %v971, 0.0
        %v1076 = vadd.f32 %v972, 0.0
        %v1077 = vadd.f32 %v973, 0.0
        %v1078 = vadd.f32 %v974, 0.0
        %v1079 = vadd.f32 %v975, 0.0
        %v1080 = vadd.f32 %v976, 0.0
        %v1081 = vadd.f32 %v977, 0.0
        %v1082 = vadd.f32 %v978, 0.0
        %v1083 = vadd.f32 %v979, 0.0
        %v1084 = vadd.f32 %v980, 0.0
        %v1085 = vadd.f32 %v981, 0.0
        %v1086 = vadd.f32 %v982, 0.0
        %v1087 = vadd.f32 %v983, 0.0
        %v1088 = vadd.f32 %v984, 0.0
        %v1089 = vadd.f32 %v985, 0.0
        %v1090 = vadd.f32 %v986, 0.0
        %v1091 = vadd.f32 %v987, 0.0
        %v1092 = vadd.f32 %v988, 0.0
        %v1093 = vadd.f32 %v989, 0.0
        %v1094 = vadd.f32 %v990, 0.0
        %v1095 = vadd.f32 %v991, 0.0
        %v1096 = vadd.f32 %v992, 0.0
        %v1097 = vadd.f32 %v993, 0.0
        %v1098 = vadd.f32 %v994, 0.0
        %v1099 = vadd.f32 %v995, 0.0
        %v1100 = vadd.f32 %v996, 0.0
        %v1101 = vadd.f32 %v997, 0.0
        %v1102 = vadd.f32 %v998, 0.0
        %v1103 = vadd.f32 %v999, 0.0
        %v1104 = vadd.f32 %v1000, 0.0
        %v1105 = vadd.f32 %v1001, 0.0
        %v1106 = vadd.f32 %v1002, 0.0
        %v1107 = vadd.f32 %v1003, 0.0
        %v1108 = vadd.f32 %v1004, 0.0
        %v1109 = vadd.f32 %v1005, 0.0
        %v1110 = vadd.f32 %v1006, 0.0
        %v1111 = vadd.f32 %v1007, 0.0
        %v1112 = vadd.f32 %v1008, 0.0
        %v1113 = vadd.f32 %v1009, 0.0
        %v1114 = vadd.f32 %v1010, 0.0
        %v1115 = vadd.f32 %v1011, 0.0
        %v1116 = vadd.f32 %v1012, 0.0
        %v1117 = vadd.f32 %v1013, 0.0
        %v1118 = vadd.f32 %v1014, 0.0
        %v1119 = vadd.f32 %v1015, 0.0
        %v1120 = vadd.f32 %v1016, 0.0
        %v1121 = vadd.f32 %v1017, 0.0
        %v1122 = vadd.f32 %v1018, 0.0
        %v1123 = vadd.f32 %v1019, 0.0
        %v1124 = vadd.f32 %v1020, 0.0
        %v1125 = vadd.f32 %v1021, 0.0
        %v1126 = vadd.f32 %v1022, 0.0
        %v1127 = vadd.f32 %v1023, 0.0
        %v1128 = vadd.f32 %v1024, 0.0
        %v1129 = vadd.f32 %v1025, 0.0
        %v1130 = vadd.f32 %v1026, 0.0
        %v1131 = vadd.f32 %v1027, 0.0
        %v1132 = vadd.f32 %v1028, 0.0
        %v1133 = vadd.f32 %v1029, 0.0
        %v1134 = vadd.f32 %v1030, 0.0
        %v1135 = vadd.f32 %v1031, 0.0
        %v1136 = vadd.f32 %v1032, 0.0
        %v1137 = vadd.f32 %v1033, 0.0
        %v1138 = vadd.f32 %v1034, 0.0
        %v1139 = vadd.f32 %v1035, 0.0
        %v1140 = vadd.f32 %v1036, 0.0
        %v1141 = vadd.f32 %v1037, 0.0
        %v1142 = vadd.f32 %v1038, 0.0
        %v1143 = vadd.f32 %v1039, 0.0
        %v1144 = vadd.f32 %v1040, 0.0
        %v1145 = vadd.f32 %v1041, 0.0
        %v1146 = vadd.f32 %v1042, 0.0
        %v1147 = vadd.f32 %v1043, 0.0
        %v1148 = vadd.f32 %v1044, 0.0
        %v1149 = vadd.f32 %v1045, 0.0
        %v1150 = vadd.f32 %v1046, 0.0
        %v1151 = vadd.f32 %v1047, 0.0
        %v1152 = vadd.f32 %v1048, 0.0
        %v1153 = vadd.f32 %v1049, 0.0
        %v1154 = vadd.f32 %v1050, 0.0
        %v1155 = vadd.f32 %v1051, 0.0
        %v1156 = vld [vmem:[%s1 + $0x1] sm:$0x1]
        %v1157 = vperm.slane %v1156, 0
        %v1158 = vmul.f32 %v252, %v1157
        %v1159 = vmul.f32 %v258, %v1157
        %v1160 = vmul.f32 %v264, %v1157
        %v1161 = vmul.f32 %v270, %v1157
        %v1162 = vmul.f32 %v277, %v1157
        %v1163 = vmul.f32 %v283, %v1157
        %v1164 = vmul.f32 %v289, %v1157
        %v1165 = vmul.f32 %v295, %v1157
        %v1166 = vmul.f32 %v302, %v1157
        %v1167 = vmul.f32 %v308, %v1157
        %v1168 = vmul.f32 %v314, %v1157
        %v1169 = vmul.f32 %v320, %v1157
        %v1170 = vmul.f32 %v327, %v1157
        %v1171 = vmul.f32 %v333, %v1157
        %v1172 = vmul.f32 %v339, %v1157
        %v1173 = vmul.f32 %v345, %v1157
        %v1174 = vmul.f32 %v352, %v1157
        %v1175 = vmul.f32 %v358, %v1157
        %v1176 = vmul.f32 %v364, %v1157
        %v1177 = vmul.f32 %v370, %v1157
        %v1178 = vmul.f32 %v377, %v1157
        %v1179 = vmul.f32 %v383, %v1157
        %v1180 = vmul.f32 %v389, %v1157
        %v1181 = vmul.f32 %v395, %v1157
        %v1182 = vmul.f32 %v402, %v1157
        %v1183 = vmul.f32 %v408, %v1157
        %v1184 = vmul.f32 %v414, %v1157
        %v1185 = vmul.f32 %v420, %v1157
        %v1186 = vmul.f32 %v427, %v1157
        %v1187 = vmul.f32 %v433, %v1157
        %v1188 = vmul.f32 %v439, %v1157
        %v1189 = vmul.f32 %v445, %v1157
        %v1190 = vmul.f32 %v452, %v1157
        %v1191 = vmul.f32 %v458, %v1157
        %v1192 = vmul.f32 %v464, %v1157
        %v1193 = vmul.f32 %v470, %v1157
        %v1194 = vmul.f32 %v477, %v1157
        %v1195 = vmul.f32 %v483, %v1157
        %v1196 = vmul.f32 %v489, %v1157
        %v1197 = vmul.f32 %v495, %v1157
        %v1198 = vmul.f32 %v502, %v1157
        %v1199 = vmul.f32 %v508, %v1157
        %v1200 = vmul.f32 %v514, %v1157
        %v1201 = vmul.f32 %v520, %v1157
        %v1202 = vmul.f32 %v527, %v1157
        %v1203 = vmul.f32 %v533, %v1157
        %v1204 = vmul.f32 %v539, %v1157
        %v1205 = vmul.f32 %v545, %v1157
        %v1206 = vmul.f32 %v552, %v1157
        %v1207 = vmul.f32 %v558, %v1157
        %v1208 = vmul.f32 %v564, %v1157
        %v1209 = vmul.f32 %v570, %v1157
        %v1210 = vmul.f32 %v577, %v1157
        %v1211 = vmul.f32 %v583, %v1157
        %v1212 = vmul.f32 %v589, %v1157
        %v1213 = vmul.f32 %v595, %v1157
        %v1214 = vmul.f32 %v602, %v1157
        %v1215 = vmul.f32 %v608, %v1157
        %v1216 = vmul.f32 %v614, %v1157
        %v1217 = vmul.f32 %v620, %v1157
        %v1218 = vmul.f32 %v627, %v1157
        %v1219 = vmul.f32 %v633, %v1157
        %v1220 = vmul.f32 %v639, %v1157
        %v1221 = vmul.f32 %v645, %v1157
        %v1222 = vmul.f32 %v652, %v1157
        %v1223 = vmul.f32 %v658, %v1157
        %v1224 = vmul.f32 %v664, %v1157
        %v1225 = vmul.f32 %v670, %v1157
        %v1226 = vmul.f32 %v677, %v1157
        %v1227 = vmul.f32 %v683, %v1157
        %v1228 = vmul.f32 %v689, %v1157
        %v1229 = vmul.f32 %v695, %v1157
        %v1230 = vmul.f32 %v702, %v1157
        %v1231 = vmul.f32 %v708, %v1157
        %v1232 = vmul.f32 %v714, %v1157
        %v1233 = vmul.f32 %v720, %v1157
        %v1234 = vmul.f32 %v727, %v1157
        %v1235 = vmul.f32 %v733, %v1157
        %v1236 = vmul.f32 %v739, %v1157
        %v1237 = vmul.f32 %v745, %v1157
        %v1238 = vmul.f32 %v752, %v1157
        %v1239 = vmul.f32 %v758, %v1157
        %v1240 = vmul.f32 %v764, %v1157
        %v1241 = vmul.f32 %v770, %v1157
        %v1242 = vmul.f32 %v777, %v1157
        %v1243 = vmul.f32 %v783, %v1157
        %v1244 = vmul.f32 %v789, %v1157
        %v1245 = vmul.f32 %v795, %v1157
        %v1246 = vmul.f32 %v802, %v1157
        %v1247 = vmul.f32 %v808, %v1157
        %v1248 = vmul.f32 %v814, %v1157
        %v1249 = vmul.f32 %v820, %v1157
        %v1250 = vmul.f32 %v827, %v1157
        %v1251 = vmul.f32 %v833, %v1157
        %v1252 = vmul.f32 %v839, %v1157
        %v1253 = vmul.f32 %v845, %v1157
        %v1254 = vmul.f32 %v852, %v1157
        %v1255 = vmul.f32 %v858, %v1157
        %v1256 = vmul.f32 %v864, %v1157
        %v1257 = vmul.f32 %v870, %v1157
        %v1258 = vmul.f32 %v877, %v1157
        %v1259 = vmul.f32 %v883, %v1157
        %v1260 = vmul.f32 %v889, %v1157
        %v1261 = vmul.f32 %v895, %v1157
        %vm1366 = vcmask 1046528
        %v1367 = vrot.slane %v1158, 1
        %v1368 = vrot.slane %v1159, 1
        %v1369 = vsel %vm1366, %v1367, %v1368
        %v1370 = vrot.slane %v1160, 1
        %v1371 = vsel %vm1366, %v1368, %v1370
        %v1372 = vrot.slane %v1161, 1
        %v1373 = vsel %vm1366, %v1370, %v1372
        %v1374 = vrot.slane %v1162, 1
        %v1375 = vrot.slane %v1163, 1
        %v1376 = vsel %vm1366, %v1374, %v1375
        %v1377 = vrot.slane %v1164, 1
        %v1378 = vsel %vm1366, %v1375, %v1377
        %v1379 = vrot.slane %v1165, 1
        %v1380 = vsel %vm1366, %v1377, %v1379
        %v1381 = vrot.slane %v1166, 1
        %v1382 = vrot.slane %v1167, 1
        %v1383 = vsel %vm1366, %v1381, %v1382
        %v1384 = vrot.slane %v1168, 1
        %v1385 = vsel %vm1366, %v1382, %v1384
        %v1386 = vrot.slane %v1169, 1
        %v1387 = vsel %vm1366, %v1384, %v1386
        %v1388 = vrot.slane %v1170, 1
        %v1389 = vrot.slane %v1171, 1
        %v1390 = vsel %vm1366, %v1388, %v1389
        %v1391 = vrot.slane %v1172, 1
        %v1392 = vsel %vm1366, %v1389, %v1391
        %v1393 = vrot.slane %v1173, 1
        %v1394 = vsel %vm1366, %v1391, %v1393
        %v1395 = vrot.slane %v1174, 1
        %v1396 = vrot.slane %v1175, 1
        %v1397 = vsel %vm1366, %v1395, %v1396
        %v1398 = vrot.slane %v1176, 1
        %v1399 = vsel %vm1366, %v1396, %v1398
        %v1400 = vrot.slane %v1177, 1
        %v1401 = vsel %vm1366, %v1398, %v1400
        %v1402 = vrot.slane %v1178, 1
        %v1403 = vrot.slane %v1179, 1
        %v1404 = vsel %vm1366, %v1402, %v1403
        %v1405 = vrot.slane %v1180, 1
        %v1406 = vsel %vm1366, %v1403, %v1405
        %v1407 = vrot.slane %v1181, 1
        %v1408 = vsel %vm1366, %v1405, %v1407
        %v1409 = vrot.slane %v1182, 1
        %v1410 = vrot.slane %v1183, 1
        %v1411 = vsel %vm1366, %v1409, %v1410
        %v1412 = vrot.slane %v1184, 1
        %v1413 = vsel %vm1366, %v1410, %v1412
        %v1414 = vrot.slane %v1185, 1
        %v1415 = vsel %vm1366, %v1412, %v1414
        %v1416 = vrot.slane %v1186, 1
        %v1417 = vrot.slane %v1187, 1
        %v1418 = vsel %vm1366, %v1416, %v1417
        %v1419 = vrot.slane %v1188, 1
        %v1420 = vsel %vm1366, %v1417, %v1419
        %v1421 = vrot.slane %v1189, 1
        %v1422 = vsel %vm1366, %v1419, %v1421
        %v1423 = vrot.slane %v1190, 1
        %v1424 = vrot.slane %v1191, 1
        %v1425 = vsel %vm1366, %v1423, %v1424
        %v1426 = vrot.slane %v1192, 1
        %v1427 = vsel %vm1366, %v1424, %v1426
        %v1428 = vrot.slane %v1193, 1
        %v1429 = vsel %vm1366, %v1426, %v1428
        %v1430 = vrot.slane %v1194, 1
        %v1431 = vrot.slane %v1195, 1
        %v1432 = vsel %vm1366, %v1430, %v1431
        %v1433 = vrot.slane %v1196, 1
        %v1434 = vsel %vm1366, %v1431, %v1433
        %v1435 = vrot.slane %v1197, 1
        %v1436 = vsel %vm1366, %v1433, %v1435
        %v1437 = vrot.slane %v1198, 1
        %v1438 = vrot.slane %v1199, 1
        %v1439 = vsel %vm1366, %v1437, %v1438
        %v1440 = vrot.slane %v1200, 1
        %v1441 = vsel %vm1366, %v1438, %v1440
        %v1442 = vrot.slane %v1201, 1
        %v1443 = vsel %vm1366, %v1440, %v1442
        %v1444 = vrot.slane %v1202, 1
        %v1445 = vrot.slane %v1203, 1
        %v1446 = vsel %vm1366, %v1444, %v1445
        %v1447 = vrot.slane %v1204, 1
        %v1448 = vsel %vm1366, %v1445, %v1447
        %v1449 = vrot.slane %v1205, 1
        %v1450 = vsel %vm1366, %v1447, %v1449
        %v1451 = vrot.slane %v1206, 1
        %v1452 = vrot.slane %v1207, 1
        %v1453 = vsel %vm1366, %v1451, %v1452
        %v1454 = vrot.slane %v1208, 1
        %v1455 = vsel %vm1366, %v1452, %v1454
        %v1456 = vrot.slane %v1209, 1
        %v1457 = vsel %vm1366, %v1454, %v1456
        %v1458 = vrot.slane %v1210, 1
        %v1459 = vrot.slane %v1211, 1
        %v1460 = vsel %vm1366, %v1458, %v1459
        %v1461 = vrot.slane %v1212, 1
        %v1462 = vsel %vm1366, %v1459, %v1461
        %v1463 = vrot.slane %v1213, 1
        %v1464 = vsel %vm1366, %v1461, %v1463
        %v1465 = vrot.slane %v1214, 1
        %v1466 = vrot.slane %v1215, 1
        %v1467 = vsel %vm1366, %v1465, %v1466
        %v1468 = vrot.slane %v1216, 1
        %v1469 = vsel %vm1366, %v1466, %v1468
        %v1470 = vrot.slane %v1217, 1
        %v1471 = vsel %vm1366, %v1468, %v1470
        %v1472 = vrot.slane %v1218, 1
        %v1473 = vrot.slane %v1219, 1
        %v1474 = vsel %vm1366, %v1472, %v1473
        %v1475 = vrot.slane %v1220, 1
        %v1476 = vsel %vm1366, %v1473, %v1475
        %v1477 = vrot.slane %v1221, 1
        %v1478 = vsel %vm1366, %v1475, %v1477
        %v1479 = vrot.slane %v1222, 1
        %v1480 = vrot.slane %v1223, 1
        %v1481 = vsel %vm1366, %v1479, %v1480
        %v1482 = vrot.slane %v1224, 1
        %v1483 = vsel %vm1366, %v1480, %v1482
        %v1484 = vrot.slane %v1225, 1
        %v1485 = vsel %vm1366, %v1482, %v1484
        %v1486 = vrot.slane %v1226, 1
        %v1487 = vrot.slane %v1227, 1
        %v1488 = vsel %vm1366, %v1486, %v1487
        %v1489 = vrot.slane %v1228, 1
        %v1490 = vsel %vm1366, %v1487, %v1489
        %v1491 = vrot.slane %v1229, 1
        %v1492 = vsel %vm1366, %v1489, %v1491
        %v1493 = vrot.slane %v1230, 1
        %v1494 = vrot.slane %v1231, 1
        %v1495 = vsel %vm1366, %v1493, %v1494
        %v1496 = vrot.slane %v1232, 1
        %v1497 = vsel %vm1366, %v1494, %v1496
        %v1498 = vrot.slane %v1233, 1
        %v1499 = vsel %vm1366, %v1496, %v1498
        %v1500 = vrot.slane %v1234, 1
        %v1501 = vrot.slane %v1235, 1
        %v1502 = vsel %vm1366, %v1500, %v1501
        %v1503 = vrot.slane %v1236, 1
        %v1504 = vsel %vm1366, %v1501, %v1503
        %v1505 = vrot.slane %v1237, 1
        %v1506 = vsel %vm1366, %v1503, %v1505
        %v1507 = vrot.slane %v1238, 1
        %v1508 = vrot.slane %v1239, 1
        %v1509 = vsel %vm1366, %v1507, %v1508
        %v1510 = vrot.slane %v1240, 1
        %v1511 = vsel %vm1366, %v1508, %v1510
        %v1512 = vrot.slane %v1241, 1
        %v1513 = vsel %vm1366, %v1510, %v1512
        %v1514 = vrot.slane %v1242, 1
        %v1515 = vrot.slane %v1243, 1
        %v1516 = vsel %vm1366, %v1514, %v1515
        %v1517 = vrot.slane %v1244, 1
        %v1518 = vsel %vm1366, %v1515, %v1517
        %v1519 = vrot.slane %v1245, 1
        %v1520 = vsel %vm1366, %v1517, %v1519
        %v1521 = vrot.slane %v1246, 1
        %v1522 = vrot.slane %v1247, 1
        %v1523 = vsel %vm1366, %v1521, %v1522
        %v1524 = vrot.slane %v1248, 1
        %v1525 = vsel %vm1366, %v1522, %v1524
        %v1526 = vrot.slane %v1249, 1
        %v1527 = vsel %vm1366, %v1524, %v1526
        %v1528 = vrot.slane %v1250, 1
        %v1529 = vrot.slane %v1251, 1
        %v1530 = vsel %vm1366, %v1528, %v1529
        %v1531 = vrot.slane %v1252, 1
        %v1532 = vsel %vm1366, %v1529, %v1531
        %v1533 = vrot.slane %v1253, 1
        %v1534 = vsel %vm1366, %v1531, %v1533
        %v1535 = vrot.slane %v1254, 1
        %v1536 = vrot.slane %v1255, 1
        %v1537 = vsel %vm1366, %v1535, %v1536
        %v1538 = vrot.slane %v1256, 1
        %v1539 = vsel %vm1366, %v1536, %v1538
        %v1540 = vrot.slane %v1257, 1
        %v1541 = vsel %vm1366, %v1538, %v1540
        %v1542 = vrot.slane %v1258, 1
        %v1543 = vrot.slane %v1259, 1
        %v1544 = vsel %vm1366, %v1542, %v1543
        %v1545 = vrot.slane %v1260, 1
        %v1546 = vsel %vm1366, %v1543, %v1545
        %v1547 = vrot.slane %v1261, 1
        %v1548 = vsel %vm1366, %v1545, %v1547
        %v1653 = vadd.f32 %v1052, %v1369
        %v1654 = vadd.f32 %v1053, %v1371
        %v1655 = vadd.f32 %v1054, %v1373
        %v1656 = vadd.f32 %v1055, %v1372
        %v1657 = vadd.f32 %v1056, %v1376
        %v1658 = vadd.f32 %v1057, %v1378
        %v1659 = vadd.f32 %v1058, %v1380
        %v1660 = vadd.f32 %v1059, %v1379
        %v1661 = vadd.f32 %v1060, %v1383
        %v1662 = vadd.f32 %v1061, %v1385
        %v1663 = vadd.f32 %v1062, %v1387
        %v1664 = vadd.f32 %v1063, %v1386
        %v1665 = vadd.f32 %v1064, %v1390
        %v1666 = vadd.f32 %v1065, %v1392
        %v1667 = vadd.f32 %v1066, %v1394
        %v1668 = vadd.f32 %v1067, %v1393
        %v1669 = vadd.f32 %v1068, %v1397
        %v1670 = vadd.f32 %v1069, %v1399
        %v1671 = vadd.f32 %v1070, %v1401
        %v1672 = vadd.f32 %v1071, %v1400
        %v1673 = vadd.f32 %v1072, %v1404
        %v1674 = vadd.f32 %v1073, %v1406
        %v1675 = vadd.f32 %v1074, %v1408
        %v1676 = vadd.f32 %v1075, %v1407
        %v1677 = vadd.f32 %v1076, %v1411
        %v1678 = vadd.f32 %v1077, %v1413
        %v1679 = vadd.f32 %v1078, %v1415
        %v1680 = vadd.f32 %v1079, %v1414
        %v1681 = vadd.f32 %v1080, %v1418
        %v1682 = vadd.f32 %v1081, %v1420
        %v1683 = vadd.f32 %v1082, %v1422
        %v1684 = vadd.f32 %v1083, %v1421
        %v1685 = vadd.f32 %v1084, %v1425
        %v1686 = vadd.f32 %v1085, %v1427
        %v1687 = vadd.f32 %v1086, %v1429
        %v1688 = vadd.f32 %v1087, %v1428
        %v1689 = vadd.f32 %v1088, %v1432
        %v1690 = vadd.f32 %v1089, %v1434
        %v1691 = vadd.f32 %v1090, %v1436
        %v1692 = vadd.f32 %v1091, %v1435
        %v1693 = vadd.f32 %v1092, %v1439
        %v1694 = vadd.f32 %v1093, %v1441
        %v1695 = vadd.f32 %v1094, %v1443
        %v1696 = vadd.f32 %v1095, %v1442
        %v1697 = vadd.f32 %v1096, %v1446
        %v1698 = vadd.f32 %v1097, %v1448
        %v1699 = vadd.f32 %v1098, %v1450
        %v1700 = vadd.f32 %v1099, %v1449
        %v1701 = vadd.f32 %v1100, %v1453
        %v1702 = vadd.f32 %v1101, %v1455
        %v1703 = vadd.f32 %v1102, %v1457
        %v1704 = vadd.f32 %v1103, %v1456
        %v1705 = vadd.f32 %v1104, %v1460
        %v1706 = vadd.f32 %v1105, %v1462
        %v1707 = vadd.f32 %v1106, %v1464
        %v1708 = vadd.f32 %v1107, %v1463
        %v1709 = vadd.f32 %v1108, %v1467
        %v1710 = vadd.f32 %v1109, %v1469
        %v1711 = vadd.f32 %v1110, %v1471
        %v1712 = vadd.f32 %v1111, %v1470
        %v1713 = vadd.f32 %v1112, %v1474
        %v1714 = vadd.f32 %v1113, %v1476
        %v1715 = vadd.f32 %v1114, %v1478
        %v1716 = vadd.f32 %v1115, %v1477
        %v1717 = vadd.f32 %v1116, %v1481
        %v1718 = vadd.f32 %v1117, %v1483
        %v1719 = vadd.f32 %v1118, %v1485
        %v1720 = vadd.f32 %v1119, %v1484
        %v1721 = vadd.f32 %v1120, %v1488
        %v1722 = vadd.f32 %v1121, %v1490
        %v1723 = vadd.f32 %v1122, %v1492
        %v1724 = vadd.f32 %v1123, %v1491
        %v1725 = vadd.f32 %v1124, %v1495
        %v1726 = vadd.f32 %v1125, %v1497
        %v1727 = vadd.f32 %v1126, %v1499
        %v1728 = vadd.f32 %v1127, %v1498
        %v1729 = vadd.f32 %v1128, %v1502
        %v1730 = vadd.f32 %v1129, %v1504
        %v1731 = vadd.f32 %v1130, %v1506
        %v1732 = vadd.f32 %v1131, %v1505
        %v1733 = vadd.f32 %v1132, %v1509
        %v1734 = vadd.f32 %v1133, %v1511
        %v1735 = vadd.f32 %v1134, %v1513
        %v1736 = vadd.f32 %v1135, %v1512
        %v1737 = vadd.f32 %v1136, %v1516
        %v1738 = vadd.f32 %v1137, %v1518
        %v1739 = vadd.f32 %v1138, %v1520
        %v1740 = vadd.f32 %v1139, %v1519
        %v1741 = vadd.f32 %v1140, %v1523
        %v1742 = vadd.f32 %v1141, %v1525
        %v1743 = vadd.f32 %v1142, %v1527
        %v1744 = vadd.f32 %v1143, %v1526
        %v1745 = vadd.f32 %v1144, %v1530
        %v1746 = vadd.f32 %v1145, %v1532
        %v1747 = vadd.f32 %v1146, %v1534
        %v1748 = vadd.f32 %v1147, %v1533
        %v1749 = vadd.f32 %v1148, %v1537
        %v1750 = vadd.f32 %v1149, %v1539
        %v1751 = vadd.f32 %v1150, %v1541
        %v1752 = vadd.f32 %v1151, %v1540
        %v1753 = vadd.f32 %v1152, %v1544
        %v1754 = vadd.f32 %v1153, %v1546
        %v1755 = vadd.f32 %v1154, %v1548
        %v1756 = vadd.f32 %v1155, %v1547
        %v1757 = vld [vmem:[%s1 + $0x2] sm:$0x1]
        %v1758 = vperm.slane %v1757, 0
        %v1759 = vmul.f32 %v252, %v1758
        %v1760 = vmul.f32 %v258, %v1758
        %v1761 = vmul.f32 %v264, %v1758
        %v1762 = vmul.f32 %v270, %v1758
        %v1763 = vmul.f32 %v277, %v1758
        %v1764 = vmul.f32 %v283, %v1758
        %v1765 = vmul.f32 %v289, %v1758
        %v1766 = vmul.f32 %v295, %v1758
        %v1767 = vmul.f32 %v302, %v1758
        %v1768 = vmul.f32 %v308, %v1758
        %v1769 = vmul.f32 %v314, %v1758
        %v1770 = vmul.f32 %v320, %v1758
        %v1771 = vmul.f32 %v327, %v1758
        %v1772 = vmul.f32 %v333, %v1758
        %v1773 = vmul.f32 %v339, %v1758
        %v1774 = vmul.f32 %v345, %v1758
        %v1775 = vmul.f32 %v352, %v1758
        %v1776 = vmul.f32 %v358, %v1758
        %v1777 = vmul.f32 %v364, %v1758
        %v1778 = vmul.f32 %v370, %v1758
        %v1779 = vmul.f32 %v377, %v1758
        %v1780 = vmul.f32 %v383, %v1758
        %v1781 = vmul.f32 %v389, %v1758
        %v1782 = vmul.f32 %v395, %v1758
        %v1783 = vmul.f32 %v402, %v1758
        %v1784 = vmul.f32 %v408, %v1758
        %v1785 = vmul.f32 %v414, %v1758
        %v1786 = vmul.f32 %v420, %v1758
        %v1787 = vmul.f32 %v427, %v1758
        %v1788 = vmul.f32 %v433, %v1758
        %v1789 = vmul.f32 %v439, %v1758
        %v1790 = vmul.f32 %v445, %v1758
        %v1791 = vmul.f32 %v452, %v1758
        %v1792 = vmul.f32 %v458, %v1758
        %v1793 = vmul.f32 %v464, %v1758
        %v1794 = vmul.f32 %v470, %v1758
        %v1795 = vmul.f32 %v477, %v1758
        %v1796 = vmul.f32 %v483, %v1758
        %v1797 = vmul.f32 %v489, %v1758
        %v1798 = vmul.f32 %v495, %v1758
        %v1799 = vmul.f32 %v502, %v1758
        %v1800 = vmul.f32 %v508, %v1758
        %v1801 = vmul.f32 %v514, %v1758
        %v1802 = vmul.f32 %v520, %v1758
        %v1803 = vmul.f32 %v527, %v1758
        %v1804 = vmul.f32 %v533, %v1758
        %v1805 = vmul.f32 %v539, %v1758
        %v1806 = vmul.f32 %v545, %v1758
        %v1807 = vmul.f32 %v552, %v1758
        %v1808 = vmul.f32 %v558, %v1758
        %v1809 = vmul.f32 %v564, %v1758
        %v1810 = vmul.f32 %v570, %v1758
        %v1811 = vmul.f32 %v577, %v1758
        %v1812 = vmul.f32 %v583, %v1758
        %v1813 = vmul.f32 %v589, %v1758
        %v1814 = vmul.f32 %v595, %v1758
        %v1815 = vmul.f32 %v602, %v1758
        %v1816 = vmul.f32 %v608, %v1758
        %v1817 = vmul.f32 %v614, %v1758
        %v1818 = vmul.f32 %v620, %v1758
        %v1819 = vmul.f32 %v627, %v1758
        %v1820 = vmul.f32 %v633, %v1758
        %v1821 = vmul.f32 %v639, %v1758
        %v1822 = vmul.f32 %v645, %v1758
        %v1823 = vmul.f32 %v652, %v1758
        %v1824 = vmul.f32 %v658, %v1758
        %v1825 = vmul.f32 %v664, %v1758
        %v1826 = vmul.f32 %v670, %v1758
        %v1827 = vmul.f32 %v677, %v1758
        %v1828 = vmul.f32 %v683, %v1758
        %v1829 = vmul.f32 %v689, %v1758
        %v1830 = vmul.f32 %v695, %v1758
        %v1831 = vmul.f32 %v702, %v1758
        %v1832 = vmul.f32 %v708, %v1758
        %v1833 = vmul.f32 %v714, %v1758
        %v1834 = vmul.f32 %v720, %v1758
        %v1835 = vmul.f32 %v727, %v1758
        %v1836 = vmul.f32 %v733, %v1758
        %v1837 = vmul.f32 %v739, %v1758
        %v1838 = vmul.f32 %v745, %v1758
        %v1839 = vmul.f32 %v752, %v1758
        %v1840 = vmul.f32 %v758, %v1758
        %v1841 = vmul.f32 %v764, %v1758
        %v1842 = vmul.f32 %v770, %v1758
        %v1843 = vmul.f32 %v777, %v1758
        %v1844 = vmul.f32 %v783, %v1758
        %v1845 = vmul.f32 %v789, %v1758
        %v1846 = vmul.f32 %v795, %v1758
        %v1847 = vmul.f32 %v802, %v1758
        %v1848 = vmul.f32 %v808, %v1758
        %v1849 = vmul.f32 %v814, %v1758
        %v1850 = vmul.f32 %v820, %v1758
        %v1851 = vmul.f32 %v827, %v1758
        %v1852 = vmul.f32 %v833, %v1758
        %v1853 = vmul.f32 %v839, %v1758
        %v1854 = vmul.f32 %v845, %v1758
        %v1855 = vmul.f32 %v852, %v1758
        %v1856 = vmul.f32 %v858, %v1758
        %v1857 = vmul.f32 %v864, %v1758
        %v1858 = vmul.f32 %v870, %v1758
        %v1859 = vmul.f32 %v877, %v1758
        %v1860 = vmul.f32 %v883, %v1758
        %v1861 = vmul.f32 %v889, %v1758
        %v1862 = vmul.f32 %v895, %v1758
        %vm1967 = vcmask 1045504
        %v1968 = vrot.slane %v1759, 2
        %v1969 = vrot.slane %v1760, 2
        %v1970 = vsel %vm1967, %v1968, %v1969
        %v1971 = vrot.slane %v1761, 2
        %v1972 = vsel %vm1967, %v1969, %v1971
        %v1973 = vrot.slane %v1762, 2
        %v1974 = vsel %vm1967, %v1971, %v1973
        %v1975 = vrot.slane %v1763, 2
        %v1976 = vrot.slane %v1764, 2
        %v1977 = vsel %vm1967, %v1975, %v1976
        %v1978 = vrot.slane %v1765, 2
        %v1979 = vsel %vm1967, %v1976, %v1978
        %v1980 = vrot.slane %v1766, 2
        %v1981 = vsel %vm1967, %v1978, %v1980
        %v1982 = vrot.slane %v1767, 2
        %v1983 = vrot.slane %v1768, 2
        %v1984 = vsel %vm1967, %v1982, %v1983
        %v1985 = vrot.slane %v1769, 2
        %v1986 = vsel %vm1967, %v1983, %v1985
        %v1987 = vrot.slane %v1770, 2
        %v1988 = vsel %vm1967, %v1985, %v1987
        %v1989 = vrot.slane %v1771, 2
        %v1990 = vrot.slane %v1772, 2
        %v1991 = vsel %vm1967, %v1989, %v1990
        %v1992 = vrot.slane %v1773, 2
        %v1993 = vsel %vm1967, %v1990, %v1992
        %v1994 = vrot.slane %v1774, 2
        %v1995 = vsel %vm1967, %v1992, %v1994
        %v1996 = vrot.slane %v1775, 2
        %v1997 = vrot.slane %v1776, 2
        %v1998 = vsel %vm1967, %v1996, %v1997
        %v1999 = vrot.slane %v1777, 2
        %v2000 = vsel %vm1967, %v1997, %v1999
        %v2001 = vrot.slane %v1778, 2
        %v2002 = vsel %vm1967, %v1999, %v2001
        %v2003 = vrot.slane %v1779, 2
        %v2004 = vrot.slane %v1780, 2
        %v2005 = vsel %vm1967, %v2003, %v2004
        %v2006 = vrot.slane %v1781, 2
        %v2007 = vsel %vm1967, %v2004, %v2006
        %v2008 = vrot.slane %v1782, 2
        %v2009 = vsel %vm1967, %v2006, %v2008
        %v2010 = vrot.slane %v1783, 2
        %v2011 = vrot.slane %v1784, 2
        %v2012 = vsel %vm1967, %v2010, %v2011
        %v2013 = vrot.slane %v1785, 2
        %v2014 = vsel %vm1967, %v2011, %v2013
        %v2015 = vrot.slane %v1786, 2
        %v2016 = vsel %vm1967, %v2013, %v2015
        %v2017 = vrot.slane %v1787, 2
        %v2018 = vrot.slane %v1788, 2
        %v2019 = vsel %vm1967, %v2017, %v2018
        %v2020 = vrot.slane %v1789, 2
        %v2021 = vsel %vm1967, %v2018, %v2020
        %v2022 = vrot.slane %v1790, 2
        %v2023 = vsel %vm1967, %v2020, %v2022
        %v2024 = vrot.slane %v1791, 2
        %v2025 = vrot.slane %v1792, 2
        %v2026 = vsel %vm1967, %v2024, %v2025
        %v2027 = vrot.slane %v1793, 2
        %v2028 = vsel %vm1967, %v2025, %v2027
        %v2029 = vrot.slane %v1794, 2
        %v2030 = vsel %vm1967, %v2027, %v2029
        %v2031 = vrot.slane %v1795, 2
        %v2032 = vrot.slane %v1796, 2
        %v2033 = vsel %vm1967, %v2031, %v2032
        %v2034 = vrot.slane %v1797, 2
        %v2035 = vsel %vm1967, %v2032, %v2034
        %v2036 = vrot.slane %v1798, 2
        %v2037 = vsel %vm1967, %v2034, %v2036
        %v2038 = vrot.slane %v1799, 2
        %v2039 = vrot.slane %v1800, 2
        %v2040 = vsel %vm1967, %v2038, %v2039
        %v2041 = vrot.slane %v1801, 2
        %v2042 = vsel %vm1967, %v2039, %v2041
        %v2043 = vrot.slane %v1802, 2
        %v2044 = vsel %vm1967, %v2041, %v2043
        %v2045 = vrot.slane %v1803, 2
        %v2046 = vrot.slane %v1804, 2
        %v2047 = vsel %vm1967, %v2045, %v2046
        %v2048 = vrot.slane %v1805, 2
        %v2049 = vsel %vm1967, %v2046, %v2048
        %v2050 = vrot.slane %v1806, 2
        %v2051 = vsel %vm1967, %v2048, %v2050
        %v2052 = vrot.slane %v1807, 2
        %v2053 = vrot.slane %v1808, 2
        %v2054 = vsel %vm1967, %v2052, %v2053
        %v2055 = vrot.slane %v1809, 2
        %v2056 = vsel %vm1967, %v2053, %v2055
        %v2057 = vrot.slane %v1810, 2
        %v2058 = vsel %vm1967, %v2055, %v2057
        %v2059 = vrot.slane %v1811, 2
        %v2060 = vrot.slane %v1812, 2
        %v2061 = vsel %vm1967, %v2059, %v2060
        %v2062 = vrot.slane %v1813, 2
        %v2063 = vsel %vm1967, %v2060, %v2062
        %v2064 = vrot.slane %v1814, 2
        %v2065 = vsel %vm1967, %v2062, %v2064
        %v2066 = vrot.slane %v1815, 2
        %v2067 = vrot.slane %v1816, 2
        %v2068 = vsel %vm1967, %v2066, %v2067
        %v2069 = vrot.slane %v1817, 2
        %v2070 = vsel %vm1967, %v2067, %v2069
        %v2071 = vrot.slane %v1818, 2
        %v2072 = vsel %vm1967, %v2069, %v2071
        %v2073 = vrot.slane %v1819, 2
        %v2074 = vrot.slane %v1820, 2
        %v2075 = vsel %vm1967, %v2073, %v2074
        %v2076 = vrot.slane %v1821, 2
        %v2077 = vsel %vm1967, %v2074, %v2076
        %v2078 = vrot.slane %v1822, 2
        %v2079 = vsel %vm1967, %v2076, %v2078
        %v2080 = vrot.slane %v1823, 2
        %v2081 = vrot.slane %v1824, 2
        %v2082 = vsel %vm1967, %v2080, %v2081
        %v2083 = vrot.slane %v1825, 2
        %v2084 = vsel %vm1967, %v2081, %v2083
        %v2085 = vrot.slane %v1826, 2
        %v2086 = vsel %vm1967, %v2083, %v2085
        %v2087 = vrot.slane %v1827, 2
        %v2088 = vrot.slane %v1828, 2
        %v2089 = vsel %vm1967, %v2087, %v2088
        %v2090 = vrot.slane %v1829, 2
        %v2091 = vsel %vm1967, %v2088, %v2090
        %v2092 = vrot.slane %v1830, 2
        %v2093 = vsel %vm1967, %v2090, %v2092
        %v2094 = vrot.slane %v1831, 2
        %v2095 = vrot.slane %v1832, 2
        %v2096 = vsel %vm1967, %v2094, %v2095
        %v2097 = vrot.slane %v1833, 2
        %v2098 = vsel %vm1967, %v2095, %v2097
        %v2099 = vrot.slane %v1834, 2
        %v2100 = vsel %vm1967, %v2097, %v2099
        %v2101 = vrot.slane %v1835, 2
        %v2102 = vrot.slane %v1836, 2
        %v2103 = vsel %vm1967, %v2101, %v2102
        %v2104 = vrot.slane %v1837, 2
        %v2105 = vsel %vm1967, %v2102, %v2104
        %v2106 = vrot.slane %v1838, 2
        %v2107 = vsel %vm1967, %v2104, %v2106
        %v2108 = vrot.slane %v1839, 2
        %v2109 = vrot.slane %v1840, 2
        %v2110 = vsel %vm1967, %v2108, %v2109
        %v2111 = vrot.slane %v1841, 2
        %v2112 = vsel %vm1967, %v2109, %v2111
        %v2113 = vrot.slane %v1842, 2
        %v2114 = vsel %vm1967, %v2111, %v2113
        %v2115 = vrot.slane %v1843, 2
        %v2116 = vrot.slane %v1844, 2
        %v2117 = vsel %vm1967, %v2115, %v2116
        %v2118 = vrot.slane %v1845, 2
        %v2119 = vsel %vm1967, %v2116, %v2118
        %v2120 = vrot.slane %v1846, 2
        %v2121 = vsel %vm1967, %v2118, %v2120
        %v2122 = vrot.slane %v1847, 2
        %v2123 = vrot.slane %v1848, 2
        %v2124 = vsel %vm1967, %v2122, %v2123
        %v2125 = vrot.slane %v1849, 2
        %v2126 = vsel %vm1967, %v2123, %v2125
        %v2127 = vrot.slane %v1850, 2
        %v2128 = vsel %vm1967, %v2125, %v2127
        %v2129 = vrot.slane %v1851, 2
        %v2130 = vrot.slane %v1852, 2
        %v2131 = vsel %vm1967, %v2129, %v2130
        %v2132 = vrot.slane %v1853, 2
        %v2133 = vsel %vm1967, %v2130, %v2132
        %v2134 = vrot.slane %v1854, 2
        %v2135 = vsel %vm1967, %v2132, %v2134
        %v2136 = vrot.slane %v1855, 2
        %v2137 = vrot.slane %v1856, 2
        %v2138 = vsel %vm1967, %v2136, %v2137
        %v2139 = vrot.slane %v1857, 2
        %v2140 = vsel %vm1967, %v2137, %v2139
        %v2141 = vrot.slane %v1858, 2
        %v2142 = vsel %vm1967, %v2139, %v2141
        %v2143 = vrot.slane %v1859, 2
        %v2144 = vrot.slane %v1860, 2
        %v2145 = vsel %vm1967, %v2143, %v2144
        %v2146 = vrot.slane %v1861, 2
        %v2147 = vsel %vm1967, %v2144, %v2146
        %v2148 = vrot.slane %v1862, 2
        %v2149 = vsel %vm1967, %v2146, %v2148
        %v2254 = vadd.f32 %v1653, %v1970
        %v2255 = vadd.f32 %v1654, %v1972
        %v2256 = vadd.f32 %v1655, %v1974
        %v2257 = vadd.f32 %v1656, %v1973
        %v2258 = vadd.f32 %v1657, %v1977
        %v2259 = vadd.f32 %v1658, %v1979
        %v2260 = vadd.f32 %v1659, %v1981
        %v2261 = vadd.f32 %v1660, %v1980
        %v2262 = vadd.f32 %v1661, %v1984
        %v2263 = vadd.f32 %v1662, %v1986
        %v2264 = vadd.f32 %v1663, %v1988
        %v2265 = vadd.f32 %v1664, %v1987
        %v2266 = vadd.f32 %v1665, %v1991
        %v2267 = vadd.f32 %v1666, %v1993
        %v2268 = vadd.f32 %v1667, %v1995
        %v2269 = vadd.f32 %v1668, %v1994
        %v2270 = vadd.f32 %v1669, %v1998
        %v2271 = vadd.f32 %v1670, %v2000
        %v2272 = vadd.f32 %v1671, %v2002
        %v2273 = vadd.f32 %v1672, %v2001
        %v2274 = vadd.f32 %v1673, %v2005
        %v2275 = vadd.f32 %v1674, %v2007
        %v2276 = vadd.f32 %v1675, %v2009
        %v2277 = vadd.f32 %v1676, %v2008
        %v2278 = vadd.f32 %v1677, %v2012
        %v2279 = vadd.f32 %v1678, %v2014
        %v2280 = vadd.f32 %v1679, %v2016
        %v2281 = vadd.f32 %v1680, %v2015
        %v2282 = vadd.f32 %v1681, %v2019
        %v2283 = vadd.f32 %v1682, %v2021
        %v2284 = vadd.f32 %v1683, %v2023
        %v2285 = vadd.f32 %v1684, %v2022
        %v2286 = vadd.f32 %v1685, %v2026
        %v2287 = vadd.f32 %v1686, %v2028
        %v2288 = vadd.f32 %v1687, %v2030
        %v2289 = vadd.f32 %v1688, %v2029
        %v2290 = vadd.f32 %v1689, %v2033
        %v2291 = vadd.f32 %v1690, %v2035
        %v2292 = vadd.f32 %v1691, %v2037
        %v2293 = vadd.f32 %v1692, %v2036
        %v2294 = vadd.f32 %v1693, %v2040
        %v2295 = vadd.f32 %v1694, %v2042
        %v2296 = vadd.f32 %v1695, %v2044
        %v2297 = vadd.f32 %v1696, %v2043
        %v2298 = vadd.f32 %v1697, %v2047
        %v2299 = vadd.f32 %v1698, %v2049
        %v2300 = vadd.f32 %v1699, %v2051
        %v2301 = vadd.f32 %v1700, %v2050
        %v2302 = vadd.f32 %v1701, %v2054
        %v2303 = vadd.f32 %v1702, %v2056
        %v2304 = vadd.f32 %v1703, %v2058
        %v2305 = vadd.f32 %v1704, %v2057
        %v2306 = vadd.f32 %v1705, %v2061
        %v2307 = vadd.f32 %v1706, %v2063
        %v2308 = vadd.f32 %v1707, %v2065
        %v2309 = vadd.f32 %v1708, %v2064
        %v2310 = vadd.f32 %v1709, %v2068
        %v2311 = vadd.f32 %v1710, %v2070
        %v2312 = vadd.f32 %v1711, %v2072
        %v2313 = vadd.f32 %v1712, %v2071
        %v2314 = vadd.f32 %v1713, %v2075
        %v2315 = vadd.f32 %v1714, %v2077
        %v2316 = vadd.f32 %v1715, %v2079
        %v2317 = vadd.f32 %v1716, %v2078
        %v2318 = vadd.f32 %v1717, %v2082
        %v2319 = vadd.f32 %v1718, %v2084
        %v2320 = vadd.f32 %v1719, %v2086
        %v2321 = vadd.f32 %v1720, %v2085
        %v2322 = vadd.f32 %v1721, %v2089
        %v2323 = vadd.f32 %v1722, %v2091
        %v2324 = vadd.f32 %v1723, %v2093
        %v2325 = vadd.f32 %v1724, %v2092
        %v2326 = vadd.f32 %v1725, %v2096
        %v2327 = vadd.f32 %v1726, %v2098
        %v2328 = vadd.f32 %v1727, %v2100
        %v2329 = vadd.f32 %v1728, %v2099
        %v2330 = vadd.f32 %v1729, %v2103
        %v2331 = vadd.f32 %v1730, %v2105
        %v2332 = vadd.f32 %v1731, %v2107
        %v2333 = vadd.f32 %v1732, %v2106
        %v2334 = vadd.f32 %v1733, %v2110
        %v2335 = vadd.f32 %v1734, %v2112
        %v2336 = vadd.f32 %v1735, %v2114
        %v2337 = vadd.f32 %v1736, %v2113
        %v2338 = vadd.f32 %v1737, %v2117
        %v2339 = vadd.f32 %v1738, %v2119
        %v2340 = vadd.f32 %v1739, %v2121
        %v2341 = vadd.f32 %v1740, %v2120
        %v2342 = vadd.f32 %v1741, %v2124
        %v2343 = vadd.f32 %v1742, %v2126
        %v2344 = vadd.f32 %v1743, %v2128
        %v2345 = vadd.f32 %v1744, %v2127
        %v2346 = vadd.f32 %v1745, %v2131
        %v2347 = vadd.f32 %v1746, %v2133
        %v2348 = vadd.f32 %v1747, %v2135
        %v2349 = vadd.f32 %v1748, %v2134
        %v2350 = vadd.f32 %v1749, %v2138
        %v2351 = vadd.f32 %v1750, %v2140
        %v2352 = vadd.f32 %v1751, %v2142
        %v2353 = vadd.f32 %v1752, %v2141
        %v2354 = vadd.f32 %v1753, %v2145
        %v2355 = vadd.f32 %v1754, %v2147
        %v2356 = vadd.f32 %v1755, %v2149
        %v2357 = vadd.f32 %v1756, %v2148
        %s2358 = scalar_lea.vmem %s1, 4
        %v2359 = vld [vmem:[%s2358] sm:$0x1]
        %v2360 = vperm.slane %v2359, 0
        %v2361 = vmul.f32 %v277, %v2360
        %v2362 = vmul.f32 %v283, %v2360
        %v2363 = vmul.f32 %v289, %v2360
        %v2364 = vmul.f32 %v295, %v2360
        %v2365 = vmul.f32 %v302, %v2360
        %v2366 = vmul.f32 %v308, %v2360
        %v2367 = vmul.f32 %v314, %v2360
        %v2368 = vmul.f32 %v320, %v2360
        %v2369 = vmul.f32 %v327, %v2360
        %v2370 = vmul.f32 %v333, %v2360
        %v2371 = vmul.f32 %v339, %v2360
        %v2372 = vmul.f32 %v345, %v2360
        %v2373 = vmul.f32 %v352, %v2360
        %v2374 = vmul.f32 %v358, %v2360
        %v2375 = vmul.f32 %v364, %v2360
        %v2376 = vmul.f32 %v370, %v2360
        %v2377 = vmul.f32 %v377, %v2360
        %v2378 = vmul.f32 %v383, %v2360
        %v2379 = vmul.f32 %v389, %v2360
        %v2380 = vmul.f32 %v395, %v2360
        %v2381 = vmul.f32 %v402, %v2360
        %v2382 = vmul.f32 %v408, %v2360
        %v2383 = vmul.f32 %v414, %v2360
        %v2384 = vmul.f32 %v420, %v2360
        %v2385 = vmul.f32 %v427, %v2360
        %v2386 = vmul.f32 %v433, %v2360
        %v2387 = vmul.f32 %v439, %v2360
        %v2388 = vmul.f32 %v445, %v2360
        %v2389 = vmul.f32 %v452, %v2360
        %v2390 = vmul.f32 %v458, %v2360
        %v2391 = vmul.f32 %v464, %v2360
        %v2392 = vmul.f32 %v470, %v2360
        %v2393 = vmul.f32 %v477, %v2360
        %v2394 = vmul.f32 %v483, %v2360
        %v2395 = vmul.f32 %v489, %v2360
        %v2396 = vmul.f32 %v495, %v2360
        %v2397 = vmul.f32 %v502, %v2360
        %v2398 = vmul.f32 %v508, %v2360
        %v2399 = vmul.f32 %v514, %v2360
        %v2400 = vmul.f32 %v520, %v2360
        %v2401 = vmul.f32 %v527, %v2360
        %v2402 = vmul.f32 %v533, %v2360
        %v2403 = vmul.f32 %v539, %v2360
        %v2404 = vmul.f32 %v545, %v2360
        %v2405 = vmul.f32 %v552, %v2360
        %v2406 = vmul.f32 %v558, %v2360
        %v2407 = vmul.f32 %v564, %v2360
        %v2408 = vmul.f32 %v570, %v2360
        %v2409 = vmul.f32 %v577, %v2360
        %v2410 = vmul.f32 %v583, %v2360
        %v2411 = vmul.f32 %v589, %v2360
        %v2412 = vmul.f32 %v595, %v2360
        %v2413 = vmul.f32 %v602, %v2360
        %v2414 = vmul.f32 %v608, %v2360
        %v2415 = vmul.f32 %v614, %v2360
        %v2416 = vmul.f32 %v620, %v2360
        %v2417 = vmul.f32 %v627, %v2360
        %v2418 = vmul.f32 %v633, %v2360
        %v2419 = vmul.f32 %v639, %v2360
        %v2420 = vmul.f32 %v645, %v2360
        %v2421 = vmul.f32 %v652, %v2360
        %v2422 = vmul.f32 %v658, %v2360
        %v2423 = vmul.f32 %v664, %v2360
        %v2424 = vmul.f32 %v670, %v2360
        %v2425 = vmul.f32 %v677, %v2360
        %v2426 = vmul.f32 %v683, %v2360
        %v2427 = vmul.f32 %v689, %v2360
        %v2428 = vmul.f32 %v695, %v2360
        %v2429 = vmul.f32 %v702, %v2360
        %v2430 = vmul.f32 %v708, %v2360
        %v2431 = vmul.f32 %v714, %v2360
        %v2432 = vmul.f32 %v720, %v2360
        %v2433 = vmul.f32 %v727, %v2360
        %v2434 = vmul.f32 %v733, %v2360
        %v2435 = vmul.f32 %v739, %v2360
        %v2436 = vmul.f32 %v745, %v2360
        %v2437 = vmul.f32 %v752, %v2360
        %v2438 = vmul.f32 %v758, %v2360
        %v2439 = vmul.f32 %v764, %v2360
        %v2440 = vmul.f32 %v770, %v2360
        %v2441 = vmul.f32 %v777, %v2360
        %v2442 = vmul.f32 %v783, %v2360
        %v2443 = vmul.f32 %v789, %v2360
        %v2444 = vmul.f32 %v795, %v2360
        %v2445 = vmul.f32 %v802, %v2360
        %v2446 = vmul.f32 %v808, %v2360
        %v2447 = vmul.f32 %v814, %v2360
        %v2448 = vmul.f32 %v820, %v2360
        %v2449 = vmul.f32 %v827, %v2360
        %v2450 = vmul.f32 %v833, %v2360
        %v2451 = vmul.f32 %v839, %v2360
        %v2452 = vmul.f32 %v845, %v2360
        %v2453 = vmul.f32 %v852, %v2360
        %v2454 = vmul.f32 %v858, %v2360
        %v2455 = vmul.f32 %v864, %v2360
        %v2456 = vmul.f32 %v870, %v2360
        %v2457 = vmul.f32 %v877, %v2360
        %v2458 = vmul.f32 %v883, %v2360
        %v2459 = vmul.f32 %v889, %v2360
        %v2460 = vmul.f32 %v895, %v2360
        %v2461 = vmul.f32 %v902, %v2360
        %v2462 = vmul.f32 %v908, %v2360
        %v2463 = vmul.f32 %v914, %v2360
        %v2464 = vmul.f32 %v920, %v2360
        %v2465 = vadd.f32 %v2254, %v2361
        %v2466 = vadd.f32 %v2255, %v2362
        %v2467 = vadd.f32 %v2256, %v2363
        %v2468 = vadd.f32 %v2257, %v2364
        %v2469 = vadd.f32 %v2258, %v2365
        %v2470 = vadd.f32 %v2259, %v2366
        %v2471 = vadd.f32 %v2260, %v2367
        %v2472 = vadd.f32 %v2261, %v2368
        %v2473 = vadd.f32 %v2262, %v2369
        %v2474 = vadd.f32 %v2263, %v2370
        %v2475 = vadd.f32 %v2264, %v2371
        %v2476 = vadd.f32 %v2265, %v2372
        %v2477 = vadd.f32 %v2266, %v2373
        %v2478 = vadd.f32 %v2267, %v2374
        %v2479 = vadd.f32 %v2268, %v2375
        %v2480 = vadd.f32 %v2269, %v2376
        %v2481 = vadd.f32 %v2270, %v2377
        %v2482 = vadd.f32 %v2271, %v2378
        %v2483 = vadd.f32 %v2272, %v2379
        %v2484 = vadd.f32 %v2273, %v2380
        %v2485 = vadd.f32 %v2274, %v2381
        %v2486 = vadd.f32 %v2275, %v2382
        %v2487 = vadd.f32 %v2276, %v2383
        %v2488 = vadd.f32 %v2277, %v2384
        %v2489 = vadd.f32 %v2278, %v2385
        %v2490 = vadd.f32 %v2279, %v2386
        %v2491 = vadd.f32 %v2280, %v2387
        %v2492 = vadd.f32 %v2281, %v2388
        %v2493 = vadd.f32 %v2282, %v2389
        %v2494 = vadd.f32 %v2283, %v2390
        %v2495 = vadd.f32 %v2284, %v2391
        %v2496 = vadd.f32 %v2285, %v2392
        %v2497 = vadd.f32 %v2286, %v2393
        %v2498 = vadd.f32 %v2287, %v2394
        %v2499 = vadd.f32 %v2288, %v2395
        %v2500 = vadd.f32 %v2289, %v2396
        %v2501 = vadd.f32 %v2290, %v2397
        %v2502 = vadd.f32 %v2291, %v2398
        %v2503 = vadd.f32 %v2292, %v2399
        %v2504 = vadd.f32 %v2293, %v2400
        %v2505 = vadd.f32 %v2294, %v2401
        %v2506 = vadd.f32 %v2295, %v2402
        %v2507 = vadd.f32 %v2296, %v2403
        %v2508 = vadd.f32 %v2297, %v2404
        %v2509 = vadd.f32 %v2298, %v2405
        %v2510 = vadd.f32 %v2299, %v2406
        %v2511 = vadd.f32 %v2300, %v2407
        %v2512 = vadd.f32 %v2301, %v2408
        %v2513 = vadd.f32 %v2302, %v2409
        %v2514 = vadd.f32 %v2303, %v2410
        %v2515 = vadd.f32 %v2304, %v2411
        %v2516 = vadd.f32 %v2305, %v2412
        %v2517 = vadd.f32 %v2306, %v2413
        %v2518 = vadd.f32 %v2307, %v2414
        %v2519 = vadd.f32 %v2308, %v2415
        %v2520 = vadd.f32 %v2309, %v2416
        %v2521 = vadd.f32 %v2310, %v2417
        %v2522 = vadd.f32 %v2311, %v2418
        %v2523 = vadd.f32 %v2312, %v2419
        %v2524 = vadd.f32 %v2313, %v2420
        %v2525 = vadd.f32 %v2314, %v2421
        %v2526 = vadd.f32 %v2315, %v2422
        %v2527 = vadd.f32 %v2316, %v2423
        %v2528 = vadd.f32 %v2317, %v2424
        %v2529 = vadd.f32 %v2318, %v2425
        %v2530 = vadd.f32 %v2319, %v2426
        %v2531 = vadd.f32 %v2320, %v2427
        %v2532 = vadd.f32 %v2321, %v2428
        %v2533 = vadd.f32 %v2322, %v2429
        %v2534 = vadd.f32 %v2323, %v2430
        %v2535 = vadd.f32 %v2324, %v2431
        %v2536 = vadd.f32 %v2325, %v2432
        %v2537 = vadd.f32 %v2326, %v2433
        %v2538 = vadd.f32 %v2327, %v2434
        %v2539 = vadd.f32 %v2328, %v2435
        %v2540 = vadd.f32 %v2329, %v2436
        %v2541 = vadd.f32 %v2330, %v2437
        %v2542 = vadd.f32 %v2331, %v2438
        %v2543 = vadd.f32 %v2332, %v2439
        %v2544 = vadd.f32 %v2333, %v2440
        %v2545 = vadd.f32 %v2334, %v2441
        %v2546 = vadd.f32 %v2335, %v2442
        %v2547 = vadd.f32 %v2336, %v2443
        %v2548 = vadd.f32 %v2337, %v2444
        %v2549 = vadd.f32 %v2338, %v2445
        %v2550 = vadd.f32 %v2339, %v2446
        %v2551 = vadd.f32 %v2340, %v2447
        %v2552 = vadd.f32 %v2341, %v2448
        %v2553 = vadd.f32 %v2342, %v2449
        %v2554 = vadd.f32 %v2343, %v2450
        %v2555 = vadd.f32 %v2344, %v2451
        %v2556 = vadd.f32 %v2345, %v2452
        %v2557 = vadd.f32 %v2346, %v2453
        %v2558 = vadd.f32 %v2347, %v2454
        %v2559 = vadd.f32 %v2348, %v2455
        %v2560 = vadd.f32 %v2349, %v2456
        %v2561 = vadd.f32 %v2350, %v2457
        %v2562 = vadd.f32 %v2351, %v2458
        %v2563 = vadd.f32 %v2352, %v2459
        %v2564 = vadd.f32 %v2353, %v2460
        %v2565 = vadd.f32 %v2354, %v2461
        %v2566 = vadd.f32 %v2355, %v2462
        %v2567 = vadd.f32 %v2356, %v2463
        %v2568 = vadd.f32 %v2357, %v2464
        %v2569 = vld [vmem:[%s2358 + $0x1] sm:$0x1]
        %v2570 = vperm.slane %v2569, 0
        %v2571 = vmul.f32 %v277, %v2570
        %v2572 = vmul.f32 %v283, %v2570
        %v2573 = vmul.f32 %v289, %v2570
        %v2574 = vmul.f32 %v295, %v2570
        %v2575 = vmul.f32 %v302, %v2570
        %v2576 = vmul.f32 %v308, %v2570
        %v2577 = vmul.f32 %v314, %v2570
        %v2578 = vmul.f32 %v320, %v2570
        %v2579 = vmul.f32 %v327, %v2570
        %v2580 = vmul.f32 %v333, %v2570
        %v2581 = vmul.f32 %v339, %v2570
        %v2582 = vmul.f32 %v345, %v2570
        %v2583 = vmul.f32 %v352, %v2570
        %v2584 = vmul.f32 %v358, %v2570
        %v2585 = vmul.f32 %v364, %v2570
        %v2586 = vmul.f32 %v370, %v2570
        %v2587 = vmul.f32 %v377, %v2570
        %v2588 = vmul.f32 %v383, %v2570
        %v2589 = vmul.f32 %v389, %v2570
        %v2590 = vmul.f32 %v395, %v2570
        %v2591 = vmul.f32 %v402, %v2570
        %v2592 = vmul.f32 %v408, %v2570
        %v2593 = vmul.f32 %v414, %v2570
        %v2594 = vmul.f32 %v420, %v2570
        %v2595 = vmul.f32 %v427, %v2570
        %v2596 = vmul.f32 %v433, %v2570
        %v2597 = vmul.f32 %v439, %v2570
        %v2598 = vmul.f32 %v445, %v2570
        %v2599 = vmul.f32 %v452, %v2570
        %v2600 = vmul.f32 %v458, %v2570
        %v2601 = vmul.f32 %v464, %v2570
        %v2602 = vmul.f32 %v470, %v2570
        %v2603 = vmul.f32 %v477, %v2570
        %v2604 = vmul.f32 %v483, %v2570
        %v2605 = vmul.f32 %v489, %v2570
        %v2606 = vmul.f32 %v495, %v2570
        %v2607 = vmul.f32 %v502, %v2570
        %v2608 = vmul.f32 %v508, %v2570
        %v2609 = vmul.f32 %v514, %v2570
        %v2610 = vmul.f32 %v520, %v2570
        %v2611 = vmul.f32 %v527, %v2570
        %v2612 = vmul.f32 %v533, %v2570
        %v2613 = vmul.f32 %v539, %v2570
        %v2614 = vmul.f32 %v545, %v2570
        %v2615 = vmul.f32 %v552, %v2570
        %v2616 = vmul.f32 %v558, %v2570
        %v2617 = vmul.f32 %v564, %v2570
        %v2618 = vmul.f32 %v570, %v2570
        %v2619 = vmul.f32 %v577, %v2570
        %v2620 = vmul.f32 %v583, %v2570
        %v2621 = vmul.f32 %v589, %v2570
        %v2622 = vmul.f32 %v595, %v2570
        %v2623 = vmul.f32 %v602, %v2570
        %v2624 = vmul.f32 %v608, %v2570
        %v2625 = vmul.f32 %v614, %v2570
        %v2626 = vmul.f32 %v620, %v2570
        %v2627 = vmul.f32 %v627, %v2570
        %v2628 = vmul.f32 %v633, %v2570
        %v2629 = vmul.f32 %v639, %v2570
        %v2630 = vmul.f32 %v645, %v2570
        %v2631 = vmul.f32 %v652, %v2570
        %v2632 = vmul.f32 %v658, %v2570
        %v2633 = vmul.f32 %v664, %v2570
        %v2634 = vmul.f32 %v670, %v2570
        %v2635 = vmul.f32 %v677, %v2570
        %v2636 = vmul.f32 %v683, %v2570
        %v2637 = vmul.f32 %v689, %v2570
        %v2638 = vmul.f32 %v695, %v2570
        %v2639 = vmul.f32 %v702, %v2570
        %v2640 = vmul.f32 %v708, %v2570
        %v2641 = vmul.f32 %v714, %v2570
        %v2642 = vmul.f32 %v720, %v2570
        %v2643 = vmul.f32 %v727, %v2570
        %v2644 = vmul.f32 %v733, %v2570
        %v2645 = vmul.f32 %v739, %v2570
        %v2646 = vmul.f32 %v745, %v2570
        %v2647 = vmul.f32 %v752, %v2570
        %v2648 = vmul.f32 %v758, %v2570
        %v2649 = vmul.f32 %v764, %v2570
        %v2650 = vmul.f32 %v770, %v2570
        %v2651 = vmul.f32 %v777, %v2570
        %v2652 = vmul.f32 %v783, %v2570
        %v2653 = vmul.f32 %v789, %v2570
        %v2654 = vmul.f32 %v795, %v2570
        %v2655 = vmul.f32 %v802, %v2570
        %v2656 = vmul.f32 %v808, %v2570
        %v2657 = vmul.f32 %v814, %v2570
        %v2658 = vmul.f32 %v820, %v2570
        %v2659 = vmul.f32 %v827, %v2570
        %v2660 = vmul.f32 %v833, %v2570
        %v2661 = vmul.f32 %v839, %v2570
        %v2662 = vmul.f32 %v845, %v2570
        %v2663 = vmul.f32 %v852, %v2570
        %v2664 = vmul.f32 %v858, %v2570
        %v2665 = vmul.f32 %v864, %v2570
        %v2666 = vmul.f32 %v870, %v2570
        %v2667 = vmul.f32 %v877, %v2570
        %v2668 = vmul.f32 %v883, %v2570
        %v2669 = vmul.f32 %v889, %v2570
        %v2670 = vmul.f32 %v895, %v2570
        %v2671 = vmul.f32 %v902, %v2570
        %v2672 = vmul.f32 %v908, %v2570
        %v2673 = vmul.f32 %v914, %v2570
        %v2674 = vmul.f32 %v920, %v2570
        %v2779 = vrot.slane %v2571, 1
        %v2780 = vrot.slane %v2572, 1
        %v2781 = vsel %vm1366, %v2779, %v2780
        %v2782 = vrot.slane %v2573, 1
        %v2783 = vsel %vm1366, %v2780, %v2782
        %v2784 = vrot.slane %v2574, 1
        %v2785 = vsel %vm1366, %v2782, %v2784
        %v2786 = vrot.slane %v2575, 1
        %v2787 = vrot.slane %v2576, 1
        %v2788 = vsel %vm1366, %v2786, %v2787
        %v2789 = vrot.slane %v2577, 1
        %v2790 = vsel %vm1366, %v2787, %v2789
        %v2791 = vrot.slane %v2578, 1
        %v2792 = vsel %vm1366, %v2789, %v2791
        %v2793 = vrot.slane %v2579, 1
        %v2794 = vrot.slane %v2580, 1
        %v2795 = vsel %vm1366, %v2793, %v2794
        %v2796 = vrot.slane %v2581, 1
        %v2797 = vsel %vm1366, %v2794, %v2796
        %v2798 = vrot.slane %v2582, 1
        %v2799 = vsel %vm1366, %v2796, %v2798
        %v2800 = vrot.slane %v2583, 1
        %v2801 = vrot.slane %v2584, 1
        %v2802 = vsel %vm1366, %v2800, %v2801
        %v2803 = vrot.slane %v2585, 1
        %v2804 = vsel %vm1366, %v2801, %v2803
        %v2805 = vrot.slane %v2586, 1
        %v2806 = vsel %vm1366, %v2803, %v2805
        %v2807 = vrot.slane %v2587, 1
        %v2808 = vrot.slane %v2588, 1
        %v2809 = vsel %vm1366, %v2807, %v2808
        %v2810 = vrot.slane %v2589, 1
        %v2811 = vsel %vm1366, %v2808, %v2810
        %v2812 = vrot.slane %v2590, 1
        %v2813 = vsel %vm1366, %v2810, %v2812
        %v2814 = vrot.slane %v2591, 1
        %v2815 = vrot.slane %v2592, 1
        %v2816 = vsel %vm1366, %v2814, %v2815
        %v2817 = vrot.slane %v2593, 1
        %v2818 = vsel %vm1366, %v2815, %v2817
        %v2819 = vrot.slane %v2594, 1
        %v2820 = vsel %vm1366, %v2817, %v2819
        %v2821 = vrot.slane %v2595, 1
        %v2822 = vrot.slane %v2596, 1
        %v2823 = vsel %vm1366, %v2821, %v2822
        %v2824 = vrot.slane %v2597, 1
        %v2825 = vsel %vm1366, %v2822, %v2824
        %v2826 = vrot.slane %v2598, 1
        %v2827 = vsel %vm1366, %v2824, %v2826
        %v2828 = vrot.slane %v2599, 1
        %v2829 = vrot.slane %v2600, 1
        %v2830 = vsel %vm1366, %v2828, %v2829
        %v2831 = vrot.slane %v2601, 1
        %v2832 = vsel %vm1366, %v2829, %v2831
        %v2833 = vrot.slane %v2602, 1
        %v2834 = vsel %vm1366, %v2831, %v2833
        %v2835 = vrot.slane %v2603, 1
        %v2836 = vrot.slane %v2604, 1
        %v2837 = vsel %vm1366, %v2835, %v2836
        %v2838 = vrot.slane %v2605, 1
        %v2839 = vsel %vm1366, %v2836, %v2838
        %v2840 = vrot.slane %v2606, 1
        %v2841 = vsel %vm1366, %v2838, %v2840
        %v2842 = vrot.slane %v2607, 1
        %v2843 = vrot.slane %v2608, 1
        %v2844 = vsel %vm1366, %v2842, %v2843
        %v2845 = vrot.slane %v2609, 1
        %v2846 = vsel %vm1366, %v2843, %v2845
        %v2847 = vrot.slane %v2610, 1
        %v2848 = vsel %vm1366, %v2845, %v2847
        %v2849 = vrot.slane %v2611, 1
        %v2850 = vrot.slane %v2612, 1
        %v2851 = vsel %vm1366, %v2849, %v2850
        %v2852 = vrot.slane %v2613, 1
        %v2853 = vsel %vm1366, %v2850, %v2852
        %v2854 = vrot.slane %v2614, 1
        %v2855 = vsel %vm1366, %v2852, %v2854
        %v2856 = vrot.slane %v2615, 1
        %v2857 = vrot.slane %v2616, 1
        %v2858 = vsel %vm1366, %v2856, %v2857
        %v2859 = vrot.slane %v2617, 1
        %v2860 = vsel %vm1366, %v2857, %v2859
        %v2861 = vrot.slane %v2618, 1
        %v2862 = vsel %vm1366, %v2859, %v2861
        %v2863 = vrot.slane %v2619, 1
        %v2864 = vrot.slane %v2620, 1
        %v2865 = vsel %vm1366, %v2863, %v2864
        %v2866 = vrot.slane %v2621, 1
        %v2867 = vsel %vm1366, %v2864, %v2866
        %v2868 = vrot.slane %v2622, 1
        %v2869 = vsel %vm1366, %v2866, %v2868
        %v2870 = vrot.slane %v2623, 1
        %v2871 = vrot.slane %v2624, 1
        %v2872 = vsel %vm1366, %v2870, %v2871
        %v2873 = vrot.slane %v2625, 1
        %v2874 = vsel %vm1366, %v2871, %v2873
        %v2875 = vrot.slane %v2626, 1
        %v2876 = vsel %vm1366, %v2873, %v2875
        %v2877 = vrot.slane %v2627, 1
        %v2878 = vrot.slane %v2628, 1
        %v2879 = vsel %vm1366, %v2877, %v2878
        %v2880 = vrot.slane %v2629, 1
        %v2881 = vsel %vm1366, %v2878, %v2880
        %v2882 = vrot.slane %v2630, 1
        %v2883 = vsel %vm1366, %v2880, %v2882
        %v2884 = vrot.slane %v2631, 1
        %v2885 = vrot.slane %v2632, 1
        %v2886 = vsel %vm1366, %v2884, %v2885
        %v2887 = vrot.slane %v2633, 1
        %v2888 = vsel %vm1366, %v2885, %v2887
        %v2889 = vrot.slane %v2634, 1
        %v2890 = vsel %vm1366, %v2887, %v2889
        %v2891 = vrot.slane %v2635, 1
        %v2892 = vrot.slane %v2636, 1
        %v2893 = vsel %vm1366, %v2891, %v2892
        %v2894 = vrot.slane %v2637, 1
        %v2895 = vsel %vm1366, %v2892, %v2894
        %v2896 = vrot.slane %v2638, 1
        %v2897 = vsel %vm1366, %v2894, %v2896
        %v2898 = vrot.slane %v2639, 1
        %v2899 = vrot.slane %v2640, 1
        %v2900 = vsel %vm1366, %v2898, %v2899
        %v2901 = vrot.slane %v2641, 1
        %v2902 = vsel %vm1366, %v2899, %v2901
        %v2903 = vrot.slane %v2642, 1
        %v2904 = vsel %vm1366, %v2901, %v2903
        %v2905 = vrot.slane %v2643, 1
        %v2906 = vrot.slane %v2644, 1
        %v2907 = vsel %vm1366, %v2905, %v2906
        %v2908 = vrot.slane %v2645, 1
        %v2909 = vsel %vm1366, %v2906, %v2908
        %v2910 = vrot.slane %v2646, 1
        %v2911 = vsel %vm1366, %v2908, %v2910
        %v2912 = vrot.slane %v2647, 1
        %v2913 = vrot.slane %v2648, 1
        %v2914 = vsel %vm1366, %v2912, %v2913
        %v2915 = vrot.slane %v2649, 1
        %v2916 = vsel %vm1366, %v2913, %v2915
        %v2917 = vrot.slane %v2650, 1
        %v2918 = vsel %vm1366, %v2915, %v2917
        %v2919 = vrot.slane %v2651, 1
        %v2920 = vrot.slane %v2652, 1
        %v2921 = vsel %vm1366, %v2919, %v2920
        %v2922 = vrot.slane %v2653, 1
        %v2923 = vsel %vm1366, %v2920, %v2922
        %v2924 = vrot.slane %v2654, 1
        %v2925 = vsel %vm1366, %v2922, %v2924
        %v2926 = vrot.slane %v2655, 1
        %v2927 = vrot.slane %v2656, 1
        %v2928 = vsel %vm1366, %v2926, %v2927
        %v2929 = vrot.slane %v2657, 1
        %v2930 = vsel %vm1366, %v2927, %v2929
        %v2931 = vrot.slane %v2658, 1
        %v2932 = vsel %vm1366, %v2929, %v2931
        %v2933 = vrot.slane %v2659, 1
        %v2934 = vrot.slane %v2660, 1
        %v2935 = vsel %vm1366, %v2933, %v2934
        %v2936 = vrot.slane %v2661, 1
        %v2937 = vsel %vm1366, %v2934, %v2936
        %v2938 = vrot.slane %v2662, 1
        %v2939 = vsel %vm1366, %v2936, %v2938
        %v2940 = vrot.slane %v2663, 1
        %v2941 = vrot.slane %v2664, 1
        %v2942 = vsel %vm1366, %v2940, %v2941
        %v2943 = vrot.slane %v2665, 1
        %v2944 = vsel %vm1366, %v2941, %v2943
        %v2945 = vrot.slane %v2666, 1
        %v2946 = vsel %vm1366, %v2943, %v2945
        %v2947 = vrot.slane %v2667, 1
        %v2948 = vrot.slane %v2668, 1
        %v2949 = vsel %vm1366, %v2947, %v2948
        %v2950 = vrot.slane %v2669, 1
        %v2951 = vsel %vm1366, %v2948, %v2950
        %v2952 = vrot.slane %v2670, 1
        %v2953 = vsel %vm1366, %v2950, %v2952
        %v2954 = vrot.slane %v2671, 1
        %v2955 = vrot.slane %v2672, 1
        %v2956 = vsel %vm1366, %v2954, %v2955
        %v2957 = vrot.slane %v2673, 1
        %v2958 = vsel %vm1366, %v2955, %v2957
        %v2959 = vrot.slane %v2674, 1
        %v2960 = vsel %vm1366, %v2957, %v2959
        %v3065 = vadd.f32 %v2465, %v2781
        %v3066 = vadd.f32 %v2466, %v2783
        %v3067 = vadd.f32 %v2467, %v2785
        %v3068 = vadd.f32 %v2468, %v2784
        %v3069 = vadd.f32 %v2469, %v2788
        %v3070 = vadd.f32 %v2470, %v2790
        %v3071 = vadd.f32 %v2471, %v2792
        %v3072 = vadd.f32 %v2472, %v2791
        %v3073 = vadd.f32 %v2473, %v2795
        %v3074 = vadd.f32 %v2474, %v2797
        %v3075 = vadd.f32 %v2475, %v2799
        %v3076 = vadd.f32 %v2476, %v2798
        %v3077 = vadd.f32 %v2477, %v2802
        %v3078 = vadd.f32 %v2478, %v2804
        %v3079 = vadd.f32 %v2479, %v2806
        %v3080 = vadd.f32 %v2480, %v2805
        %v3081 = vadd.f32 %v2481, %v2809
        %v3082 = vadd.f32 %v2482, %v2811
        %v3083 = vadd.f32 %v2483, %v2813
        %v3084 = vadd.f32 %v2484, %v2812
        %v3085 = vadd.f32 %v2485, %v2816
        %v3086 = vadd.f32 %v2486, %v2818
        %v3087 = vadd.f32 %v2487, %v2820
        %v3088 = vadd.f32 %v2488, %v2819
        %v3089 = vadd.f32 %v2489, %v2823
        %v3090 = vadd.f32 %v2490, %v2825
        %v3091 = vadd.f32 %v2491, %v2827
        %v3092 = vadd.f32 %v2492, %v2826
        %v3093 = vadd.f32 %v2493, %v2830
        %v3094 = vadd.f32 %v2494, %v2832
        %v3095 = vadd.f32 %v2495, %v2834
        %v3096 = vadd.f32 %v2496, %v2833
        %v3097 = vadd.f32 %v2497, %v2837
        %v3098 = vadd.f32 %v2498, %v2839
        %v3099 = vadd.f32 %v2499, %v2841
        %v3100 = vadd.f32 %v2500, %v2840
        %v3101 = vadd.f32 %v2501, %v2844
        %v3102 = vadd.f32 %v2502, %v2846
        %v3103 = vadd.f32 %v2503, %v2848
        %v3104 = vadd.f32 %v2504, %v2847
        %v3105 = vadd.f32 %v2505, %v2851
        %v3106 = vadd.f32 %v2506, %v2853
        %v3107 = vadd.f32 %v2507, %v2855
        %v3108 = vadd.f32 %v2508, %v2854
        %v3109 = vadd.f32 %v2509, %v2858
        %v3110 = vadd.f32 %v2510, %v2860
        %v3111 = vadd.f32 %v2511, %v2862
        %v3112 = vadd.f32 %v2512, %v2861
        %v3113 = vadd.f32 %v2513, %v2865
        %v3114 = vadd.f32 %v2514, %v2867
        %v3115 = vadd.f32 %v2515, %v2869
        %v3116 = vadd.f32 %v2516, %v2868
        %v3117 = vadd.f32 %v2517, %v2872
        %v3118 = vadd.f32 %v2518, %v2874
        %v3119 = vadd.f32 %v2519, %v2876
        %v3120 = vadd.f32 %v2520, %v2875
        %v3121 = vadd.f32 %v2521, %v2879
        %v3122 = vadd.f32 %v2522, %v2881
        %v3123 = vadd.f32 %v2523, %v2883
        %v3124 = vadd.f32 %v2524, %v2882
        %v3125 = vadd.f32 %v2525, %v2886
        %v3126 = vadd.f32 %v2526, %v2888
        %v3127 = vadd.f32 %v2527, %v2890
        %v3128 = vadd.f32 %v2528, %v2889
        %v3129 = vadd.f32 %v2529, %v2893
        %v3130 = vadd.f32 %v2530, %v2895
        %v3131 = vadd.f32 %v2531, %v2897
        %v3132 = vadd.f32 %v2532, %v2896
        %v3133 = vadd.f32 %v2533, %v2900
        %v3134 = vadd.f32 %v2534, %v2902
        %v3135 = vadd.f32 %v2535, %v2904
        %v3136 = vadd.f32 %v2536, %v2903
        %v3137 = vadd.f32 %v2537, %v2907
        %v3138 = vadd.f32 %v2538, %v2909
        %v3139 = vadd.f32 %v2539, %v2911
        %v3140 = vadd.f32 %v2540, %v2910
        %v3141 = vadd.f32 %v2541, %v2914
        %v3142 = vadd.f32 %v2542, %v2916
        %v3143 = vadd.f32 %v2543, %v2918
        %v3144 = vadd.f32 %v2544, %v2917
        %v3145 = vadd.f32 %v2545, %v2921
        %v3146 = vadd.f32 %v2546, %v2923
        %v3147 = vadd.f32 %v2547, %v2925
        %v3148 = vadd.f32 %v2548, %v2924
        %v3149 = vadd.f32 %v2549, %v2928
        %v3150 = vadd.f32 %v2550, %v2930
        %v3151 = vadd.f32 %v2551, %v2932
        %v3152 = vadd.f32 %v2552, %v2931
        %v3153 = vadd.f32 %v2553, %v2935
        %v3154 = vadd.f32 %v2554, %v2937
        %v3155 = vadd.f32 %v2555, %v2939
        %v3156 = vadd.f32 %v2556, %v2938
        %v3157 = vadd.f32 %v2557, %v2942
        %v3158 = vadd.f32 %v2558, %v2944
        %v3159 = vadd.f32 %v2559, %v2946
        %v3160 = vadd.f32 %v2560, %v2945
        %v3161 = vadd.f32 %v2561, %v2949
        %v3162 = vadd.f32 %v2562, %v2951
        %v3163 = vadd.f32 %v2563, %v2953
        %v3164 = vadd.f32 %v2564, %v2952
        %v3165 = vadd.f32 %v2565, %v2956
        %v3166 = vadd.f32 %v2566, %v2958
        %v3167 = vadd.f32 %v2567, %v2960
        %v3168 = vadd.f32 %v2568, %v2959
        %v3169 = vld [vmem:[%s2358 + $0x2] sm:$0x1]
        %v3170 = vperm.slane %v3169, 0
        %v3171 = vmul.f32 %v277, %v3170
        %v3172 = vmul.f32 %v283, %v3170
        %v3173 = vmul.f32 %v289, %v3170
        %v3174 = vmul.f32 %v295, %v3170
        %v3175 = vmul.f32 %v302, %v3170
        %v3176 = vmul.f32 %v308, %v3170
        %v3177 = vmul.f32 %v314, %v3170
        %v3178 = vmul.f32 %v320, %v3170
        %v3179 = vmul.f32 %v327, %v3170
        %v3180 = vmul.f32 %v333, %v3170
        %v3181 = vmul.f32 %v339, %v3170
        %v3182 = vmul.f32 %v345, %v3170
        %v3183 = vmul.f32 %v352, %v3170
        %v3184 = vmul.f32 %v358, %v3170
        %v3185 = vmul.f32 %v364, %v3170
        %v3186 = vmul.f32 %v370, %v3170
        %v3187 = vmul.f32 %v377, %v3170
        %v3188 = vmul.f32 %v383, %v3170
        %v3189 = vmul.f32 %v389, %v3170
        %v3190 = vmul.f32 %v395, %v3170
        %v3191 = vmul.f32 %v402, %v3170
        %v3192 = vmul.f32 %v408, %v3170
        %v3193 = vmul.f32 %v414, %v3170
        %v3194 = vmul.f32 %v420, %v3170
        %v3195 = vmul.f32 %v427, %v3170
        %v3196 = vmul.f32 %v433, %v3170
        %v3197 = vmul.f32 %v439, %v3170
        %v3198 = vmul.f32 %v445, %v3170
        %v3199 = vmul.f32 %v452, %v3170
        %v3200 = vmul.f32 %v458, %v3170
        %v3201 = vmul.f32 %v464, %v3170
        %v3202 = vmul.f32 %v470, %v3170
        %v3203 = vmul.f32 %v477, %v3170
        %v3204 = vmul.f32 %v483, %v3170
        %v3205 = vmul.f32 %v489, %v3170
        %v3206 = vmul.f32 %v495, %v3170
        %v3207 = vmul.f32 %v502, %v3170
        %v3208 = vmul.f32 %v508, %v3170
        %v3209 = vmul.f32 %v514, %v3170
        %v3210 = vmul.f32 %v520, %v3170
        %v3211 = vmul.f32 %v527, %v3170
        %v3212 = vmul.f32 %v533, %v3170
        %v3213 = vmul.f32 %v539, %v3170
        %v3214 = vmul.f32 %v545, %v3170
        %v3215 = vmul.f32 %v552, %v3170
        %v3216 = vmul.f32 %v558, %v3170
        %v3217 = vmul.f32 %v564, %v3170
        %v3218 = vmul.f32 %v570, %v3170
        %v3219 = vmul.f32 %v577, %v3170
        %v3220 = vmul.f32 %v583, %v3170
        %v3221 = vmul.f32 %v589, %v3170
        %v3222 = vmul.f32 %v595, %v3170
        %v3223 = vmul.f32 %v602, %v3170
        %v3224 = vmul.f32 %v608, %v3170
        %v3225 = vmul.f32 %v614, %v3170
        %v3226 = vmul.f32 %v620, %v3170
        %v3227 = vmul.f32 %v627, %v3170
        %v3228 = vmul.f32 %v633, %v3170
        %v3229 = vmul.f32 %v639, %v3170
        %v3230 = vmul.f32 %v645, %v3170
        %v3231 = vmul.f32 %v652, %v3170
        %v3232 = vmul.f32 %v658, %v3170
        %v3233 = vmul.f32 %v664, %v3170
        %v3234 = vmul.f32 %v670, %v3170
        %v3235 = vmul.f32 %v677, %v3170
        %v3236 = vmul.f32 %v683, %v3170
        %v3237 = vmul.f32 %v689, %v3170
        %v3238 = vmul.f32 %v695, %v3170
        %v3239 = vmul.f32 %v702, %v3170
        %v3240 = vmul.f32 %v708, %v3170
        %v3241 = vmul.f32 %v714, %v3170
        %v3242 = vmul.f32 %v720, %v3170
        %v3243 = vmul.f32 %v727, %v3170
        %v3244 = vmul.f32 %v733, %v3170
        %v3245 = vmul.f32 %v739, %v3170
        %v3246 = vmul.f32 %v745, %v3170
        %v3247 = vmul.f32 %v752, %v3170
        %v3248 = vmul.f32 %v758, %v3170
        %v3249 = vmul.f32 %v764, %v3170
        %v3250 = vmul.f32 %v770, %v3170
        %v3251 = vmul.f32 %v777, %v3170
        %v3252 = vmul.f32 %v783, %v3170
        %v3253 = vmul.f32 %v789, %v3170
        %v3254 = vmul.f32 %v795, %v3170
        %v3255 = vmul.f32 %v802, %v3170
        %v3256 = vmul.f32 %v808, %v3170
        %v3257 = vmul.f32 %v814, %v3170
        %v3258 = vmul.f32 %v820, %v3170
        %v3259 = vmul.f32 %v827, %v3170
        %v3260 = vmul.f32 %v833, %v3170
        %v3261 = vmul.f32 %v839, %v3170
        %v3262 = vmul.f32 %v845, %v3170
        %v3263 = vmul.f32 %v852, %v3170
        %v3264 = vmul.f32 %v858, %v3170
        %v3265 = vmul.f32 %v864, %v3170
        %v3266 = vmul.f32 %v870, %v3170
        %v3267 = vmul.f32 %v877, %v3170
        %v3268 = vmul.f32 %v883, %v3170
        %v3269 = vmul.f32 %v889, %v3170
        %v3270 = vmul.f32 %v895, %v3170
        %v3271 = vmul.f32 %v902, %v3170
        %v3272 = vmul.f32 %v908, %v3170
        %v3273 = vmul.f32 %v914, %v3170
        %v3274 = vmul.f32 %v920, %v3170
        %v3379 = vrot.slane %v3171, 2
        %v3380 = vrot.slane %v3172, 2
        %v3381 = vsel %vm1967, %v3379, %v3380
        %v3382 = vrot.slane %v3173, 2
        %v3383 = vsel %vm1967, %v3380, %v3382
        %v3384 = vrot.slane %v3174, 2
        %v3385 = vsel %vm1967, %v3382, %v3384
        %v3386 = vrot.slane %v3175, 2
        %v3387 = vrot.slane %v3176, 2
        %v3388 = vsel %vm1967, %v3386, %v3387
        %v3389 = vrot.slane %v3177, 2
        %v3390 = vsel %vm1967, %v3387, %v3389
        %v3391 = vrot.slane %v3178, 2
        %v3392 = vsel %vm1967, %v3389, %v3391
        %v3393 = vrot.slane %v3179, 2
        %v3394 = vrot.slane %v3180, 2
        %v3395 = vsel %vm1967, %v3393, %v3394
        %v3396 = vrot.slane %v3181, 2
        %v3397 = vsel %vm1967, %v3394, %v3396
        %v3398 = vrot.slane %v3182, 2
        %v3399 = vsel %vm1967, %v3396, %v3398
        %v3400 = vrot.slane %v3183, 2
        %v3401 = vrot.slane %v3184, 2
        %v3402 = vsel %vm1967, %v3400, %v3401
        %v3403 = vrot.slane %v3185, 2
        %v3404 = vsel %vm1967, %v3401, %v3403
        %v3405 = vrot.slane %v3186, 2
        %v3406 = vsel %vm1967, %v3403, %v3405
        %v3407 = vrot.slane %v3187, 2
        %v3408 = vrot.slane %v3188, 2
        %v3409 = vsel %vm1967, %v3407, %v3408
        %v3410 = vrot.slane %v3189, 2
        %v3411 = vsel %vm1967, %v3408, %v3410
        %v3412 = vrot.slane %v3190, 2
        %v3413 = vsel %vm1967, %v3410, %v3412
        %v3414 = vrot.slane %v3191, 2
        %v3415 = vrot.slane %v3192, 2
        %v3416 = vsel %vm1967, %v3414, %v3415
        %v3417 = vrot.slane %v3193, 2
        %v3418 = vsel %vm1967, %v3415, %v3417
        %v3419 = vrot.slane %v3194, 2
        %v3420 = vsel %vm1967, %v3417, %v3419
        %v3421 = vrot.slane %v3195, 2
        %v3422 = vrot.slane %v3196, 2
        %v3423 = vsel %vm1967, %v3421, %v3422
        %v3424 = vrot.slane %v3197, 2
        %v3425 = vsel %vm1967, %v3422, %v3424
        %v3426 = vrot.slane %v3198, 2
        %v3427 = vsel %vm1967, %v3424, %v3426
        %v3428 = vrot.slane %v3199, 2
        %v3429 = vrot.slane %v3200, 2
        %v3430 = vsel %vm1967, %v3428, %v3429
        %v3431 = vrot.slane %v3201, 2
        %v3432 = vsel %vm1967, %v3429, %v3431
        %v3433 = vrot.slane %v3202, 2
        %v3434 = vsel %vm1967, %v3431, %v3433
        %v3435 = vrot.slane %v3203, 2
        %v3436 = vrot.slane %v3204, 2
        %v3437 = vsel %vm1967, %v3435, %v3436
        %v3438 = vrot.slane %v3205, 2
        %v3439 = vsel %vm1967, %v3436, %v3438
        %v3440 = vrot.slane %v3206, 2
        %v3441 = vsel %vm1967, %v3438, %v3440
        %v3442 = vrot.slane %v3207, 2
        %v3443 = vrot.slane %v3208, 2
        %v3444 = vsel %vm1967, %v3442, %v3443
        %v3445 = vrot.slane %v3209, 2
        %v3446 = vsel %vm1967, %v3443, %v3445
        %v3447 = vrot.slane %v3210, 2
        %v3448 = vsel %vm1967, %v3445, %v3447
        %v3449 = vrot.slane %v3211, 2
        %v3450 = vrot.slane %v3212, 2
        %v3451 = vsel %vm1967, %v3449, %v3450
        %v3452 = vrot.slane %v3213, 2
        %v3453 = vsel %vm1967, %v3450, %v3452
        %v3454 = vrot.slane %v3214, 2
        %v3455 = vsel %vm1967, %v3452, %v3454
        %v3456 = vrot.slane %v3215, 2
        %v3457 = vrot.slane %v3216, 2
        %v3458 = vsel %vm1967, %v3456, %v3457
        %v3459 = vrot.slane %v3217, 2
        %v3460 = vsel %vm1967, %v3457, %v3459
        %v3461 = vrot.slane %v3218, 2
        %v3462 = vsel %vm1967, %v3459, %v3461
        %v3463 = vrot.slane %v3219, 2
        %v3464 = vrot.slane %v3220, 2
        %v3465 = vsel %vm1967, %v3463, %v3464
        %v3466 = vrot.slane %v3221, 2
        %v3467 = vsel %vm1967, %v3464, %v3466
        %v3468 = vrot.slane %v3222, 2
        %v3469 = vsel %vm1967, %v3466, %v3468
        %v3470 = vrot.slane %v3223, 2
        %v3471 = vrot.slane %v3224, 2
        %v3472 = vsel %vm1967, %v3470, %v3471
        %v3473 = vrot.slane %v3225, 2
        %v3474 = vsel %vm1967, %v3471, %v3473
        %v3475 = vrot.slane %v3226, 2
        %v3476 = vsel %vm1967, %v3473, %v3475
        %v3477 = vrot.slane %v3227, 2
        %v3478 = vrot.slane %v3228, 2
        %v3479 = vsel %vm1967, %v3477, %v3478
        %v3480 = vrot.slane %v3229, 2
        %v3481 = vsel %vm1967, %v3478, %v3480
        %v3482 = vrot.slane %v3230, 2
        %v3483 = vsel %vm1967, %v3480, %v3482
        %v3484 = vrot.slane %v3231, 2
        %v3485 = vrot.slane %v3232, 2
        %v3486 = vsel %vm1967, %v3484, %v3485
        %v3487 = vrot.slane %v3233, 2
        %v3488 = vsel %vm1967, %v3485, %v3487
        %v3489 = vrot.slane %v3234, 2
        %v3490 = vsel %vm1967, %v3487, %v3489
        %v3491 = vrot.slane %v3235, 2
        %v3492 = vrot.slane %v3236, 2
        %v3493 = vsel %vm1967, %v3491, %v3492
        %v3494 = vrot.slane %v3237, 2
        %v3495 = vsel %vm1967, %v3492, %v3494
        %v3496 = vrot.slane %v3238, 2
        %v3497 = vsel %vm1967, %v3494, %v3496
        %v3498 = vrot.slane %v3239, 2
        %v3499 = vrot.slane %v3240, 2
        %v3500 = vsel %vm1967, %v3498, %v3499
        %v3501 = vrot.slane %v3241, 2
        %v3502 = vsel %vm1967, %v3499, %v3501
        %v3503 = vrot.slane %v3242, 2
        %v3504 = vsel %vm1967, %v3501, %v3503
        %v3505 = vrot.slane %v3243, 2
        %v3506 = vrot.slane %v3244, 2
        %v3507 = vsel %vm1967, %v3505, %v3506
        %v3508 = vrot.slane %v3245, 2
        %v3509 = vsel %vm1967, %v3506, %v3508
        %v3510 = vrot.slane %v3246, 2
        %v3511 = vsel %vm1967, %v3508, %v3510
        %v3512 = vrot.slane %v3247, 2
        %v3513 = vrot.slane %v3248, 2
        %v3514 = vsel %vm1967, %v3512, %v3513
        %v3515 = vrot.slane %v3249, 2
        %v3516 = vsel %vm1967, %v3513, %v3515
        %v3517 = vrot.slane %v3250, 2
        %v3518 = vsel %vm1967, %v3515, %v3517
        %v3519 = vrot.slane %v3251, 2
        %v3520 = vrot.slane %v3252, 2
        %v3521 = vsel %vm1967, %v3519, %v3520
        %v3522 = vrot.slane %v3253, 2
        %v3523 = vsel %vm1967, %v3520, %v3522
        %v3524 = vrot.slane %v3254, 2
        %v3525 = vsel %vm1967, %v3522, %v3524
        %v3526 = vrot.slane %v3255, 2
        %v3527 = vrot.slane %v3256, 2
        %v3528 = vsel %vm1967, %v3526, %v3527
        %v3529 = vrot.slane %v3257, 2
        %v3530 = vsel %vm1967, %v3527, %v3529
        %v3531 = vrot.slane %v3258, 2
        %v3532 = vsel %vm1967, %v3529, %v3531
        %v3533 = vrot.slane %v3259, 2
        %v3534 = vrot.slane %v3260, 2
        %v3535 = vsel %vm1967, %v3533, %v3534
        %v3536 = vrot.slane %v3261, 2
        %v3537 = vsel %vm1967, %v3534, %v3536
        %v3538 = vrot.slane %v3262, 2
        %v3539 = vsel %vm1967, %v3536, %v3538
        %v3540 = vrot.slane %v3263, 2
        %v3541 = vrot.slane %v3264, 2
        %v3542 = vsel %vm1967, %v3540, %v3541
        %v3543 = vrot.slane %v3265, 2
        %v3544 = vsel %vm1967, %v3541, %v3543
        %v3545 = vrot.slane %v3266, 2
        %v3546 = vsel %vm1967, %v3543, %v3545
        %v3547 = vrot.slane %v3267, 2
        %v3548 = vrot.slane %v3268, 2
        %v3549 = vsel %vm1967, %v3547, %v3548
        %v3550 = vrot.slane %v3269, 2
        %v3551 = vsel %vm1967, %v3548, %v3550
        %v3552 = vrot.slane %v3270, 2
        %v3553 = vsel %vm1967, %v3550, %v3552
        %v3554 = vrot.slane %v3271, 2
        %v3555 = vrot.slane %v3272, 2
        %v3556 = vsel %vm1967, %v3554, %v3555
        %v3557 = vrot.slane %v3273, 2
        %v3558 = vsel %vm1967, %v3555, %v3557
        %v3559 = vrot.slane %v3274, 2
        %v3560 = vsel %vm1967, %v3557, %v3559
        %v3665 = vadd.f32 %v3065, %v3381
        %v3666 = vadd.f32 %v3066, %v3383
        %v3667 = vadd.f32 %v3067, %v3385
        %v3668 = vadd.f32 %v3068, %v3384
        %v3669 = vadd.f32 %v3069, %v3388
        %v3670 = vadd.f32 %v3070, %v3390
        %v3671 = vadd.f32 %v3071, %v3392
        %v3672 = vadd.f32 %v3072, %v3391
        %v3673 = vadd.f32 %v3073, %v3395
        %v3674 = vadd.f32 %v3074, %v3397
        %v3675 = vadd.f32 %v3075, %v3399
        %v3676 = vadd.f32 %v3076, %v3398
        %v3677 = vadd.f32 %v3077, %v3402
        %v3678 = vadd.f32 %v3078, %v3404
        %v3679 = vadd.f32 %v3079, %v3406
        %v3680 = vadd.f32 %v3080, %v3405
        %v3681 = vadd.f32 %v3081, %v3409
        %v3682 = vadd.f32 %v3082, %v3411
        %v3683 = vadd.f32 %v3083, %v3413
        %v3684 = vadd.f32 %v3084, %v3412
        %v3685 = vadd.f32 %v3085, %v3416
        %v3686 = vadd.f32 %v3086, %v3418
        %v3687 = vadd.f32 %v3087, %v3420
        %v3688 = vadd.f32 %v3088, %v3419
        %v3689 = vadd.f32 %v3089, %v3423
        %v3690 = vadd.f32 %v3090, %v3425
        %v3691 = vadd.f32 %v3091, %v3427
        %v3692 = vadd.f32 %v3092, %v3426
        %v3693 = vadd.f32 %v3093, %v3430
        %v3694 = vadd.f32 %v3094, %v3432
        %v3695 = vadd.f32 %v3095, %v3434
        %v3696 = vadd.f32 %v3096, %v3433
        %v3697 = vadd.f32 %v3097, %v3437
        %v3698 = vadd.f32 %v3098, %v3439
        %v3699 = vadd.f32 %v3099, %v3441
        %v3700 = vadd.f32 %v3100, %v3440
        %v3701 = vadd.f32 %v3101, %v3444
        %v3702 = vadd.f32 %v3102, %v3446
        %v3703 = vadd.f32 %v3103, %v3448
        %v3704 = vadd.f32 %v3104, %v3447
        %v3705 = vadd.f32 %v3105, %v3451
        %v3706 = vadd.f32 %v3106, %v3453
        %v3707 = vadd.f32 %v3107, %v3455
        %v3708 = vadd.f32 %v3108, %v3454
        %v3709 = vadd.f32 %v3109, %v3458
        %v3710 = vadd.f32 %v3110, %v3460
        %v3711 = vadd.f32 %v3111, %v3462
        %v3712 = vadd.f32 %v3112, %v3461
        %v3713 = vadd.f32 %v3113, %v3465
        %v3714 = vadd.f32 %v3114, %v3467
        %v3715 = vadd.f32 %v3115, %v3469
        %v3716 = vadd.f32 %v3116, %v3468
        %v3717 = vadd.f32 %v3117, %v3472
        %v3718 = vadd.f32 %v3118, %v3474
        %v3719 = vadd.f32 %v3119, %v3476
        %v3720 = vadd.f32 %v3120, %v3475
        %v3721 = vadd.f32 %v3121, %v3479
        %v3722 = vadd.f32 %v3122, %v3481
        %v3723 = vadd.f32 %v3123, %v3483
        %v3724 = vadd.f32 %v3124, %v3482
        %v3725 = vadd.f32 %v3125, %v3486
        %v3726 = vadd.f32 %v3126, %v3488
        %v3727 = vadd.f32 %v3127, %v3490
        %v3728 = vadd.f32 %v3128, %v3489
        %v3729 = vadd.f32 %v3129, %v3493
        %v3730 = vadd.f32 %v3130, %v3495
        %v3731 = vadd.f32 %v3131, %v3497
        %v3732 = vadd.f32 %v3132, %v3496
        %v3733 = vadd.f32 %v3133, %v3500
        %v3734 = vadd.f32 %v3134, %v3502
        %v3735 = vadd.f32 %v3135, %v3504
        %v3736 = vadd.f32 %v3136, %v3503
        %v3737 = vadd.f32 %v3137, %v3507
        %v3738 = vadd.f32 %v3138, %v3509
        %v3739 = vadd.f32 %v3139, %v3511
        %v3740 = vadd.f32 %v3140, %v3510
        %v3741 = vadd.f32 %v3141, %v3514
        %v3742 = vadd.f32 %v3142, %v3516
        %v3743 = vadd.f32 %v3143, %v3518
        %v3744 = vadd.f32 %v3144, %v3517
        %v3745 = vadd.f32 %v3145, %v3521
        %v3746 = vadd.f32 %v3146, %v3523
        %v3747 = vadd.f32 %v3147, %v3525
        %v3748 = vadd.f32 %v3148, %v3524
        %v3749 = vadd.f32 %v3149, %v3528
        %v3750 = vadd.f32 %v3150, %v3530
        %v3751 = vadd.f32 %v3151, %v3532
        %v3752 = vadd.f32 %v3152, %v3531
        %v3753 = vadd.f32 %v3153, %v3535
        %v3754 = vadd.f32 %v3154, %v3537
        %v3755 = vadd.f32 %v3155, %v3539
        %v3756 = vadd.f32 %v3156, %v3538
        %v3757 = vadd.f32 %v3157, %v3542
        %v3758 = vadd.f32 %v3158, %v3544
        %v3759 = vadd.f32 %v3159, %v3546
        %v3760 = vadd.f32 %v3160, %v3545
        %v3761 = vadd.f32 %v3161, %v3549
        %v3762 = vadd.f32 %v3162, %v3551
        %v3763 = vadd.f32 %v3163, %v3553
        %v3764 = vadd.f32 %v3164, %v3552
        %v3765 = vadd.f32 %v3165, %v3556
        %v3766 = vadd.f32 %v3166, %v3558
        %v3767 = vadd.f32 %v3167, %v3560
        %v3768 = vadd.f32 %v3168, %v3559
        %s3769 = scalar_lea.vmem %s1, 8
        %v3770 = vld [vmem:[%s3769] sm:$0x1]
        %v3771 = vperm.slane %v3770, 0
        %v3772 = vmul.f32 %v302, %v3771
        %v3773 = vmul.f32 %v308, %v3771
        %v3774 = vmul.f32 %v314, %v3771
        %v3775 = vmul.f32 %v320, %v3771
        %v3776 = vmul.f32 %v327, %v3771
        %v3777 = vmul.f32 %v333, %v3771
        %v3778 = vmul.f32 %v339, %v3771
        %v3779 = vmul.f32 %v345, %v3771
        %v3780 = vmul.f32 %v352, %v3771
        %v3781 = vmul.f32 %v358, %v3771
        %v3782 = vmul.f32 %v364, %v3771
        %v3783 = vmul.f32 %v370, %v3771
        %v3784 = vmul.f32 %v377, %v3771
        %v3785 = vmul.f32 %v383, %v3771
        %v3786 = vmul.f32 %v389, %v3771
        %v3787 = vmul.f32 %v395, %v3771
        %v3788 = vmul.f32 %v402, %v3771
        %v3789 = vmul.f32 %v408, %v3771
        %v3790 = vmul.f32 %v414, %v3771
        %v3791 = vmul.f32 %v420, %v3771
        %v3792 = vmul.f32 %v427, %v3771
        %v3793 = vmul.f32 %v433, %v3771
        %v3794 = vmul.f32 %v439, %v3771
        %v3795 = vmul.f32 %v445, %v3771
        %v3796 = vmul.f32 %v452, %v3771
        %v3797 = vmul.f32 %v458, %v3771
        %v3798 = vmul.f32 %v464, %v3771
        %v3799 = vmul.f32 %v470, %v3771
        %v3800 = vmul.f32 %v477, %v3771
        %v3801 = vmul.f32 %v483, %v3771
        %v3802 = vmul.f32 %v489, %v3771
        %v3803 = vmul.f32 %v495, %v3771
        %v3804 = vmul.f32 %v502, %v3771
        %v3805 = vmul.f32 %v508, %v3771
        %v3806 = vmul.f32 %v514, %v3771
        %v3807 = vmul.f32 %v520, %v3771
        %v3808 = vmul.f32 %v527, %v3771
        %v3809 = vmul.f32 %v533, %v3771
        %v3810 = vmul.f32 %v539, %v3771
        %v3811 = vmul.f32 %v545, %v3771
        %v3812 = vmul.f32 %v552, %v3771
        %v3813 = vmul.f32 %v558, %v3771
        %v3814 = vmul.f32 %v564, %v3771
        %v3815 = vmul.f32 %v570, %v3771
        %v3816 = vmul.f32 %v577, %v3771
        %v3817 = vmul.f32 %v583, %v3771
        %v3818 = vmul.f32 %v589, %v3771
        %v3819 = vmul.f32 %v595, %v3771
        %v3820 = vmul.f32 %v602, %v3771
        %v3821 = vmul.f32 %v608, %v3771
        %v3822 = vmul.f32 %v614, %v3771
        %v3823 = vmul.f32 %v620, %v3771
        %v3824 = vmul.f32 %v627, %v3771
        %v3825 = vmul.f32 %v633, %v3771
        %v3826 = vmul.f32 %v639, %v3771
        %v3827 = vmul.f32 %v645, %v3771
        %v3828 = vmul.f32 %v652, %v3771
        %v3829 = vmul.f32 %v658, %v3771
        %v3830 = vmul.f32 %v664, %v3771
        %v3831 = vmul.f32 %v670, %v3771
        %v3832 = vmul.f32 %v677, %v3771
        %v3833 = vmul.f32 %v683, %v3771
        %v3834 = vmul.f32 %v689, %v3771
        %v3835 = vmul.f32 %v695, %v3771
        %v3836 = vmul.f32 %v702, %v3771
        %v3837 = vmul.f32 %v708, %v3771
        %v3838 = vmul.f32 %v714, %v3771
        %v3839 = vmul.f32 %v720, %v3771
        %v3840 = vmul.f32 %v727, %v3771
        %v3841 = vmul.f32 %v733, %v3771
        %v3842 = vmul.f32 %v739, %v3771
        %v3843 = vmul.f32 %v745, %v3771
        %v3844 = vmul.f32 %v752, %v3771
        %v3845 = vmul.f32 %v758, %v3771
        %v3846 = vmul.f32 %v764, %v3771
        %v3847 = vmul.f32 %v770, %v3771
        %v3848 = vmul.f32 %v777, %v3771
        %v3849 = vmul.f32 %v783, %v3771
        %v3850 = vmul.f32 %v789, %v3771
        %v3851 = vmul.f32 %v795, %v3771
        %v3852 = vmul.f32 %v802, %v3771
        %v3853 = vmul.f32 %v808, %v3771
        %v3854 = vmul.f32 %v814, %v3771
        %v3855 = vmul.f32 %v820, %v3771
        %v3856 = vmul.f32 %v827, %v3771
        %v3857 = vmul.f32 %v833, %v3771
        %v3858 = vmul.f32 %v839, %v3771
        %v3859 = vmul.f32 %v845, %v3771
        %v3860 = vmul.f32 %v852, %v3771
        %v3861 = vmul.f32 %v858, %v3771
        %v3862 = vmul.f32 %v864, %v3771
        %v3863 = vmul.f32 %v870, %v3771
        %v3864 = vmul.f32 %v877, %v3771
        %v3865 = vmul.f32 %v883, %v3771
        %v3866 = vmul.f32 %v889, %v3771
        %v3867 = vmul.f32 %v895, %v3771
        %v3868 = vmul.f32 %v902, %v3771
        %v3869 = vmul.f32 %v908, %v3771
        %v3870 = vmul.f32 %v914, %v3771
        %v3871 = vmul.f32 %v920, %v3771
        %v3872 = vmul.f32 %v927, %v3771
        %v3873 = vmul.f32 %v933, %v3771
        %v3874 = vmul.f32 %v939, %v3771
        %v3875 = vmul.f32 %v945, %v3771
        %v3876 = vadd.f32 %v3665, %v3772
        %v3877 = vadd.f32 %v3666, %v3773
        %v3878 = vadd.f32 %v3667, %v3774
        %v3879 = vadd.f32 %v3668, %v3775
        %v3880 = vadd.f32 %v3669, %v3776
        %v3881 = vadd.f32 %v3670, %v3777
        %v3882 = vadd.f32 %v3671, %v3778
        %v3883 = vadd.f32 %v3672, %v3779
        %v3884 = vadd.f32 %v3673, %v3780
        %v3885 = vadd.f32 %v3674, %v3781
        %v3886 = vadd.f32 %v3675, %v3782
        %v3887 = vadd.f32 %v3676, %v3783
        %v3888 = vadd.f32 %v3677, %v3784
        %v3889 = vadd.f32 %v3678, %v3785
        %v3890 = vadd.f32 %v3679, %v3786
        %v3891 = vadd.f32 %v3680, %v3787
        %v3892 = vadd.f32 %v3681, %v3788
        %v3893 = vadd.f32 %v3682, %v3789
        %v3894 = vadd.f32 %v3683, %v3790
        %v3895 = vadd.f32 %v3684, %v3791
        %v3896 = vadd.f32 %v3685, %v3792
        %v3897 = vadd.f32 %v3686, %v3793
        %v3898 = vadd.f32 %v3687, %v3794
        %v3899 = vadd.f32 %v3688, %v3795
        %v3900 = vadd.f32 %v3689, %v3796
        %v3901 = vadd.f32 %v3690, %v3797
        %v3902 = vadd.f32 %v3691, %v3798
        %v3903 = vadd.f32 %v3692, %v3799
        %v3904 = vadd.f32 %v3693, %v3800
        %v3905 = vadd.f32 %v3694, %v3801
        %v3906 = vadd.f32 %v3695, %v3802
        %v3907 = vadd.f32 %v3696, %v3803
        %v3908 = vadd.f32 %v3697, %v3804
        %v3909 = vadd.f32 %v3698, %v3805
        %v3910 = vadd.f32 %v3699, %v3806
        %v3911 = vadd.f32 %v3700, %v3807
        %v3912 = vadd.f32 %v3701, %v3808
        %v3913 = vadd.f32 %v3702, %v3809
        %v3914 = vadd.f32 %v3703, %v3810
        %v3915 = vadd.f32 %v3704, %v3811
        %v3916 = vadd.f32 %v3705, %v3812
        %v3917 = vadd.f32 %v3706, %v3813
        %v3918 = vadd.f32 %v3707, %v3814
        %v3919 = vadd.f32 %v3708, %v3815
        %v3920 = vadd.f32 %v3709, %v3816
        %v3921 = vadd.f32 %v3710, %v3817
        %v3922 = vadd.f32 %v3711, %v3818
        %v3923 = vadd.f32 %v3712, %v3819
        %v3924 = vadd.f32 %v3713, %v3820
        %v3925 = vadd.f32 %v3714, %v3821
        %v3926 = vadd.f32 %v3715, %v3822
        %v3927 = vadd.f32 %v3716, %v3823
        %v3928 = vadd.f32 %v3717, %v3824
        %v3929 = vadd.f32 %v3718, %v3825
        %v3930 = vadd.f32 %v3719, %v3826
        %v3931 = vadd.f32 %v3720, %v3827
        %v3932 = vadd.f32 %v3721, %v3828
        %v3933 = vadd.f32 %v3722, %v3829
        %v3934 = vadd.f32 %v3723, %v3830
        %v3935 = vadd.f32 %v3724, %v3831
        %v3936 = vadd.f32 %v3725, %v3832
        %v3937 = vadd.f32 %v3726, %v3833
        %v3938 = vadd.f32 %v3727, %v3834
        %v3939 = vadd.f32 %v3728, %v3835
        %v3940 = vadd.f32 %v3729, %v3836
        %v3941 = vadd.f32 %v3730, %v3837
        %v3942 = vadd.f32 %v3731, %v3838
        %v3943 = vadd.f32 %v3732, %v3839
        %v3944 = vadd.f32 %v3733, %v3840
        %v3945 = vadd.f32 %v3734, %v3841
        %v3946 = vadd.f32 %v3735, %v3842
        %v3947 = vadd.f32 %v3736, %v3843
        %v3948 = vadd.f32 %v3737, %v3844
        %v3949 = vadd.f32 %v3738, %v3845
        %v3950 = vadd.f32 %v3739, %v3846
        %v3951 = vadd.f32 %v3740, %v3847
        %v3952 = vadd.f32 %v3741, %v3848
        %v3953 = vadd.f32 %v3742, %v3849
        %v3954 = vadd.f32 %v3743, %v3850
        %v3955 = vadd.f32 %v3744, %v3851
        %v3956 = vadd.f32 %v3745, %v3852
        %v3957 = vadd.f32 %v3746, %v3853
        %v3958 = vadd.f32 %v3747, %v3854
        %v3959 = vadd.f32 %v3748, %v3855
        %v3960 = vadd.f32 %v3749, %v3856
        %v3961 = vadd.f32 %v3750, %v3857
        %v3962 = vadd.f32 %v3751, %v3858
        %v3963 = vadd.f32 %v3752, %v3859
        %v3964 = vadd.f32 %v3753, %v3860
        %v3965 = vadd.f32 %v3754, %v3861
        %v3966 = vadd.f32 %v3755, %v3862
        %v3967 = vadd.f32 %v3756, %v3863
        %v3968 = vadd.f32 %v3757, %v3864
        %v3969 = vadd.f32 %v3758, %v3865
        %v3970 = vadd.f32 %v3759, %v3866
        %v3971 = vadd.f32 %v3760, %v3867
        %v3972 = vadd.f32 %v3761, %v3868
        %v3973 = vadd.f32 %v3762, %v3869
        %v3974 = vadd.f32 %v3763, %v3870
        %v3975 = vadd.f32 %v3764, %v3871
        %v3976 = vadd.f32 %v3765, %v3872
        %v3977 = vadd.f32 %v3766, %v3873
        %v3978 = vadd.f32 %v3767, %v3874
        %v3979 = vadd.f32 %v3768, %v3875
        %v3980 = vld [vmem:[%s3769 + $0x1] sm:$0x1]
        %v3981 = vperm.slane %v3980, 0
        %v3982 = vmul.f32 %v302, %v3981
        %v3983 = vmul.f32 %v308, %v3981
        %v3984 = vmul.f32 %v314, %v3981
        %v3985 = vmul.f32 %v320, %v3981
        %v3986 = vmul.f32 %v327, %v3981
        %v3987 = vmul.f32 %v333, %v3981
        %v3988 = vmul.f32 %v339, %v3981
        %v3989 = vmul.f32 %v345, %v3981
        %v3990 = vmul.f32 %v352, %v3981
        %v3991 = vmul.f32 %v358, %v3981
        %v3992 = vmul.f32 %v364, %v3981
        %v3993 = vmul.f32 %v370, %v3981
        %v3994 = vmul.f32 %v377, %v3981
        %v3995 = vmul.f32 %v383, %v3981
        %v3996 = vmul.f32 %v389, %v3981
        %v3997 = vmul.f32 %v395, %v3981
        %v3998 = vmul.f32 %v402, %v3981
        %v3999 = vmul.f32 %v408, %v3981
        %v4000 = vmul.f32 %v414, %v3981
        %v4001 = vmul.f32 %v420, %v3981
        %v4002 = vmul.f32 %v427, %v3981
        %v4003 = vmul.f32 %v433, %v3981
        %v4004 = vmul.f32 %v439, %v3981
        %v4005 = vmul.f32 %v445, %v3981
        %v4006 = vmul.f32 %v452, %v3981
        %v4007 = vmul.f32 %v458, %v3981
        %v4008 = vmul.f32 %v464, %v3981
        %v4009 = vmul.f32 %v470, %v3981
        %v4010 = vmul.f32 %v477, %v3981
        %v4011 = vmul.f32 %v483, %v3981
        %v4012 = vmul.f32 %v489, %v3981
        %v4013 = vmul.f32 %v495, %v3981
        %v4014 = vmul.f32 %v502, %v3981
        %v4015 = vmul.f32 %v508, %v3981
        %v4016 = vmul.f32 %v514, %v3981
        %v4017 = vmul.f32 %v520, %v3981
        %v4018 = vmul.f32 %v527, %v3981
        %v4019 = vmul.f32 %v533, %v3981
        %v4020 = vmul.f32 %v539, %v3981
        %v4021 = vmul.f32 %v545, %v3981
        %v4022 = vmul.f32 %v552, %v3981
        %v4023 = vmul.f32 %v558, %v3981
        %v4024 = vmul.f32 %v564, %v3981
        %v4025 = vmul.f32 %v570, %v3981
        %v4026 = vmul.f32 %v577, %v3981
        %v4027 = vmul.f32 %v583, %v3981
        %v4028 = vmul.f32 %v589, %v3981
        %v4029 = vmul.f32 %v595, %v3981
        %v4030 = vmul.f32 %v602, %v3981
        %v4031 = vmul.f32 %v608, %v3981
        %v4032 = vmul.f32 %v614, %v3981
        %v4033 = vmul.f32 %v620, %v3981
        %v4034 = vmul.f32 %v627, %v3981
        %v4035 = vmul.f32 %v633, %v3981
        %v4036 = vmul.f32 %v639, %v3981
        %v4037 = vmul.f32 %v645, %v3981
        %v4038 = vmul.f32 %v652, %v3981
        %v4039 = vmul.f32 %v658, %v3981
        %v4040 = vmul.f32 %v664, %v3981
        %v4041 = vmul.f32 %v670, %v3981
        %v4042 = vmul.f32 %v677, %v3981
        %v4043 = vmul.f32 %v683, %v3981
        %v4044 = vmul.f32 %v689, %v3981
        %v4045 = vmul.f32 %v695, %v3981
        %v4046 = vmul.f32 %v702, %v3981
        %v4047 = vmul.f32 %v708, %v3981
        %v4048 = vmul.f32 %v714, %v3981
        %v4049 = vmul.f32 %v720, %v3981
        %v4050 = vmul.f32 %v727, %v3981
        %v4051 = vmul.f32 %v733, %v3981
        %v4052 = vmul.f32 %v739, %v3981
        %v4053 = vmul.f32 %v745, %v3981
        %v4054 = vmul.f32 %v752, %v3981
        %v4055 = vmul.f32 %v758, %v3981
        %v4056 = vmul.f32 %v764, %v3981
        %v4057 = vmul.f32 %v770, %v3981
        %v4058 = vmul.f32 %v777, %v3981
        %v4059 = vmul.f32 %v783, %v3981
        %v4060 = vmul.f32 %v789, %v3981
        %v4061 = vmul.f32 %v795, %v3981
        %v4062 = vmul.f32 %v802, %v3981
        %v4063 = vmul.f32 %v808, %v3981
        %v4064 = vmul.f32 %v814, %v3981
        %v4065 = vmul.f32 %v820, %v3981
        %v4066 = vmul.f32 %v827, %v3981
        %v4067 = vmul.f32 %v833, %v3981
        %v4068 = vmul.f32 %v839, %v3981
        %v4069 = vmul.f32 %v845, %v3981
        %v4070 = vmul.f32 %v852, %v3981
        %v4071 = vmul.f32 %v858, %v3981
        %v4072 = vmul.f32 %v864, %v3981
        %v4073 = vmul.f32 %v870, %v3981
        %v4074 = vmul.f32 %v877, %v3981
        %v4075 = vmul.f32 %v883, %v3981
        %v4076 = vmul.f32 %v889, %v3981
        %v4077 = vmul.f32 %v895, %v3981
        %v4078 = vmul.f32 %v902, %v3981
        %v4079 = vmul.f32 %v908, %v3981
        %v4080 = vmul.f32 %v914, %v3981
        %v4081 = vmul.f32 %v920, %v3981
        %v4082 = vmul.f32 %v927, %v3981
        %v4083 = vmul.f32 %v933, %v3981
        %v4084 = vmul.f32 %v939, %v3981
        %v4085 = vmul.f32 %v945, %v3981
        %v4190 = vrot.slane %v3982, 1
        %v4191 = vrot.slane %v3983, 1
        %v4192 = vsel %vm1366, %v4190, %v4191
        %v4193 = vrot.slane %v3984, 1
        %v4194 = vsel %vm1366, %v4191, %v4193
        %v4195 = vrot.slane %v3985, 1
        %v4196 = vsel %vm1366, %v4193, %v4195
        %v4197 = vrot.slane %v3986, 1
        %v4198 = vrot.slane %v3987, 1
        %v4199 = vsel %vm1366, %v4197, %v4198
        %v4200 = vrot.slane %v3988, 1
        %v4201 = vsel %vm1366, %v4198, %v4200
        %v4202 = vrot.slane %v3989, 1
        %v4203 = vsel %vm1366, %v4200, %v4202
        %v4204 = vrot.slane %v3990, 1
        %v4205 = vrot.slane %v3991, 1
        %v4206 = vsel %vm1366, %v4204, %v4205
        %v4207 = vrot.slane %v3992, 1
        %v4208 = vsel %vm1366, %v4205, %v4207
        %v4209 = vrot.slane %v3993, 1
        %v4210 = vsel %vm1366, %v4207, %v4209
        %v4211 = vrot.slane %v3994, 1
        %v4212 = vrot.slane %v3995, 1
        %v4213 = vsel %vm1366, %v4211, %v4212
        %v4214 = vrot.slane %v3996, 1
        %v4215 = vsel %vm1366, %v4212, %v4214
        %v4216 = vrot.slane %v3997, 1
        %v4217 = vsel %vm1366, %v4214, %v4216
        %v4218 = vrot.slane %v3998, 1
        %v4219 = vrot.slane %v3999, 1
        %v4220 = vsel %vm1366, %v4218, %v4219
        %v4221 = vrot.slane %v4000, 1
        %v4222 = vsel %vm1366, %v4219, %v4221
        %v4223 = vrot.slane %v4001, 1
        %v4224 = vsel %vm1366, %v4221, %v4223
        %v4225 = vrot.slane %v4002, 1
        %v4226 = vrot.slane %v4003, 1
        %v4227 = vsel %vm1366, %v4225, %v4226
        %v4228 = vrot.slane %v4004, 1
        %v4229 = vsel %vm1366, %v4226, %v4228
        %v4230 = vrot.slane %v4005, 1
        %v4231 = vsel %vm1366, %v4228, %v4230
        %v4232 = vrot.slane %v4006, 1
        %v4233 = vrot.slane %v4007, 1
        %v4234 = vsel %vm1366, %v4232, %v4233
        %v4235 = vrot.slane %v4008, 1
        %v4236 = vsel %vm1366, %v4233, %v4235
        %v4237 = vrot.slane %v4009, 1
        %v4238 = vsel %vm1366, %v4235, %v4237
        %v4239 = vrot.slane %v4010, 1
        %v4240 = vrot.slane %v4011, 1
        %v4241 = vsel %vm1366, %v4239, %v4240
        %v4242 = vrot.slane %v4012, 1
        %v4243 = vsel %vm1366, %v4240, %v4242
        %v4244 = vrot.slane %v4013, 1
        %v4245 = vsel %vm1366, %v4242, %v4244
        %v4246 = vrot.slane %v4014, 1
        %v4247 = vrot.slane %v4015, 1
        %v4248 = vsel %vm1366, %v4246, %v4247
        %v4249 = vrot.slane %v4016, 1
        %v4250 = vsel %vm1366, %v4247, %v4249
        %v4251 = vrot.slane %v4017, 1
        %v4252 = vsel %vm1366, %v4249, %v4251
        %v4253 = vrot.slane %v4018, 1
        %v4254 = vrot.slane %v4019, 1
        %v4255 = vsel %vm1366, %v4253, %v4254
        %v4256 = vrot.slane %v4020, 1
        %v4257 = vsel %vm1366, %v4254, %v4256
        %v4258 = vrot.slane %v4021, 1
        %v4259 = vsel %vm1366, %v4256, %v4258
        %v4260 = vrot.slane %v4022, 1
        %v4261 = vrot.slane %v4023, 1
        %v4262 = vsel %vm1366, %v4260, %v4261
        %v4263 = vrot.slane %v4024, 1
        %v4264 = vsel %vm1366, %v4261, %v4263
        %v4265 = vrot.slane %v4025, 1
        %v4266 = vsel %vm1366, %v4263, %v4265
        %v4267 = vrot.slane %v4026, 1
        %v4268 = vrot.slane %v4027, 1
        %v4269 = vsel %vm1366, %v4267, %v4268
        %v4270 = vrot.slane %v4028, 1
        %v4271 = vsel %vm1366, %v4268, %v4270
        %v4272 = vrot.slane %v4029, 1
        %v4273 = vsel %vm1366, %v4270, %v4272
        %v4274 = vrot.slane %v4030, 1
        %v4275 = vrot.slane %v4031, 1
        %v4276 = vsel %vm1366, %v4274, %v4275
        %v4277 = vrot.slane %v4032, 1
        %v4278 = vsel %vm1366, %v4275, %v4277
        %v4279 = vrot.slane %v4033, 1
        %v4280 = vsel %vm1366, %v4277, %v4279
        %v4281 = vrot.slane %v4034, 1
        %v4282 = vrot.slane %v4035, 1
        %v4283 = vsel %vm1366, %v4281, %v4282
        %v4284 = vrot.slane %v4036, 1
        %v4285 = vsel %vm1366, %v4282, %v4284
        %v4286 = vrot.slane %v4037, 1
        %v4287 = vsel %vm1366, %v4284, %v4286
        %v4288 = vrot.slane %v4038, 1
        %v4289 = vrot.slane %v4039, 1
        %v4290 = vsel %vm1366, %v4288, %v4289
        %v4291 = vrot.slane %v4040, 1
        %v4292 = vsel %vm1366, %v4289, %v4291
        %v4293 = vrot.slane %v4041, 1
        %v4294 = vsel %vm1366, %v4291, %v4293
        %v4295 = vrot.slane %v4042, 1
        %v4296 = vrot.slane %v4043, 1
        %v4297 = vsel %vm1366, %v4295, %v4296
        %v4298 = vrot.slane %v4044, 1
        %v4299 = vsel %vm1366, %v4296, %v4298
        %v4300 = vrot.slane %v4045, 1
        %v4301 = vsel %vm1366, %v4298, %v4300
        %v4302 = vrot.slane %v4046, 1
        %v4303 = vrot.slane %v4047, 1
        %v4304 = vsel %vm1366, %v4302, %v4303
        %v4305 = vrot.slane %v4048, 1
        %v4306 = vsel %vm1366, %v4303, %v4305
        %v4307 = vrot.slane %v4049, 1
        %v4308 = vsel %vm1366, %v4305, %v4307
        %v4309 = vrot.slane %v4050, 1
        %v4310 = vrot.slane %v4051, 1
        %v4311 = vsel %vm1366, %v4309, %v4310
        %v4312 = vrot.slane %v4052, 1
        %v4313 = vsel %vm1366, %v4310, %v4312
        %v4314 = vrot.slane %v4053, 1
        %v4315 = vsel %vm1366, %v4312, %v4314
        %v4316 = vrot.slane %v4054, 1
        %v4317 = vrot.slane %v4055, 1
        %v4318 = vsel %vm1366, %v4316, %v4317
        %v4319 = vrot.slane %v4056, 1
        %v4320 = vsel %vm1366, %v4317, %v4319
        %v4321 = vrot.slane %v4057, 1
        %v4322 = vsel %vm1366, %v4319, %v4321
        %v4323 = vrot.slane %v4058, 1
        %v4324 = vrot.slane %v4059, 1
        %v4325 = vsel %vm1366, %v4323, %v4324
        %v4326 = vrot.slane %v4060, 1
        %v4327 = vsel %vm1366, %v4324, %v4326
        %v4328 = vrot.slane %v4061, 1
        %v4329 = vsel %vm1366, %v4326, %v4328
        %v4330 = vrot.slane %v4062, 1
        %v4331 = vrot.slane %v4063, 1
        %v4332 = vsel %vm1366, %v4330, %v4331
        %v4333 = vrot.slane %v4064, 1
        %v4334 = vsel %vm1366, %v4331, %v4333
        %v4335 = vrot.slane %v4065, 1
        %v4336 = vsel %vm1366, %v4333, %v4335
        %v4337 = vrot.slane %v4066, 1
        %v4338 = vrot.slane %v4067, 1
        %v4339 = vsel %vm1366, %v4337, %v4338
        %v4340 = vrot.slane %v4068, 1
        %v4341 = vsel %vm1366, %v4338, %v4340
        %v4342 = vrot.slane %v4069, 1
        %v4343 = vsel %vm1366, %v4340, %v4342
        %v4344 = vrot.slane %v4070, 1
        %v4345 = vrot.slane %v4071, 1
        %v4346 = vsel %vm1366, %v4344, %v4345
        %v4347 = vrot.slane %v4072, 1
        %v4348 = vsel %vm1366, %v4345, %v4347
        %v4349 = vrot.slane %v4073, 1
        %v4350 = vsel %vm1366, %v4347, %v4349
        %v4351 = vrot.slane %v4074, 1
        %v4352 = vrot.slane %v4075, 1
        %v4353 = vsel %vm1366, %v4351, %v4352
        %v4354 = vrot.slane %v4076, 1
        %v4355 = vsel %vm1366, %v4352, %v4354
        %v4356 = vrot.slane %v4077, 1
        %v4357 = vsel %vm1366, %v4354, %v4356
        %v4358 = vrot.slane %v4078, 1
        %v4359 = vrot.slane %v4079, 1
        %v4360 = vsel %vm1366, %v4358, %v4359
        %v4361 = vrot.slane %v4080, 1
        %v4362 = vsel %vm1366, %v4359, %v4361
        %v4363 = vrot.slane %v4081, 1
        %v4364 = vsel %vm1366, %v4361, %v4363
        %v4365 = vrot.slane %v4082, 1
        %v4366 = vrot.slane %v4083, 1
        %v4367 = vsel %vm1366, %v4365, %v4366
        %v4368 = vrot.slane %v4084, 1
        %v4369 = vsel %vm1366, %v4366, %v4368
        %v4370 = vrot.slane %v4085, 1
        %v4371 = vsel %vm1366, %v4368, %v4370
        %v4476 = vadd.f32 %v3876, %v4192
        %v4477 = vadd.f32 %v3877, %v4194
        %v4478 = vadd.f32 %v3878, %v4196
        %v4479 = vadd.f32 %v3879, %v4195
        %v4480 = vadd.f32 %v3880, %v4199
        %v4481 = vadd.f32 %v3881, %v4201
        %v4482 = vadd.f32 %v3882, %v4203
        %v4483 = vadd.f32 %v3883, %v4202
        %v4484 = vadd.f32 %v3884, %v4206
        %v4485 = vadd.f32 %v3885, %v4208
        %v4486 = vadd.f32 %v3886, %v4210
        %v4487 = vadd.f32 %v3887, %v4209
        %v4488 = vadd.f32 %v3888, %v4213
        %v4489 = vadd.f32 %v3889, %v4215
        %v4490 = vadd.f32 %v3890, %v4217
        %v4491 = vadd.f32 %v3891, %v4216
        %v4492 = vadd.f32 %v3892, %v4220
        %v4493 = vadd.f32 %v3893, %v4222
        %v4494 = vadd.f32 %v3894, %v4224
        %v4495 = vadd.f32 %v3895, %v4223
        %v4496 = vadd.f32 %v3896, %v4227
        %v4497 = vadd.f32 %v3897, %v4229
        %v4498 = vadd.f32 %v3898, %v4231
        %v4499 = vadd.f32 %v3899, %v4230
        %v4500 = vadd.f32 %v3900, %v4234
        %v4501 = vadd.f32 %v3901, %v4236
        %v4502 = vadd.f32 %v3902, %v4238
        %v4503 = vadd.f32 %v3903, %v4237
        %v4504 = vadd.f32 %v3904, %v4241
        %v4505 = vadd.f32 %v3905, %v4243
        %v4506 = vadd.f32 %v3906, %v4245
        %v4507 = vadd.f32 %v3907, %v4244
        %v4508 = vadd.f32 %v3908, %v4248
        %v4509 = vadd.f32 %v3909, %v4250
        %v4510 = vadd.f32 %v3910, %v4252
        %v4511 = vadd.f32 %v3911, %v4251
        %v4512 = vadd.f32 %v3912, %v4255
        %v4513 = vadd.f32 %v3913, %v4257
        %v4514 = vadd.f32 %v3914, %v4259
        %v4515 = vadd.f32 %v3915, %v4258
        %v4516 = vadd.f32 %v3916, %v4262
        %v4517 = vadd.f32 %v3917, %v4264
        %v4518 = vadd.f32 %v3918, %v4266
        %v4519 = vadd.f32 %v3919, %v4265
        %v4520 = vadd.f32 %v3920, %v4269
        %v4521 = vadd.f32 %v3921, %v4271
        %v4522 = vadd.f32 %v3922, %v4273
        %v4523 = vadd.f32 %v3923, %v4272
        %v4524 = vadd.f32 %v3924, %v4276
        %v4525 = vadd.f32 %v3925, %v4278
        %v4526 = vadd.f32 %v3926, %v4280
        %v4527 = vadd.f32 %v3927, %v4279
        %v4528 = vadd.f32 %v3928, %v4283
        %v4529 = vadd.f32 %v3929, %v4285
        %v4530 = vadd.f32 %v3930, %v4287
        %v4531 = vadd.f32 %v3931, %v4286
        %v4532 = vadd.f32 %v3932, %v4290
        %v4533 = vadd.f32 %v3933, %v4292
        %v4534 = vadd.f32 %v3934, %v4294
        %v4535 = vadd.f32 %v3935, %v4293
        %v4536 = vadd.f32 %v3936, %v4297
        %v4537 = vadd.f32 %v3937, %v4299
        %v4538 = vadd.f32 %v3938, %v4301
        %v4539 = vadd.f32 %v3939, %v4300
        %v4540 = vadd.f32 %v3940, %v4304
        %v4541 = vadd.f32 %v3941, %v4306
        %v4542 = vadd.f32 %v3942, %v4308
        %v4543 = vadd.f32 %v3943, %v4307
        %v4544 = vadd.f32 %v3944, %v4311
        %v4545 = vadd.f32 %v3945, %v4313
        %v4546 = vadd.f32 %v3946, %v4315
        %v4547 = vadd.f32 %v3947, %v4314
        %v4548 = vadd.f32 %v3948, %v4318
        %v4549 = vadd.f32 %v3949, %v4320
        %v4550 = vadd.f32 %v3950, %v4322
        %v4551 = vadd.f32 %v3951, %v4321
        %v4552 = vadd.f32 %v3952, %v4325
        %v4553 = vadd.f32 %v3953, %v4327
        %v4554 = vadd.f32 %v3954, %v4329
        %v4555 = vadd.f32 %v3955, %v4328
        %v4556 = vadd.f32 %v3956, %v4332
        %v4557 = vadd.f32 %v3957, %v4334
        %v4558 = vadd.f32 %v3958, %v4336
        %v4559 = vadd.f32 %v3959, %v4335
        %v4560 = vadd.f32 %v3960, %v4339
        %v4561 = vadd.f32 %v3961, %v4341
        %v4562 = vadd.f32 %v3962, %v4343
        %v4563 = vadd.f32 %v3963, %v4342
        %v4564 = vadd.f32 %v3964, %v4346
        %v4565 = vadd.f32 %v3965, %v4348
        %v4566 = vadd.f32 %v3966, %v4350
        %v4567 = vadd.f32 %v3967, %v4349
        %v4568 = vadd.f32 %v3968, %v4353
        %v4569 = vadd.f32 %v3969, %v4355
        %v4570 = vadd.f32 %v3970, %v4357
        %v4571 = vadd.f32 %v3971, %v4356
        %v4572 = vadd.f32 %v3972, %v4360
        %v4573 = vadd.f32 %v3973, %v4362
        %v4574 = vadd.f32 %v3974, %v4364
        %v4575 = vadd.f32 %v3975, %v4363
        %v4576 = vadd.f32 %v3976, %v4367
        %v4577 = vadd.f32 %v3977, %v4369
        %v4578 = vadd.f32 %v3978, %v4371
        %v4579 = vadd.f32 %v3979, %v4370
        %v4580 = vld [vmem:[%s3769 + $0x2] sm:$0x1]
        %v4581 = vperm.slane %v4580, 0
        %v4582 = vmul.f32 %v302, %v4581
        %v4583 = vmul.f32 %v308, %v4581
        %v4584 = vmul.f32 %v314, %v4581
        %v4585 = vmul.f32 %v320, %v4581
        %v4586 = vmul.f32 %v327, %v4581
        %v4587 = vmul.f32 %v333, %v4581
        %v4588 = vmul.f32 %v339, %v4581
        %v4589 = vmul.f32 %v345, %v4581
        %v4590 = vmul.f32 %v352, %v4581
        %v4591 = vmul.f32 %v358, %v4581
        %v4592 = vmul.f32 %v364, %v4581
        %v4593 = vmul.f32 %v370, %v4581
        %v4594 = vmul.f32 %v377, %v4581
        %v4595 = vmul.f32 %v383, %v4581
        %v4596 = vmul.f32 %v389, %v4581
        %v4597 = vmul.f32 %v395, %v4581
        %v4598 = vmul.f32 %v402, %v4581
        %v4599 = vmul.f32 %v408, %v4581
        %v4600 = vmul.f32 %v414, %v4581
        %v4601 = vmul.f32 %v420, %v4581
        %v4602 = vmul.f32 %v427, %v4581
        %v4603 = vmul.f32 %v433, %v4581
        %v4604 = vmul.f32 %v439, %v4581
        %v4605 = vmul.f32 %v445, %v4581
        %v4606 = vmul.f32 %v452, %v4581
        %v4607 = vmul.f32 %v458, %v4581
        %v4608 = vmul.f32 %v464, %v4581
        %v4609 = vmul.f32 %v470, %v4581
        %v4610 = vmul.f32 %v477, %v4581
        %v4611 = vmul.f32 %v483, %v4581
        %v4612 = vmul.f32 %v489, %v4581
        %v4613 = vmul.f32 %v495, %v4581
        %v4614 = vmul.f32 %v502, %v4581
        %v4615 = vmul.f32 %v508, %v4581
        %v4616 = vmul.f32 %v514, %v4581
        %v4617 = vmul.f32 %v520, %v4581
        %v4618 = vmul.f32 %v527, %v4581
        %v4619 = vmul.f32 %v533, %v4581
        %v4620 = vmul.f32 %v539, %v4581
        %v4621 = vmul.f32 %v545, %v4581
        %v4622 = vmul.f32 %v552, %v4581
        %v4623 = vmul.f32 %v558, %v4581
        %v4624 = vmul.f32 %v564, %v4581
        %v4625 = vmul.f32 %v570, %v4581
        %v4626 = vmul.f32 %v577, %v4581
        %v4627 = vmul.f32 %v583, %v4581
        %v4628 = vmul.f32 %v589, %v4581
        %v4629 = vmul.f32 %v595, %v4581
        %v4630 = vmul.f32 %v602, %v4581
        %v4631 = vmul.f32 %v608, %v4581
        %v4632 = vmul.f32 %v614, %v4581
        %v4633 = vmul.f32 %v620, %v4581
        %v4634 = vmul.f32 %v627, %v4581
        %v4635 = vmul.f32 %v633, %v4581
        %v4636 = vmul.f32 %v639, %v4581
        %v4637 = vmul.f32 %v645, %v4581
        %v4638 = vmul.f32 %v652, %v4581
        %v4639 = vmul.f32 %v658, %v4581
        %v4640 = vmul.f32 %v664, %v4581
        %v4641 = vmul.f32 %v670, %v4581
        %v4642 = vmul.f32 %v677, %v4581
        %v4643 = vmul.f32 %v683, %v4581
        %v4644 = vmul.f32 %v689, %v4581
        %v4645 = vmul.f32 %v695, %v4581
        %v4646 = vmul.f32 %v702, %v4581
        %v4647 = vmul.f32 %v708, %v4581
        %v4648 = vmul.f32 %v714, %v4581
        %v4649 = vmul.f32 %v720, %v4581
        %v4650 = vmul.f32 %v727, %v4581
        %v4651 = vmul.f32 %v733, %v4581
        %v4652 = vmul.f32 %v739, %v4581
        %v4653 = vmul.f32 %v745, %v4581
        %v4654 = vmul.f32 %v752, %v4581
        %v4655 = vmul.f32 %v758, %v4581
        %v4656 = vmul.f32 %v764, %v4581
        %v4657 = vmul.f32 %v770, %v4581
        %v4658 = vmul.f32 %v777, %v4581
        %v4659 = vmul.f32 %v783, %v4581
        %v4660 = vmul.f32 %v789, %v4581
        %v4661 = vmul.f32 %v795, %v4581
        %v4662 = vmul.f32 %v802, %v4581
        %v4663 = vmul.f32 %v808, %v4581
        %v4664 = vmul.f32 %v814, %v4581
        %v4665 = vmul.f32 %v820, %v4581
        %v4666 = vmul.f32 %v827, %v4581
        %v4667 = vmul.f32 %v833, %v4581
        %v4668 = vmul.f32 %v839, %v4581
        %v4669 = vmul.f32 %v845, %v4581
        %v4670 = vmul.f32 %v852, %v4581
        %v4671 = vmul.f32 %v858, %v4581
        %v4672 = vmul.f32 %v864, %v4581
        %v4673 = vmul.f32 %v870, %v4581
        %v4674 = vmul.f32 %v877, %v4581
        %v4675 = vmul.f32 %v883, %v4581
        %v4676 = vmul.f32 %v889, %v4581
        %v4677 = vmul.f32 %v895, %v4581
        %v4678 = vmul.f32 %v902, %v4581
        %v4679 = vmul.f32 %v908, %v4581
        %v4680 = vmul.f32 %v914, %v4581
        %v4681 = vmul.f32 %v920, %v4581
        %v4682 = vmul.f32 %v927, %v4581
        %v4683 = vmul.f32 %v933, %v4581
        %v4684 = vmul.f32 %v939, %v4581
        %v4685 = vmul.f32 %v945, %v4581
        %v4790 = vrot.slane %v4582, 2
        %v4791 = vrot.slane %v4583, 2
        %v4792 = vsel %vm1967, %v4790, %v4791
        %v4793 = vrot.slane %v4584, 2
        %v4794 = vsel %vm1967, %v4791, %v4793
        %v4795 = vrot.slane %v4585, 2
        %v4796 = vsel %vm1967, %v4793, %v4795
        %v4797 = vrot.slane %v4586, 2
        %v4798 = vrot.slane %v4587, 2
        %v4799 = vsel %vm1967, %v4797, %v4798
        %v4800 = vrot.slane %v4588, 2
        %v4801 = vsel %vm1967, %v4798, %v4800
        %v4802 = vrot.slane %v4589, 2
        %v4803 = vsel %vm1967, %v4800, %v4802
        %v4804 = vrot.slane %v4590, 2
        %v4805 = vrot.slane %v4591, 2
        %v4806 = vsel %vm1967, %v4804, %v4805
        %v4807 = vrot.slane %v4592, 2
        %v4808 = vsel %vm1967, %v4805, %v4807
        %v4809 = vrot.slane %v4593, 2
        %v4810 = vsel %vm1967, %v4807, %v4809
        %v4811 = vrot.slane %v4594, 2
        %v4812 = vrot.slane %v4595, 2
        %v4813 = vsel %vm1967, %v4811, %v4812
        %v4814 = vrot.slane %v4596, 2
        %v4815 = vsel %vm1967, %v4812, %v4814
        %v4816 = vrot.slane %v4597, 2
        %v4817 = vsel %vm1967, %v4814, %v4816
        %v4818 = vrot.slane %v4598, 2
        %v4819 = vrot.slane %v4599, 2
        %v4820 = vsel %vm1967, %v4818, %v4819
        %v4821 = vrot.slane %v4600, 2
        %v4822 = vsel %vm1967, %v4819, %v4821
        %v4823 = vrot.slane %v4601, 2
        %v4824 = vsel %vm1967, %v4821, %v4823
        %v4825 = vrot.slane %v4602, 2
        %v4826 = vrot.slane %v4603, 2
        %v4827 = vsel %vm1967, %v4825, %v4826
        %v4828 = vrot.slane %v4604, 2
        %v4829 = vsel %vm1967, %v4826, %v4828
        %v4830 = vrot.slane %v4605, 2
        %v4831 = vsel %vm1967, %v4828, %v4830
        %v4832 = vrot.slane %v4606, 2
        %v4833 = vrot.slane %v4607, 2
        %v4834 = vsel %vm1967, %v4832, %v4833
        %v4835 = vrot.slane %v4608, 2
        %v4836 = vsel %vm1967, %v4833, %v4835
        %v4837 = vrot.slane %v4609, 2
        %v4838 = vsel %vm1967, %v4835, %v4837
        %v4839 = vrot.slane %v4610, 2
        %v4840 = vrot.slane %v4611, 2
        %v4841 = vsel %vm1967, %v4839, %v4840
        %v4842 = vrot.slane %v4612, 2
        %v4843 = vsel %vm1967, %v4840, %v4842
        %v4844 = vrot.slane %v4613, 2
        %v4845 = vsel %vm1967, %v4842, %v4844
        %v4846 = vrot.slane %v4614, 2
        %v4847 = vrot.slane %v4615, 2
        %v4848 = vsel %vm1967, %v4846, %v4847
        %v4849 = vrot.slane %v4616, 2
        %v4850 = vsel %vm1967, %v4847, %v4849
        %v4851 = vrot.slane %v4617, 2
        %v4852 = vsel %vm1967, %v4849, %v4851
        %v4853 = vrot.slane %v4618, 2
        %v4854 = vrot.slane %v4619, 2
        %v4855 = vsel %vm1967, %v4853, %v4854
        %v4856 = vrot.slane %v4620, 2
        %v4857 = vsel %vm1967, %v4854, %v4856
        %v4858 = vrot.slane %v4621, 2
        %v4859 = vsel %vm1967, %v4856, %v4858
        %v4860 = vrot.slane %v4622, 2
        %v4861 = vrot.slane %v4623, 2
        %v4862 = vsel %vm1967, %v4860, %v4861
        %v4863 = vrot.slane %v4624, 2
        %v4864 = vsel %vm1967, %v4861, %v4863
        %v4865 = vrot.slane %v4625, 2
        %v4866 = vsel %vm1967, %v4863, %v4865
        %v4867 = vrot.slane %v4626, 2
        %v4868 = vrot.slane %v4627, 2
        %v4869 = vsel %vm1967, %v4867, %v4868
        %v4870 = vrot.slane %v4628, 2
        %v4871 = vsel %vm1967, %v4868, %v4870
        %v4872 = vrot.slane %v4629, 2
        %v4873 = vsel %vm1967, %v4870, %v4872
        %v4874 = vrot.slane %v4630, 2
        %v4875 = vrot.slane %v4631, 2
        %v4876 = vsel %vm1967, %v4874, %v4875
        %v4877 = vrot.slane %v4632, 2
        %v4878 = vsel %vm1967, %v4875, %v4877
        %v4879 = vrot.slane %v4633, 2
        %v4880 = vsel %vm1967, %v4877, %v4879
        %v4881 = vrot.slane %v4634, 2
        %v4882 = vrot.slane %v4635, 2
        %v4883 = vsel %vm1967, %v4881, %v4882
        %v4884 = vrot.slane %v4636, 2
        %v4885 = vsel %vm1967, %v4882, %v4884
        %v4886 = vrot.slane %v4637, 2
        %v4887 = vsel %vm1967, %v4884, %v4886
        %v4888 = vrot.slane %v4638, 2
        %v4889 = vrot.slane %v4639, 2
        %v4890 = vsel %vm1967, %v4888, %v4889
        %v4891 = vrot.slane %v4640, 2
        %v4892 = vsel %vm1967, %v4889, %v4891
        %v4893 = vrot.slane %v4641, 2
        %v4894 = vsel %vm1967, %v4891, %v4893
        %v4895 = vrot.slane %v4642, 2
        %v4896 = vrot.slane %v4643, 2
        %v4897 = vsel %vm1967, %v4895, %v4896
        %v4898 = vrot.slane %v4644, 2
        %v4899 = vsel %vm1967, %v4896, %v4898
        %v4900 = vrot.slane %v4645, 2
        %v4901 = vsel %vm1967, %v4898, %v4900
        %v4902 = vrot.slane %v4646, 2
        %v4903 = vrot.slane %v4647, 2
        %v4904 = vsel %vm1967, %v4902, %v4903
        %v4905 = vrot.slane %v4648, 2
        %v4906 = vsel %vm1967, %v4903, %v4905
        %v4907 = vrot.slane %v4649, 2
        %v4908 = vsel %vm1967, %v4905, %v4907
        %v4909 = vrot.slane %v4650, 2
        %v4910 = vrot.slane %v4651, 2
        %v4911 = vsel %vm1967, %v4909, %v4910
        %v4912 = vrot.slane %v4652, 2
        %v4913 = vsel %vm1967, %v4910, %v4912
        %v4914 = vrot.slane %v4653, 2
        %v4915 = vsel %vm1967, %v4912, %v4914
        %v4916 = vrot.slane %v4654, 2
        %v4917 = vrot.slane %v4655, 2
        %v4918 = vsel %vm1967, %v4916, %v4917
        %v4919 = vrot.slane %v4656, 2
        %v4920 = vsel %vm1967, %v4917, %v4919
        %v4921 = vrot.slane %v4657, 2
        %v4922 = vsel %vm1967, %v4919, %v4921
        %v4923 = vrot.slane %v4658, 2
        %v4924 = vrot.slane %v4659, 2
        %v4925 = vsel %vm1967, %v4923, %v4924
        %v4926 = vrot.slane %v4660, 2
        %v4927 = vsel %vm1967, %v4924, %v4926
        %v4928 = vrot.slane %v4661, 2
        %v4929 = vsel %vm1967, %v4926, %v4928
        %v4930 = vrot.slane %v4662, 2
        %v4931 = vrot.slane %v4663, 2
        %v4932 = vsel %vm1967, %v4930, %v4931
        %v4933 = vrot.slane %v4664, 2
        %v4934 = vsel %vm1967, %v4931, %v4933
        %v4935 = vrot.slane %v4665, 2
        %v4936 = vsel %vm1967, %v4933, %v4935
        %v4937 = vrot.slane %v4666, 2
        %v4938 = vrot.slane %v4667, 2
        %v4939 = vsel %vm1967, %v4937, %v4938
        %v4940 = vrot.slane %v4668, 2
        %v4941 = vsel %vm1967, %v4938, %v4940
        %v4942 = vrot.slane %v4669, 2
        %v4943 = vsel %vm1967, %v4940, %v4942
        %v4944 = vrot.slane %v4670, 2
        %v4945 = vrot.slane %v4671, 2
        %v4946 = vsel %vm1967, %v4944, %v4945
        %v4947 = vrot.slane %v4672, 2
        %v4948 = vsel %vm1967, %v4945, %v4947
        %v4949 = vrot.slane %v4673, 2
        %v4950 = vsel %vm1967, %v4947, %v4949
        %v4951 = vrot.slane %v4674, 2
        %v4952 = vrot.slane %v4675, 2
        %v4953 = vsel %vm1967, %v4951, %v4952
        %v4954 = vrot.slane %v4676, 2
        %v4955 = vsel %vm1967, %v4952, %v4954
        %v4956 = vrot.slane %v4677, 2
        %v4957 = vsel %vm1967, %v4954, %v4956
        %v4958 = vrot.slane %v4678, 2
        %v4959 = vrot.slane %v4679, 2
        %v4960 = vsel %vm1967, %v4958, %v4959
        %v4961 = vrot.slane %v4680, 2
        %v4962 = vsel %vm1967, %v4959, %v4961
        %v4963 = vrot.slane %v4681, 2
        %v4964 = vsel %vm1967, %v4961, %v4963
        %v4965 = vrot.slane %v4682, 2
        %v4966 = vrot.slane %v4683, 2
        %v4967 = vsel %vm1967, %v4965, %v4966
        %v4968 = vrot.slane %v4684, 2
        %v4969 = vsel %vm1967, %v4966, %v4968
        %v4970 = vrot.slane %v4685, 2
        %v4971 = vsel %vm1967, %v4968, %v4970
        %v5076 = vadd.f32 %v4476, %v4792
        %v5077 = vadd.f32 %v4477, %v4794
        %v5078 = vadd.f32 %v4478, %v4796
        %v5079 = vadd.f32 %v4479, %v4795
        %v5080 = vadd.f32 %v4480, %v4799
        %v5081 = vadd.f32 %v4481, %v4801
        %v5082 = vadd.f32 %v4482, %v4803
        %v5083 = vadd.f32 %v4483, %v4802
        %v5084 = vadd.f32 %v4484, %v4806
        %v5085 = vadd.f32 %v4485, %v4808
        %v5086 = vadd.f32 %v4486, %v4810
        %v5087 = vadd.f32 %v4487, %v4809
        %v5088 = vadd.f32 %v4488, %v4813
        %v5089 = vadd.f32 %v4489, %v4815
        %v5090 = vadd.f32 %v4490, %v4817
        %v5091 = vadd.f32 %v4491, %v4816
        %v5092 = vadd.f32 %v4492, %v4820
        %v5093 = vadd.f32 %v4493, %v4822
        %v5094 = vadd.f32 %v4494, %v4824
        %v5095 = vadd.f32 %v4495, %v4823
        %v5096 = vadd.f32 %v4496, %v4827
        %v5097 = vadd.f32 %v4497, %v4829
        %v5098 = vadd.f32 %v4498, %v4831
        %v5099 = vadd.f32 %v4499, %v4830
        %v5100 = vadd.f32 %v4500, %v4834
        %v5101 = vadd.f32 %v4501, %v4836
        %v5102 = vadd.f32 %v4502, %v4838
        %v5103 = vadd.f32 %v4503, %v4837
        %v5104 = vadd.f32 %v4504, %v4841
        %v5105 = vadd.f32 %v4505, %v4843
        %v5106 = vadd.f32 %v4506, %v4845
        %v5107 = vadd.f32 %v4507, %v4844
        %v5108 = vadd.f32 %v4508, %v4848
        %v5109 = vadd.f32 %v4509, %v4850
        %v5110 = vadd.f32 %v4510, %v4852
        %v5111 = vadd.f32 %v4511, %v4851
        %v5112 = vadd.f32 %v4512, %v4855
        %v5113 = vadd.f32 %v4513, %v4857
        %v5114 = vadd.f32 %v4514, %v4859
        %v5115 = vadd.f32 %v4515, %v4858
        %v5116 = vadd.f32 %v4516, %v4862
        %v5117 = vadd.f32 %v4517, %v4864
        %v5118 = vadd.f32 %v4518, %v4866
        %v5119 = vadd.f32 %v4519, %v4865
        %v5120 = vadd.f32 %v4520, %v4869
        %v5121 = vadd.f32 %v4521, %v4871
        %v5122 = vadd.f32 %v4522, %v4873
        %v5123 = vadd.f32 %v4523, %v4872
        %v5124 = vadd.f32 %v4524, %v4876
        %v5125 = vadd.f32 %v4525, %v4878
        %v5126 = vadd.f32 %v4526, %v4880
        %v5127 = vadd.f32 %v4527, %v4879
        %v5128 = vadd.f32 %v4528, %v4883
        %v5129 = vadd.f32 %v4529, %v4885
        %v5130 = vadd.f32 %v4530, %v4887
        %v5131 = vadd.f32 %v4531, %v4886
        %v5132 = vadd.f32 %v4532, %v4890
        %v5133 = vadd.f32 %v4533, %v4892
        %v5134 = vadd.f32 %v4534, %v4894
        %v5135 = vadd.f32 %v4535, %v4893
        %v5136 = vadd.f32 %v4536, %v4897
        %v5137 = vadd.f32 %v4537, %v4899
        %v5138 = vadd.f32 %v4538, %v4901
        %v5139 = vadd.f32 %v4539, %v4900
        %v5140 = vadd.f32 %v4540, %v4904
        %v5141 = vadd.f32 %v4541, %v4906
        %v5142 = vadd.f32 %v4542, %v4908
        %v5143 = vadd.f32 %v4543, %v4907
        %v5144 = vadd.f32 %v4544, %v4911
        %v5145 = vadd.f32 %v4545, %v4913
        %v5146 = vadd.f32 %v4546, %v4915
        %v5147 = vadd.f32 %v4547, %v4914
        %v5148 = vadd.f32 %v4548, %v4918
        %v5149 = vadd.f32 %v4549, %v4920
        %v5150 = vadd.f32 %v4550, %v4922
        %v5151 = vadd.f32 %v4551, %v4921
        %v5152 = vadd.f32 %v4552, %v4925
        %v5153 = vadd.f32 %v4553, %v4927
        %v5154 = vadd.f32 %v4554, %v4929
        %v5155 = vadd.f32 %v4555, %v4928
        %v5156 = vadd.f32 %v4556, %v4932
        %v5157 = vadd.f32 %v4557, %v4934
        %v5158 = vadd.f32 %v4558, %v4936
        %v5159 = vadd.f32 %v4559, %v4935
        %v5160 = vadd.f32 %v4560, %v4939
        %v5161 = vadd.f32 %v4561, %v4941
        %v5162 = vadd.f32 %v4562, %v4943
        %v5163 = vadd.f32 %v4563, %v4942
        %v5164 = vadd.f32 %v4564, %v4946
        %v5165 = vadd.f32 %v4565, %v4948
        %v5166 = vadd.f32 %v4566, %v4950
        %v5167 = vadd.f32 %v4567, %v4949
        %v5168 = vadd.f32 %v4568, %v4953
        %v5169 = vadd.f32 %v4569, %v4955
        %v5170 = vadd.f32 %v4570, %v4957
        %v5171 = vadd.f32 %v4571, %v4956
        %v5172 = vadd.f32 %v4572, %v4960
        %v5173 = vadd.f32 %v4573, %v4962
        %v5174 = vadd.f32 %v4574, %v4964
        %v5175 = vadd.f32 %v4575, %v4963
        %v5176 = vadd.f32 %v4576, %v4967
        %v5177 = vadd.f32 %v4577, %v4969
        %v5178 = vadd.f32 %v4578, %v4971
        %v5179 = vadd.f32 %v4579, %v4970
        %v5180 = vld [vmem:[%s2] sm:$0x1]
        %v5182 = vperm.slane %v5180, 0
        %v5184 = vadd.f32 %v5076, %v5182
        %v5185 = vadd.f32 %v5077, %v5182
        %v5186 = vadd.f32 %v5078, %v5182
        %v5187 = vadd.f32 %v5079, %v5182
        %v5188 = vadd.f32 %v5080, %v5182
        %v5189 = vadd.f32 %v5081, %v5182
        %v5190 = vadd.f32 %v5082, %v5182
        %v5191 = vadd.f32 %v5083, %v5182
        %v5192 = vadd.f32 %v5084, %v5182
        %v5193 = vadd.f32 %v5085, %v5182
        %v5194 = vadd.f32 %v5086, %v5182
        %v5195 = vadd.f32 %v5087, %v5182
        %v5196 = vadd.f32 %v5088, %v5182
        %v5197 = vadd.f32 %v5089, %v5182
        %v5198 = vadd.f32 %v5090, %v5182
        %v5199 = vadd.f32 %v5091, %v5182
        %v5200 = vadd.f32 %v5092, %v5182
        %v5201 = vadd.f32 %v5093, %v5182
        %v5202 = vadd.f32 %v5094, %v5182
        %v5203 = vadd.f32 %v5095, %v5182
        %v5204 = vadd.f32 %v5096, %v5182
        %v5205 = vadd.f32 %v5097, %v5182
        %v5206 = vadd.f32 %v5098, %v5182
        %v5207 = vadd.f32 %v5099, %v5182
        %v5208 = vadd.f32 %v5100, %v5182
        %v5209 = vadd.f32 %v5101, %v5182
        %v5210 = vadd.f32 %v5102, %v5182
        %v5211 = vadd.f32 %v5103, %v5182
        %v5212 = vadd.f32 %v5104, %v5182
        %v5213 = vadd.f32 %v5105, %v5182
        %v5214 = vadd.f32 %v5106, %v5182
        %v5215 = vadd.f32 %v5107, %v5182
        %v5216 = vadd.f32 %v5108, %v5182
        %v5217 = vadd.f32 %v5109, %v5182
        %v5218 = vadd.f32 %v5110, %v5182
        %v5219 = vadd.f32 %v5111, %v5182
        %v5220 = vadd.f32 %v5112, %v5182
        %v5221 = vadd.f32 %v5113, %v5182
        %v5222 = vadd.f32 %v5114, %v5182
        %v5223 = vadd.f32 %v5115, %v5182
        %v5224 = vadd.f32 %v5116, %v5182
        %v5225 = vadd.f32 %v5117, %v5182
        %v5226 = vadd.f32 %v5118, %v5182
        %v5227 = vadd.f32 %v5119, %v5182
        %v5228 = vadd.f32 %v5120, %v5182
        %v5229 = vadd.f32 %v5121, %v5182
        %v5230 = vadd.f32 %v5122, %v5182
        %v5231 = vadd.f32 %v5123, %v5182
        %v5232 = vadd.f32 %v5124, %v5182
        %v5233 = vadd.f32 %v5125, %v5182
        %v5234 = vadd.f32 %v5126, %v5182
        %v5235 = vadd.f32 %v5127, %v5182
        %v5236 = vadd.f32 %v5128, %v5182
        %v5237 = vadd.f32 %v5129, %v5182
        %v5238 = vadd.f32 %v5130, %v5182
        %v5239 = vadd.f32 %v5131, %v5182
        %v5240 = vadd.f32 %v5132, %v5182
        %v5241 = vadd.f32 %v5133, %v5182
        %v5242 = vadd.f32 %v5134, %v5182
        %v5243 = vadd.f32 %v5135, %v5182
        %v5244 = vadd.f32 %v5136, %v5182
        %v5245 = vadd.f32 %v5137, %v5182
        %v5246 = vadd.f32 %v5138, %v5182
        %v5247 = vadd.f32 %v5139, %v5182
        %v5248 = vadd.f32 %v5140, %v5182
        %v5249 = vadd.f32 %v5141, %v5182
        %v5250 = vadd.f32 %v5142, %v5182
        %v5251 = vadd.f32 %v5143, %v5182
        %v5252 = vadd.f32 %v5144, %v5182
        %v5253 = vadd.f32 %v5145, %v5182
        %v5254 = vadd.f32 %v5146, %v5182
        %v5255 = vadd.f32 %v5147, %v5182
        %v5256 = vadd.f32 %v5148, %v5182
        %v5257 = vadd.f32 %v5149, %v5182
        %v5258 = vadd.f32 %v5150, %v5182
        %v5259 = vadd.f32 %v5151, %v5182
        %v5260 = vadd.f32 %v5152, %v5182
        %v5261 = vadd.f32 %v5153, %v5182
        %v5262 = vadd.f32 %v5154, %v5182
        %v5263 = vadd.f32 %v5155, %v5182
        %v5264 = vadd.f32 %v5156, %v5182
        %v5265 = vadd.f32 %v5157, %v5182
        %v5266 = vadd.f32 %v5158, %v5182
        %v5267 = vadd.f32 %v5159, %v5182
        %v5268 = vadd.f32 %v5160, %v5182
        %v5269 = vadd.f32 %v5161, %v5182
        %v5270 = vadd.f32 %v5162, %v5182
        %v5271 = vadd.f32 %v5163, %v5182
        %v5272 = vadd.f32 %v5164, %v5182
        %v5273 = vadd.f32 %v5165, %v5182
        %v5274 = vadd.f32 %v5166, %v5182
        %v5275 = vadd.f32 %v5167, %v5182
        %v5276 = vadd.f32 %v5168, %v5182
        %v5277 = vadd.f32 %v5169, %v5182
        %v5278 = vadd.f32 %v5170, %v5182
        %v5279 = vadd.f32 %v5171, %v5182
        %v5280 = vadd.f32 %v5172, %v5182
        %v5281 = vadd.f32 %v5173, %v5182
        %v5282 = vadd.f32 %v5174, %v5182
        %v5283 = vadd.f32 %v5175, %v5182
        %v5284 = vadd.f32 %v5176, %v5182
        %v5285 = vadd.f32 %v5177, %v5182
        %v5286 = vadd.f32 %v5178, %v5182
        %v5287 = vadd.f32 %v5179, %v5182
        %v5288 = vmax.f32 %v5184, 0.0
        %v5289 = vmax.f32 %v5185, 0.0
        %v5290 = vmax.f32 %v5186, 0.0
        %v5291 = vmax.f32 %v5187, 0.0
        %v5292 = vmax.f32 %v5188, 0.0
        %v5293 = vmax.f32 %v5189, 0.0
        %v5294 = vmax.f32 %v5190, 0.0
        %v5295 = vmax.f32 %v5191, 0.0
        %v5296 = vmax.f32 %v5192, 0.0
        %v5297 = vmax.f32 %v5193, 0.0
        %v5298 = vmax.f32 %v5194, 0.0
        %v5299 = vmax.f32 %v5195, 0.0
        %v5300 = vmax.f32 %v5196, 0.0
        %v5301 = vmax.f32 %v5197, 0.0
        %v5302 = vmax.f32 %v5198, 0.0
        %v5303 = vmax.f32 %v5199, 0.0
        %v5304 = vmax.f32 %v5200, 0.0
        %v5305 = vmax.f32 %v5201, 0.0
        %v5306 = vmax.f32 %v5202, 0.0
        %v5307 = vmax.f32 %v5203, 0.0
        %v5308 = vmax.f32 %v5204, 0.0
        %v5309 = vmax.f32 %v5205, 0.0
        %v5310 = vmax.f32 %v5206, 0.0
        %v5311 = vmax.f32 %v5207, 0.0
        %v5312 = vmax.f32 %v5208, 0.0
        %v5313 = vmax.f32 %v5209, 0.0
        %v5314 = vmax.f32 %v5210, 0.0
        %v5315 = vmax.f32 %v5211, 0.0
        %v5316 = vmax.f32 %v5212, 0.0
        %v5317 = vmax.f32 %v5213, 0.0
        %v5318 = vmax.f32 %v5214, 0.0
        %v5319 = vmax.f32 %v5215, 0.0
        %v5320 = vmax.f32 %v5216, 0.0
        %v5321 = vmax.f32 %v5217, 0.0
        %v5322 = vmax.f32 %v5218, 0.0
        %v5323 = vmax.f32 %v5219, 0.0
        %v5324 = vmax.f32 %v5220, 0.0
        %v5325 = vmax.f32 %v5221, 0.0
        %v5326 = vmax.f32 %v5222, 0.0
        %v5327 = vmax.f32 %v5223, 0.0
        %v5328 = vmax.f32 %v5224, 0.0
        %v5329 = vmax.f32 %v5225, 0.0
        %v5330 = vmax.f32 %v5226, 0.0
        %v5331 = vmax.f32 %v5227, 0.0
        %v5332 = vmax.f32 %v5228, 0.0
        %v5333 = vmax.f32 %v5229, 0.0
        %v5334 = vmax.f32 %v5230, 0.0
        %v5335 = vmax.f32 %v5231, 0.0
        %v5336 = vmax.f32 %v5232, 0.0
        %v5337 = vmax.f32 %v5233, 0.0
        %v5338 = vmax.f32 %v5234, 0.0
        %v5339 = vmax.f32 %v5235, 0.0
        %v5340 = vmax.f32 %v5236, 0.0
        %v5341 = vmax.f32 %v5237, 0.0
        %v5342 = vmax.f32 %v5238, 0.0
        %v5343 = vmax.f32 %v5239, 0.0
        %v5344 = vmax.f32 %v5240, 0.0
        %v5345 = vmax.f32 %v5241, 0.0
        %v5346 = vmax.f32 %v5242, 0.0
        %v5347 = vmax.f32 %v5243, 0.0
        %v5348 = vmax.f32 %v5244, 0.0
        %v5349 = vmax.f32 %v5245, 0.0
        %v5350 = vmax.f32 %v5246, 0.0
        %v5351 = vmax.f32 %v5247, 0.0
        %v5352 = vmax.f32 %v5248, 0.0
        %v5353 = vmax.f32 %v5249, 0.0
        %v5354 = vmax.f32 %v5250, 0.0
        %v5355 = vmax.f32 %v5251, 0.0
        %v5356 = vmax.f32 %v5252, 0.0
        %v5357 = vmax.f32 %v5253, 0.0
        %v5358 = vmax.f32 %v5254, 0.0
        %v5359 = vmax.f32 %v5255, 0.0
        %v5360 = vmax.f32 %v5256, 0.0
        %v5361 = vmax.f32 %v5257, 0.0
        %v5362 = vmax.f32 %v5258, 0.0
        %v5363 = vmax.f32 %v5259, 0.0
        %v5364 = vmax.f32 %v5260, 0.0
        %v5365 = vmax.f32 %v5261, 0.0
        %v5366 = vmax.f32 %v5262, 0.0
        %v5367 = vmax.f32 %v5263, 0.0
        %v5368 = vmax.f32 %v5264, 0.0
        %v5369 = vmax.f32 %v5265, 0.0
        %v5370 = vmax.f32 %v5266, 0.0
        %v5371 = vmax.f32 %v5267, 0.0
        %v5372 = vmax.f32 %v5268, 0.0
        %v5373 = vmax.f32 %v5269, 0.0
        %v5374 = vmax.f32 %v5270, 0.0
        %v5375 = vmax.f32 %v5271, 0.0
        %v5376 = vmax.f32 %v5272, 0.0
        %v5377 = vmax.f32 %v5273, 0.0
        %v5378 = vmax.f32 %v5274, 0.0
        %v5379 = vmax.f32 %v5275, 0.0
        %v5380 = vmax.f32 %v5276, 0.0
        %v5381 = vmax.f32 %v5277, 0.0
        %v5382 = vmax.f32 %v5278, 0.0
        %v5383 = vmax.f32 %v5279, 0.0
        %v5384 = vmax.f32 %v5280, 0.0
        %v5385 = vmax.f32 %v5281, 0.0
        %v5386 = vmax.f32 %v5282, 0.0
        %v5387 = vmax.f32 %v5283, 0.0
        %v5388 = vmax.f32 %v5284, 0.0
        %v5389 = vmax.f32 %v5285, 0.0
        %v5390 = vmax.f32 %v5286, 0.0
        %v5391 = vmax.f32 %v5287, 0.0
        %vm5392 = vcmask 261120
        %5393 = vst.msk [vmem:[#allocation2] sm:$0xff] %vm5392, %v5288
        %5394 = vst.msk [vmem:[#allocation2 + $0x8] sm:$0xff] %vm5392, %v5289
        %5395 = vst.msk [vmem:[#allocation2 + $0x10] sm:$0xff] %vm5392, %v5290
        %vm5396 = vcmask 254976
        %5397 = vst.msk [vmem:[#allocation2 + $0x18] sm:$0x3] %vm5396, %v5291
        %5398 = vst.msk [vmem:[#allocation2 + $0x20] sm:$0xff] %vm5392, %v5292
        %5399 = vst.msk [vmem:[#allocation2 + $0x28] sm:$0xff] %vm5392, %v5293
        %5400 = vst.msk [vmem:[#allocation2 + $0x30] sm:$0xff] %vm5392, %v5294
        %5401 = vst.msk [vmem:[#allocation2 + $0x38] sm:$0x3] %vm5396, %v5295
        %5402 = vst.msk [vmem:[#allocation2 + $0x40] sm:$0xff] %vm5392, %v5296
        %5403 = vst.msk [vmem:[#allocation2 + $0x48] sm:$0xff] %vm5392, %v5297
        %5404 = vst.msk [vmem:[#allocation2 + $0x50] sm:$0xff] %vm5392, %v5298
        %5405 = vst.msk [vmem:[#allocation2 + $0x58] sm:$0x3] %vm5396, %v5299
        %5406 = vst.msk [vmem:[#allocation2 + $0x60] sm:$0xff] %vm5392, %v5300
        %5407 = vst.msk [vmem:[#allocation2 + $0x68] sm:$0xff] %vm5392, %v5301
        %5408 = vst.msk [vmem:[#allocation2 + $0x70] sm:$0xff] %vm5392, %v5302
        %5409 = vst.msk [vmem:[#allocation2 + $0x78] sm:$0x3] %vm5396, %v5303
        %5410 = vst.msk [vmem:[#allocation2 + $0x80] sm:$0xff] %vm5392, %v5304
        %5411 = vst.msk [vmem:[#allocation2 + $0x88] sm:$0xff] %vm5392, %v5305
        %5412 = vst.msk [vmem:[#allocation2 + $0x90] sm:$0xff] %vm5392, %v5306
        %5413 = vst.msk [vmem:[#allocation2 + $0x98] sm:$0x3] %vm5396, %v5307
        %5414 = vst.msk [vmem:[#allocation2 + $0xa0] sm:$0xff] %vm5392, %v5308
        %5415 = vst.msk [vmem:[#allocation2 + $0xa8] sm:$0xff] %vm5392, %v5309
        %5416 = vst.msk [vmem:[#allocation2 + $0xb0] sm:$0xff] %vm5392, %v5310
        %5417 = vst.msk [vmem:[#allocation2 + $0xb8] sm:$0x3] %vm5396, %v5311
        %5418 = vst.msk [vmem:[#allocation2 + $0xc0] sm:$0xff] %vm5392, %v5312
        %5419 = vst.msk [vmem:[#allocation2 + $0xc8] sm:$0xff] %vm5392, %v5313
        %5420 = vst.msk [vmem:[#allocation2 + $0xd0] sm:$0xff] %vm5392, %v5314
        %5421 = vst.msk [vmem:[#allocation2 + $0xd8] sm:$0x3] %vm5396, %v5315
        %5422 = vst.msk [vmem:[#allocation2 + $0xe0] sm:$0xff] %vm5392, %v5316
        %5423 = vst.msk [vmem:[#allocation2 + $0xe8] sm:$0xff] %vm5392, %v5317
        %5424 = vst.msk [vmem:[#allocation2 + $0xf0] sm:$0xff] %vm5392, %v5318
        %5425 = vst.msk [vmem:[#allocation2 + $0xf8] sm:$0x3] %vm5396, %v5319
        %5426 = vst.msk [vmem:[#allocation2 + $0x100] sm:$0xff] %vm5392, %v5320
        %5427 = vst.msk [vmem:[#allocation2 + $0x108] sm:$0xff] %vm5392, %v5321
        %5428 = vst.msk [vmem:[#allocation2 + $0x110] sm:$0xff] %vm5392, %v5322
        %5429 = vst.msk [vmem:[#allocation2 + $0x118] sm:$0x3] %vm5396, %v5323
        %5430 = vst.msk [vmem:[#allocation2 + $0x120] sm:$0xff] %vm5392, %v5324
        %5431 = vst.msk [vmem:[#allocation2 + $0x128] sm:$0xff] %vm5392, %v5325
        %5432 = vst.msk [vmem:[#allocation2 + $0x130] sm:$0xff] %vm5392, %v5326
        %5433 = vst.msk [vmem:[#allocation2 + $0x138] sm:$0x3] %vm5396, %v5327
        %5434 = vst.msk [vmem:[#allocation2 + $0x140] sm:$0xff] %vm5392, %v5328
        %5435 = vst.msk [vmem:[#allocation2 + $0x148] sm:$0xff] %vm5392, %v5329
        %5436 = vst.msk [vmem:[#allocation2 + $0x150] sm:$0xff] %vm5392, %v5330
        %5437 = vst.msk [vmem:[#allocation2 + $0x158] sm:$0x3] %vm5396, %v5331
        %5438 = vst.msk [vmem:[#allocation2 + $0x160] sm:$0xff] %vm5392, %v5332
        %5439 = vst.msk [vmem:[#allocation2 + $0x168] sm:$0xff] %vm5392, %v5333
        %5440 = vst.msk [vmem:[#allocation2 + $0x170] sm:$0xff] %vm5392, %v5334
        %5441 = vst.msk [vmem:[#allocation2 + $0x178] sm:$0x3] %vm5396, %v5335
        %5442 = vst.msk [vmem:[#allocation2 + $0x180] sm:$0xff] %vm5392, %v5336
        %5443 = vst.msk [vmem:[#allocation2 + $0x188] sm:$0xff] %vm5392, %v5337
        %5444 = vst.msk [vmem:[#allocation2 + $0x190] sm:$0xff] %vm5392, %v5338
        %5445 = vst.msk [vmem:[#allocation2 + $0x198] sm:$0x3] %vm5396, %v5339
        %5446 = vst.msk [vmem:[#allocation2 + $0x1a0] sm:$0xff] %vm5392, %v5340
        %5447 = vst.msk [vmem:[#allocation2 + $0x1a8] sm:$0xff] %vm5392, %v5341
        %5448 = vst.msk [vmem:[#allocation2 + $0x1b0] sm:$0xff] %vm5392, %v5342
        %5449 = vst.msk [vmem:[#allocation2 + $0x1b8] sm:$0x3] %vm5396, %v5343
        %5450 = vst.msk [vmem:[#allocation2 + $0x1c0] sm:$0xff] %vm5392, %v5344
        %5451 = vst.msk [vmem:[#allocation2 + $0x1c8] sm:$0xff] %vm5392, %v5345
        %5452 = vst.msk [vmem:[#allocation2 + $0x1d0] sm:$0xff] %vm5392, %v5346
        %5453 = vst.msk [vmem:[#allocation2 + $0x1d8] sm:$0x3] %vm5396, %v5347
        %5454 = vst.msk [vmem:[#allocation2 + $0x1e0] sm:$0xff] %vm5392, %v5348
        %5455 = vst.msk [vmem:[#allocation2 + $0x1e8] sm:$0xff] %vm5392, %v5349
        %5456 = vst.msk [vmem:[#allocation2 + $0x1f0] sm:$0xff] %vm5392, %v5350
        %5457 = vst.msk [vmem:[#allocation2 + $0x1f8] sm:$0x3] %vm5396, %v5351
        %5458 = vst.msk [vmem:[#allocation2 + $0x200] sm:$0xff] %vm5392, %v5352
        %5459 = vst.msk [vmem:[#allocation2 + $0x208] sm:$0xff] %vm5392, %v5353
        %5460 = vst.msk [vmem:[#allocation2 + $0x210] sm:$0xff] %vm5392, %v5354
        %5461 = vst.msk [vmem:[#allocation2 + $0x218] sm:$0x3] %vm5396, %v5355
        %5462 = vst.msk [vmem:[#allocation2 + $0x220] sm:$0xff] %vm5392, %v5356
        %5463 = vst.msk [vmem:[#allocation2 + $0x228] sm:$0xff] %vm5392, %v5357
        %5464 = vst.msk [vmem:[#allocation2 + $0x230] sm:$0xff] %vm5392, %v5358
        %5465 = vst.msk [vmem:[#allocation2 + $0x238] sm:$0x3] %vm5396, %v5359
        %5466 = vst.msk [vmem:[#allocation2 + $0x240] sm:$0xff] %vm5392, %v5360
        %5467 = vst.msk [vmem:[#allocation2 + $0x248] sm:$0xff] %vm5392, %v5361
        %5468 = vst.msk [vmem:[#allocation2 + $0x250] sm:$0xff] %vm5392, %v5362
        %5469 = vst.msk [vmem:[#allocation2 + $0x258] sm:$0x3] %vm5396, %v5363
        %5470 = vst.msk [vmem:[#allocation2 + $0x260] sm:$0xff] %vm5392, %v5364
        %5471 = vst.msk [vmem:[#allocation2 + $0x268] sm:$0xff] %vm5392, %v5365
        %5472 = vst.msk [vmem:[#allocation2 + $0x270] sm:$0xff] %vm5392, %v5366
        %5473 = vst.msk [vmem:[#allocation2 + $0x278] sm:$0x3] %vm5396, %v5367
        %5474 = vst.msk [vmem:[#allocation2 + $0x280] sm:$0xff] %vm5392, %v5368
        %5475 = vst.msk [vmem:[#allocation2 + $0x288] sm:$0xff] %vm5392, %v5369
        %5476 = vst.msk [vmem:[#allocation2 + $0x290] sm:$0xff] %vm5392, %v5370
        %5477 = vst.msk [vmem:[#allocation2 + $0x298] sm:$0x3] %vm5396, %v5371
        %5478 = vst.msk [vmem:[#allocation2 + $0x2a0] sm:$0xff] %vm5392, %v5372
        %5479 = vst.msk [vmem:[#allocation2 + $0x2a8] sm:$0xff] %vm5392, %v5373
        %5480 = vst.msk [vmem:[#allocation2 + $0x2b0] sm:$0xff] %vm5392, %v5374
        %5481 = vst.msk [vmem:[#allocation2 + $0x2b8] sm:$0x3] %vm5396, %v5375
        %5482 = vst.msk [vmem:[#allocation2 + $0x2c0] sm:$0xff] %vm5392, %v5376
        %5483 = vst.msk [vmem:[#allocation2 + $0x2c8] sm:$0xff] %vm5392, %v5377
        %5484 = vst.msk [vmem:[#allocation2 + $0x2d0] sm:$0xff] %vm5392, %v5378
        %5485 = vst.msk [vmem:[#allocation2 + $0x2d8] sm:$0x3] %vm5396, %v5379
        %5486 = vst.msk [vmem:[#allocation2 + $0x2e0] sm:$0xff] %vm5392, %v5380
        %5487 = vst.msk [vmem:[#allocation2 + $0x2e8] sm:$0xff] %vm5392, %v5381
        %5488 = vst.msk [vmem:[#allocation2 + $0x2f0] sm:$0xff] %vm5392, %v5382
        %5489 = vst.msk [vmem:[#allocation2 + $0x2f8] sm:$0x3] %vm5396, %v5383
        %5490 = vst.msk [vmem:[#allocation2 + $0x300] sm:$0xff] %vm5392, %v5384
        %5491 = vst.msk [vmem:[#allocation2 + $0x308] sm:$0xff] %vm5392, %v5385
        %5492 = vst.msk [vmem:[#allocation2 + $0x310] sm:$0xff] %vm5392, %v5386
        %5493 = vst.msk [vmem:[#allocation2 + $0x318] sm:$0x3] %vm5396, %v5387
        %5494 = vst.msk [vmem:[#allocation2 + $0x320] sm:$0xff] %vm5392, %v5388
        %5495 = vst.msk [vmem:[#allocation2 + $0x328] sm:$0xff] %vm5392, %v5389
        %5496 = vst.msk [vmem:[#allocation2 + $0x330] sm:$0xff] %vm5392, %v5390
        %5497 = vst.msk [vmem:[#allocation2 + $0x338] sm:$0x3] %vm5396, %v5391
        %v5498 = vld [vmem:[#allocation2] sm:$0xff]
        %v5499 = vld [vmem:[#allocation2 + $0x8] sm:$0xff]
        %v5500 = vld [vmem:[#allocation2 + $0x10] sm:$0xff]
        %v5501 = vld [vmem:[#allocation2 + $0x20] sm:$0xff]
        %v5502 = vld [vmem:[#allocation2 + $0x28] sm:$0xff]
        %v5503 = vld [vmem:[#allocation2 + $0x30] sm:$0xff]
        %v5504 = vld [vmem:[#allocation2 + $0x40] sm:$0xff]
        %v5505 = vld [vmem:[#allocation2 + $0x48] sm:$0xff]
        %v5506 = vld [vmem:[#allocation2 + $0x50] sm:$0xff]
        %v5507 = vld [vmem:[#allocation2 + $0x60] sm:$0xff]
        %v5508 = vld [vmem:[#allocation2 + $0x68] sm:$0xff]
        %v5509 = vld [vmem:[#allocation2 + $0x70] sm:$0xff]
        %v5510 = vld [vmem:[#allocation2 + $0x80] sm:$0xff]
        %v5511 = vld [vmem:[#allocation2 + $0x88] sm:$0xff]
        %v5512 = vld [vmem:[#allocation2 + $0x90] sm:$0xff]
        %v5513 = vld [vmem:[#allocation2 + $0xa0] sm:$0xff]
        %v5514 = vld [vmem:[#allocation2 + $0xa8] sm:$0xff]
        %v5515 = vld [vmem:[#allocation2 + $0xb0] sm:$0xff]
        %v5516 = vld [vmem:[#allocation2 + $0xc0] sm:$0xff]
        %v5517 = vld [vmem:[#allocation2 + $0xc8] sm:$0xff]
        %v5518 = vld [vmem:[#allocation2 + $0xd0] sm:$0xff]
        %v5519 = vld [vmem:[#allocation2 + $0xe0] sm:$0xff]
        %v5520 = vld [vmem:[#allocation2 + $0xe8] sm:$0xff]
        %v5521 = vld [vmem:[#allocation2 + $0xf0] sm:$0xff]
        %v5522 = vld [vmem:[#allocation2 + $0x100] sm:$0xff]
        %v5523 = vld [vmem:[#allocation2 + $0x108] sm:$0xff]
        %v5524 = vld [vmem:[#allocation2 + $0x110] sm:$0xff]
        %v5525 = vld [vmem:[#allocation2 + $0x120] sm:$0xff]
        %v5526 = vld [vmem:[#allocation2 + $0x128] sm:$0xff]
        %v5527 = vld [vmem:[#allocation2 + $0x130] sm:$0xff]
        %v5528 = vld [vmem:[#allocation2 + $0x140] sm:$0xff]
        %v5529 = vld [vmem:[#allocation2 + $0x148] sm:$0xff]
        %v5530 = vld [vmem:[#allocation2 + $0x150] sm:$0xff]
        %v5531 = vld [vmem:[#allocation2 + $0x160] sm:$0xff]
        %v5532 = vld [vmem:[#allocation2 + $0x168] sm:$0xff]
        %v5533 = vld [vmem:[#allocation2 + $0x170] sm:$0xff]
        %v5534 = vld [vmem:[#allocation2 + $0x180] sm:$0xff]
        %v5535 = vld [vmem:[#allocation2 + $0x188] sm:$0xff]
        %v5536 = vld [vmem:[#allocation2 + $0x190] sm:$0xff]
        %v5537 = vld [vmem:[#allocation2 + $0x1a0] sm:$0xff]
        %v5538 = vld [vmem:[#allocation2 + $0x1a8] sm:$0xff]
        %v5539 = vld [vmem:[#allocation2 + $0x1b0] sm:$0xff]
        %v5540 = vld [vmem:[#allocation2 + $0x1c0] sm:$0xff]
        %v5541 = vld [vmem:[#allocation2 + $0x1c8] sm:$0xff]
        %v5542 = vld [vmem:[#allocation2 + $0x1d0] sm:$0xff]
        %v5543 = vld [vmem:[#allocation2 + $0x1e0] sm:$0xff]
        %v5544 = vld [vmem:[#allocation2 + $0x1e8] sm:$0xff]
        %v5545 = vld [vmem:[#allocation2 + $0x1f0] sm:$0xff]
        %v5546 = vld [vmem:[#allocation2 + $0x200] sm:$0xff]
        %v5547 = vld [vmem:[#allocation2 + $0x208] sm:$0xff]
        %v5548 = vld [vmem:[#allocation2 + $0x210] sm:$0xff]
        %v5549 = vld [vmem:[#allocation2 + $0x220] sm:$0xff]
        %v5550 = vld [vmem:[#allocation2 + $0x228] sm:$0xff]
        %v5551 = vld [vmem:[#allocation2 + $0x230] sm:$0xff]
        %v5552 = vld [vmem:[#allocation2 + $0x240] sm:$0xff]
        %v5553 = vld [vmem:[#allocation2 + $0x248] sm:$0xff]
        %v5554 = vld [vmem:[#allocation2 + $0x250] sm:$0xff]
        %v5555 = vld [vmem:[#allocation2 + $0x260] sm:$0xff]
        %v5556 = vld [vmem:[#allocation2 + $0x268] sm:$0xff]
        %v5557 = vld [vmem:[#allocation2 + $0x270] sm:$0xff]
        %v5558 = vld [vmem:[#allocation2 + $0x280] sm:$0xff]
        %v5559 = vld [vmem:[#allocation2 + $0x288] sm:$0xff]
        %v5560 = vld [vmem:[#allocation2 + $0x290] sm:$0xff]
        %v5561 = vld [vmem:[#allocation2 + $0x2a0] sm:$0xff]
        %v5562 = vld [vmem:[#allocation2 + $0x2a8] sm:$0xff]
        %v5563 = vld [vmem:[#allocation2 + $0x2b0] sm:$0xff]
        %v5564 = vld [vmem:[#allocation2 + $0x2c0] sm:$0xff]
        %v5565 = vld [vmem:[#allocation2 + $0x2c8] sm:$0xff]
        %v5566 = vld [vmem:[#allocation2 + $0x2d0] sm:$0xff]
        %v5567 = vld [vmem:[#allocation2 + $0x2e0] sm:$0xff]
        %v5568 = vld [vmem:[#allocation2 + $0x2e8] sm:$0xff]
        %v5569 = vld [vmem:[#allocation2 + $0x2f0] sm:$0xff]
        %v5570 = vld [vmem:[#allocation3] sm:$0xff]
        %v5571 = vld [vmem:[#allocation3 + $0x8] sm:$0xff]
        %v5572 = vld [vmem:[#allocation3 + $0x10] sm:$0xff]
        %v5573 = vld [vmem:[#allocation3 + $0x18] sm:$0xff]
        %v5574 = vld [vmem:[#allocation2 + $0x1] sm:$0xff]
        %v5575 = vld [vmem:[#allocation2 + $0x9] sm:$0xff]
        %v5576 = vld [vmem:[#allocation2 + $0x11] sm:$0xff]
        %v5577 = vld [vmem:[#allocation2 + $0x21] sm:$0xff]
        %v5578 = vld [vmem:[#allocation2 + $0x29] sm:$0xff]
        %v5579 = vld [vmem:[#allocation2 + $0x31] sm:$0xff]
        %v5580 = vld [vmem:[#allocation2 + $0x41] sm:$0xff]
        %v5581 = vld [vmem:[#allocation2 + $0x49] sm:$0xff]
        %v5582 = vld [vmem:[#allocation2 + $0x51] sm:$0xff]
        %v5583 = vld [vmem:[#allocation2 + $0x61] sm:$0xff]
        %v5584 = vld [vmem:[#allocation2 + $0x69] sm:$0xff]
        %v5585 = vld [vmem:[#allocation2 + $0x71] sm:$0xff]
        %v5586 = vld [vmem:[#allocation2 + $0x81] sm:$0xff]
        %v5587 = vld [vmem:[#allocation2 + $0x89] sm:$0xff]
        %v5588 = vld [vmem:[#allocation2 + $0x91] sm:$0xff]
        %v5589 = vld [vmem:[#allocation2 + $0xa1] sm:$0xff]
        %v5590 = vld [vmem:[#allocation2 + $0xa9] sm:$0xff]
        %v5591 = vld [vmem:[#allocation2 + $0xb1] sm:$0xff]
        %v5592 = vld [vmem:[#allocation2 + $0xc1] sm:$0xff]
        %v5593 = vld [vmem:[#allocation2 + $0xc9] sm:$0xff]
        %v5594 = vld [vmem:[#allocation2 + $0xd1] sm:$0xff]
        %v5595 = vld [vmem:[#allocation2 + $0xe1] sm:$0xff]
        %v5596 = vld [vmem:[#allocation2 + $0xe9] sm:$0xff]
        %v5597 = vld [vmem:[#allocation2 + $0xf1] sm:$0xff]
        %v5598 = vld [vmem:[#allocation2 + $0x101] sm:$0xff]
        %v5599 = vld [vmem:[#allocation2 + $0x109] sm:$0xff]
        %v5600 = vld [vmem:[#allocation2 + $0x111] sm:$0xff]
        %v5601 = vld [vmem:[#allocation2 + $0x121] sm:$0xff]
        %v5602 = vld [vmem:[#allocation2 + $0x129] sm:$0xff]
        %v5603 = vld [vmem:[#allocation2 + $0x131] sm:$0xff]
        %v5604 = vld [vmem:[#allocation2 + $0x141] sm:$0xff]
        %v5605 = vld [vmem:[#allocation2 + $0x149] sm:$0xff]
        %v5606 = vld [vmem:[#allocation2 + $0x151] sm:$0xff]
        %v5607 = vld [vmem:[#allocation2 + $0x161] sm:$0xff]
        %v5608 = vld [vmem:[#allocation2 + $0x169] sm:$0xff]
        %v5609 = vld [vmem:[#allocation2 + $0x171] sm:$0xff]
        %v5610 = vld [vmem:[#allocation2 + $0x181] sm:$0xff]
        %v5611 = vld [vmem:[#allocation2 + $0x189] sm:$0xff]
        %v5612 = vld [vmem:[#allocation2 + $0x191] sm:$0xff]
        %v5613 = vld [vmem:[#allocation2 + $0x1a1] sm:$0xff]
        %v5614 = vld [vmem:[#allocation2 + $0x1a9] sm:$0xff]
        %v5615 = vld [vmem:[#allocation2 + $0x1b1] sm:$0xff]
        %v5616 = vld [vmem:[#allocation2 + $0x1c1] sm:$0xff]
        %v5617 = vld [vmem:[#allocation2 + $0x1c9] sm:$0xff]
        %v5618 = vld [vmem:[#allocation2 + $0x1d1] sm:$0xff]
        %v5619 = vld [vmem:[#allocation2 + $0x1e1] sm:$0xff]
        %v5620 = vld [vmem:[#allocation2 + $0x1e9] sm:$0xff]
        %v5621 = vld [vmem:[#allocation2 + $0x1f1] sm:$0xff]
        %v5622 = vld [vmem:[#allocation2 + $0x201] sm:$0xff]
        %v5623 = vld [vmem:[#allocation2 + $0x209] sm:$0xff]
        %v5624 = vld [vmem:[#allocation2 + $0x211] sm:$0xff]
        %v5625 = vld [vmem:[#allocation2 + $0x221] sm:$0xff]
        %v5626 = vld [vmem:[#allocation2 + $0x229] sm:$0xff]
        %v5627 = vld [vmem:[#allocation2 + $0x231] sm:$0xff]
        %v5628 = vld [vmem:[#allocation2 + $0x241] sm:$0xff]
        %v5629 = vld [vmem:[#allocation2 + $0x249] sm:$0xff]
        %v5630 = vld [vmem:[#allocation2 + $0x251] sm:$0xff]
        %v5631 = vld [vmem:[#allocation2 + $0x261] sm:$0xff]
        %v5632 = vld [vmem:[#allocation2 + $0x269] sm:$0xff]
        %v5633 = vld [vmem:[#allocation2 + $0x271] sm:$0xff]
        %v5634 = vld [vmem:[#allocation2 + $0x281] sm:$0xff]
        %v5635 = vld [vmem:[#allocation2 + $0x289] sm:$0xff]
        %v5636 = vld [vmem:[#allocation2 + $0x291] sm:$0xff]
        %v5637 = vld [vmem:[#allocation2 + $0x2a1] sm:$0xff]
        %v5638 = vld [vmem:[#allocation2 + $0x2a9] sm:$0xff]
        %v5639 = vld [vmem:[#allocation2 + $0x2b1] sm:$0xff]
        %v5640 = vld [vmem:[#allocation2 + $0x2c1] sm:$0xff]
        %v5641 = vld [vmem:[#allocation2 + $0x2c9] sm:$0xff]
        %v5642 = vld [vmem:[#allocation2 + $0x2d1] sm:$0xff]
        %v5643 = vld [vmem:[#allocation2 + $0x2e1] sm:$0xff]
        %v5644 = vld [vmem:[#allocation2 + $0x2e9] sm:$0xff]
        %v5645 = vld [vmem:[#allocation2 + $0x2f1] sm:$0xff]
        %s5646 = scalar_lea.vmem [#allocation3], 32
        %v5647 = vld [vmem:[%s5646] sm:$0xff]
        %v5648 = vld [vmem:[%s5646 + $0x8] sm:$0xff]
        %v5649 = vld [vmem:[%s5646 + $0x10] sm:$0xff]
        %v5650 = vld [vmem:[%s5646 + $0x18] sm:$0xff]
        %v5652 = vsel %vm5392, %v5574, 0
        %v5655 = vsel %vm5392, %v5575, 0
        %v5658 = vsel %vm5392, %v5576, 0
        %v5661 = vsel %vm5392, %v5577, 0
        %v5664 = vsel %vm5392, %v5578, 0
        %v5667 = vsel %vm5392, %v5579, 0
        %v5670 = vsel %vm5392, %v5580, 0
        %v5673 = vsel %vm5392, %v5581, 0
        %v5676 = vsel %vm5392, %v5582, 0
        %v5679 = vsel %vm5392, %v5583, 0
        %v5682 = vsel %vm5392, %v5584, 0
        %v5685 = vsel %vm5392, %v5585, 0
        %v5688 = vsel %vm5392, %v5586, 0
        %v5691 = vsel %vm5392, %v5587, 0
        %v5694 = vsel %vm5392, %v5588, 0
        %v5697 = vsel %vm5392, %v5589, 0
        %v5700 = vsel %vm5392, %v5590, 0
        %v5703 = vsel %vm5392, %v5591, 0
        %v5706 = vsel %vm5392, %v5592, 0
        %v5709 = vsel %vm5392, %v5593, 0
        %v5712 = vsel %vm5392, %v5594, 0
        %v5715 = vsel %vm5392, %v5595, 0
        %v5718 = vsel %vm5392, %v5596, 0
        %v5721 = vsel %vm5392, %v5597, 0
        %v5724 = vsel %vm5392, %v5598, 0
        %v5727 = vsel %vm5392, %v5599, 0
        %v5730 = vsel %vm5392, %v5600, 0
        %v5733 = vsel %vm5392, %v5601, 0
        %v5736 = vsel %vm5392, %v5602, 0
        %v5739 = vsel %vm5392, %v5603, 0
        %v5742 = vsel %vm5392, %v5604, 0
        %v5745 = vsel %vm5392, %v5605, 0
        %v5748 = vsel %vm5392, %v5606, 0
        %v5751 = vsel %vm5392, %v5607, 0
        %v5754 = vsel %vm5392, %v5608, 0
        %v5757 = vsel %vm5392, %v5609, 0
        %v5760 = vsel %vm5392, %v5610, 0
        %v5763 = vsel %vm5392, %v5611, 0
        %v5766 = vsel %vm5392, %v5612, 0
        %v5769 = vsel %vm5392, %v5613, 0
        %v5772 = vsel %vm5392, %v5614, 0
        %v5775 = vsel %vm5392, %v5615, 0
        %v5778 = vsel %vm5392, %v5616, 0
        %v5781 = vsel %vm5392, %v5617, 0
        %v5784 = vsel %vm5392, %v5618, 0
        %v5787 = vsel %vm5392, %v5619, 0
        %v5790 = vsel %vm5392, %v5620, 0
        %v5793 = vsel %vm5392, %v5621, 0
        %v5796 = vsel %vm5392, %v5622, 0
        %v5799 = vsel %vm5392, %v5623, 0
        %v5802 = vsel %vm5392, %v5624, 0
        %v5805 = vsel %vm5392, %v5625, 0
        %v5808 = vsel %vm5392, %v5626, 0
        %v5811 = vsel %vm5392, %v5627, 0
        %v5814 = vsel %vm5392, %v5628, 0
        %v5817 = vsel %vm5392, %v5629, 0
        %v5820 = vsel %vm5392, %v5630, 0
        %v5823 = vsel %vm5392, %v5631, 0
        %v5826 = vsel %vm5392, %v5632, 0
        %v5829 = vsel %vm5392, %v5633, 0
        %v5832 = vsel %vm5392, %v5634, 0
        %v5835 = vsel %vm5392, %v5635, 0
        %v5838 = vsel %vm5392, %v5636, 0
        %v5841 = vsel %vm5392, %v5637, 0
        %v5844 = vsel %vm5392, %v5638, 0
        %v5847 = vsel %vm5392, %v5639, 0
        %v5850 = vsel %vm5392, %v5640, 0
        %v5853 = vsel %vm5392, %v5641, 0
        %v5856 = vsel %vm5392, %v5642, 0
        %v5859 = vsel %vm5392, %v5643, 0
        %v5862 = vsel %vm5392, %v5644, 0
        %v5865 = vsel %vm5392, %v5645, 0
        %5867 = vmatpush.msra.mxu0 0.0
        %5868 = vmatpush.msra.mxu0 0.0
        %5869 = vmatpush.msra.mxu0 0.0
        %5870 = vmatpush.msra.mxu0 0.0
        %5871 = vmatpush.msra.mxu0 0.0
        %5872 = vmatpush.msra.mxu0 0.0
        %5873 = vmatpush.msra.mxu0 0.0
        %5874 = vmatpush.msra.mxu0 0.0
        %5875 = vmatpush.msra.mxu0 0.0
        %5876 = vmatpush.msra.mxu0 0.0
        %5877 = vmatpush.msra.mxu0 0.0
        %5878 = vmatpush.msra.mxu0 0.0
        %5879 = vmatpush.msra.mxu0 %v5650
        %5880 = vmatpush.msra.mxu0 %v5649
        %5881 = vmatpush.msra.mxu0 %v5648
        %5882 = vmatpush.msra.mxu0 %v5647
        %5883 = vmatmul.f32.gmra.mxu0 %v5652
        %v5884 = vpop.f32.mrf.mxu0
        %v5885 = vadd.f32 0.0, %v5884
        %5886 = vmatmul.f32.gmra.mxu0 %v5655
        %v5887 = vpop.f32.mrf.mxu0
        %v5888 = vadd.f32 0.0, %v5887
        %5889 = vmatmul.f32.gmra.mxu0 %v5658
        %v5890 = vpop.f32.mrf.mxu0
        %v5891 = vadd.f32 0.0, %v5890
        %5892 = vmatmul.f32.gmra.mxu0 %v5661
        %v5893 = vpop.f32.mrf.mxu0
        %v5894 = vadd.f32 0.0, %v5893
        %5895 = vmatmul.f32.gmra.mxu0 %v5664
        %v5896 = vpop.f32.mrf.mxu0
        %v5897 = vadd.f32 0.0, %v5896
        %5898 = vmatmul.f32.gmra.mxu0 %v5667
        %v5899 = vpop.f32.mrf.mxu0
        %v5900 = vadd.f32 0.0, %v5899
        %5901 = vmatmul.f32.gmra.mxu0 %v5670
        %v5902 = vpop.f32.mrf.mxu0
        %v5903 = vadd.f32 0.0, %v5902
        %5904 = vmatmul.f32.gmra.mxu0 %v5673
        %v5905 = vpop.f32.mrf.mxu0
        %v5906 = vadd.f32 0.0, %v5905
        %5907 = vmatmul.f32.gmra.mxu0 %v5676
        %v5908 = vpop.f32.mrf.mxu0
        %v5909 = vadd.f32 0.0, %v5908
        %5910 = vmatmul.f32.gmra.mxu0 %v5679
        %v5911 = vpop.f32.mrf.mxu0
        %v5912 = vadd.f32 0.0, %v5911
        %5913 = vmatmul.f32.gmra.mxu0 %v5682
        %v5914 = vpop.f32.mrf.mxu0
        %v5915 = vadd.f32 0.0, %v5914
        %5916 = vmatmul.f32.gmra.mxu0 %v5685
        %v5917 = vpop.f32.mrf.mxu0
        %v5918 = vadd.f32 0.0, %v5917
        %5919 = vmatmul.f32.gmra.mxu0 %v5688
        %v5920 = vpop.f32.mrf.mxu0
        %v5921 = vadd.f32 0.0, %v5920
        %5922 = vmatmul.f32.gmra.mxu0 %v5691
        %v5923 = vpop.f32.mrf.mxu0
        %v5924 = vadd.f32 0.0, %v5923
        %5925 = vmatmul.f32.gmra.mxu0 %v5694
        %v5926 = vpop.f32.mrf.mxu0
        %v5927 = vadd.f32 0.0, %v5926
        %5928 = vmatmul.f32.gmra.mxu0 %v5697
        %v5929 = vpop.f32.mrf.mxu0
        %v5930 = vadd.f32 0.0, %v5929
        %5931 = vmatmul.f32.gmra.mxu0 %v5700
        %v5932 = vpop.f32.mrf.mxu0
        %v5933 = vadd.f32 0.0, %v5932
        %5934 = vmatmul.f32.gmra.mxu0 %v5703
        %v5935 = vpop.f32.mrf.mxu0
        %v5936 = vadd.f32 0.0, %v5935
        %5937 = vmatmul.f32.gmra.mxu0 %v5706
        %v5938 = vpop.f32.mrf.mxu0
        %v5939 = vadd.f32 0.0, %v5938
        %5940 = vmatmul.f32.gmra.mxu0 %v5709
        %v5941 = vpop.f32.mrf.mxu0
        %v5942 = vadd.f32 0.0, %v5941
        %5943 = vmatmul.f32.gmra.mxu0 %v5712
        %v5944 = vpop.f32.mrf.mxu0
        %v5945 = vadd.f32 0.0, %v5944
        %5946 = vmatmul.f32.gmra.mxu0 %v5715
        %v5947 = vpop.f32.mrf.mxu0
        %v5948 = vadd.f32 0.0, %v5947
        %5949 = vmatmul.f32.gmra.mxu0 %v5718
        %v5950 = vpop.f32.mrf.mxu0
        %v5951 = vadd.f32 0.0, %v5950
        %5952 = vmatmul.f32.gmra.mxu0 %v5721
        %v5953 = vpop.f32.mrf.mxu0
        %v5954 = vadd.f32 0.0, %v5953
        %5955 = vmatmul.f32.gmra.mxu0 %v5724
        %v5956 = vpop.f32.mrf.mxu0
        %v5957 = vadd.f32 0.0, %v5956
        %5958 = vmatmul.f32.gmra.mxu0 %v5727
        %v5959 = vpop.f32.mrf.mxu0
        %v5960 = vadd.f32 0.0, %v5959
        %5961 = vmatmul.f32.gmra.mxu0 %v5730
        %v5962 = vpop.f32.mrf.mxu0
        %v5963 = vadd.f32 0.0, %v5962
        %5964 = vmatmul.f32.gmra.mxu0 %v5733
        %v5965 = vpop.f32.mrf.mxu0
        %v5966 = vadd.f32 0.0, %v5965
        %5967 = vmatmul.f32.gmra.mxu0 %v5736
        %v5968 = vpop.f32.mrf.mxu0
        %v5969 = vadd.f32 0.0, %v5968
        %5970 = vmatmul.f32.gmra.mxu0 %v5739
        %v5971 = vpop.f32.mrf.mxu0
        %v5972 = vadd.f32 0.0, %v5971
        %5973 = vmatmul.f32.gmra.mxu0 %v5742
        %v5974 = vpop.f32.mrf.mxu0
        %v5975 = vadd.f32 0.0, %v5974
        %5976 = vmatmul.f32.gmra.mxu0 %v5745
        %v5977 = vpop.f32.mrf.mxu0
        %v5978 = vadd.f32 0.0, %v5977
        %5979 = vmatmul.f32.gmra.mxu0 %v5748
        %v5980 = vpop.f32.mrf.mxu0
        %v5981 = vadd.f32 0.0, %v5980
        %5982 = vmatmul.f32.gmra.mxu0 %v5751
        %v5983 = vpop.f32.mrf.mxu0
        %v5984 = vadd.f32 0.0, %v5983
        %5985 = vmatmul.f32.gmra.mxu0 %v5754
        %v5986 = vpop.f32.mrf.mxu0
        %v5987 = vadd.f32 0.0, %v5986
        %5988 = vmatmul.f32.gmra.mxu0 %v5757
        %v5989 = vpop.f32.mrf.mxu0
        %v5990 = vadd.f32 0.0, %v5989
        %5991 = vmatmul.f32.gmra.mxu0 %v5760
        %v5992 = vpop.f32.mrf.mxu0
        %v5993 = vadd.f32 0.0, %v5992
        %5994 = vmatmul.f32.gmra.mxu0 %v5763
        %v5995 = vpop.f32.mrf.mxu0
        %v5996 = vadd.f32 0.0, %v5995
        %5997 = vmatmul.f32.gmra.mxu0 %v5766
        %v5998 = vpop.f32.mrf.mxu0
        %v5999 = vadd.f32 0.0, %v5998
        %6000 = vmatmul.f32.gmra.mxu0 %v5769
        %v6001 = vpop.f32.mrf.mxu0
        %v6002 = vadd.f32 0.0, %v6001
        %6003 = vmatmul.f32.gmra.mxu0 %v5772
        %v6004 = vpop.f32.mrf.mxu0
        %v6005 = vadd.f32 0.0, %v6004
        %6006 = vmatmul.f32.gmra.mxu0 %v5775
        %v6007 = vpop.f32.mrf.mxu0
        %v6008 = vadd.f32 0.0, %v6007
        %6009 = vmatmul.f32.gmra.mxu0 %v5778
        %v6010 = vpop.f32.mrf.mxu0
        %v6011 = vadd.f32 0.0, %v6010
        %6012 = vmatmul.f32.gmra.mxu0 %v5781
        %v6013 = vpop.f32.mrf.mxu0
        %v6014 = vadd.f32 0.0, %v6013
        %6015 = vmatmul.f32.gmra.mxu0 %v5784
        %v6016 = vpop.f32.mrf.mxu0
        %v6017 = vadd.f32 0.0, %v6016
        %6018 = vmatmul.f32.gmra.mxu0 %v5787
        %v6019 = vpop.f32.mrf.mxu0
        %v6020 = vadd.f32 0.0, %v6019
        %6021 = vmatmul.f32.gmra.mxu0 %v5790
        %v6022 = vpop.f32.mrf.mxu0
        %v6023 = vadd.f32 0.0, %v6022
        %6024 = vmatmul.f32.gmra.mxu0 %v5793
        %v6025 = vpop.f32.mrf.mxu0
        %v6026 = vadd.f32 0.0, %v6025
        %6027 = vmatmul.f32.gmra.mxu0 %v5796
        %v6028 = vpop.f32.mrf.mxu0
        %v6029 = vadd.f32 0.0, %v6028
        %6030 = vmatmul.f32.gmra.mxu0 %v5799
        %v6031 = vpop.f32.mrf.mxu0
        %v6032 = vadd.f32 0.0, %v6031
        %6033 = vmatmul.f32.gmra.mxu0 %v5802
        %v6034 = vpop.f32.mrf.mxu0
        %v6035 = vadd.f32 0.0, %v6034
        %6036 = vmatmul.f32.gmra.mxu0 %v5805
        %v6037 = vpop.f32.mrf.mxu0
        %v6038 = vadd.f32 0.0, %v6037
        %6039 = vmatmul.f32.gmra.mxu0 %v5808
        %v6040 = vpop.f32.mrf.mxu0
        %v6041 = vadd.f32 0.0, %v6040
        %6042 = vmatmul.f32.gmra.mxu0 %v5811
        %v6043 = vpop.f32.mrf.mxu0
        %v6044 = vadd.f32 0.0, %v6043
        %6045 = vmatmul.f32.gmra.mxu0 %v5814
        %v6046 = vpop.f32.mrf.mxu0
        %v6047 = vadd.f32 0.0, %v6046
        %6048 = vmatmul.f32.gmra.mxu0 %v5817
        %v6049 = vpop.f32.mrf.mxu0
        %v6050 = vadd.f32 0.0, %v6049
        %6051 = vmatmul.f32.gmra.mxu0 %v5820
        %v6052 = vpop.f32.mrf.mxu0
        %v6053 = vadd.f32 0.0, %v6052
        %6054 = vmatmul.f32.gmra.mxu0 %v5823
        %v6055 = vpop.f32.mrf.mxu0
        %v6056 = vadd.f32 0.0, %v6055
        %6057 = vmatmul.f32.gmra.mxu0 %v5826
        %v6058 = vpop.f32.mrf.mxu0
        %v6059 = vadd.f32 0.0, %v6058
        %6060 = vmatmul.f32.gmra.mxu0 %v5829
        %v6061 = vpop.f32.mrf.mxu0
        %v6062 = vadd.f32 0.0, %v6061
        %6063 = vmatmul.f32.gmra.mxu0 %v5832
        %v6064 = vpop.f32.mrf.mxu0
        %v6065 = vadd.f32 0.0, %v6064
        %6066 = vmatmul.f32.gmra.mxu0 %v5835
        %v6067 = vpop.f32.mrf.mxu0
        %v6068 = vadd.f32 0.0, %v6067
        %6069 = vmatmul.f32.gmra.mxu0 %v5838
        %v6070 = vpop.f32.mrf.mxu0
        %v6071 = vadd.f32 0.0, %v6070
        %6072 = vmatmul.f32.gmra.mxu0 %v5841
        %v6073 = vpop.f32.mrf.mxu0
        %v6074 = vadd.f32 0.0, %v6073
        %6075 = vmatmul.f32.gmra.mxu0 %v5844
        %v6076 = vpop.f32.mrf.mxu0
        %v6077 = vadd.f32 0.0, %v6076
        %6078 = vmatmul.f32.gmra.mxu0 %v5847
        %v6079 = vpop.f32.mrf.mxu0
        %v6080 = vadd.f32 0.0, %v6079
        %6081 = vmatmul.f32.gmra.mxu0 %v5850
        %v6082 = vpop.f32.mrf.mxu0
        %v6083 = vadd.f32 0.0, %v6082
        %6084 = vmatmul.f32.gmra.mxu0 %v5853
        %v6085 = vpop.f32.mrf.mxu0
        %v6086 = vadd.f32 0.0, %v6085
        %6087 = vmatmul.f32.gmra.mxu0 %v5856
        %v6088 = vpop.f32.mrf.mxu0
        %v6089 = vadd.f32 0.0, %v6088
        %6090 = vmatmul.f32.gmra.mxu0 %v5859
        %v6091 = vpop.f32.mrf.mxu0
        %v6092 = vadd.f32 0.0, %v6091
        %6093 = vmatmul.f32.gmra.mxu0 %v5862
        %v6094 = vpop.f32.mrf.mxu0
        %v6095 = vadd.f32 0.0, %v6094
        %6096 = vmatmul.f32.gmra.mxu0 %v5865
        %v6097 = vpop.f32.mrf.mxu0
        %v6098 = vadd.f32 0.0, %v6097
        %6099 = vdwg.mxu0
        %v6101 = vsel %vm5392, %v5498, 0
        %v6104 = vsel %vm5392, %v5499, 0
        %v6107 = vsel %vm5392, %v5500, 0
        %v6110 = vsel %vm5392, %v5501, 0
        %v6113 = vsel %vm5392, %v5502, 0
        %v6116 = vsel %vm5392, %v5503, 0
        %v6119 = vsel %vm5392, %v5504, 0
        %v6122 = vsel %vm5392, %v5505, 0
        %v6125 = vsel %vm5392, %v5506, 0
        %v6128 = vsel %vm5392, %v5507, 0
        %v6131 = vsel %vm5392, %v5508, 0
        %v6134 = vsel %vm5392, %v5509, 0
        %v6137 = vsel %vm5392, %v5510, 0
        %v6140 = vsel %vm5392, %v5511, 0
        %v6143 = vsel %vm5392, %v5512, 0
        %v6146 = vsel %vm5392, %v5513, 0
        %v6149 = vsel %vm5392, %v5514, 0
        %v6152 = vsel %vm5392, %v5515, 0
        %v6155 = vsel %vm5392, %v5516, 0
        %v6158 = vsel %vm5392, %v5517, 0
        %v6161 = vsel %vm5392, %v5518, 0
        %v6164 = vsel %vm5392, %v5519, 0
        %v6167 = vsel %vm5392, %v5520, 0
        %v6170 = vsel %vm5392, %v5521, 0
        %v6173 = vsel %vm5392, %v5522, 0
        %v6176 = vsel %vm5392, %v5523, 0
        %v6179 = vsel %vm5392, %v5524, 0
        %v6182 = vsel %vm5392, %v5525, 0
        %v6185 = vsel %vm5392, %v5526, 0
        %v6188 = vsel %vm5392, %v5527, 0
        %v6191 = vsel %vm5392, %v5528, 0
        %v6194 = vsel %vm5392, %v5529, 0
        %v6197 = vsel %vm5392, %v5530, 0
        %v6200 = vsel %vm5392, %v5531, 0
        %v6203 = vsel %vm5392, %v5532, 0
        %v6206 = vsel %vm5392, %v5533, 0
        %v6209 = vsel %vm5392, %v5534, 0
        %v6212 = vsel %vm5392, %v5535, 0
        %v6215 = vsel %vm5392, %v5536, 0
        %v6218 = vsel %vm5392, %v5537, 0
        %v6221 = vsel %vm5392, %v5538, 0
        %v6224 = vsel %vm5392, %v5539, 0
        %v6227 = vsel %vm5392, %v5540, 0
        %v6230 = vsel %vm5392, %v5541, 0
        %v6233 = vsel %vm5392, %v5542, 0
        %v6236 = vsel %vm5392, %v5543, 0
        %v6239 = vsel %vm5392, %v5544, 0
        %v6242 = vsel %vm5392, %v5545, 0
        %v6245 = vsel %vm5392, %v5546, 0
        %v6248 = vsel %vm5392, %v5547, 0
        %v6251 = vsel %vm5392, %v5548, 0
        %v6254 = vsel %vm5392, %v5549, 0
        %v6257 = vsel %vm5392, %v5550, 0
        %v6260 = vsel %vm5392, %v5551, 0
        %v6263 = vsel %vm5392, %v5552, 0
        %v6266 = vsel %vm5392, %v5553, 0
        %v6269 = vsel %vm5392, %v5554, 0
        %v6272 = vsel %vm5392, %v5555, 0
        %v6275 = vsel %vm5392, %v5556, 0
        %v6278 = vsel %vm5392, %v5557, 0
        %v6281 = vsel %vm5392, %v5558, 0
        %v6284 = vsel %vm5392, %v5559, 0
        %v6287 = vsel %vm5392, %v5560, 0
        %v6290 = vsel %vm5392, %v5561, 0
        %v6293 = vsel %vm5392, %v5562, 0
        %v6296 = vsel %vm5392, %v5563, 0
        %v6299 = vsel %vm5392, %v5564, 0
        %v6302 = vsel %vm5392, %v5565, 0
        %v6305 = vsel %vm5392, %v5566, 0
        %v6308 = vsel %vm5392, %v5567, 0
        %v6311 = vsel %vm5392, %v5568, 0
        %v6314 = vsel %vm5392, %v5569, 0
        %6316 = vmatpush.msra.mxu0 0.0
        %6317 = vmatpush.msra.mxu0 0.0
        %6318 = vmatpush.msra.mxu0 0.0
        %6319 = vmatpush.msra.mxu0 0.0
        %6320 = vmatpush.msra.mxu0 0.0
        %6321 = vmatpush.msra.mxu0 0.0
        %6322 = vmatpush.msra.mxu0 0.0
        %6323 = vmatpush.msra.mxu0 0.0
        %6324 = vmatpush.msra.mxu0 0.0
        %6325 = vmatpush.msra.mxu0 0.0
        %6326 = vmatpush.msra.mxu0 0.0
        %6327 = vmatpush.msra.mxu0 0.0
        %6328 = vmatpush.msra.mxu0 %v5573
        %6329 = vmatpush.msra.mxu0 %v5572
        %6330 = vmatpush.msra.mxu0 %v5571
        %6331 = vmatpush.msra.mxu0 %v5570
        %6332 = vmatmul.f32.gmra.mxu0 %v6101
        %v6333 = vpop.f32.mrf.mxu0
        %v6334 = vadd.f32 %v5885, %v6333
        %6335 = vmatmul.f32.gmra.mxu0 %v6104
        %v6336 = vpop.f32.mrf.mxu0
        %v6337 = vadd.f32 %v5888, %v6336
        %6338 = vmatmul.f32.gmra.mxu0 %v6107
        %v6339 = vpop.f32.mrf.mxu0
        %v6340 = vadd.f32 %v5891, %v6339
        %6341 = vmatmul.f32.gmra.mxu0 %v6110
        %v6342 = vpop.f32.mrf.mxu0
        %v6343 = vadd.f32 %v5894, %v6342
        %6344 = vmatmul.f32.gmra.mxu0 %v6113
        %v6345 = vpop.f32.mrf.mxu0
        %v6346 = vadd.f32 %v5897, %v6345
        %6347 = vmatmul.f32.gmra.mxu0 %v6116
        %v6348 = vpop.f32.mrf.mxu0
        %v6349 = vadd.f32 %v5900, %v6348
        %6350 = vmatmul.f32.gmra.mxu0 %v6119
        %v6351 = vpop.f32.mrf.mxu0
        %v6352 = vadd.f32 %v5903, %v6351
        %6353 = vmatmul.f32.gmra.mxu0 %v6122
        %v6354 = vpop.f32.mrf.mxu0
        %v6355 = vadd.f32 %v5906, %v6354
        %6356 = vmatmul.f32.gmra.mxu0 %v6125
        %v6357 = vpop.f32.mrf.mxu0
        %v6358 = vadd.f32 %v5909, %v6357
        %6359 = vmatmul.f32.gmra.mxu0 %v6128
        %v6360 = vpop.f32.mrf.mxu0
        %v6361 = vadd.f32 %v5912, %v6360
        %6362 = vmatmul.f32.gmra.mxu0 %v6131
        %v6363 = vpop.f32.mrf.mxu0
        %v6364 = vadd.f32 %v5915, %v6363
        %6365 = vmatmul.f32.gmra.mxu0 %v6134
        %v6366 = vpop.f32.mrf.mxu0
        %v6367 = vadd.f32 %v5918, %v6366
        %6368 = vmatmul.f32.gmra.mxu0 %v6137
        %v6369 = vpop.f32.mrf.mxu0
        %v6370 = vadd.f32 %v5921, %v6369
        %6371 = vmatmul.f32.gmra.mxu0 %v6140
        %v6372 = vpop.f32.mrf.mxu0
        %v6373 = vadd.f32 %v5924, %v6372
        %6374 = vmatmul.f32.gmra.mxu0 %v6143
        %v6375 = vpop.f32.mrf.mxu0
        %v6376 = vadd.f32 %v5927, %v6375
        %6377 = vmatmul.f32.gmra.mxu0 %v6146
        %v6378 = vpop.f32.mrf.mxu0
        %v6379 = vadd.f32 %v5930, %v6378
        %6380 = vmatmul.f32.gmra.mxu0 %v6149
        %v6381 = vpop.f32.mrf.mxu0
        %v6382 = vadd.f32 %v5933, %v6381
        %6383 = vmatmul.f32.gmra.mxu0 %v6152
        %v6384 = vpop.f32.mrf.mxu0
        %v6385 = vadd.f32 %v5936, %v6384
        %6386 = vmatmul.f32.gmra.mxu0 %v6155
        %v6387 = vpop.f32.mrf.mxu0
        %v6388 = vadd.f32 %v5939, %v6387
        %6389 = vmatmul.f32.gmra.mxu0 %v6158
        %v6390 = vpop.f32.mrf.mxu0
        %v6391 = vadd.f32 %v5942, %v6390
        %6392 = vmatmul.f32.gmra.mxu0 %v6161
        %v6393 = vpop.f32.mrf.mxu0
        %v6394 = vadd.f32 %v5945, %v6393
        %6395 = vmatmul.f32.gmra.mxu0 %v6164
        %v6396 = vpop.f32.mrf.mxu0
        %v6397 = vadd.f32 %v5948, %v6396
        %6398 = vmatmul.f32.gmra.mxu0 %v6167
        %v6399 = vpop.f32.mrf.mxu0
        %v6400 = vadd.f32 %v5951, %v6399
        %6401 = vmatmul.f32.gmra.mxu0 %v6170
        %v6402 = vpop.f32.mrf.mxu0
        %v6403 = vadd.f32 %v5954, %v6402
        %6404 = vmatmul.f32.gmra.mxu0 %v6173
        %v6405 = vpop.f32.mrf.mxu0
        %v6406 = vadd.f32 %v5957, %v6405
        %6407 = vmatmul.f32.gmra.mxu0 %v6176
        %v6408 = vpop.f32.mrf.mxu0
        %v6409 = vadd.f32 %v5960, %v6408
        %6410 = vmatmul.f32.gmra.mxu0 %v6179
        %v6411 = vpop.f32.mrf.mxu0
        %v6412 = vadd.f32 %v5963, %v6411
        %6413 = vmatmul.f32.gmra.mxu0 %v6182
        %v6414 = vpop.f32.mrf.mxu0
        %v6415 = vadd.f32 %v5966, %v6414
        %6416 = vmatmul.f32.gmra.mxu0 %v6185
        %v6417 = vpop.f32.mrf.mxu0
        %v6418 = vadd.f32 %v5969, %v6417
        %6419 = vmatmul.f32.gmra.mxu0 %v6188
        %v6420 = vpop.f32.mrf.mxu0
        %v6421 = vadd.f32 %v5972, %v6420
        %6422 = vmatmul.f32.gmra.mxu0 %v6191
        %v6423 = vpop.f32.mrf.mxu0
        %v6424 = vadd.f32 %v5975, %v6423
        %6425 = vmatmul.f32.gmra.mxu0 %v6194
        %v6426 = vpop.f32.mrf.mxu0
        %v6427 = vadd.f32 %v5978, %v6426
        %6428 = vmatmul.f32.gmra.mxu0 %v6197
        %v6429 = vpop.f32.mrf.mxu0
        %v6430 = vadd.f32 %v5981, %v6429
        %6431 = vmatmul.f32.gmra.mxu0 %v6200
        %v6432 = vpop.f32.mrf.mxu0
        %v6433 = vadd.f32 %v5984, %v6432
        %6434 = vmatmul.f32.gmra.mxu0 %v6203
        %v6435 = vpop.f32.mrf.mxu0
        %v6436 = vadd.f32 %v5987, %v6435
        %6437 = vmatmul.f32.gmra.mxu0 %v6206
        %v6438 = vpop.f32.mrf.mxu0
        %v6439 = vadd.f32 %v5990, %v6438
        %6440 = vmatmul.f32.gmra.mxu0 %v6209
        %v6441 = vpop.f32.mrf.mxu0
        %v6442 = vadd.f32 %v5993, %v6441
        %6443 = vmatmul.f32.gmra.mxu0 %v6212
        %v6444 = vpop.f32.mrf.mxu0
        %v6445 = vadd.f32 %v5996, %v6444
        %6446 = vmatmul.f32.gmra.mxu0 %v6215
        %v6447 = vpop.f32.mrf.mxu0
        %v6448 = vadd.f32 %v5999, %v6447
        %6449 = vmatmul.f32.gmra.mxu0 %v6218
        %v6450 = vpop.f32.mrf.mxu0
        %v6451 = vadd.f32 %v6002, %v6450
        %6452 = vmatmul.f32.gmra.mxu0 %v6221
        %v6453 = vpop.f32.mrf.mxu0
        %v6454 = vadd.f32 %v6005, %v6453
        %6455 = vmatmul.f32.gmra.mxu0 %v6224
        %v6456 = vpop.f32.mrf.mxu0
        %v6457 = vadd.f32 %v6008, %v6456
        %6458 = vmatmul.f32.gmra.mxu0 %v6227
        %v6459 = vpop.f32.mrf.mxu0
        %v6460 = vadd.f32 %v6011, %v6459
        %6461 = vmatmul.f32.gmra.mxu0 %v6230
        %v6462 = vpop.f32.mrf.mxu0
        %v6463 = vadd.f32 %v6014, %v6462
        %6464 = vmatmul.f32.gmra.mxu0 %v6233
        %v6465 = vpop.f32.mrf.mxu0
        %v6466 = vadd.f32 %v6017, %v6465
        %6467 = vmatmul.f32.gmra.mxu0 %v6236
        %v6468 = vpop.f32.mrf.mxu0
        %v6469 = vadd.f32 %v6020, %v6468
        %6470 = vmatmul.f32.gmra.mxu0 %v6239
        %v6471 = vpop.f32.mrf.mxu0
        %v6472 = vadd.f32 %v6023, %v6471
        %6473 = vmatmul.f32.gmra.mxu0 %v6242
        %v6474 = vpop.f32.mrf.mxu0
        %v6475 = vadd.f32 %v6026, %v6474
        %6476 = vmatmul.f32.gmra.mxu0 %v6245
        %v6477 = vpop.f32.mrf.mxu0
        %v6478 = vadd.f32 %v6029, %v6477
        %6479 = vmatmul.f32.gmra.mxu0 %v6248
        %v6480 = vpop.f32.mrf.mxu0
        %v6481 = vadd.f32 %v6032, %v6480
        %6482 = vmatmul.f32.gmra.mxu0 %v6251
        %v6483 = vpop.f32.mrf.mxu0
        %v6484 = vadd.f32 %v6035, %v6483
        %6485 = vmatmul.f32.gmra.mxu0 %v6254
        %v6486 = vpop.f32.mrf.mxu0
        %v6487 = vadd.f32 %v6038, %v6486
        %6488 = vmatmul.f32.gmra.mxu0 %v6257
        %v6489 = vpop.f32.mrf.mxu0
        %v6490 = vadd.f32 %v6041, %v6489
        %6491 = vmatmul.f32.gmra.mxu0 %v6260
        %v6492 = vpop.f32.mrf.mxu0
        %v6493 = vadd.f32 %v6044, %v6492
        %6494 = vmatmul.f32.gmra.mxu0 %v6263
        %v6495 = vpop.f32.mrf.mxu0
        %v6496 = vadd.f32 %v6047, %v6495
        %6497 = vmatmul.f32.gmra.mxu0 %v6266
        %v6498 = vpop.f32.mrf.mxu0
        %v6499 = vadd.f32 %v6050, %v6498
        %6500 = vmatmul.f32.gmra.mxu0 %v6269
        %v6501 = vpop.f32.mrf.mxu0
        %v6502 = vadd.f32 %v6053, %v6501
        %6503 = vmatmul.f32.gmra.mxu0 %v6272
        %v6504 = vpop.f32.mrf.mxu0
        %v6505 = vadd.f32 %v6056, %v6504
        %6506 = vmatmul.f32.gmra.mxu0 %v6275
        %v6507 = vpop.f32.mrf.mxu0
        %v6508 = vadd.f32 %v6059, %v6507
        %6509 = vmatmul.f32.gmra.mxu0 %v6278
        %v6510 = vpop.f32.mrf.mxu0
        %v6511 = vadd.f32 %v6062, %v6510
        %6512 = vmatmul.f32.gmra.mxu0 %v6281
        %v6513 = vpop.f32.mrf.mxu0
        %v6514 = vadd.f32 %v6065, %v6513
        %6515 = vmatmul.f32.gmra.mxu0 %v6284
        %v6516 = vpop.f32.mrf.mxu0
        %v6517 = vadd.f32 %v6068, %v6516
        %6518 = vmatmul.f32.gmra.mxu0 %v6287
        %v6519 = vpop.f32.mrf.mxu0
        %v6520 = vadd.f32 %v6071, %v6519
        %6521 = vmatmul.f32.gmra.mxu0 %v6290
        %v6522 = vpop.f32.mrf.mxu0
        %v6523 = vadd.f32 %v6074, %v6522
        %6524 = vmatmul.f32.gmra.mxu0 %v6293
        %v6525 = vpop.f32.mrf.mxu0
        %v6526 = vadd.f32 %v6077, %v6525
        %6527 = vmatmul.f32.gmra.mxu0 %v6296
        %v6528 = vpop.f32.mrf.mxu0
        %v6529 = vadd.f32 %v6080, %v6528
        %6530 = vmatmul.f32.gmra.mxu0 %v6299
        %v6531 = vpop.f32.mrf.mxu0
        %v6532 = vadd.f32 %v6083, %v6531
        %6533 = vmatmul.f32.gmra.mxu0 %v6302
        %v6534 = vpop.f32.mrf.mxu0
        %v6535 = vadd.f32 %v6086, %v6534
        %6536 = vmatmul.f32.gmra.mxu0 %v6305
        %v6537 = vpop.f32.mrf.mxu0
        %v6538 = vadd.f32 %v6089, %v6537
        %6539 = vmatmul.f32.gmra.mxu0 %v6308
        %v6540 = vpop.f32.mrf.mxu0
        %v6541 = vadd.f32 %v6092, %v6540
        %6542 = vmatmul.f32.gmra.mxu0 %v6311
        %v6543 = vpop.f32.mrf.mxu0
        %v6544 = vadd.f32 %v6095, %v6543
        %6545 = vmatmul.f32.gmra.mxu0 %v6314
        %v6546 = vpop.f32.mrf.mxu0
        %v6547 = vadd.f32 %v6098, %v6546
        %6548 = vdwg.mxu0
        %v6549 = vld [vmem:[#allocation2 + $0x2] sm:$0xff]
        %v6550 = vld [vmem:[#allocation2 + $0xa] sm:$0xff]
        %v6551 = vld [vmem:[#allocation2 + $0x12] sm:$0xff]
        %v6552 = vld [vmem:[#allocation2 + $0x22] sm:$0xff]
        %v6553 = vld [vmem:[#allocation2 + $0x2a] sm:$0xff]
        %v6554 = vld [vmem:[#allocation2 + $0x32] sm:$0xff]
        %v6555 = vld [vmem:[#allocation2 + $0x42] sm:$0xff]
        %v6556 = vld [vmem:[#allocation2 + $0x4a] sm:$0xff]
        %v6557 = vld [vmem:[#allocation2 + $0x52] sm:$0xff]
        %v6558 = vld [vmem:[#allocation2 + $0x62] sm:$0xff]
        %v6559 = vld [vmem:[#allocation2 + $0x6a] sm:$0xff]
        %v6560 = vld [vmem:[#allocation2 + $0x72] sm:$0xff]
        %v6561 = vld [vmem:[#allocation2 + $0x82] sm:$0xff]
        %v6562 = vld [vmem:[#allocation2 + $0x8a] sm:$0xff]
        %v6563 = vld [vmem:[#allocation2 + $0x92] sm:$0xff]
        %v6564 = vld [vmem:[#allocation2 + $0xa2] sm:$0xff]
        %v6565 = vld [vmem:[#allocation2 + $0xaa] sm:$0xff]
        %v6566 = vld [vmem:[#allocation2 + $0xb2] sm:$0xff]
        %v6567 = vld [vmem:[#allocation2 + $0xc2] sm:$0xff]
        %v6568 = vld [vmem:[#allocation2 + $0xca] sm:$0xff]
        %v6569 = vld [vmem:[#allocation2 + $0xd2] sm:$0xff]
        %v6570 = vld [vmem:[#allocation2 + $0xe2] sm:$0xff]
        %v6571 = vld [vmem:[#allocation2 + $0xea] sm:$0xff]
        %v6572 = vld [vmem:[#allocation2 + $0xf2] sm:$0xff]
        %v6573 = vld [vmem:[#allocation2 + $0x102] sm:$0xff]
        %v6574 = vld [vmem:[#allocation2 + $0x10a] sm:$0xff]
        %v6575 = vld [vmem:[#allocation2 + $0x112] sm:$0xff]
        %v6576 = vld [vmem:[#allocation2 + $0x122] sm:$0xff]
        %v6577 = vld [vmem:[#allocation2 + $0x12a] sm:$0xff]
        %v6578 = vld [vmem:[#allocation2 + $0x132] sm:$0xff]
        %v6579 = vld [vmem:[#allocation2 + $0x142] sm:$0xff]
        %v6580 = vld [vmem:[#allocation2 + $0x14a] sm:$0xff]
        %v6581 = vld [vmem:[#allocation2 + $0x152] sm:$0xff]
        %v6582 = vld [vmem:[#allocation2 + $0x162] sm:$0xff]
        %v6583 = vld [vmem:[#allocation2 + $0x16a] sm:$0xff]
        %v6584 = vld [vmem:[#allocation2 + $0x172] sm:$0xff]
        %v6585 = vld [vmem:[#allocation2 + $0x182] sm:$0xff]
        %v6586 = vld [vmem:[#allocation2 + $0x18a] sm:$0xff]
        %v6587 = vld [vmem:[#allocation2 + $0x192] sm:$0xff]
        %v6588 = vld [vmem:[#allocation2 + $0x1a2] sm:$0xff]
        %v6589 = vld [vmem:[#allocation2 + $0x1aa] sm:$0xff]
        %v6590 = vld [vmem:[#allocation2 + $0x1b2] sm:$0xff]
        %v6591 = vld [vmem:[#allocation2 + $0x1c2] sm:$0xff]
        %v6592 = vld [vmem:[#allocation2 + $0x1ca] sm:$0xff]
        %v6593 = vld [vmem:[#allocation2 + $0x1d2] sm:$0xff]
        %v6594 = vld [vmem:[#allocation2 + $0x1e2] sm:$0xff]
        %v6595 = vld [vmem:[#allocation2 + $0x1ea] sm:$0xff]
        %v6596 = vld [vmem:[#allocation2 + $0x1f2] sm:$0xff]
        %v6597 = vld [vmem:[#allocation2 + $0x202] sm:$0xff]
        %v6598 = vld [vmem:[#allocation2 + $0x20a] sm:$0xff]
        %v6599 = vld [vmem:[#allocation2 + $0x212] sm:$0xff]
        %v6600 = vld [vmem:[#allocation2 + $0x222] sm:$0xff]
        %v6601 = vld [vmem:[#allocation2 + $0x22a] sm:$0xff]
        %v6602 = vld [vmem:[#allocation2 + $0x232] sm:$0xff]
        %v6603 = vld [vmem:[#allocation2 + $0x242] sm:$0xff]
        %v6604 = vld [vmem:[#allocation2 + $0x24a] sm:$0xff]
        %v6605 = vld [vmem:[#allocation2 + $0x252] sm:$0xff]
        %v6606 = vld [vmem:[#allocation2 + $0x262] sm:$0xff]
        %v6607 = vld [vmem:[#allocation2 + $0x26a] sm:$0xff]
        %v6608 = vld [vmem:[#allocation2 + $0x272] sm:$0xff]
        %v6609 = vld [vmem:[#allocation2 + $0x282] sm:$0xff]
        %v6610 = vld [vmem:[#allocation2 + $0x28a] sm:$0xff]
        %v6611 = vld [vmem:[#allocation2 + $0x292] sm:$0xff]
        %v6612 = vld [vmem:[#allocation2 + $0x2a2] sm:$0xff]
        %v6613 = vld [vmem:[#allocation2 + $0x2aa] sm:$0xff]
        %v6614 = vld [vmem:[#allocation2 + $0x2b2] sm:$0xff]
        %v6615 = vld [vmem:[#allocation2 + $0x2c2] sm:$0xff]
        %v6616 = vld [vmem:[#allocation2 + $0x2ca] sm:$0xff]
        %v6617 = vld [vmem:[#allocation2 + $0x2d2] sm:$0xff]
        %v6618 = vld [vmem:[#allocation2 + $0x2e2] sm:$0xff]
        %v6619 = vld [vmem:[#allocation2 + $0x2ea] sm:$0xff]
        %v6620 = vld [vmem:[#allocation2 + $0x2f2] sm:$0xff]
        %s6621 = scalar_lea.vmem [#allocation3], 64
        %v6622 = vld [vmem:[%s6621] sm:$0xff]
        %v6623 = vld [vmem:[%s6621 + $0x8] sm:$0xff]
        %v6624 = vld [vmem:[%s6621 + $0x10] sm:$0xff]
        %v6625 = vld [vmem:[%s6621 + $0x18] sm:$0xff]
        %v6627 = vsel %vm5392, %v6549, 0
        %v6630 = vsel %vm5392, %v6550, 0
        %v6633 = vsel %vm5392, %v6551, 0
        %v6636 = vsel %vm5392, %v6552, 0
        %v6639 = vsel %vm5392, %v6553, 0
        %v6642 = vsel %vm5392, %v6554, 0
        %v6645 = vsel %vm5392, %v6555, 0
        %v6648 = vsel %vm5392, %v6556, 0
        %v6651 = vsel %vm5392, %v6557, 0
        %v6654 = vsel %vm5392, %v6558, 0
        %v6657 = vsel %vm5392, %v6559, 0
        %v6660 = vsel %vm5392, %v6560, 0
        %v6663 = vsel %vm5392, %v6561, 0
        %v6666 = vsel %vm5392, %v6562, 0
        %v6669 = vsel %vm5392, %v6563, 0
        %v6672 = vsel %vm5392, %v6564, 0
        %v6675 = vsel %vm5392, %v6565, 0
        %v6678 = vsel %vm5392, %v6566, 0
        %v6681 = vsel %vm5392, %v6567, 0
        %v6684 = vsel %vm5392, %v6568, 0
        %v6687 = vsel %vm5392, %v6569, 0
        %v6690 = vsel %vm5392, %v6570, 0
        %v6693 = vsel %vm5392, %v6571, 0
        %v6696 = vsel %vm5392, %v6572, 0
        %v6699 = vsel %vm5392, %v6573, 0
        %v6702 = vsel %vm5392, %v6574, 0
        %v6705 = vsel %vm5392, %v6575, 0
        %v6708 = vsel %vm5392, %v6576, 0
        %v6711 = vsel %vm5392, %v6577, 0
        %v6714 = vsel %vm5392, %v6578, 0
        %v6717 = vsel %vm5392, %v6579, 0
        %v6720 = vsel %vm5392, %v6580, 0
        %v6723 = vsel %vm5392, %v6581, 0
        %v6726 = vsel %vm5392, %v6582, 0
        %v6729 = vsel %vm5392, %v6583, 0
        %v6732 = vsel %vm5392, %v6584, 0
        %v6735 = vsel %vm5392, %v6585, 0
        %v6738 = vsel %vm5392, %v6586, 0
        %v6741 = vsel %vm5392, %v6587, 0
        %v6744 = vsel %vm5392, %v6588, 0
        %v6747 = vsel %vm5392, %v6589, 0
        %v6750 = vsel %vm5392, %v6590, 0
        %v6753 = vsel %vm5392, %v6591, 0
        %v6756 = vsel %vm5392, %v6592, 0
        %v6759 = vsel %vm5392, %v6593, 0
        %v6762 = vsel %vm5392, %v6594, 0
        %v6765 = vsel %vm5392, %v6595, 0
        %v6768 = vsel %vm5392, %v6596, 0
        %v6771 = vsel %vm5392, %v6597, 0
        %v6774 = vsel %vm5392, %v6598, 0
        %v6777 = vsel %vm5392, %v6599, 0
        %v6780 = vsel %vm5392, %v6600, 0
        %v6783 = vsel %vm5392, %v6601, 0
        %v6786 = vsel %vm5392, %v6602, 0
        %v6789 = vsel %vm5392, %v6603, 0
        %v6792 = vsel %vm5392, %v6604, 0
        %v6795 = vsel %vm5392, %v6605, 0
        %v6798 = vsel %vm5392, %v6606, 0
        %v6801 = vsel %vm5392, %v6607, 0
        %v6804 = vsel %vm5392, %v6608, 0
        %v6807 = vsel %vm5392, %v6609, 0
        %v6810 = vsel %vm5392, %v6610, 0
        %v6813 = vsel %vm5392, %v6611, 0
        %v6816 = vsel %vm5392, %v6612, 0
        %v6819 = vsel %vm5392, %v6613, 0
        %v6822 = vsel %vm5392, %v6614, 0
        %v6825 = vsel %vm5392, %v6615, 0
        %v6828 = vsel %vm5392, %v6616, 0
        %v6831 = vsel %vm5392, %v6617, 0
        %v6834 = vsel %vm5392, %v6618, 0
        %v6837 = vsel %vm5392, %v6619, 0
        %v6840 = vsel %vm5392, %v6620, 0
        %6842 = vmatpush.msra.mxu0 0.0
        %6843 = vmatpush.msra.mxu0 0.0
        %6844 = vmatpush.msra.mxu0 0.0
        %6845 = vmatpush.msra.mxu0 0.0
        %6846 = vmatpush.msra.mxu0 0.0
        %6847 = vmatpush.msra.mxu0 0.0
        %6848 = vmatpush.msra.mxu0 0.0
        %6849 = vmatpush.msra.mxu0 0.0
        %6850 = vmatpush.msra.mxu0 0.0
        %6851 = vmatpush.msra.mxu0 0.0
        %6852 = vmatpush.msra.mxu0 0.0
        %6853 = vmatpush.msra.mxu0 0.0
        %6854 = vmatpush.msra.mxu0 %v6625
        %6855 = vmatpush.msra.mxu0 %v6624
        %6856 = vmatpush.msra.mxu0 %v6623
        %6857 = vmatpush.msra.mxu0 %v6622
        %6858 = vmatmul.f32.gmra.mxu0 %v6627
        %v6859 = vpop.f32.mrf.mxu0
        %v6860 = vadd.f32 0.0, %v6859
        %6861 = vmatmul.f32.gmra.mxu0 %v6630
        %v6862 = vpop.f32.mrf.mxu0
        %v6863 = vadd.f32 0.0, %v6862
        %6864 = vmatmul.f32.gmra.mxu0 %v6633
        %v6865 = vpop.f32.mrf.mxu0
        %v6866 = vadd.f32 0.0, %v6865
        %6867 = vmatmul.f32.gmra.mxu0 %v6636
        %v6868 = vpop.f32.mrf.mxu0
        %v6869 = vadd.f32 0.0, %v6868
        %6870 = vmatmul.f32.gmra.mxu0 %v6639
        %v6871 = vpop.f32.mrf.mxu0
        %v6872 = vadd.f32 0.0, %v6871
        %6873 = vmatmul.f32.gmra.mxu0 %v6642
        %v6874 = vpop.f32.mrf.mxu0
        %v6875 = vadd.f32 0.0, %v6874
        %6876 = vmatmul.f32.gmra.mxu0 %v6645
        %v6877 = vpop.f32.mrf.mxu0
        %v6878 = vadd.f32 0.0, %v6877
        %6879 = vmatmul.f32.gmra.mxu0 %v6648
        %v6880 = vpop.f32.mrf.mxu0
        %v6881 = vadd.f32 0.0, %v6880
        %6882 = vmatmul.f32.gmra.mxu0 %v6651
        %v6883 = vpop.f32.mrf.mxu0
        %v6884 = vadd.f32 0.0, %v6883
        %6885 = vmatmul.f32.gmra.mxu0 %v6654
        %v6886 = vpop.f32.mrf.mxu0
        %v6887 = vadd.f32 0.0, %v6886
        %6888 = vmatmul.f32.gmra.mxu0 %v6657
        %v6889 = vpop.f32.mrf.mxu0
        %v6890 = vadd.f32 0.0, %v6889
        %6891 = vmatmul.f32.gmra.mxu0 %v6660
        %v6892 = vpop.f32.mrf.mxu0
        %v6893 = vadd.f32 0.0, %v6892
        %6894 = vmatmul.f32.gmra.mxu0 %v6663
        %v6895 = vpop.f32.mrf.mxu0
        %v6896 = vadd.f32 0.0, %v6895
        %6897 = vmatmul.f32.gmra.mxu0 %v6666
        %v6898 = vpop.f32.mrf.mxu0
        %v6899 = vadd.f32 0.0, %v6898
        %6900 = vmatmul.f32.gmra.mxu0 %v6669
        %v6901 = vpop.f32.mrf.mxu0
        %v6902 = vadd.f32 0.0, %v6901
        %6903 = vmatmul.f32.gmra.mxu0 %v6672
        %v6904 = vpop.f32.mrf.mxu0
        %v6905 = vadd.f32 0.0, %v6904
        %6906 = vmatmul.f32.gmra.mxu0 %v6675
        %v6907 = vpop.f32.mrf.mxu0
        %v6908 = vadd.f32 0.0, %v6907
        %6909 = vmatmul.f32.gmra.mxu0 %v6678
        %v6910 = vpop.f32.mrf.mxu0
        %v6911 = vadd.f32 0.0, %v6910
        %6912 = vmatmul.f32.gmra.mxu0 %v6681
        %v6913 = vpop.f32.mrf.mxu0
        %v6914 = vadd.f32 0.0, %v6913
        %6915 = vmatmul.f32.gmra.mxu0 %v6684
        %v6916 = vpop.f32.mrf.mxu0
        %v6917 = vadd.f32 0.0, %v6916
        %6918 = vmatmul.f32.gmra.mxu0 %v6687
        %v6919 = vpop.f32.mrf.mxu0
        %v6920 = vadd.f32 0.0, %v6919
        %6921 = vmatmul.f32.gmra.mxu0 %v6690
        %v6922 = vpop.f32.mrf.mxu0
        %v6923 = vadd.f32 0.0, %v6922
        %6924 = vmatmul.f32.gmra.mxu0 %v6693
        %v6925 = vpop.f32.mrf.mxu0
        %v6926 = vadd.f32 0.0, %v6925
        %6927 = vmatmul.f32.gmra.mxu0 %v6696
        %v6928 = vpop.f32.mrf.mxu0
        %v6929 = vadd.f32 0.0, %v6928
        %6930 = vmatmul.f32.gmra.mxu0 %v6699
        %v6931 = vpop.f32.mrf.mxu0
        %v6932 = vadd.f32 0.0, %v6931
        %6933 = vmatmul.f32.gmra.mxu0 %v6702
        %v6934 = vpop.f32.mrf.mxu0
        %v6935 = vadd.f32 0.0, %v6934
        %6936 = vmatmul.f32.gmra.mxu0 %v6705
        %v6937 = vpop.f32.mrf.mxu0
        %v6938 = vadd.f32 0.0, %v6937
        %6939 = vmatmul.f32.gmra.mxu0 %v6708
        %v6940 = vpop.f32.mrf.mxu0
        %v6941 = vadd.f32 0.0, %v6940
        %6942 = vmatmul.f32.gmra.mxu0 %v6711
        %v6943 = vpop.f32.mrf.mxu0
        %v6944 = vadd.f32 0.0, %v6943
        %6945 = vmatmul.f32.gmra.mxu0 %v6714
        %v6946 = vpop.f32.mrf.mxu0
        %v6947 = vadd.f32 0.0, %v6946
        %6948 = vmatmul.f32.gmra.mxu0 %v6717
        %v6949 = vpop.f32.mrf.mxu0
        %v6950 = vadd.f32 0.0, %v6949
        %6951 = vmatmul.f32.gmra.mxu0 %v6720
        %v6952 = vpop.f32.mrf.mxu0
        %v6953 = vadd.f32 0.0, %v6952
        %6954 = vmatmul.f32.gmra.mxu0 %v6723
        %v6955 = vpop.f32.mrf.mxu0
        %v6956 = vadd.f32 0.0, %v6955
        %6957 = vmatmul.f32.gmra.mxu0 %v6726
        %v6958 = vpop.f32.mrf.mxu0
        %v6959 = vadd.f32 0.0, %v6958
        %6960 = vmatmul.f32.gmra.mxu0 %v6729
        %v6961 = vpop.f32.mrf.mxu0
        %v6962 = vadd.f32 0.0, %v6961
        %6963 = vmatmul.f32.gmra.mxu0 %v6732
        %v6964 = vpop.f32.mrf.mxu0
        %v6965 = vadd.f32 0.0, %v6964
        %6966 = vmatmul.f32.gmra.mxu0 %v6735
        %v6967 = vpop.f32.mrf.mxu0
        %v6968 = vadd.f32 0.0, %v6967
        %6969 = vmatmul.f32.gmra.mxu0 %v6738
        %v6970 = vpop.f32.mrf.mxu0
        %v6971 = vadd.f32 0.0, %v6970
        %6972 = vmatmul.f32.gmra.mxu0 %v6741
        %v6973 = vpop.f32.mrf.mxu0
        %v6974 = vadd.f32 0.0, %v6973
        %6975 = vmatmul.f32.gmra.mxu0 %v6744
        %v6976 = vpop.f32.mrf.mxu0
        %v6977 = vadd.f32 0.0, %v6976
        %6978 = vmatmul.f32.gmra.mxu0 %v6747
        %v6979 = vpop.f32.mrf.mxu0
        %v6980 = vadd.f32 0.0, %v6979
        %6981 = vmatmul.f32.gmra.mxu0 %v6750
        %v6982 = vpop.f32.mrf.mxu0
        %v6983 = vadd.f32 0.0, %v6982
        %6984 = vmatmul.f32.gmra.mxu0 %v6753
        %v6985 = vpop.f32.mrf.mxu0
        %v6986 = vadd.f32 0.0, %v6985
        %6987 = vmatmul.f32.gmra.mxu0 %v6756
        %v6988 = vpop.f32.mrf.mxu0
        %v6989 = vadd.f32 0.0, %v6988
        %6990 = vmatmul.f32.gmra.mxu0 %v6759
        %v6991 = vpop.f32.mrf.mxu0
        %v6992 = vadd.f32 0.0, %v6991
        %6993 = vmatmul.f32.gmra.mxu0 %v6762
        %v6994 = vpop.f32.mrf.mxu0
        %v6995 = vadd.f32 0.0, %v6994
        %6996 = vmatmul.f32.gmra.mxu0 %v6765
        %v6997 = vpop.f32.mrf.mxu0
        %v6998 = vadd.f32 0.0, %v6997
        %6999 = vmatmul.f32.gmra.mxu0 %v6768
        %v7000 = vpop.f32.mrf.mxu0
        %v7001 = vadd.f32 0.0, %v7000
        %7002 = vmatmul.f32.gmra.mxu0 %v6771
        %v7003 = vpop.f32.mrf.mxu0
        %v7004 = vadd.f32 0.0, %v7003
        %7005 = vmatmul.f32.gmra.mxu0 %v6774
        %v7006 = vpop.f32.mrf.mxu0
        %v7007 = vadd.f32 0.0, %v7006
        %7008 = vmatmul.f32.gmra.mxu0 %v6777
        %v7009 = vpop.f32.mrf.mxu0
        %v7010 = vadd.f32 0.0, %v7009
        %7011 = vmatmul.f32.gmra.mxu0 %v6780
        %v7012 = vpop.f32.mrf.mxu0
        %v7013 = vadd.f32 0.0, %v7012
        %7014 = vmatmul.f32.gmra.mxu0 %v6783
        %v7015 = vpop.f32.mrf.mxu0
        %v7016 = vadd.f32 0.0, %v7015
        %7017 = vmatmul.f32.gmra.mxu0 %v6786
        %v7018 = vpop.f32.mrf.mxu0
        %v7019 = vadd.f32 0.0, %v7018
        %7020 = vmatmul.f32.gmra.mxu0 %v6789
        %v7021 = vpop.f32.mrf.mxu0
        %v7022 = vadd.f32 0.0, %v7021
        %7023 = vmatmul.f32.gmra.mxu0 %v6792
        %v7024 = vpop.f32.mrf.mxu0
        %v7025 = vadd.f32 0.0, %v7024
        %7026 = vmatmul.f32.gmra.mxu0 %v6795
        %v7027 = vpop.f32.mrf.mxu0
        %v7028 = vadd.f32 0.0, %v7027
        %7029 = vmatmul.f32.gmra.mxu0 %v6798
        %v7030 = vpop.f32.mrf.mxu0
        %v7031 = vadd.f32 0.0, %v7030
        %7032 = vmatmul.f32.gmra.mxu0 %v6801
        %v7033 = vpop.f32.mrf.mxu0
        %v7034 = vadd.f32 0.0, %v7033
        %7035 = vmatmul.f32.gmra.mxu0 %v6804
        %v7036 = vpop.f32.mrf.mxu0
        %v7037 = vadd.f32 0.0, %v7036
        %7038 = vmatmul.f32.gmra.mxu0 %v6807
        %v7039 = vpop.f32.mrf.mxu0
        %v7040 = vadd.f32 0.0, %v7039
        %7041 = vmatmul.f32.gmra.mxu0 %v6810
        %v7042 = vpop.f32.mrf.mxu0
        %v7043 = vadd.f32 0.0, %v7042
        %7044 = vmatmul.f32.gmra.mxu0 %v6813
        %v7045 = vpop.f32.mrf.mxu0
        %v7046 = vadd.f32 0.0, %v7045
        %7047 = vmatmul.f32.gmra.mxu0 %v6816
        %v7048 = vpop.f32.mrf.mxu0
        %v7049 = vadd.f32 0.0, %v7048
        %7050 = vmatmul.f32.gmra.mxu0 %v6819
        %v7051 = vpop.f32.mrf.mxu0
        %v7052 = vadd.f32 0.0, %v7051
        %7053 = vmatmul.f32.gmra.mxu0 %v6822
        %v7054 = vpop.f32.mrf.mxu0
        %v7055 = vadd.f32 0.0, %v7054
        %7056 = vmatmul.f32.gmra.mxu0 %v6825
        %v7057 = vpop.f32.mrf.mxu0
        %v7058 = vadd.f32 0.0, %v7057
        %7059 = vmatmul.f32.gmra.mxu0 %v6828
        %v7060 = vpop.f32.mrf.mxu0
        %v7061 = vadd.f32 0.0, %v7060
        %7062 = vmatmul.f32.gmra.mxu0 %v6831
        %v7063 = vpop.f32.mrf.mxu0
        %v7064 = vadd.f32 0.0, %v7063
        %7065 = vmatmul.f32.gmra.mxu0 %v6834
        %v7066 = vpop.f32.mrf.mxu0
        %v7067 = vadd.f32 0.0, %v7066
        %7068 = vmatmul.f32.gmra.mxu0 %v6837
        %v7069 = vpop.f32.mrf.mxu0
        %v7070 = vadd.f32 0.0, %v7069
        %7071 = vmatmul.f32.gmra.mxu0 %v6840
        %v7072 = vpop.f32.mrf.mxu0
        %v7073 = vadd.f32 0.0, %v7072
        %7074 = vdwg.mxu0
        %v7075 = vadd.f32 %v6334, %v6860
        %v7076 = vadd.f32 %v6337, %v6863
        %v7077 = vadd.f32 %v6340, %v6866
        %v7078 = vadd.f32 %v6343, %v6869
        %v7079 = vadd.f32 %v6346, %v6872
        %v7080 = vadd.f32 %v6349, %v6875
        %v7081 = vadd.f32 %v6352, %v6878
        %v7082 = vadd.f32 %v6355, %v6881
        %v7083 = vadd.f32 %v6358, %v6884
        %v7084 = vadd.f32 %v6361, %v6887
        %v7085 = vadd.f32 %v6364, %v6890
        %v7086 = vadd.f32 %v6367, %v6893
        %v7087 = vadd.f32 %v6370, %v6896
        %v7088 = vadd.f32 %v6373, %v6899
        %v7089 = vadd.f32 %v6376, %v6902
        %v7090 = vadd.f32 %v6379, %v6905
        %v7091 = vadd.f32 %v6382, %v6908
        %v7092 = vadd.f32 %v6385, %v6911
        %v7093 = vadd.f32 %v6388, %v6914
        %v7094 = vadd.f32 %v6391, %v6917
        %v7095 = vadd.f32 %v6394, %v6920
        %v7096 = vadd.f32 %v6397, %v6923
        %v7097 = vadd.f32 %v6400, %v6926
        %v7098 = vadd.f32 %v6403, %v6929
        %v7099 = vadd.f32 %v6406, %v6932
        %v7100 = vadd.f32 %v6409, %v6935
        %v7101 = vadd.f32 %v6412, %v6938
        %v7102 = vadd.f32 %v6415, %v6941
        %v7103 = vadd.f32 %v6418, %v6944
        %v7104 = vadd.f32 %v6421, %v6947
        %v7105 = vadd.f32 %v6424, %v6950
        %v7106 = vadd.f32 %v6427, %v6953
        %v7107 = vadd.f32 %v6430, %v6956
        %v7108 = vadd.f32 %v6433, %v6959
        %v7109 = vadd.f32 %v6436, %v6962
        %v7110 = vadd.f32 %v6439, %v6965
        %v7111 = vadd.f32 %v6442, %v6968
        %v7112 = vadd.f32 %v6445, %v6971
        %v7113 = vadd.f32 %v6448, %v6974
        %v7114 = vadd.f32 %v6451, %v6977
        %v7115 = vadd.f32 %v6454, %v6980
        %v7116 = vadd.f32 %v6457, %v6983
        %v7117 = vadd.f32 %v6460, %v6986
        %v7118 = vadd.f32 %v6463, %v6989
        %v7119 = vadd.f32 %v6466, %v6992
        %v7120 = vadd.f32 %v6469, %v6995
        %v7121 = vadd.f32 %v6472, %v6998
        %v7122 = vadd.f32 %v6475, %v7001
        %v7123 = vadd.f32 %v6478, %v7004
        %v7124 = vadd.f32 %v6481, %v7007
        %v7125 = vadd.f32 %v6484, %v7010
        %v7126 = vadd.f32 %v6487, %v7013
        %v7127 = vadd.f32 %v6490, %v7016
        %v7128 = vadd.f32 %v6493, %v7019
        %v7129 = vadd.f32 %v6496, %v7022
        %v7130 = vadd.f32 %v6499, %v7025
        %v7131 = vadd.f32 %v6502, %v7028
        %v7132 = vadd.f32 %v6505, %v7031
        %v7133 = vadd.f32 %v6508, %v7034
        %v7134 = vadd.f32 %v6511, %v7037
        %v7135 = vadd.f32 %v6514, %v7040
        %v7136 = vadd.f32 %v6517, %v7043
        %v7137 = vadd.f32 %v6520, %v7046
        %v7138 = vadd.f32 %v6523, %v7049
        %v7139 = vadd.f32 %v6526, %v7052
        %v7140 = vadd.f32 %v6529, %v7055
        %v7141 = vadd.f32 %v6532, %v7058
        %v7142 = vadd.f32 %v6535, %v7061
        %v7143 = vadd.f32 %v6538, %v7064
        %v7144 = vadd.f32 %v6541, %v7067
        %v7145 = vadd.f32 %v6544, %v7070
        %v7146 = vadd.f32 %v6547, %v7073
        %s7147 = scalar_lea.vmem [#allocation2], 32
        %v7148 = vld [vmem:[%s7147] sm:$0xff]
        %v7149 = vld [vmem:[%s7147 + $0x8] sm:$0xff]
        %v7150 = vld [vmem:[%s7147 + $0x10] sm:$0xff]
        %v7151 = vld [vmem:[%s7147 + $0x20] sm:$0xff]
        %v7152 = vld [vmem:[%s7147 + $0x28] sm:$0xff]
        %v7153 = vld [vmem:[%s7147 + $0x30] sm:$0xff]
        %v7154 = vld [vmem:[%s7147 + $0x40] sm:$0xff]
        %v7155 = vld [vmem:[%s7147 + $0x48] sm:$0xff]
        %v7156 = vld [vmem:[%s7147 + $0x50] sm:$0xff]
        %v7157 = vld [vmem:[%s7147 + $0x60] sm:$0xff]
        %v7158 = vld [vmem:[%s7147 + $0x68] sm:$0xff]
        %v7159 = vld [vmem:[%s7147 + $0x70] sm:$0xff]
        %v7160 = vld [vmem:[%s7147 + $0x80] sm:$0xff]
        %v7161 = vld [vmem:[%s7147 + $0x88] sm:$0xff]
        %v7162 = vld [vmem:[%s7147 + $0x90] sm:$0xff]
        %v7163 = vld [vmem:[%s7147 + $0xa0] sm:$0xff]
        %v7164 = vld [vmem:[%s7147 + $0xa8] sm:$0xff]
        %v7165 = vld [vmem:[%s7147 + $0xb0] sm:$0xff]
        %v7166 = vld [vmem:[%s7147 + $0xc0] sm:$0xff]
        %v7167 = vld [vmem:[%s7147 + $0xc8] sm:$0xff]
        %v7168 = vld [vmem:[%s7147 + $0xd0] sm:$0xff]
        %v7169 = vld [vmem:[%s7147 + $0xe0] sm:$0xff]
        %v7170 = vld [vmem:[%s7147 + $0xe8] sm:$0xff]
        %v7171 = vld [vmem:[%s7147 + $0xf0] sm:$0xff]
        %v7172 = vld [vmem:[%s7147 + $0x100] sm:$0xff]
        %v7173 = vld [vmem:[%s7147 + $0x108] sm:$0xff]
        %v7174 = vld [vmem:[%s7147 + $0x110] sm:$0xff]
        %v7175 = vld [vmem:[%s7147 + $0x120] sm:$0xff]
        %v7176 = vld [vmem:[%s7147 + $0x128] sm:$0xff]
        %v7177 = vld [vmem:[%s7147 + $0x130] sm:$0xff]
        %v7178 = vld [vmem:[%s7147 + $0x140] sm:$0xff]
        %v7179 = vld [vmem:[%s7147 + $0x148] sm:$0xff]
        %v7180 = vld [vmem:[%s7147 + $0x150] sm:$0xff]
        %v7181 = vld [vmem:[%s7147 + $0x160] sm:$0xff]
        %v7182 = vld [vmem:[%s7147 + $0x168] sm:$0xff]
        %v7183 = vld [vmem:[%s7147 + $0x170] sm:$0xff]
        %v7184 = vld [vmem:[%s7147 + $0x180] sm:$0xff]
        %v7185 = vld [vmem:[%s7147 + $0x188] sm:$0xff]
        %v7186 = vld [vmem:[%s7147 + $0x190] sm:$0xff]
        %v7187 = vld [vmem:[%s7147 + $0x1a0] sm:$0xff]
        %v7188 = vld [vmem:[%s7147 + $0x1a8] sm:$0xff]
        %v7189 = vld [vmem:[%s7147 + $0x1b0] sm:$0xff]
        %v7190 = vld [vmem:[%s7147 + $0x1c0] sm:$0xff]
        %v7191 = vld [vmem:[%s7147 + $0x1c8] sm:$0xff]
        %v7192 = vld [vmem:[%s7147 + $0x1d0] sm:$0xff]
        %v7193 = vld [vmem:[%s7147 + $0x1e0] sm:$0xff]
        %v7194 = vld [vmem:[%s7147 + $0x1e8] sm:$0xff]
        %v7195 = vld [vmem:[%s7147 + $0x1f0] sm:$0xff]
        %v7196 = vld [vmem:[%s7147 + $0x200] sm:$0xff]
        %v7197 = vld [vmem:[%s7147 + $0x208] sm:$0xff]
        %v7198 = vld [vmem:[%s7147 + $0x210] sm:$0xff]
        %v7199 = vld [vmem:[%s7147 + $0x220] sm:$0xff]
        %v7200 = vld [vmem:[%s7147 + $0x228] sm:$0xff]
        %v7201 = vld [vmem:[%s7147 + $0x230] sm:$0xff]
        %v7202 = vld [vmem:[%s7147 + $0x240] sm:$0xff]
        %v7203 = vld [vmem:[%s7147 + $0x248] sm:$0xff]
        %v7204 = vld [vmem:[%s7147 + $0x250] sm:$0xff]
        %v7205 = vld [vmem:[%s7147 + $0x260] sm:$0xff]
        %v7206 = vld [vmem:[%s7147 + $0x268] sm:$0xff]
        %v7207 = vld [vmem:[%s7147 + $0x270] sm:$0xff]
        %v7208 = vld [vmem:[%s7147 + $0x280] sm:$0xff]
        %v7209 = vld [vmem:[%s7147 + $0x288] sm:$0xff]
        %v7210 = vld [vmem:[%s7147 + $0x290] sm:$0xff]
        %v7211 = vld [vmem:[%s7147 + $0x2a0] sm:$0xff]
        %v7212 = vld [vmem:[%s7147 + $0x2a8] sm:$0xff]
        %v7213 = vld [vmem:[%s7147 + $0x2b0] sm:$0xff]
        %v7214 = vld [vmem:[%s7147 + $0x2c0] sm:$0xff]
        %v7215 = vld [vmem:[%s7147 + $0x2c8] sm:$0xff]
        %v7216 = vld [vmem:[%s7147 + $0x2d0] sm:$0xff]
        %v7217 = vld [vmem:[%s7147 + $0x2e0] sm:$0xff]
        %v7218 = vld [vmem:[%s7147 + $0x2e8] sm:$0xff]
        %v7219 = vld [vmem:[%s7147 + $0x2f0] sm:$0xff]
        %s7220 = scalar_lea.vmem [#allocation3], 96
        %v7221 = vld [vmem:[%s7220] sm:$0xff]
        %v7222 = vld [vmem:[%s7220 + $0x8] sm:$0xff]
        %v7223 = vld [vmem:[%s7220 + $0x10] sm:$0xff]
        %v7224 = vld [vmem:[%s7220 + $0x18] sm:$0xff]
        %v7226 = vsel %vm5392, %v7148, 0
        %v7229 = vsel %vm5392, %v7149, 0
        %v7232 = vsel %vm5392, %v7150, 0
        %v7235 = vsel %vm5392, %v7151, 0
        %v7238 = vsel %vm5392, %v7152, 0
        %v7241 = vsel %vm5392, %v7153, 0
        %v7244 = vsel %vm5392, %v7154, 0
        %v7247 = vsel %vm5392, %v7155, 0
        %v7250 = vsel %vm5392, %v7156, 0
        %v7253 = vsel %vm5392, %v7157, 0
        %v7256 = vsel %vm5392, %v7158, 0
        %v7259 = vsel %vm5392, %v7159, 0
        %v7262 = vsel %vm5392, %v7160, 0
        %v7265 = vsel %vm5392, %v7161, 0
        %v7268 = vsel %vm5392, %v7162, 0
        %v7271 = vsel %vm5392, %v7163, 0
        %v7274 = vsel %vm5392, %v7164, 0
        %v7277 = vsel %vm5392, %v7165, 0
        %v7280 = vsel %vm5392, %v7166, 0
        %v7283 = vsel %vm5392, %v7167, 0
        %v7286 = vsel %vm5392, %v7168, 0
        %v7289 = vsel %vm5392, %v7169, 0
        %v7292 = vsel %vm5392, %v7170, 0
        %v7295 = vsel %vm5392, %v7171, 0
        %v7298 = vsel %vm5392, %v7172, 0
        %v7301 = vsel %vm5392, %v7173, 0
        %v7304 = vsel %vm5392, %v7174, 0
        %v7307 = vsel %vm5392, %v7175, 0
        %v7310 = vsel %vm5392, %v7176, 0
        %v7313 = vsel %vm5392, %v7177, 0
        %v7316 = vsel %vm5392, %v7178, 0
        %v7319 = vsel %vm5392, %v7179, 0
        %v7322 = vsel %vm5392, %v7180, 0
        %v7325 = vsel %vm5392, %v7181, 0
        %v7328 = vsel %vm5392, %v7182, 0
        %v7331 = vsel %vm5392, %v7183, 0
        %v7334 = vsel %vm5392, %v7184, 0
        %v7337 = vsel %vm5392, %v7185, 0
        %v7340 = vsel %vm5392, %v7186, 0
        %v7343 = vsel %vm5392, %v7187, 0
        %v7346 = vsel %vm5392, %v7188, 0
        %v7349 = vsel %vm5392, %v7189, 0
        %v7352 = vsel %vm5392, %v7190, 0
        %v7355 = vsel %vm5392, %v7191, 0
        %v7358 = vsel %vm5392, %v7192, 0
        %v7361 = vsel %vm5392, %v7193, 0
        %v7364 = vsel %vm5392, %v7194, 0
        %v7367 = vsel %vm5392, %v7195, 0
        %v7370 = vsel %vm5392, %v7196, 0
        %v7373 = vsel %vm5392, %v7197, 0
        %v7376 = vsel %vm5392, %v7198, 0
        %v7379 = vsel %vm5392, %v7199, 0
        %v7382 = vsel %vm5392, %v7200, 0
        %v7385 = vsel %vm5392, %v7201, 0
        %v7388 = vsel %vm5392, %v7202, 0
        %v7391 = vsel %vm5392, %v7203, 0
        %v7394 = vsel %vm5392, %v7204, 0
        %v7397 = vsel %vm5392, %v7205, 0
        %v7400 = vsel %vm5392, %v7206, 0
        %v7403 = vsel %vm5392, %v7207, 0
        %v7406 = vsel %vm5392, %v7208, 0
        %v7409 = vsel %vm5392, %v7209, 0
        %v7412 = vsel %vm5392, %v7210, 0
        %v7415 = vsel %vm5392, %v7211, 0
        %v7418 = vsel %vm5392, %v7212, 0
        %v7421 = vsel %vm5392, %v7213, 0
        %v7424 = vsel %vm5392, %v7214, 0
        %v7427 = vsel %vm5392, %v7215, 0
        %v7430 = vsel %vm5392, %v7216, 0
        %v7433 = vsel %vm5392, %v7217, 0
        %v7436 = vsel %vm5392, %v7218, 0
        %v7439 = vsel %vm5392, %v7219, 0
        %7441 = vmatpush.msra.mxu0 0.0
        %7442 = vmatpush.msra.mxu0 0.0
        %7443 = vmatpush.msra.mxu0 0.0
        %7444 = vmatpush.msra.mxu0 0.0
        %7445 = vmatpush.msra.mxu0 0.0
        %7446 = vmatpush.msra.mxu0 0.0
        %7447 = vmatpush.msra.mxu0 0.0
        %7448 = vmatpush.msra.mxu0 0.0
        %7449 = vmatpush.msra.mxu0 0.0
        %7450 = vmatpush.msra.mxu0 0.0
        %7451 = vmatpush.msra.mxu0 0.0
        %7452 = vmatpush.msra.mxu0 0.0
        %7453 = vmatpush.msra.mxu0 %v7224
        %7454 = vmatpush.msra.mxu0 %v7223
        %7455 = vmatpush.msra.mxu0 %v7222
        %7456 = vmatpush.msra.mxu0 %v7221
        %7457 = vmatmul.f32.gmra.mxu0 %v7226
        %v7458 = vpop.f32.mrf.mxu0
        %v7459 = vadd.f32 0.0, %v7458
        %7460 = vmatmul.f32.gmra.mxu0 %v7229
        %v7461 = vpop.f32.mrf.mxu0
        %v7462 = vadd.f32 0.0, %v7461
        %7463 = vmatmul.f32.gmra.mxu0 %v7232
        %v7464 = vpop.f32.mrf.mxu0
        %v7465 = vadd.f32 0.0, %v7464
        %7466 = vmatmul.f32.gmra.mxu0 %v7235
        %v7467 = vpop.f32.mrf.mxu0
        %v7468 = vadd.f32 0.0, %v7467
        %7469 = vmatmul.f32.gmra.mxu0 %v7238
        %v7470 = vpop.f32.mrf.mxu0
        %v7471 = vadd.f32 0.0, %v7470
        %7472 = vmatmul.f32.gmra.mxu0 %v7241
        %v7473 = vpop.f32.mrf.mxu0
        %v7474 = vadd.f32 0.0, %v7473
        %7475 = vmatmul.f32.gmra.mxu0 %v7244
        %v7476 = vpop.f32.mrf.mxu0
        %v7477 = vadd.f32 0.0, %v7476
        %7478 = vmatmul.f32.gmra.mxu0 %v7247
        %v7479 = vpop.f32.mrf.mxu0
        %v7480 = vadd.f32 0.0, %v7479
        %7481 = vmatmul.f32.gmra.mxu0 %v7250
        %v7482 = vpop.f32.mrf.mxu0
        %v7483 = vadd.f32 0.0, %v7482
        %7484 = vmatmul.f32.gmra.mxu0 %v7253
        %v7485 = vpop.f32.mrf.mxu0
        %v7486 = vadd.f32 0.0, %v7485
        %7487 = vmatmul.f32.gmra.mxu0 %v7256
        %v7488 = vpop.f32.mrf.mxu0
        %v7489 = vadd.f32 0.0, %v7488
        %7490 = vmatmul.f32.gmra.mxu0 %v7259
        %v7491 = vpop.f32.mrf.mxu0
        %v7492 = vadd.f32 0.0, %v7491
        %7493 = vmatmul.f32.gmra.mxu0 %v7262
        %v7494 = vpop.f32.mrf.mxu0
        %v7495 = vadd.f32 0.0, %v7494
        %7496 = vmatmul.f32.gmra.mxu0 %v7265
        %v7497 = vpop.f32.mrf.mxu0
        %v7498 = vadd.f32 0.0, %v7497
        %7499 = vmatmul.f32.gmra.mxu0 %v7268
        %v7500 = vpop.f32.mrf.mxu0
        %v7501 = vadd.f32 0.0, %v7500
        %7502 = vmatmul.f32.gmra.mxu0 %v7271
        %v7503 = vpop.f32.mrf.mxu0
        %v7504 = vadd.f32 0.0, %v7503
        %7505 = vmatmul.f32.gmra.mxu0 %v7274
        %v7506 = vpop.f32.mrf.mxu0
        %v7507 = vadd.f32 0.0, %v7506
        %7508 = vmatmul.f32.gmra.mxu0 %v7277
        %v7509 = vpop.f32.mrf.mxu0
        %v7510 = vadd.f32 0.0, %v7509
        %7511 = vmatmul.f32.gmra.mxu0 %v7280
        %v7512 = vpop.f32.mrf.mxu0
        %v7513 = vadd.f32 0.0, %v7512
        %7514 = vmatmul.f32.gmra.mxu0 %v7283
        %v7515 = vpop.f32.mrf.mxu0
        %v7516 = vadd.f32 0.0, %v7515
        %7517 = vmatmul.f32.gmra.mxu0 %v7286
        %v7518 = vpop.f32.mrf.mxu0
        %v7519 = vadd.f32 0.0, %v7518
        %7520 = vmatmul.f32.gmra.mxu0 %v7289
        %v7521 = vpop.f32.mrf.mxu0
        %v7522 = vadd.f32 0.0, %v7521
        %7523 = vmatmul.f32.gmra.mxu0 %v7292
        %v7524 = vpop.f32.mrf.mxu0
        %v7525 = vadd.f32 0.0, %v7524
        %7526 = vmatmul.f32.gmra.mxu0 %v7295
        %v7527 = vpop.f32.mrf.mxu0
        %v7528 = vadd.f32 0.0, %v7527
        %7529 = vmatmul.f32.gmra.mxu0 %v7298
        %v7530 = vpop.f32.mrf.mxu0
        %v7531 = vadd.f32 0.0, %v7530
        %7532 = vmatmul.f32.gmra.mxu0 %v7301
        %v7533 = vpop.f32.mrf.mxu0
        %v7534 = vadd.f32 0.0, %v7533
        %7535 = vmatmul.f32.gmra.mxu0 %v7304
        %v7536 = vpop.f32.mrf.mxu0
        %v7537 = vadd.f32 0.0, %v7536
        %7538 = vmatmul.f32.gmra.mxu0 %v7307
        %v7539 = vpop.f32.mrf.mxu0
        %v7540 = vadd.f32 0.0, %v7539
        %7541 = vmatmul.f32.gmra.mxu0 %v7310
        %v7542 = vpop.f32.mrf.mxu0
        %v7543 = vadd.f32 0.0, %v7542
        %7544 = vmatmul.f32.gmra.mxu0 %v7313
        %v7545 = vpop.f32.mrf.mxu0
        %v7546 = vadd.f32 0.0, %v7545
        %7547 = vmatmul.f32.gmra.mxu0 %v7316
        %v7548 = vpop.f32.mrf.mxu0
        %v7549 = vadd.f32 0.0, %v7548
        %7550 = vmatmul.f32.gmra.mxu0 %v7319
        %v7551 = vpop.f32.mrf.mxu0
        %v7552 = vadd.f32 0.0, %v7551
        %7553 = vmatmul.f32.gmra.mxu0 %v7322
        %v7554 = vpop.f32.mrf.mxu0
        %v7555 = vadd.f32 0.0, %v7554
        %7556 = vmatmul.f32.gmra.mxu0 %v7325
        %v7557 = vpop.f32.mrf.mxu0
        %v7558 = vadd.f32 0.0, %v7557
        %7559 = vmatmul.f32.gmra.mxu0 %v7328
        %v7560 = vpop.f32.mrf.mxu0
        %v7561 = vadd.f32 0.0, %v7560
        %7562 = vmatmul.f32.gmra.mxu0 %v7331
        %v7563 = vpop.f32.mrf.mxu0
        %v7564 = vadd.f32 0.0, %v7563
        %7565 = vmatmul.f32.gmra.mxu0 %v7334
        %v7566 = vpop.f32.mrf.mxu0
        %v7567 = vadd.f32 0.0, %v7566
        %7568 = vmatmul.f32.gmra.mxu0 %v7337
        %v7569 = vpop.f32.mrf.mxu0
        %v7570 = vadd.f32 0.0, %v7569
        %7571 = vmatmul.f32.gmra.mxu0 %v7340
        %v7572 = vpop.f32.mrf.mxu0
        %v7573 = vadd.f32 0.0, %v7572
        %7574 = vmatmul.f32.gmra.mxu0 %v7343
        %v7575 = vpop.f32.mrf.mxu0
        %v7576 = vadd.f32 0.0, %v7575
        %7577 = vmatmul.f32.gmra.mxu0 %v7346
        %v7578 = vpop.f32.mrf.mxu0
        %v7579 = vadd.f32 0.0, %v7578
        %7580 = vmatmul.f32.gmra.mxu0 %v7349
        %v7581 = vpop.f32.mrf.mxu0
        %v7582 = vadd.f32 0.0, %v7581
        %7583 = vmatmul.f32.gmra.mxu0 %v7352
        %v7584 = vpop.f32.mrf.mxu0
        %v7585 = vadd.f32 0.0, %v7584
        %7586 = vmatmul.f32.gmra.mxu0 %v7355
        %v7587 = vpop.f32.mrf.mxu0
        %v7588 = vadd.f32 0.0, %v7587
        %7589 = vmatmul.f32.gmra.mxu0 %v7358
        %v7590 = vpop.f32.mrf.mxu0
        %v7591 = vadd.f32 0.0, %v7590
        %7592 = vmatmul.f32.gmra.mxu0 %v7361
        %v7593 = vpop.f32.mrf.mxu0
        %v7594 = vadd.f32 0.0, %v7593
        %7595 = vmatmul.f32.gmra.mxu0 %v7364
        %v7596 = vpop.f32.mrf.mxu0
        %v7597 = vadd.f32 0.0, %v7596
        %7598 = vmatmul.f32.gmra.mxu0 %v7367
        %v7599 = vpop.f32.mrf.mxu0
        %v7600 = vadd.f32 0.0, %v7599
        %7601 = vmatmul.f32.gmra.mxu0 %v7370
        %v7602 = vpop.f32.mrf.mxu0
        %v7603 = vadd.f32 0.0, %v7602
        %7604 = vmatmul.f32.gmra.mxu0 %v7373
        %v7605 = vpop.f32.mrf.mxu0
        %v7606 = vadd.f32 0.0, %v7605
        %7607 = vmatmul.f32.gmra.mxu0 %v7376
        %v7608 = vpop.f32.mrf.mxu0
        %v7609 = vadd.f32 0.0, %v7608
        %7610 = vmatmul.f32.gmra.mxu0 %v7379
        %v7611 = vpop.f32.mrf.mxu0
        %v7612 = vadd.f32 0.0, %v7611
        %7613 = vmatmul.f32.gmra.mxu0 %v7382
        %v7614 = vpop.f32.mrf.mxu0
        %v7615 = vadd.f32 0.0, %v7614
        %7616 = vmatmul.f32.gmra.mxu0 %v7385
        %v7617 = vpop.f32.mrf.mxu0
        %v7618 = vadd.f32 0.0, %v7617
        %7619 = vmatmul.f32.gmra.mxu0 %v7388
        %v7620 = vpop.f32.mrf.mxu0
        %v7621 = vadd.f32 0.0, %v7620
        %7622 = vmatmul.f32.gmra.mxu0 %v7391
        %v7623 = vpop.f32.mrf.mxu0
        %v7624 = vadd.f32 0.0, %v7623
        %7625 = vmatmul.f32.gmra.mxu0 %v7394
        %v7626 = vpop.f32.mrf.mxu0
        %v7627 = vadd.f32 0.0, %v7626
        %7628 = vmatmul.f32.gmra.mxu0 %v7397
        %v7629 = vpop.f32.mrf.mxu0
        %v7630 = vadd.f32 0.0, %v7629
        %7631 = vmatmul.f32.gmra.mxu0 %v7400
        %v7632 = vpop.f32.mrf.mxu0
        %v7633 = vadd.f32 0.0, %v7632
        %7634 = vmatmul.f32.gmra.mxu0 %v7403
        %v7635 = vpop.f32.mrf.mxu0
        %v7636 = vadd.f32 0.0, %v7635
        %7637 = vmatmul.f32.gmra.mxu0 %v7406
        %v7638 = vpop.f32.mrf.mxu0
        %v7639 = vadd.f32 0.0, %v7638
        %7640 = vmatmul.f32.gmra.mxu0 %v7409
        %v7641 = vpop.f32.mrf.mxu0
        %v7642 = vadd.f32 0.0, %v7641
        %7643 = vmatmul.f32.gmra.mxu0 %v7412
        %v7644 = vpop.f32.mrf.mxu0
        %v7645 = vadd.f32 0.0, %v7644
        %7646 = vmatmul.f32.gmra.mxu0 %v7415
        %v7647 = vpop.f32.mrf.mxu0
        %v7648 = vadd.f32 0.0, %v7647
        %7649 = vmatmul.f32.gmra.mxu0 %v7418
        %v7650 = vpop.f32.mrf.mxu0
        %v7651 = vadd.f32 0.0, %v7650
        %7652 = vmatmul.f32.gmra.mxu0 %v7421
        %v7653 = vpop.f32.mrf.mxu0
        %v7654 = vadd.f32 0.0, %v7653
        %7655 = vmatmul.f32.gmra.mxu0 %v7424
        %v7656 = vpop.f32.mrf.mxu0
        %v7657 = vadd.f32 0.0, %v7656
        %7658 = vmatmul.f32.gmra.mxu0 %v7427
        %v7659 = vpop.f32.mrf.mxu0
        %v7660 = vadd.f32 0.0, %v7659
        %7661 = vmatmul.f32.gmra.mxu0 %v7430
        %v7662 = vpop.f32.mrf.mxu0
        %v7663 = vadd.f32 0.0, %v7662
        %7664 = vmatmul.f32.gmra.mxu0 %v7433
        %v7665 = vpop.f32.mrf.mxu0
        %v7666 = vadd.f32 0.0, %v7665
        %7667 = vmatmul.f32.gmra.mxu0 %v7436
        %v7668 = vpop.f32.mrf.mxu0
        %v7669 = vadd.f32 0.0, %v7668
        %7670 = vmatmul.f32.gmra.mxu0 %v7439
        %v7671 = vpop.f32.mrf.mxu0
        %v7672 = vadd.f32 0.0, %v7671
        %7673 = vdwg.mxu0
        %v7674 = vadd.f32 %v7075, %v7459
        %v7675 = vadd.f32 %v7076, %v7462
        %v7676 = vadd.f32 %v7077, %v7465
        %v7677 = vadd.f32 %v7078, %v7468
        %v7678 = vadd.f32 %v7079, %v7471
        %v7679 = vadd.f32 %v7080, %v7474
        %v7680 = vadd.f32 %v7081, %v7477
        %v7681 = vadd.f32 %v7082, %v7480
        %v7682 = vadd.f32 %v7083, %v7483
        %v7683 = vadd.f32 %v7084, %v7486
        %v7684 = vadd.f32 %v7085, %v7489
        %v7685 = vadd.f32 %v7086, %v7492
        %v7686 = vadd.f32 %v7087, %v7495
        %v7687 = vadd.f32 %v7088, %v7498
        %v7688 = vadd.f32 %v7089, %v7501
        %v7689 = vadd.f32 %v7090, %v7504
        %v7690 = vadd.f32 %v7091, %v7507
        %v7691 = vadd.f32 %v7092, %v7510
        %v7692 = vadd.f32 %v7093, %v7513
        %v7693 = vadd.f32 %v7094, %v7516
        %v7694 = vadd.f32 %v7095, %v7519
        %v7695 = vadd.f32 %v7096, %v7522
        %v7696 = vadd.f32 %v7097, %v7525
        %v7697 = vadd.f32 %v7098, %v7528
        %v7698 = vadd.f32 %v7099, %v7531
        %v7699 = vadd.f32 %v7100, %v7534
        %v7700 = vadd.f32 %v7101, %v7537
        %v7701 = vadd.f32 %v7102, %v7540
        %v7702 = vadd.f32 %v7103, %v7543
        %v7703 = vadd.f32 %v7104, %v7546
        %v7704 = vadd.f32 %v7105, %v7549
        %v7705 = vadd.f32 %v7106, %v7552
        %v7706 = vadd.f32 %v7107, %v7555
        %v7707 = vadd.f32 %v7108, %v7558
        %v7708 = vadd.f32 %v7109, %v7561
        %v7709 = vadd.f32 %v7110, %v7564
        %v7710 = vadd.f32 %v7111, %v7567
        %v7711 = vadd.f32 %v7112, %v7570
        %v7712 = vadd.f32 %v7113, %v7573
        %v7713 = vadd.f32 %v7114, %v7576
        %v7714 = vadd.f32 %v7115, %v7579
        %v7715 = vadd.f32 %v7116, %v7582
        %v7716 = vadd.f32 %v7117, %v7585
        %v7717 = vadd.f32 %v7118, %v7588
        %v7718 = vadd.f32 %v7119, %v7591
        %v7719 = vadd.f32 %v7120, %v7594
        %v7720 = vadd.f32 %v7121, %v7597
        %v7721 = vadd.f32 %v7122, %v7600
        %v7722 = vadd.f32 %v7123, %v7603
        %v7723 = vadd.f32 %v7124, %v7606
        %v7724 = vadd.f32 %v7125, %v7609
        %v7725 = vadd.f32 %v7126, %v7612
        %v7726 = vadd.f32 %v7127, %v7615
        %v7727 = vadd.f32 %v7128, %v7618
        %v7728 = vadd.f32 %v7129, %v7621
        %v7729 = vadd.f32 %v7130, %v7624
        %v7730 = vadd.f32 %v7131, %v7627
        %v7731 = vadd.f32 %v7132, %v7630
        %v7732 = vadd.f32 %v7133, %v7633
        %v7733 = vadd.f32 %v7134, %v7636
        %v7734 = vadd.f32 %v7135, %v7639
        %v7735 = vadd.f32 %v7136, %v7642
        %v7736 = vadd.f32 %v7137, %v7645
        %v7737 = vadd.f32 %v7138, %v7648
        %v7738 = vadd.f32 %v7139, %v7651
        %v7739 = vadd.f32 %v7140, %v7654
        %v7740 = vadd.f32 %v7141, %v7657
        %v7741 = vadd.f32 %v7142, %v7660
        %v7742 = vadd.f32 %v7143, %v7663
        %v7743 = vadd.f32 %v7144, %v7666
        %v7744 = vadd.f32 %v7145, %v7669
        %v7745 = vadd.f32 %v7146, %v7672
        %v7746 = vld [vmem:[%s7147 + $0x1] sm:$0xff]
        %v7747 = vld [vmem:[%s7147 + $0x9] sm:$0xff]
        %v7748 = vld [vmem:[%s7147 + $0x11] sm:$0xff]
        %v7749 = vld [vmem:[%s7147 + $0x21] sm:$0xff]
        %v7750 = vld [vmem:[%s7147 + $0x29] sm:$0xff]
        %v7751 = vld [vmem:[%s7147 + $0x31] sm:$0xff]
        %v7752 = vld [vmem:[%s7147 + $0x41] sm:$0xff]
        %v7753 = vld [vmem:[%s7147 + $0x49] sm:$0xff]
        %v7754 = vld [vmem:[%s7147 + $0x51] sm:$0xff]
        %v7755 = vld [vmem:[%s7147 + $0x61] sm:$0xff]
        %v7756 = vld [vmem:[%s7147 + $0x69] sm:$0xff]
        %v7757 = vld [vmem:[%s7147 + $0x71] sm:$0xff]
        %v7758 = vld [vmem:[%s7147 + $0x81] sm:$0xff]
        %v7759 = vld [vmem:[%s7147 + $0x89] sm:$0xff]
        %v7760 = vld [vmem:[%s7147 + $0x91] sm:$0xff]
        %v7761 = vld [vmem:[%s7147 + $0xa1] sm:$0xff]
        %v7762 = vld [vmem:[%s7147 + $0xa9] sm:$0xff]
        %v7763 = vld [vmem:[%s7147 + $0xb1] sm:$0xff]
        %v7764 = vld [vmem:[%s7147 + $0xc1] sm:$0xff]
        %v7765 = vld [vmem:[%s7147 + $0xc9] sm:$0xff]
        %v7766 = vld [vmem:[%s7147 + $0xd1] sm:$0xff]
        %v7767 = vld [vmem:[%s7147 + $0xe1] sm:$0xff]
        %v7768 = vld [vmem:[%s7147 + $0xe9] sm:$0xff]
        %v7769 = vld [vmem:[%s7147 + $0xf1] sm:$0xff]
        %v7770 = vld [vmem:[%s7147 + $0x101] sm:$0xff]
        %v7771 = vld [vmem:[%s7147 + $0x109] sm:$0xff]
        %v7772 = vld [vmem:[%s7147 + $0x111] sm:$0xff]
        %v7773 = vld [vmem:[%s7147 + $0x121] sm:$0xff]
        %v7774 = vld [vmem:[%s7147 + $0x129] sm:$0xff]
        %v7775 = vld [vmem:[%s7147 + $0x131] sm:$0xff]
        %v7776 = vld [vmem:[%s7147 + $0x141] sm:$0xff]
        %v7777 = vld [vmem:[%s7147 + $0x149] sm:$0xff]
        %v7778 = vld [vmem:[%s7147 + $0x151] sm:$0xff]
        %v7779 = vld [vmem:[%s7147 + $0x161] sm:$0xff]
        %v7780 = vld [vmem:[%s7147 + $0x169] sm:$0xff]
        %v7781 = vld [vmem:[%s7147 + $0x171] sm:$0xff]
        %v7782 = vld [vmem:[%s7147 + $0x181] sm:$0xff]
        %v7783 = vld [vmem:[%s7147 + $0x189] sm:$0xff]
        %v7784 = vld [vmem:[%s7147 + $0x191] sm:$0xff]
        %v7785 = vld [vmem:[%s7147 + $0x1a1] sm:$0xff]
        %v7786 = vld [vmem:[%s7147 + $0x1a9] sm:$0xff]
        %v7787 = vld [vmem:[%s7147 + $0x1b1] sm:$0xff]
        %v7788 = vld [vmem:[%s7147 + $0x1c1] sm:$0xff]
        %v7789 = vld [vmem:[%s7147 + $0x1c9] sm:$0xff]
        %v7790 = vld [vmem:[%s7147 + $0x1d1] sm:$0xff]
        %v7791 = vld [vmem:[%s7147 + $0x1e1] sm:$0xff]
        %v7792 = vld [vmem:[%s7147 + $0x1e9] sm:$0xff]
        %v7793 = vld [vmem:[%s7147 + $0x1f1] sm:$0xff]
        %v7794 = vld [vmem:[%s7147 + $0x201] sm:$0xff]
        %v7795 = vld [vmem:[%s7147 + $0x209] sm:$0xff]
        %v7796 = vld [vmem:[%s7147 + $0x211] sm:$0xff]
        %v7797 = vld [vmem:[%s7147 + $0x221] sm:$0xff]
        %v7798 = vld [vmem:[%s7147 + $0x229] sm:$0xff]
        %v7799 = vld [vmem:[%s7147 + $0x231] sm:$0xff]
        %v7800 = vld [vmem:[%s7147 + $0x241] sm:$0xff]
        %v7801 = vld [vmem:[%s7147 + $0x249] sm:$0xff]
        %v7802 = vld [vmem:[%s7147 + $0x251] sm:$0xff]
        %v7803 = vld [vmem:[%s7147 + $0x261] sm:$0xff]
        %v7804 = vld [vmem:[%s7147 + $0x269] sm:$0xff]
        %v7805 = vld [vmem:[%s7147 + $0x271] sm:$0xff]
        %v7806 = vld [vmem:[%s7147 + $0x281] sm:$0xff]
        %v7807 = vld [vmem:[%s7147 + $0x289] sm:$0xff]
        %v7808 = vld [vmem:[%s7147 + $0x291] sm:$0xff]
        %v7809 = vld [vmem:[%s7147 + $0x2a1] sm:$0xff]
        %v7810 = vld [vmem:[%s7147 + $0x2a9] sm:$0xff]
        %v7811 = vld [vmem:[%s7147 + $0x2b1] sm:$0xff]
        %v7812 = vld [vmem:[%s7147 + $0x2c1] sm:$0xff]
        %v7813 = vld [vmem:[%s7147 + $0x2c9] sm:$0xff]
        %v7814 = vld [vmem:[%s7147 + $0x2d1] sm:$0xff]
        %v7815 = vld [vmem:[%s7147 + $0x2e1] sm:$0xff]
        %v7816 = vld [vmem:[%s7147 + $0x2e9] sm:$0xff]
        %v7817 = vld [vmem:[%s7147 + $0x2f1] sm:$0xff]
        %s7818 = scalar_lea.vmem [#allocation3], 128
        %v7819 = vld [vmem:[%s7818] sm:$0xff]
        %v7820 = vld [vmem:[%s7818 + $0x8] sm:$0xff]
        %v7821 = vld [vmem:[%s7818 + $0x10] sm:$0xff]
        %v7822 = vld [vmem:[%s7818 + $0x18] sm:$0xff]
        %v7824 = vsel %vm5392, %v7746, 0
        %v7827 = vsel %vm5392, %v7747, 0
        %v7830 = vsel %vm5392, %v7748, 0
        %v7833 = vsel %vm5392, %v7749, 0
        %v7836 = vsel %vm5392, %v7750, 0
        %v7839 = vsel %vm5392, %v7751, 0
        %v7842 = vsel %vm5392, %v7752, 0
        %v7845 = vsel %vm5392, %v7753, 0
        %v7848 = vsel %vm5392, %v7754, 0
        %v7851 = vsel %vm5392, %v7755, 0
        %v7854 = vsel %vm5392, %v7756, 0
        %v7857 = vsel %vm5392, %v7757, 0
        %v7860 = vsel %vm5392, %v7758, 0
        %v7863 = vsel %vm5392, %v7759, 0
        %v7866 = vsel %vm5392, %v7760, 0
        %v7869 = vsel %vm5392, %v7761, 0
        %v7872 = vsel %vm5392, %v7762, 0
        %v7875 = vsel %vm5392, %v7763, 0
        %v7878 = vsel %vm5392, %v7764, 0
        %v7881 = vsel %vm5392, %v7765, 0
        %v7884 = vsel %vm5392, %v7766, 0
        %v7887 = vsel %vm5392, %v7767, 0
        %v7890 = vsel %vm5392, %v7768, 0
        %v7893 = vsel %vm5392, %v7769, 0
        %v7896 = vsel %vm5392, %v7770, 0
        %v7899 = vsel %vm5392, %v7771, 0
        %v7902 = vsel %vm5392, %v7772, 0
        %v7905 = vsel %vm5392, %v7773, 0
        %v7908 = vsel %vm5392, %v7774, 0
        %v7911 = vsel %vm5392, %v7775, 0
        %v7914 = vsel %vm5392, %v7776, 0
        %v7917 = vsel %vm5392, %v7777, 0
        %v7920 = vsel %vm5392, %v7778, 0
        %v7923 = vsel %vm5392, %v7779, 0
        %v7926 = vsel %vm5392, %v7780, 0
        %v7929 = vsel %vm5392, %v7781, 0
        %v7932 = vsel %vm5392, %v7782, 0
        %v7935 = vsel %vm5392, %v7783, 0
        %v7938 = vsel %vm5392, %v7784, 0
        %v7941 = vsel %vm5392, %v7785, 0
        %v7944 = vsel %vm5392, %v7786, 0
        %v7947 = vsel %vm5392, %v7787, 0
        %v7950 = vsel %vm5392, %v7788, 0
        %v7953 = vsel %vm5392, %v7789, 0
        %v7956 = vsel %vm5392, %v7790, 0
        %v7959 = vsel %vm5392, %v7791, 0
        %v7962 = vsel %vm5392, %v7792, 0
        %v7965 = vsel %vm5392, %v7793, 0
        %v7968 = vsel %vm5392, %v7794, 0
        %v7971 = vsel %vm5392, %v7795, 0
        %v7974 = vsel %vm5392, %v7796, 0
        %v7977 = vsel %vm5392, %v7797, 0
        %v7980 = vsel %vm5392, %v7798, 0
        %v7983 = vsel %vm5392, %v7799, 0
        %v7986 = vsel %vm5392, %v7800, 0
        %v7989 = vsel %vm5392, %v7801, 0
        %v7992 = vsel %vm5392, %v7802, 0
        %v7995 = vsel %vm5392, %v7803, 0
        %v7998 = vsel %vm5392, %v7804, 0
        %v8001 = vsel %vm5392, %v7805, 0
        %v8004 = vsel %vm5392, %v7806, 0
        %v8007 = vsel %vm5392, %v7807, 0
        %v8010 = vsel %vm5392, %v7808, 0
        %v8013 = vsel %vm5392, %v7809, 0
        %v8016 = vsel %vm5392, %v7810, 0
        %v8019 = vsel %vm5392, %v7811, 0
        %v8022 = vsel %vm5392, %v7812, 0
        %v8025 = vsel %vm5392, %v7813, 0
        %v8028 = vsel %vm5392, %v7814, 0
        %v8031 = vsel %vm5392, %v7815, 0
        %v8034 = vsel %vm5392, %v7816, 0
        %v8037 = vsel %vm5392, %v7817, 0
        %8039 = vmatpush.msra.mxu0 0.0
        %8040 = vmatpush.msra.mxu0 0.0
        %8041 = vmatpush.msra.mxu0 0.0
        %8042 = vmatpush.msra.mxu0 0.0
        %8043 = vmatpush.msra.mxu0 0.0
        %8044 = vmatpush.msra.mxu0 0.0
        %8045 = vmatpush.msra.mxu0 0.0
        %8046 = vmatpush.msra.mxu0 0.0
        %8047 = vmatpush.msra.mxu0 0.0
        %8048 = vmatpush.msra.mxu0 0.0
        %8049 = vmatpush.msra.mxu0 0.0
        %8050 = vmatpush.msra.mxu0 0.0
        %8051 = vmatpush.msra.mxu0 %v7822
        %8052 = vmatpush.msra.mxu0 %v7821
        %8053 = vmatpush.msra.mxu0 %v7820
        %8054 = vmatpush.msra.mxu0 %v7819
        %8055 = vmatmul.f32.gmra.mxu0 %v7824
        %v8056 = vpop.f32.mrf.mxu0
        %v8057 = vadd.f32 0.0, %v8056
        %8058 = vmatmul.f32.gmra.mxu0 %v7827
        %v8059 = vpop.f32.mrf.mxu0
        %v8060 = vadd.f32 0.0, %v8059
        %8061 = vmatmul.f32.gmra.mxu0 %v7830
        %v8062 = vpop.f32.mrf.mxu0
        %v8063 = vadd.f32 0.0, %v8062
        %8064 = vmatmul.f32.gmra.mxu0 %v7833
        %v8065 = vpop.f32.mrf.mxu0
        %v8066 = vadd.f32 0.0, %v8065
        %8067 = vmatmul.f32.gmra.mxu0 %v7836
        %v8068 = vpop.f32.mrf.mxu0
        %v8069 = vadd.f32 0.0, %v8068
        %8070 = vmatmul.f32.gmra.mxu0 %v7839
        %v8071 = vpop.f32.mrf.mxu0
        %v8072 = vadd.f32 0.0, %v8071
        %8073 = vmatmul.f32.gmra.mxu0 %v7842
        %v8074 = vpop.f32.mrf.mxu0
        %v8075 = vadd.f32 0.0, %v8074
        %8076 = vmatmul.f32.gmra.mxu0 %v7845
        %v8077 = vpop.f32.mrf.mxu0
        %v8078 = vadd.f32 0.0, %v8077
        %8079 = vmatmul.f32.gmra.mxu0 %v7848
        %v8080 = vpop.f32.mrf.mxu0
        %v8081 = vadd.f32 0.0, %v8080
        %8082 = vmatmul.f32.gmra.mxu0 %v7851
        %v8083 = vpop.f32.mrf.mxu0
        %v8084 = vadd.f32 0.0, %v8083
        %8085 = vmatmul.f32.gmra.mxu0 %v7854
        %v8086 = vpop.f32.mrf.mxu0
        %v8087 = vadd.f32 0.0, %v8086
        %8088 = vmatmul.f32.gmra.mxu0 %v7857
        %v8089 = vpop.f32.mrf.mxu0
        %v8090 = vadd.f32 0.0, %v8089
        %8091 = vmatmul.f32.gmra.mxu0 %v7860
        %v8092 = vpop.f32.mrf.mxu0
        %v8093 = vadd.f32 0.0, %v8092
        %8094 = vmatmul.f32.gmra.mxu0 %v7863
        %v8095 = vpop.f32.mrf.mxu0
        %v8096 = vadd.f32 0.0, %v8095
        %8097 = vmatmul.f32.gmra.mxu0 %v7866
        %v8098 = vpop.f32.mrf.mxu0
        %v8099 = vadd.f32 0.0, %v8098
        %8100 = vmatmul.f32.gmra.mxu0 %v7869
        %v8101 = vpop.f32.mrf.mxu0
        %v8102 = vadd.f32 0.0, %v8101
        %8103 = vmatmul.f32.gmra.mxu0 %v7872
        %v8104 = vpop.f32.mrf.mxu0
        %v8105 = vadd.f32 0.0, %v8104
        %8106 = vmatmul.f32.gmra.mxu0 %v7875
        %v8107 = vpop.f32.mrf.mxu0
        %v8108 = vadd.f32 0.0, %v8107
        %8109 = vmatmul.f32.gmra.mxu0 %v7878
        %v8110 = vpop.f32.mrf.mxu0
        %v8111 = vadd.f32 0.0, %v8110
        %8112 = vmatmul.f32.gmra.mxu0 %v7881
        %v8113 = vpop.f32.mrf.mxu0
        %v8114 = vadd.f32 0.0, %v8113
        %8115 = vmatmul.f32.gmra.mxu0 %v7884
        %v8116 = vpop.f32.mrf.mxu0
        %v8117 = vadd.f32 0.0, %v8116
        %8118 = vmatmul.f32.gmra.mxu0 %v7887
        %v8119 = vpop.f32.mrf.mxu0
        %v8120 = vadd.f32 0.0, %v8119
        %8121 = vmatmul.f32.gmra.mxu0 %v7890
        %v8122 = vpop.f32.mrf.mxu0
        %v8123 = vadd.f32 0.0, %v8122
        %8124 = vmatmul.f32.gmra.mxu0 %v7893
        %v8125 = vpop.f32.mrf.mxu0
        %v8126 = vadd.f32 0.0, %v8125
        %8127 = vmatmul.f32.gmra.mxu0 %v7896
        %v8128 = vpop.f32.mrf.mxu0
        %v8129 = vadd.f32 0.0, %v8128
        %8130 = vmatmul.f32.gmra.mxu0 %v7899
        %v8131 = vpop.f32.mrf.mxu0
        %v8132 = vadd.f32 0.0, %v8131
        %8133 = vmatmul.f32.gmra.mxu0 %v7902
        %v8134 = vpop.f32.mrf.mxu0
        %v8135 = vadd.f32 0.0, %v8134
        %8136 = vmatmul.f32.gmra.mxu0 %v7905
        %v8137 = vpop.f32.mrf.mxu0
        %v8138 = vadd.f32 0.0, %v8137
        %8139 = vmatmul.f32.gmra.mxu0 %v7908
        %v8140 = vpop.f32.mrf.mxu0
        %v8141 = vadd.f32 0.0, %v8140
        %8142 = vmatmul.f32.gmra.mxu0 %v7911
        %v8143 = vpop.f32.mrf.mxu0
        %v8144 = vadd.f32 0.0, %v8143
        %8145 = vmatmul.f32.gmra.mxu0 %v7914
        %v8146 = vpop.f32.mrf.mxu0
        %v8147 = vadd.f32 0.0, %v8146
        %8148 = vmatmul.f32.gmra.mxu0 %v7917
        %v8149 = vpop.f32.mrf.mxu0
        %v8150 = vadd.f32 0.0, %v8149
        %8151 = vmatmul.f32.gmra.mxu0 %v7920
        %v8152 = vpop.f32.mrf.mxu0
        %v8153 = vadd.f32 0.0, %v8152
        %8154 = vmatmul.f32.gmra.mxu0 %v7923
        %v8155 = vpop.f32.mrf.mxu0
        %v8156 = vadd.f32 0.0, %v8155
        %8157 = vmatmul.f32.gmra.mxu0 %v7926
        %v8158 = vpop.f32.mrf.mxu0
        %v8159 = vadd.f32 0.0, %v8158
        %8160 = vmatmul.f32.gmra.mxu0 %v7929
        %v8161 = vpop.f32.mrf.mxu0
        %v8162 = vadd.f32 0.0, %v8161
        %8163 = vmatmul.f32.gmra.mxu0 %v7932
        %v8164 = vpop.f32.mrf.mxu0
        %v8165 = vadd.f32 0.0, %v8164
        %8166 = vmatmul.f32.gmra.mxu0 %v7935
        %v8167 = vpop.f32.mrf.mxu0
        %v8168 = vadd.f32 0.0, %v8167
        %8169 = vmatmul.f32.gmra.mxu0 %v7938
        %v8170 = vpop.f32.mrf.mxu0
        %v8171 = vadd.f32 0.0, %v8170
        %8172 = vmatmul.f32.gmra.mxu0 %v7941
        %v8173 = vpop.f32.mrf.mxu0
        %v8174 = vadd.f32 0.0, %v8173
        %8175 = vmatmul.f32.gmra.mxu0 %v7944
        %v8176 = vpop.f32.mrf.mxu0
        %v8177 = vadd.f32 0.0, %v8176
        %8178 = vmatmul.f32.gmra.mxu0 %v7947
        %v8179 = vpop.f32.mrf.mxu0
        %v8180 = vadd.f32 0.0, %v8179
        %8181 = vmatmul.f32.gmra.mxu0 %v7950
        %v8182 = vpop.f32.mrf.mxu0
        %v8183 = vadd.f32 0.0, %v8182
        %8184 = vmatmul.f32.gmra.mxu0 %v7953
        %v8185 = vpop.f32.mrf.mxu0
        %v8186 = vadd.f32 0.0, %v8185
        %8187 = vmatmul.f32.gmra.mxu0 %v7956
        %v8188 = vpop.f32.mrf.mxu0
        %v8189 = vadd.f32 0.0, %v8188
        %8190 = vmatmul.f32.gmra.mxu0 %v7959
        %v8191 = vpop.f32.mrf.mxu0
        %v8192 = vadd.f32 0.0, %v8191
        %8193 = vmatmul.f32.gmra.mxu0 %v7962
        %v8194 = vpop.f32.mrf.mxu0
        %v8195 = vadd.f32 0.0, %v8194
        %8196 = vmatmul.f32.gmra.mxu0 %v7965
        %v8197 = vpop.f32.mrf.mxu0
        %v8198 = vadd.f32 0.0, %v8197
        %8199 = vmatmul.f32.gmra.mxu0 %v7968
        %v8200 = vpop.f32.mrf.mxu0
        %v8201 = vadd.f32 0.0, %v8200
        %8202 = vmatmul.f32.gmra.mxu0 %v7971
        %v8203 = vpop.f32.mrf.mxu0
        %v8204 = vadd.f32 0.0, %v8203
        %8205 = vmatmul.f32.gmra.mxu0 %v7974
        %v8206 = vpop.f32.mrf.mxu0
        %v8207 = vadd.f32 0.0, %v8206
        %8208 = vmatmul.f32.gmra.mxu0 %v7977
        %v8209 = vpop.f32.mrf.mxu0
        %v8210 = vadd.f32 0.0, %v8209
        %8211 = vmatmul.f32.gmra.mxu0 %v7980
        %v8212 = vpop.f32.mrf.mxu0
        %v8213 = vadd.f32 0.0, %v8212
        %8214 = vmatmul.f32.gmra.mxu0 %v7983
        %v8215 = vpop.f32.mrf.mxu0
        %v8216 = vadd.f32 0.0, %v8215
        %8217 = vmatmul.f32.gmra.mxu0 %v7986
        %v8218 = vpop.f32.mrf.mxu0
        %v8219 = vadd.f32 0.0, %v8218
        %8220 = vmatmul.f32.gmra.mxu0 %v7989
        %v8221 = vpop.f32.mrf.mxu0
        %v8222 = vadd.f32 0.0, %v8221
        %8223 = vmatmul.f32.gmra.mxu0 %v7992
        %v8224 = vpop.f32.mrf.mxu0
        %v8225 = vadd.f32 0.0, %v8224
        %8226 = vmatmul.f32.gmra.mxu0 %v7995
        %v8227 = vpop.f32.mrf.mxu0
        %v8228 = vadd.f32 0.0, %v8227
        %8229 = vmatmul.f32.gmra.mxu0 %v7998
        %v8230 = vpop.f32.mrf.mxu0
        %v8231 = vadd.f32 0.0, %v8230
        %8232 = vmatmul.f32.gmra.mxu0 %v8001
        %v8233 = vpop.f32.mrf.mxu0
        %v8234 = vadd.f32 0.0, %v8233
        %8235 = vmatmul.f32.gmra.mxu0 %v8004
        %v8236 = vpop.f32.mrf.mxu0
        %v8237 = vadd.f32 0.0, %v8236
        %8238 = vmatmul.f32.gmra.mxu0 %v8007
        %v8239 = vpop.f32.mrf.mxu0
        %v8240 = vadd.f32 0.0, %v8239
        %8241 = vmatmul.f32.gmra.mxu0 %v8010
        %v8242 = vpop.f32.mrf.mxu0
        %v8243 = vadd.f32 0.0, %v8242
        %8244 = vmatmul.f32.gmra.mxu0 %v8013
        %v8245 = vpop.f32.mrf.mxu0
        %v8246 = vadd.f32 0.0, %v8245
        %8247 = vmatmul.f32.gmra.mxu0 %v8016
        %v8248 = vpop.f32.mrf.mxu0
        %v8249 = vadd.f32 0.0, %v8248
        %8250 = vmatmul.f32.gmra.mxu0 %v8019
        %v8251 = vpop.f32.mrf.mxu0
        %v8252 = vadd.f32 0.0, %v8251
        %8253 = vmatmul.f32.gmra.mxu0 %v8022
        %v8254 = vpop.f32.mrf.mxu0
        %v8255 = vadd.f32 0.0, %v8254
        %8256 = vmatmul.f32.gmra.mxu0 %v8025
        %v8257 = vpop.f32.mrf.mxu0
        %v8258 = vadd.f32 0.0, %v8257
        %8259 = vmatmul.f32.gmra.mxu0 %v8028
        %v8260 = vpop.f32.mrf.mxu0
        %v8261 = vadd.f32 0.0, %v8260
        %8262 = vmatmul.f32.gmra.mxu0 %v8031
        %v8263 = vpop.f32.mrf.mxu0
        %v8264 = vadd.f32 0.0, %v8263
        %8265 = vmatmul.f32.gmra.mxu0 %v8034
        %v8266 = vpop.f32.mrf.mxu0
        %v8267 = vadd.f32 0.0, %v8266
        %8268 = vmatmul.f32.gmra.mxu0 %v8037
        %v8269 = vpop.f32.mrf.mxu0
        %v8270 = vadd.f32 0.0, %v8269
        %8271 = vdwg.mxu0
        %v8272 = vadd.f32 %v7674, %v8057
        %v8273 = vadd.f32 %v7675, %v8060
        %v8274 = vadd.f32 %v7676, %v8063
        %v8275 = vadd.f32 %v7677, %v8066
        %v8276 = vadd.f32 %v7678, %v8069
        %v8277 = vadd.f32 %v7679, %v8072
        %v8278 = vadd.f32 %v7680, %v8075
        %v8279 = vadd.f32 %v7681, %v8078
        %v8280 = vadd.f32 %v7682, %v8081
        %v8281 = vadd.f32 %v7683, %v8084
        %v8282 = vadd.f32 %v7684, %v8087
        %v8283 = vadd.f32 %v7685, %v8090
        %v8284 = vadd.f32 %v7686, %v8093
        %v8285 = vadd.f32 %v7687, %v8096
        %v8286 = vadd.f32 %v7688, %v8099
        %v8287 = vadd.f32 %v7689, %v8102
        %v8288 = vadd.f32 %v7690, %v8105
        %v8289 = vadd.f32 %v7691, %v8108
        %v8290 = vadd.f32 %v7692, %v8111
        %v8291 = vadd.f32 %v7693, %v8114
        %v8292 = vadd.f32 %v7694, %v8117
        %v8293 = vadd.f32 %v7695, %v8120
        %v8294 = vadd.f32 %v7696, %v8123
        %v8295 = vadd.f32 %v7697, %v8126
        %v8296 = vadd.f32 %v7698, %v8129
        %v8297 = vadd.f32 %v7699, %v8132
        %v8298 = vadd.f32 %v7700, %v8135
        %v8299 = vadd.f32 %v7701, %v8138
        %v8300 = vadd.f32 %v7702, %v8141
        %v8301 = vadd.f32 %v7703, %v8144
        %v8302 = vadd.f32 %v7704, %v8147
        %v8303 = vadd.f32 %v7705, %v8150
        %v8304 = vadd.f32 %v7706, %v8153
        %v8305 = vadd.f32 %v7707, %v8156
        %v8306 = vadd.f32 %v7708, %v8159
        %v8307 = vadd.f32 %v7709, %v8162
        %v8308 = vadd.f32 %v7710, %v8165
        %v8309 = vadd.f32 %v7711, %v8168
        %v8310 = vadd.f32 %v7712, %v8171
        %v8311 = vadd.f32 %v7713, %v8174
        %v8312 = vadd.f32 %v7714, %v8177
        %v8313 = vadd.f32 %v7715, %v8180
        %v8314 = vadd.f32 %v7716, %v8183
        %v8315 = vadd.f32 %v7717, %v8186
        %v8316 = vadd.f32 %v7718, %v8189
        %v8317 = vadd.f32 %v7719, %v8192
        %v8318 = vadd.f32 %v7720, %v8195
        %v8319 = vadd.f32 %v7721, %v8198
        %v8320 = vadd.f32 %v7722, %v8201
        %v8321 = vadd.f32 %v7723, %v8204
        %v8322 = vadd.f32 %v7724, %v8207
        %v8323 = vadd.f32 %v7725, %v8210
        %v8324 = vadd.f32 %v7726, %v8213
        %v8325 = vadd.f32 %v7727, %v8216
        %v8326 = vadd.f32 %v7728, %v8219
        %v8327 = vadd.f32 %v7729, %v8222
        %v8328 = vadd.f32 %v7730, %v8225
        %v8329 = vadd.f32 %v7731, %v8228
        %v8330 = vadd.f32 %v7732, %v8231
        %v8331 = vadd.f32 %v7733, %v8234
        %v8332 = vadd.f32 %v7734, %v8237
        %v8333 = vadd.f32 %v7735, %v8240
        %v8334 = vadd.f32 %v7736, %v8243
        %v8335 = vadd.f32 %v7737, %v8246
        %v8336 = vadd.f32 %v7738, %v8249
        %v8337 = vadd.f32 %v7739, %v8252
        %v8338 = vadd.f32 %v7740, %v8255
        %v8339 = vadd.f32 %v7741, %v8258
        %v8340 = vadd.f32 %v7742, %v8261
        %v8341 = vadd.f32 %v7743, %v8264
        %v8342 = vadd.f32 %v7744, %v8267
        %v8343 = vadd.f32 %v7745, %v8270
        %v8344 = vld [vmem:[%s7147 + $0x2] sm:$0xff]
        %v8345 = vld [vmem:[%s7147 + $0xa] sm:$0xff]
        %v8346 = vld [vmem:[%s7147 + $0x12] sm:$0xff]
        %v8347 = vld [vmem:[%s7147 + $0x22] sm:$0xff]
        %v8348 = vld [vmem:[%s7147 + $0x2a] sm:$0xff]
        %v8349 = vld [vmem:[%s7147 + $0x32] sm:$0xff]
        %v8350 = vld [vmem:[%s7147 + $0x42] sm:$0xff]
        %v8351 = vld [vmem:[%s7147 + $0x4a] sm:$0xff]
        %v8352 = vld [vmem:[%s7147 + $0x52] sm:$0xff]
        %v8353 = vld [vmem:[%s7147 + $0x62] sm:$0xff]
        %v8354 = vld [vmem:[%s7147 + $0x6a] sm:$0xff]
        %v8355 = vld [vmem:[%s7147 + $0x72] sm:$0xff]
        %v8356 = vld [vmem:[%s7147 + $0x82] sm:$0xff]
        %v8357 = vld [vmem:[%s7147 + $0x8a] sm:$0xff]
        %v8358 = vld [vmem:[%s7147 + $0x92] sm:$0xff]
        %v8359 = vld [vmem:[%s7147 + $0xa2] sm:$0xff]
        %v8360 = vld [vmem:[%s7147 + $0xaa] sm:$0xff]
        %v8361 = vld [vmem:[%s7147 + $0xb2] sm:$0xff]
        %v8362 = vld [vmem:[%s7147 + $0xc2] sm:$0xff]
        %v8363 = vld [vmem:[%s7147 + $0xca] sm:$0xff]
        %v8364 = vld [vmem:[%s7147 + $0xd2] sm:$0xff]
        %v8365 = vld [vmem:[%s7147 + $0xe2] sm:$0xff]
        %v8366 = vld [vmem:[%s7147 + $0xea] sm:$0xff]
        %v8367 = vld [vmem:[%s7147 + $0xf2] sm:$0xff]
        %v8368 = vld [vmem:[%s7147 + $0x102] sm:$0xff]
        %v8369 = vld [vmem:[%s7147 + $0x10a] sm:$0xff]
        %v8370 = vld [vmem:[%s7147 + $0x112] sm:$0xff]
        %v8371 = vld [vmem:[%s7147 + $0x122] sm:$0xff]
        %v8372 = vld [vmem:[%s7147 + $0x12a] sm:$0xff]
        %v8373 = vld [vmem:[%s7147 + $0x132] sm:$0xff]
        %v8374 = vld [vmem:[%s7147 + $0x142] sm:$0xff]
        %v8375 = vld [vmem:[%s7147 + $0x14a] sm:$0xff]
        %v8376 = vld [vmem:[%s7147 + $0x152] sm:$0xff]
        %v8377 = vld [vmem:[%s7147 + $0x162] sm:$0xff]
        %v8378 = vld [vmem:[%s7147 + $0x16a] sm:$0xff]
        %v8379 = vld [vmem:[%s7147 + $0x172] sm:$0xff]
        %v8380 = vld [vmem:[%s7147 + $0x182] sm:$0xff]
        %v8381 = vld [vmem:[%s7147 + $0x18a] sm:$0xff]
        %v8382 = vld [vmem:[%s7147 + $0x192] sm:$0xff]
        %v8383 = vld [vmem:[%s7147 + $0x1a2] sm:$0xff]
        %v8384 = vld [vmem:[%s7147 + $0x1aa] sm:$0xff]
        %v8385 = vld [vmem:[%s7147 + $0x1b2] sm:$0xff]
        %v8386 = vld [vmem:[%s7147 + $0x1c2] sm:$0xff]
        %v8387 = vld [vmem:[%s7147 + $0x1ca] sm:$0xff]
        %v8388 = vld [vmem:[%s7147 + $0x1d2] sm:$0xff]
        %v8389 = vld [vmem:[%s7147 + $0x1e2] sm:$0xff]
        %v8390 = vld [vmem:[%s7147 + $0x1ea] sm:$0xff]
        %v8391 = vld [vmem:[%s7147 + $0x1f2] sm:$0xff]
        %v8392 = vld [vmem:[%s7147 + $0x202] sm:$0xff]
        %v8393 = vld [vmem:[%s7147 + $0x20a] sm:$0xff]
        %v8394 = vld [vmem:[%s7147 + $0x212] sm:$0xff]
        %v8395 = vld [vmem:[%s7147 + $0x222] sm:$0xff]
        %v8396 = vld [vmem:[%s7147 + $0x22a] sm:$0xff]
        %v8397 = vld [vmem:[%s7147 + $0x232] sm:$0xff]
        %v8398 = vld [vmem:[%s7147 + $0x242] sm:$0xff]
        %v8399 = vld [vmem:[%s7147 + $0x24a] sm:$0xff]
        %v8400 = vld [vmem:[%s7147 + $0x252] sm:$0xff]
        %v8401 = vld [vmem:[%s7147 + $0x262] sm:$0xff]
        %v8402 = vld [vmem:[%s7147 + $0x26a] sm:$0xff]
        %v8403 = vld [vmem:[%s7147 + $0x272] sm:$0xff]
        %v8404 = vld [vmem:[%s7147 + $0x282] sm:$0xff]
        %v8405 = vld [vmem:[%s7147 + $0x28a] sm:$0xff]
        %v8406 = vld [vmem:[%s7147 + $0x292] sm:$0xff]
        %v8407 = vld [vmem:[%s7147 + $0x2a2] sm:$0xff]
        %v8408 = vld [vmem:[%s7147 + $0x2aa] sm:$0xff]
        %v8409 = vld [vmem:[%s7147 + $0x2b2] sm:$0xff]
        %v8410 = vld [vmem:[%s7147 + $0x2c2] sm:$0xff]
        %v8411 = vld [vmem:[%s7147 + $0x2ca] sm:$0xff]
        %v8412 = vld [vmem:[%s7147 + $0x2d2] sm:$0xff]
        %v8413 = vld [vmem:[%s7147 + $0x2e2] sm:$0xff]
        %v8414 = vld [vmem:[%s7147 + $0x2ea] sm:$0xff]
        %v8415 = vld [vmem:[%s7147 + $0x2f2] sm:$0xff]
        %s8416 = scalar_lea.vmem [#allocation3], 160
        %v8417 = vld [vmem:[%s8416] sm:$0xff]
        %v8418 = vld [vmem:[%s8416 + $0x8] sm:$0xff]
        %v8419 = vld [vmem:[%s8416 + $0x10] sm:$0xff]
        %v8420 = vld [vmem:[%s8416 + $0x18] sm:$0xff]
        %v8422 = vsel %vm5392, %v8344, 0
        %v8425 = vsel %vm5392, %v8345, 0
        %v8428 = vsel %vm5392, %v8346, 0
        %v8431 = vsel %vm5392, %v8347, 0
        %v8434 = vsel %vm5392, %v8348, 0
        %v8437 = vsel %vm5392, %v8349, 0
        %v8440 = vsel %vm5392, %v8350, 0
        %v8443 = vsel %vm5392, %v8351, 0
        %v8446 = vsel %vm5392, %v8352, 0
        %v8449 = vsel %vm5392, %v8353, 0
        %v8452 = vsel %vm5392, %v8354, 0
        %v8455 = vsel %vm5392, %v8355, 0
        %v8458 = vsel %vm5392, %v8356, 0
        %v8461 = vsel %vm5392, %v8357, 0
        %v8464 = vsel %vm5392, %v8358, 0
        %v8467 = vsel %vm5392, %v8359, 0
        %v8470 = vsel %vm5392, %v8360, 0
        %v8473 = vsel %vm5392, %v8361, 0
        %v8476 = vsel %vm5392, %v8362, 0
        %v8479 = vsel %vm5392, %v8363, 0
        %v8482 = vsel %vm5392, %v8364, 0
        %v8485 = vsel %vm5392, %v8365, 0
        %v8488 = vsel %vm5392, %v8366, 0
        %v8491 = vsel %vm5392, %v8367, 0
        %v8494 = vsel %vm5392, %v8368, 0
        %v8497 = vsel %vm5392, %v8369, 0
        %v8500 = vsel %vm5392, %v8370, 0
        %v8503 = vsel %vm5392, %v8371, 0
        %v8506 = vsel %vm5392, %v8372, 0
        %v8509 = vsel %vm5392, %v8373, 0
        %v8512 = vsel %vm5392, %v8374, 0
        %v8515 = vsel %vm5392, %v8375, 0
        %v8518 = vsel %vm5392, %v8376, 0
        %v8521 = vsel %vm5392, %v8377, 0
        %v8524 = vsel %vm5392, %v8378, 0
        %v8527 = vsel %vm5392, %v8379, 0
        %v8530 = vsel %vm5392, %v8380, 0
        %v8533 = vsel %vm5392, %v8381, 0
        %v8536 = vsel %vm5392, %v8382, 0
        %v8539 = vsel %vm5392, %v8383, 0
        %v8542 = vsel %vm5392, %v8384, 0
        %v8545 = vsel %vm5392, %v8385, 0
        %v8548 = vsel %vm5392, %v8386, 0
        %v8551 = vsel %vm5392, %v8387, 0
        %v8554 = vsel %vm5392, %v8388, 0
        %v8557 = vsel %vm5392, %v8389, 0
        %v8560 = vsel %vm5392, %v8390, 0
        %v8563 = vsel %vm5392, %v8391, 0
        %v8566 = vsel %vm5392, %v8392, 0
        %v8569 = vsel %vm5392, %v8393, 0
        %v8572 = vsel %vm5392, %v8394, 0
        %v8575 = vsel %vm5392, %v8395, 0
        %v8578 = vsel %vm5392, %v8396, 0
        %v8581 = vsel %vm5392, %v8397, 0
        %v8584 = vsel %vm5392, %v8398, 0
        %v8587 = vsel %vm5392, %v8399, 0
        %v8590 = vsel %vm5392, %v8400, 0
        %v8593 = vsel %vm5392, %v8401, 0
        %v8596 = vsel %vm5392, %v8402, 0
        %v8599 = vsel %vm5392, %v8403, 0
        %v8602 = vsel %vm5392, %v8404, 0
        %v8605 = vsel %vm5392, %v8405, 0
        %v8608 = vsel %vm5392, %v8406, 0
        %v8611 = vsel %vm5392, %v8407, 0
        %v8614 = vsel %vm5392, %v8408, 0
        %v8617 = vsel %vm5392, %v8409, 0
        %v8620 = vsel %vm5392, %v8410, 0
        %v8623 = vsel %vm5392, %v8411, 0
        %v8626 = vsel %vm5392, %v8412, 0
        %v8629 = vsel %vm5392, %v8413, 0
        %v8632 = vsel %vm5392, %v8414, 0
        %v8635 = vsel %vm5392, %v8415, 0
        %8637 = vmatpush.msra.mxu0 0.0
        %8638 = vmatpush.msra.mxu0 0.0
        %8639 = vmatpush.msra.mxu0 0.0
        %8640 = vmatpush.msra.mxu0 0.0
        %8641 = vmatpush.msra.mxu0 0.0
        %8642 = vmatpush.msra.mxu0 0.0
        %8643 = vmatpush.msra.mxu0 0.0
        %8644 = vmatpush.msra.mxu0 0.0
        %8645 = vmatpush.msra.mxu0 0.0
        %8646 = vmatpush.msra.mxu0 0.0
        %8647 = vmatpush.msra.mxu0 0.0
        %8648 = vmatpush.msra.mxu0 0.0
        %8649 = vmatpush.msra.mxu0 %v8420
        %8650 = vmatpush.msra.mxu0 %v8419
        %8651 = vmatpush.msra.mxu0 %v8418
        %8652 = vmatpush.msra.mxu0 %v8417
        %8653 = vmatmul.f32.gmra.mxu0 %v8422
        %v8654 = vpop.f32.mrf.mxu0
        %v8655 = vadd.f32 0.0, %v8654
        %8656 = vmatmul.f32.gmra.mxu0 %v8425
        %v8657 = vpop.f32.mrf.mxu0
        %v8658 = vadd.f32 0.0, %v8657
        %8659 = vmatmul.f32.gmra.mxu0 %v8428
        %v8660 = vpop.f32.mrf.mxu0
        %v8661 = vadd.f32 0.0, %v8660
        %8662 = vmatmul.f32.gmra.mxu0 %v8431
        %v8663 = vpop.f32.mrf.mxu0
        %v8664 = vadd.f32 0.0, %v8663
        %8665 = vmatmul.f32.gmra.mxu0 %v8434
        %v8666 = vpop.f32.mrf.mxu0
        %v8667 = vadd.f32 0.0, %v8666
        %8668 = vmatmul.f32.gmra.mxu0 %v8437
        %v8669 = vpop.f32.mrf.mxu0
        %v8670 = vadd.f32 0.0, %v8669
        %8671 = vmatmul.f32.gmra.mxu0 %v8440
        %v8672 = vpop.f32.mrf.mxu0
        %v8673 = vadd.f32 0.0, %v8672
        %8674 = vmatmul.f32.gmra.mxu0 %v8443
        %v8675 = vpop.f32.mrf.mxu0
        %v8676 = vadd.f32 0.0, %v8675
        %8677 = vmatmul.f32.gmra.mxu0 %v8446
        %v8678 = vpop.f32.mrf.mxu0
        %v8679 = vadd.f32 0.0, %v8678
        %8680 = vmatmul.f32.gmra.mxu0 %v8449
        %v8681 = vpop.f32.mrf.mxu0
        %v8682 = vadd.f32 0.0, %v8681
        %8683 = vmatmul.f32.gmra.mxu0 %v8452
        %v8684 = vpop.f32.mrf.mxu0
        %v8685 = vadd.f32 0.0, %v8684
        %8686 = vmatmul.f32.gmra.mxu0 %v8455
        %v8687 = vpop.f32.mrf.mxu0
        %v8688 = vadd.f32 0.0, %v8687
        %8689 = vmatmul.f32.gmra.mxu0 %v8458
        %v8690 = vpop.f32.mrf.mxu0
        %v8691 = vadd.f32 0.0, %v8690
        %8692 = vmatmul.f32.gmra.mxu0 %v8461
        %v8693 = vpop.f32.mrf.mxu0
        %v8694 = vadd.f32 0.0, %v8693
        %8695 = vmatmul.f32.gmra.mxu0 %v8464
        %v8696 = vpop.f32.mrf.mxu0
        %v8697 = vadd.f32 0.0, %v8696
        %8698 = vmatmul.f32.gmra.mxu0 %v8467
        %v8699 = vpop.f32.mrf.mxu0
        %v8700 = vadd.f32 0.0, %v8699
        %8701 = vmatmul.f32.gmra.mxu0 %v8470
        %v8702 = vpop.f32.mrf.mxu0
        %v8703 = vadd.f32 0.0, %v8702
        %8704 = vmatmul.f32.gmra.mxu0 %v8473
        %v8705 = vpop.f32.mrf.mxu0
        %v8706 = vadd.f32 0.0, %v8705
        %8707 = vmatmul.f32.gmra.mxu0 %v8476
        %v8708 = vpop.f32.mrf.mxu0
        %v8709 = vadd.f32 0.0, %v8708
        %8710 = vmatmul.f32.gmra.mxu0 %v8479
        %v8711 = vpop.f32.mrf.mxu0
        %v8712 = vadd.f32 0.0, %v8711
        %8713 = vmatmul.f32.gmra.mxu0 %v8482
        %v8714 = vpop.f32.mrf.mxu0
        %v8715 = vadd.f32 0.0, %v8714
        %8716 = vmatmul.f32.gmra.mxu0 %v8485
        %v8717 = vpop.f32.mrf.mxu0
        %v8718 = vadd.f32 0.0, %v8717
        %8719 = vmatmul.f32.gmra.mxu0 %v8488
        %v8720 = vpop.f32.mrf.mxu0
        %v8721 = vadd.f32 0.0, %v8720
        %8722 = vmatmul.f32.gmra.mxu0 %v8491
        %v8723 = vpop.f32.mrf.mxu0
        %v8724 = vadd.f32 0.0, %v8723
        %8725 = vmatmul.f32.gmra.mxu0 %v8494
        %v8726 = vpop.f32.mrf.mxu0
        %v8727 = vadd.f32 0.0, %v8726
        %8728 = vmatmul.f32.gmra.mxu0 %v8497
        %v8729 = vpop.f32.mrf.mxu0
        %v8730 = vadd.f32 0.0, %v8729
        %8731 = vmatmul.f32.gmra.mxu0 %v8500
        %v8732 = vpop.f32.mrf.mxu0
        %v8733 = vadd.f32 0.0, %v8732
        %8734 = vmatmul.f32.gmra.mxu0 %v8503
        %v8735 = vpop.f32.mrf.mxu0
        %v8736 = vadd.f32 0.0, %v8735
        %8737 = vmatmul.f32.gmra.mxu0 %v8506
        %v8738 = vpop.f32.mrf.mxu0
        %v8739 = vadd.f32 0.0, %v8738
        %8740 = vmatmul.f32.gmra.mxu0 %v8509
        %v8741 = vpop.f32.mrf.mxu0
        %v8742 = vadd.f32 0.0, %v8741
        %8743 = vmatmul.f32.gmra.mxu0 %v8512
        %v8744 = vpop.f32.mrf.mxu0
        %v8745 = vadd.f32 0.0, %v8744
        %8746 = vmatmul.f32.gmra.mxu0 %v8515
        %v8747 = vpop.f32.mrf.mxu0
        %v8748 = vadd.f32 0.0, %v8747
        %8749 = vmatmul.f32.gmra.mxu0 %v8518
        %v8750 = vpop.f32.mrf.mxu0
        %v8751 = vadd.f32 0.0, %v8750
        %8752 = vmatmul.f32.gmra.mxu0 %v8521
        %v8753 = vpop.f32.mrf.mxu0
        %v8754 = vadd.f32 0.0, %v8753
        %8755 = vmatmul.f32.gmra.mxu0 %v8524
        %v8756 = vpop.f32.mrf.mxu0
        %v8757 = vadd.f32 0.0, %v8756
        %8758 = vmatmul.f32.gmra.mxu0 %v8527
        %v8759 = vpop.f32.mrf.mxu0
        %v8760 = vadd.f32 0.0, %v8759
        %8761 = vmatmul.f32.gmra.mxu0 %v8530
        %v8762 = vpop.f32.mrf.mxu0
        %v8763 = vadd.f32 0.0, %v8762
        %8764 = vmatmul.f32.gmra.mxu0 %v8533
        %v8765 = vpop.f32.mrf.mxu0
        %v8766 = vadd.f32 0.0, %v8765
        %8767 = vmatmul.f32.gmra.mxu0 %v8536
        %v8768 = vpop.f32.mrf.mxu0
        %v8769 = vadd.f32 0.0, %v8768
        %8770 = vmatmul.f32.gmra.mxu0 %v8539
        %v8771 = vpop.f32.mrf.mxu0
        %v8772 = vadd.f32 0.0, %v8771
        %8773 = vmatmul.f32.gmra.mxu0 %v8542
        %v8774 = vpop.f32.mrf.mxu0
        %v8775 = vadd.f32 0.0, %v8774
        %8776 = vmatmul.f32.gmra.mxu0 %v8545
        %v8777 = vpop.f32.mrf.mxu0
        %v8778 = vadd.f32 0.0, %v8777
        %8779 = vmatmul.f32.gmra.mxu0 %v8548
        %v8780 = vpop.f32.mrf.mxu0
        %v8781 = vadd.f32 0.0, %v8780
        %8782 = vmatmul.f32.gmra.mxu0 %v8551
        %v8783 = vpop.f32.mrf.mxu0
        %v8784 = vadd.f32 0.0, %v8783
        %8785 = vmatmul.f32.gmra.mxu0 %v8554
        %v8786 = vpop.f32.mrf.mxu0
        %v8787 = vadd.f32 0.0, %v8786
        %8788 = vmatmul.f32.gmra.mxu0 %v8557
        %v8789 = vpop.f32.mrf.mxu0
        %v8790 = vadd.f32 0.0, %v8789
        %8791 = vmatmul.f32.gmra.mxu0 %v8560
        %v8792 = vpop.f32.mrf.mxu0
        %v8793 = vadd.f32 0.0, %v8792
        %8794 = vmatmul.f32.gmra.mxu0 %v8563
        %v8795 = vpop.f32.mrf.mxu0
        %v8796 = vadd.f32 0.0, %v8795
        %8797 = vmatmul.f32.gmra.mxu0 %v8566
        %v8798 = vpop.f32.mrf.mxu0
        %v8799 = vadd.f32 0.0, %v8798
        %8800 = vmatmul.f32.gmra.mxu0 %v8569
        %v8801 = vpop.f32.mrf.mxu0
        %v8802 = vadd.f32 0.0, %v8801
        %8803 = vmatmul.f32.gmra.mxu0 %v8572
        %v8804 = vpop.f32.mrf.mxu0
        %v8805 = vadd.f32 0.0, %v8804
        %8806 = vmatmul.f32.gmra.mxu0 %v8575
        %v8807 = vpop.f32.mrf.mxu0
        %v8808 = vadd.f32 0.0, %v8807
        %8809 = vmatmul.f32.gmra.mxu0 %v8578
        %v8810 = vpop.f32.mrf.mxu0
        %v8811 = vadd.f32 0.0, %v8810
        %8812 = vmatmul.f32.gmra.mxu0 %v8581
        %v8813 = vpop.f32.mrf.mxu0
        %v8814 = vadd.f32 0.0, %v8813
        %8815 = vmatmul.f32.gmra.mxu0 %v8584
        %v8816 = vpop.f32.mrf.mxu0
        %v8817 = vadd.f32 0.0, %v8816
        %8818 = vmatmul.f32.gmra.mxu0 %v8587
        %v8819 = vpop.f32.mrf.mxu0
        %v8820 = vadd.f32 0.0, %v8819
        %8821 = vmatmul.f32.gmra.mxu0 %v8590
        %v8822 = vpop.f32.mrf.mxu0
        %v8823 = vadd.f32 0.0, %v8822
        %8824 = vmatmul.f32.gmra.mxu0 %v8593
        %v8825 = vpop.f32.mrf.mxu0
        %v8826 = vadd.f32 0.0, %v8825
        %8827 = vmatmul.f32.gmra.mxu0 %v8596
        %v8828 = vpop.f32.mrf.mxu0
        %v8829 = vadd.f32 0.0, %v8828
        %8830 = vmatmul.f32.gmra.mxu0 %v8599
        %v8831 = vpop.f32.mrf.mxu0
        %v8832 = vadd.f32 0.0, %v8831
        %8833 = vmatmul.f32.gmra.mxu0 %v8602
        %v8834 = vpop.f32.mrf.mxu0
        %v8835 = vadd.f32 0.0, %v8834
        %8836 = vmatmul.f32.gmra.mxu0 %v8605
        %v8837 = vpop.f32.mrf.mxu0
        %v8838 = vadd.f32 0.0, %v8837
        %8839 = vmatmul.f32.gmra.mxu0 %v8608
        %v8840 = vpop.f32.mrf.mxu0
        %v8841 = vadd.f32 0.0, %v8840
        %8842 = vmatmul.f32.gmra.mxu0 %v8611
        %v8843 = vpop.f32.mrf.mxu0
        %v8844 = vadd.f32 0.0, %v8843
        %8845 = vmatmul.f32.gmra.mxu0 %v8614
        %v8846 = vpop.f32.mrf.mxu0
        %v8847 = vadd.f32 0.0, %v8846
        %8848 = vmatmul.f32.gmra.mxu0 %v8617
        %v8849 = vpop.f32.mrf.mxu0
        %v8850 = vadd.f32 0.0, %v8849
        %8851 = vmatmul.f32.gmra.mxu0 %v8620
        %v8852 = vpop.f32.mrf.mxu0
        %v8853 = vadd.f32 0.0, %v8852
        %8854 = vmatmul.f32.gmra.mxu0 %v8623
        %v8855 = vpop.f32.mrf.mxu0
        %v8856 = vadd.f32 0.0, %v8855
        %8857 = vmatmul.f32.gmra.mxu0 %v8626
        %v8858 = vpop.f32.mrf.mxu0
        %v8859 = vadd.f32 0.0, %v8858
        %8860 = vmatmul.f32.gmra.mxu0 %v8629
        %v8861 = vpop.f32.mrf.mxu0
        %v8862 = vadd.f32 0.0, %v8861
        %8863 = vmatmul.f32.gmra.mxu0 %v8632
        %v8864 = vpop.f32.mrf.mxu0
        %v8865 = vadd.f32 0.0, %v8864
        %8866 = vmatmul.f32.gmra.mxu0 %v8635
        %v8867 = vpop.f32.mrf.mxu0
        %v8868 = vadd.f32 0.0, %v8867
        %8869 = vdwg.mxu0
        %v8870 = vadd.f32 %v8272, %v8655
        %v8871 = vadd.f32 %v8273, %v8658
        %v8872 = vadd.f32 %v8274, %v8661
        %v8873 = vadd.f32 %v8275, %v8664
        %v8874 = vadd.f32 %v8276, %v8667
        %v8875 = vadd.f32 %v8277, %v8670
        %v8876 = vadd.f32 %v8278, %v8673
        %v8877 = vadd.f32 %v8279, %v8676
        %v8878 = vadd.f32 %v8280, %v8679
        %v8879 = vadd.f32 %v8281, %v8682
        %v8880 = vadd.f32 %v8282, %v8685
        %v8881 = vadd.f32 %v8283, %v8688
        %v8882 = vadd.f32 %v8284, %v8691
        %v8883 = vadd.f32 %v8285, %v8694
        %v8884 = vadd.f32 %v8286, %v8697
        %v8885 = vadd.f32 %v8287, %v8700
        %v8886 = vadd.f32 %v8288, %v8703
        %v8887 = vadd.f32 %v8289, %v8706
        %v8888 = vadd.f32 %v8290, %v8709
        %v8889 = vadd.f32 %v8291, %v8712
        %v8890 = vadd.f32 %v8292, %v8715
        %v8891 = vadd.f32 %v8293, %v8718
        %v8892 = vadd.f32 %v8294, %v8721
        %v8893 = vadd.f32 %v8295, %v8724
        %v8894 = vadd.f32 %v8296, %v8727
        %v8895 = vadd.f32 %v8297, %v8730
        %v8896 = vadd.f32 %v8298, %v8733
        %v8897 = vadd.f32 %v8299, %v8736
        %v8898 = vadd.f32 %v8300, %v8739
        %v8899 = vadd.f32 %v8301, %v8742
        %v8900 = vadd.f32 %v8302, %v8745
        %v8901 = vadd.f32 %v8303, %v8748
        %v8902 = vadd.f32 %v8304, %v8751
        %v8903 = vadd.f32 %v8305, %v8754
        %v8904 = vadd.f32 %v8306, %v8757
        %v8905 = vadd.f32 %v8307, %v8760
        %v8906 = vadd.f32 %v8308, %v8763
        %v8907 = vadd.f32 %v8309, %v8766
        %v8908 = vadd.f32 %v8310, %v8769
        %v8909 = vadd.f32 %v8311, %v8772
        %v8910 = vadd.f32 %v8312, %v8775
        %v8911 = vadd.f32 %v8313, %v8778
        %v8912 = vadd.f32 %v8314, %v8781
        %v8913 = vadd.f32 %v8315, %v8784
        %v8914 = vadd.f32 %v8316, %v8787
        %v8915 = vadd.f32 %v8317, %v8790
        %v8916 = vadd.f32 %v8318, %v8793
        %v8917 = vadd.f32 %v8319, %v8796
        %v8918 = vadd.f32 %v8320, %v8799
        %v8919 = vadd.f32 %v8321, %v8802
        %v8920 = vadd.f32 %v8322, %v8805
        %v8921 = vadd.f32 %v8323, %v8808
        %v8922 = vadd.f32 %v8324, %v8811
        %v8923 = vadd.f32 %v8325, %v8814
        %v8924 = vadd.f32 %v8326, %v8817
        %v8925 = vadd.f32 %v8327, %v8820
        %v8926 = vadd.f32 %v8328, %v8823
        %v8927 = vadd.f32 %v8329, %v8826
        %v8928 = vadd.f32 %v8330, %v8829
        %v8929 = vadd.f32 %v8331, %v8832
        %v8930 = vadd.f32 %v8332, %v8835
        %v8931 = vadd.f32 %v8333, %v8838
        %v8932 = vadd.f32 %v8334, %v8841
        %v8933 = vadd.f32 %v8335, %v8844
        %v8934 = vadd.f32 %v8336, %v8847
        %v8935 = vadd.f32 %v8337, %v8850
        %v8936 = vadd.f32 %v8338, %v8853
        %v8937 = vadd.f32 %v8339, %v8856
        %v8938 = vadd.f32 %v8340, %v8859
        %v8939 = vadd.f32 %v8341, %v8862
        %v8940 = vadd.f32 %v8342, %v8865
        %v8941 = vadd.f32 %v8343, %v8868
        %s8942 = scalar_lea.vmem [#allocation2], 64
        %v8943 = vld [vmem:[%s8942] sm:$0xff]
        %v8944 = vld [vmem:[%s8942 + $0x8] sm:$0xff]
        %v8945 = vld [vmem:[%s8942 + $0x10] sm:$0xff]
        %v8946 = vld [vmem:[%s8942 + $0x20] sm:$0xff]
        %v8947 = vld [vmem:[%s8942 + $0x28] sm:$0xff]
        %v8948 = vld [vmem:[%s8942 + $0x30] sm:$0xff]
        %v8949 = vld [vmem:[%s8942 + $0x40] sm:$0xff]
        %v8950 = vld [vmem:[%s8942 + $0x48] sm:$0xff]
        %v8951 = vld [vmem:[%s8942 + $0x50] sm:$0xff]
        %v8952 = vld [vmem:[%s8942 + $0x60] sm:$0xff]
        %v8953 = vld [vmem:[%s8942 + $0x68] sm:$0xff]
        %v8954 = vld [vmem:[%s8942 + $0x70] sm:$0xff]
        %v8955 = vld [vmem:[%s8942 + $0x80] sm:$0xff]
        %v8956 = vld [vmem:[%s8942 + $0x88] sm:$0xff]
        %v8957 = vld [vmem:[%s8942 + $0x90] sm:$0xff]
        %v8958 = vld [vmem:[%s8942 + $0xa0] sm:$0xff]
        %v8959 = vld [vmem:[%s8942 + $0xa8] sm:$0xff]
        %v8960 = vld [vmem:[%s8942 + $0xb0] sm:$0xff]
        %v8961 = vld [vmem:[%s8942 + $0xc0] sm:$0xff]
        %v8962 = vld [vmem:[%s8942 + $0xc8] sm:$0xff]
        %v8963 = vld [vmem:[%s8942 + $0xd0] sm:$0xff]
        %v8964 = vld [vmem:[%s8942 + $0xe0] sm:$0xff]
        %v8965 = vld [vmem:[%s8942 + $0xe8] sm:$0xff]
        %v8966 = vld [vmem:[%s8942 + $0xf0] sm:$0xff]
        %v8967 = vld [vmem:[%s8942 + $0x100] sm:$0xff]
        %v8968 = vld [vmem:[%s8942 + $0x108] sm:$0xff]
        %v8969 = vld [vmem:[%s8942 + $0x110] sm:$0xff]
        %v8970 = vld [vmem:[%s8942 + $0x120] sm:$0xff]
        %v8971 = vld [vmem:[%s8942 + $0x128] sm:$0xff]
        %v8972 = vld [vmem:[%s8942 + $0x130] sm:$0xff]
        %v8973 = vld [vmem:[%s8942 + $0x140] sm:$0xff]
        %v8974 = vld [vmem:[%s8942 + $0x148] sm:$0xff]
        %v8975 = vld [vmem:[%s8942 + $0x150] sm:$0xff]
        %v8976 = vld [vmem:[%s8942 + $0x160] sm:$0xff]
        %v8977 = vld [vmem:[%s8942 + $0x168] sm:$0xff]
        %v8978 = vld [vmem:[%s8942 + $0x170] sm:$0xff]
        %v8979 = vld [vmem:[%s8942 + $0x180] sm:$0xff]
        %v8980 = vld [vmem:[%s8942 + $0x188] sm:$0xff]
        %v8981 = vld [vmem:[%s8942 + $0x190] sm:$0xff]
        %v8982 = vld [vmem:[%s8942 + $0x1a0] sm:$0xff]
        %v8983 = vld [vmem:[%s8942 + $0x1a8] sm:$0xff]
        %v8984 = vld [vmem:[%s8942 + $0x1b0] sm:$0xff]
        %v8985 = vld [vmem:[%s8942 + $0x1c0] sm:$0xff]
        %v8986 = vld [vmem:[%s8942 + $0x1c8] sm:$0xff]
        %v8987 = vld [vmem:[%s8942 + $0x1d0] sm:$0xff]
        %v8988 = vld [vmem:[%s8942 + $0x1e0] sm:$0xff]
        %v8989 = vld [vmem:[%s8942 + $0x1e8] sm:$0xff]
        %v8990 = vld [vmem:[%s8942 + $0x1f0] sm:$0xff]
        %v8991 = vld [vmem:[%s8942 + $0x200] sm:$0xff]
        %v8992 = vld [vmem:[%s8942 + $0x208] sm:$0xff]
        %v8993 = vld [vmem:[%s8942 + $0x210] sm:$0xff]
        %v8994 = vld [vmem:[%s8942 + $0x220] sm:$0xff]
        %v8995 = vld [vmem:[%s8942 + $0x228] sm:$0xff]
        %v8996 = vld [vmem:[%s8942 + $0x230] sm:$0xff]
        %v8997 = vld [vmem:[%s8942 + $0x240] sm:$0xff]
        %v8998 = vld [vmem:[%s8942 + $0x248] sm:$0xff]
        %v8999 = vld [vmem:[%s8942 + $0x250] sm:$0xff]
        %v9000 = vld [vmem:[%s8942 + $0x260] sm:$0xff]
        %v9001 = vld [vmem:[%s8942 + $0x268] sm:$0xff]
        %v9002 = vld [vmem:[%s8942 + $0x270] sm:$0xff]
        %v9003 = vld [vmem:[%s8942 + $0x280] sm:$0xff]
        %v9004 = vld [vmem:[%s8942 + $0x288] sm:$0xff]
        %v9005 = vld [vmem:[%s8942 + $0x290] sm:$0xff]
        %v9006 = vld [vmem:[%s8942 + $0x2a0] sm:$0xff]
        %v9007 = vld [vmem:[%s8942 + $0x2a8] sm:$0xff]
        %v9008 = vld [vmem:[%s8942 + $0x2b0] sm:$0xff]
        %v9009 = vld [vmem:[%s8942 + $0x2c0] sm:$0xff]
        %v9010 = vld [vmem:[%s8942 + $0x2c8] sm:$0xff]
        %v9011 = vld [vmem:[%s8942 + $0x2d0] sm:$0xff]
        %v9012 = vld [vmem:[%s8942 + $0x2e0] sm:$0xff]
        %v9013 = vld [vmem:[%s8942 + $0x2e8] sm:$0xff]
        %v9014 = vld [vmem:[%s8942 + $0x2f0] sm:$0xff]
        %s9015 = scalar_lea.vmem [#allocation3], 192
        %v9016 = vld [vmem:[%s9015] sm:$0xff]
        %v9017 = vld [vmem:[%s9015 + $0x8] sm:$0xff]
        %v9018 = vld [vmem:[%s9015 + $0x10] sm:$0xff]
        %v9019 = vld [vmem:[%s9015 + $0x18] sm:$0xff]
        %v9021 = vsel %vm5392, %v8943, 0
        %v9024 = vsel %vm5392, %v8944, 0
        %v9027 = vsel %vm5392, %v8945, 0
        %v9030 = vsel %vm5392, %v8946, 0
        %v9033 = vsel %vm5392, %v8947, 0
        %v9036 = vsel %vm5392, %v8948, 0
        %v9039 = vsel %vm5392, %v8949, 0
        %v9042 = vsel %vm5392, %v8950, 0
        %v9045 = vsel %vm5392, %v8951, 0
        %v9048 = vsel %vm5392, %v8952, 0
        %v9051 = vsel %vm5392, %v8953, 0
        %v9054 = vsel %vm5392, %v8954, 0
        %v9057 = vsel %vm5392, %v8955, 0
        %v9060 = vsel %vm5392, %v8956, 0
        %v9063 = vsel %vm5392, %v8957, 0
        %v9066 = vsel %vm5392, %v8958, 0
        %v9069 = vsel %vm5392, %v8959, 0
        %v9072 = vsel %vm5392, %v8960, 0
        %v9075 = vsel %vm5392, %v8961, 0
        %v9078 = vsel %vm5392, %v8962, 0
        %v9081 = vsel %vm5392, %v8963, 0
        %v9084 = vsel %vm5392, %v8964, 0
        %v9087 = vsel %vm5392, %v8965, 0
        %v9090 = vsel %vm5392, %v8966, 0
        %v9093 = vsel %vm5392, %v8967, 0
        %v9096 = vsel %vm5392, %v8968, 0
        %v9099 = vsel %vm5392, %v8969, 0
        %v9102 = vsel %vm5392, %v8970, 0
        %v9105 = vsel %vm5392, %v8971, 0
        %v9108 = vsel %vm5392, %v8972, 0
        %v9111 = vsel %vm5392, %v8973, 0
        %v9114 = vsel %vm5392, %v8974, 0
        %v9117 = vsel %vm5392, %v8975, 0
        %v9120 = vsel %vm5392, %v8976, 0
        %v9123 = vsel %vm5392, %v8977, 0
        %v9126 = vsel %vm5392, %v8978, 0
        %v9129 = vsel %vm5392, %v8979, 0
        %v9132 = vsel %vm5392, %v8980, 0
        %v9135 = vsel %vm5392, %v8981, 0
        %v9138 = vsel %vm5392, %v8982, 0
        %v9141 = vsel %vm5392, %v8983, 0
        %v9144 = vsel %vm5392, %v8984, 0
        %v9147 = vsel %vm5392, %v8985, 0
        %v9150 = vsel %vm5392, %v8986, 0
        %v9153 = vsel %vm5392, %v8987, 0
        %v9156 = vsel %vm5392, %v8988, 0
        %v9159 = vsel %vm5392, %v8989, 0
        %v9162 = vsel %vm5392, %v8990, 0
        %v9165 = vsel %vm5392, %v8991, 0
        %v9168 = vsel %vm5392, %v8992, 0
        %v9171 = vsel %vm5392, %v8993, 0
        %v9174 = vsel %vm5392, %v8994, 0
        %v9177 = vsel %vm5392, %v8995, 0
        %v9180 = vsel %vm5392, %v8996, 0
        %v9183 = vsel %vm5392, %v8997, 0
        %v9186 = vsel %vm5392, %v8998, 0
        %v9189 = vsel %vm5392, %v8999, 0
        %v9192 = vsel %vm5392, %v9000, 0
        %v9195 = vsel %vm5392, %v9001, 0
        %v9198 = vsel %vm5392, %v9002, 0
        %v9201 = vsel %vm5392, %v9003, 0
        %v9204 = vsel %vm5392, %v9004, 0
        %v9207 = vsel %vm5392, %v9005, 0
        %v9210 = vsel %vm5392, %v9006, 0
        %v9213 = vsel %vm5392, %v9007, 0
        %v9216 = vsel %vm5392, %v9008, 0
        %v9219 = vsel %vm5392, %v9009, 0
        %v9222 = vsel %vm5392, %v9010, 0
        %v9225 = vsel %vm5392, %v9011, 0
        %v9228 = vsel %vm5392, %v9012, 0
        %v9231 = vsel %vm5392, %v9013, 0
        %v9234 = vsel %vm5392, %v9014, 0
        %9236 = vmatpush.msra.mxu0 0.0
        %9237 = vmatpush.msra.mxu0 0.0
        %9238 = vmatpush.msra.mxu0 0.0
        %9239 = vmatpush.msra.mxu0 0.0
        %9240 = vmatpush.msra.mxu0 0.0
        %9241 = vmatpush.msra.mxu0 0.0
        %9242 = vmatpush.msra.mxu0 0.0
        %9243 = vmatpush.msra.mxu0 0.0
        %9244 = vmatpush.msra.mxu0 0.0
        %9245 = vmatpush.msra.mxu0 0.0
        %9246 = vmatpush.msra.mxu0 0.0
        %9247 = vmatpush.msra.mxu0 0.0
        %9248 = vmatpush.msra.mxu0 %v9019
        %9249 = vmatpush.msra.mxu0 %v9018
        %9250 = vmatpush.msra.mxu0 %v9017
        %9251 = vmatpush.msra.mxu0 %v9016
        %9252 = vmatmul.f32.gmra.mxu0 %v9021
        %v9253 = vpop.f32.mrf.mxu0
        %v9254 = vadd.f32 0.0, %v9253
        %9255 = vmatmul.f32.gmra.mxu0 %v9024
        %v9256 = vpop.f32.mrf.mxu0
        %v9257 = vadd.f32 0.0, %v9256
        %9258 = vmatmul.f32.gmra.mxu0 %v9027
        %v9259 = vpop.f32.mrf.mxu0
        %v9260 = vadd.f32 0.0, %v9259
        %9261 = vmatmul.f32.gmra.mxu0 %v9030
        %v9262 = vpop.f32.mrf.mxu0
        %v9263 = vadd.f32 0.0, %v9262
        %9264 = vmatmul.f32.gmra.mxu0 %v9033
        %v9265 = vpop.f32.mrf.mxu0
        %v9266 = vadd.f32 0.0, %v9265
        %9267 = vmatmul.f32.gmra.mxu0 %v9036
        %v9268 = vpop.f32.mrf.mxu0
        %v9269 = vadd.f32 0.0, %v9268
        %9270 = vmatmul.f32.gmra.mxu0 %v9039
        %v9271 = vpop.f32.mrf.mxu0
        %v9272 = vadd.f32 0.0, %v9271
        %9273 = vmatmul.f32.gmra.mxu0 %v9042
        %v9274 = vpop.f32.mrf.mxu0
        %v9275 = vadd.f32 0.0, %v9274
        %9276 = vmatmul.f32.gmra.mxu0 %v9045
        %v9277 = vpop.f32.mrf.mxu0
        %v9278 = vadd.f32 0.0, %v9277
        %9279 = vmatmul.f32.gmra.mxu0 %v9048
        %v9280 = vpop.f32.mrf.mxu0
        %v9281 = vadd.f32 0.0, %v9280
        %9282 = vmatmul.f32.gmra.mxu0 %v9051
        %v9283 = vpop.f32.mrf.mxu0
        %v9284 = vadd.f32 0.0, %v9283
        %9285 = vmatmul.f32.gmra.mxu0 %v9054
        %v9286 = vpop.f32.mrf.mxu0
        %v9287 = vadd.f32 0.0, %v9286
        %9288 = vmatmul.f32.gmra.mxu0 %v9057
        %v9289 = vpop.f32.mrf.mxu0
        %v9290 = vadd.f32 0.0, %v9289
        %9291 = vmatmul.f32.gmra.mxu0 %v9060
        %v9292 = vpop.f32.mrf.mxu0
        %v9293 = vadd.f32 0.0, %v9292
        %9294 = vmatmul.f32.gmra.mxu0 %v9063
        %v9295 = vpop.f32.mrf.mxu0
        %v9296 = vadd.f32 0.0, %v9295
        %9297 = vmatmul.f32.gmra.mxu0 %v9066
        %v9298 = vpop.f32.mrf.mxu0
        %v9299 = vadd.f32 0.0, %v9298
        %9300 = vmatmul.f32.gmra.mxu0 %v9069
        %v9301 = vpop.f32.mrf.mxu0
        %v9302 = vadd.f32 0.0, %v9301
        %9303 = vmatmul.f32.gmra.mxu0 %v9072
        %v9304 = vpop.f32.mrf.mxu0
        %v9305 = vadd.f32 0.0, %v9304
        %9306 = vmatmul.f32.gmra.mxu0 %v9075
        %v9307 = vpop.f32.mrf.mxu0
        %v9308 = vadd.f32 0.0, %v9307
        %9309 = vmatmul.f32.gmra.mxu0 %v9078
        %v9310 = vpop.f32.mrf.mxu0
        %v9311 = vadd.f32 0.0, %v9310
        %9312 = vmatmul.f32.gmra.mxu0 %v9081
        %v9313 = vpop.f32.mrf.mxu0
        %v9314 = vadd.f32 0.0, %v9313
        %9315 = vmatmul.f32.gmra.mxu0 %v9084
        %v9316 = vpop.f32.mrf.mxu0
        %v9317 = vadd.f32 0.0, %v9316
        %9318 = vmatmul.f32.gmra.mxu0 %v9087
        %v9319 = vpop.f32.mrf.mxu0
        %v9320 = vadd.f32 0.0, %v9319
        %9321 = vmatmul.f32.gmra.mxu0 %v9090
        %v9322 = vpop.f32.mrf.mxu0
        %v9323 = vadd.f32 0.0, %v9322
        %9324 = vmatmul.f32.gmra.mxu0 %v9093
        %v9325 = vpop.f32.mrf.mxu0
        %v9326 = vadd.f32 0.0, %v9325
        %9327 = vmatmul.f32.gmra.mxu0 %v9096
        %v9328 = vpop.f32.mrf.mxu0
        %v9329 = vadd.f32 0.0, %v9328
        %9330 = vmatmul.f32.gmra.mxu0 %v9099
        %v9331 = vpop.f32.mrf.mxu0
        %v9332 = vadd.f32 0.0, %v9331
        %9333 = vmatmul.f32.gmra.mxu0 %v9102
        %v9334 = vpop.f32.mrf.mxu0
        %v9335 = vadd.f32 0.0, %v9334
        %9336 = vmatmul.f32.gmra.mxu0 %v9105
        %v9337 = vpop.f32.mrf.mxu0
        %v9338 = vadd.f32 0.0, %v9337
        %9339 = vmatmul.f32.gmra.mxu0 %v9108
        %v9340 = vpop.f32.mrf.mxu0
        %v9341 = vadd.f32 0.0, %v9340
        %9342 = vmatmul.f32.gmra.mxu0 %v9111
        %v9343 = vpop.f32.mrf.mxu0
        %v9344 = vadd.f32 0.0, %v9343
        %9345 = vmatmul.f32.gmra.mxu0 %v9114
        %v9346 = vpop.f32.mrf.mxu0
        %v9347 = vadd.f32 0.0, %v9346
        %9348 = vmatmul.f32.gmra.mxu0 %v9117
        %v9349 = vpop.f32.mrf.mxu0
        %v9350 = vadd.f32 0.0, %v9349
        %9351 = vmatmul.f32.gmra.mxu0 %v9120
        %v9352 = vpop.f32.mrf.mxu0
        %v9353 = vadd.f32 0.0, %v9352
        %9354 = vmatmul.f32.gmra.mxu0 %v9123
        %v9355 = vpop.f32.mrf.mxu0
        %v9356 = vadd.f32 0.0, %v9355
        %9357 = vmatmul.f32.gmra.mxu0 %v9126
        %v9358 = vpop.f32.mrf.mxu0
        %v9359 = vadd.f32 0.0, %v9358
        %9360 = vmatmul.f32.gmra.mxu0 %v9129
        %v9361 = vpop.f32.mrf.mxu0
        %v9362 = vadd.f32 0.0, %v9361
        %9363 = vmatmul.f32.gmra.mxu0 %v9132
        %v9364 = vpop.f32.mrf.mxu0
        %v9365 = vadd.f32 0.0, %v9364
        %9366 = vmatmul.f32.gmra.mxu0 %v9135
        %v9367 = vpop.f32.mrf.mxu0
        %v9368 = vadd.f32 0.0, %v9367
        %9369 = vmatmul.f32.gmra.mxu0 %v9138
        %v9370 = vpop.f32.mrf.mxu0
        %v9371 = vadd.f32 0.0, %v9370
        %9372 = vmatmul.f32.gmra.mxu0 %v9141
        %v9373 = vpop.f32.mrf.mxu0
        %v9374 = vadd.f32 0.0, %v9373
        %9375 = vmatmul.f32.gmra.mxu0 %v9144
        %v9376 = vpop.f32.mrf.mxu0
        %v9377 = vadd.f32 0.0, %v9376
        %9378 = vmatmul.f32.gmra.mxu0 %v9147
        %v9379 = vpop.f32.mrf.mxu0
        %v9380 = vadd.f32 0.0, %v9379
        %9381 = vmatmul.f32.gmra.mxu0 %v9150
        %v9382 = vpop.f32.mrf.mxu0
        %v9383 = vadd.f32 0.0, %v9382
        %9384 = vmatmul.f32.gmra.mxu0 %v9153
        %v9385 = vpop.f32.mrf.mxu0
        %v9386 = vadd.f32 0.0, %v9385
        %9387 = vmatmul.f32.gmra.mxu0 %v9156
        %v9388 = vpop.f32.mrf.mxu0
        %v9389 = vadd.f32 0.0, %v9388
        %9390 = vmatmul.f32.gmra.mxu0 %v9159
        %v9391 = vpop.f32.mrf.mxu0
        %v9392 = vadd.f32 0.0, %v9391
        %9393 = vmatmul.f32.gmra.mxu0 %v9162
        %v9394 = vpop.f32.mrf.mxu0
        %v9395 = vadd.f32 0.0, %v9394
        %9396 = vmatmul.f32.gmra.mxu0 %v9165
        %v9397 = vpop.f32.mrf.mxu0
        %v9398 = vadd.f32 0.0, %v9397
        %9399 = vmatmul.f32.gmra.mxu0 %v9168
        %v9400 = vpop.f32.mrf.mxu0
        %v9401 = vadd.f32 0.0, %v9400
        %9402 = vmatmul.f32.gmra.mxu0 %v9171
        %v9403 = vpop.f32.mrf.mxu0
        %v9404 = vadd.f32 0.0, %v9403
        %9405 = vmatmul.f32.gmra.mxu0 %v9174
        %v9406 = vpop.f32.mrf.mxu0
        %v9407 = vadd.f32 0.0, %v9406
        %9408 = vmatmul.f32.gmra.mxu0 %v9177
        %v9409 = vpop.f32.mrf.mxu0
        %v9410 = vadd.f32 0.0, %v9409
        %9411 = vmatmul.f32.gmra.mxu0 %v9180
        %v9412 = vpop.f32.mrf.mxu0
        %v9413 = vadd.f32 0.0, %v9412
        %9414 = vmatmul.f32.gmra.mxu0 %v9183
        %v9415 = vpop.f32.mrf.mxu0
        %v9416 = vadd.f32 0.0, %v9415
        %9417 = vmatmul.f32.gmra.mxu0 %v9186
        %v9418 = vpop.f32.mrf.mxu0
        %v9419 = vadd.f32 0.0, %v9418
        %9420 = vmatmul.f32.gmra.mxu0 %v9189
        %v9421 = vpop.f32.mrf.mxu0
        %v9422 = vadd.f32 0.0, %v9421
        %9423 = vmatmul.f32.gmra.mxu0 %v9192
        %v9424 = vpop.f32.mrf.mxu0
        %v9425 = vadd.f32 0.0, %v9424
        %9426 = vmatmul.f32.gmra.mxu0 %v9195
        %v9427 = vpop.f32.mrf.mxu0
        %v9428 = vadd.f32 0.0, %v9427
        %9429 = vmatmul.f32.gmra.mxu0 %v9198
        %v9430 = vpop.f32.mrf.mxu0
        %v9431 = vadd.f32 0.0, %v9430
        %9432 = vmatmul.f32.gmra.mxu0 %v9201
        %v9433 = vpop.f32.mrf.mxu0
        %v9434 = vadd.f32 0.0, %v9433
        %9435 = vmatmul.f32.gmra.mxu0 %v9204
        %v9436 = vpop.f32.mrf.mxu0
        %v9437 = vadd.f32 0.0, %v9436
        %9438 = vmatmul.f32.gmra.mxu0 %v9207
        %v9439 = vpop.f32.mrf.mxu0
        %v9440 = vadd.f32 0.0, %v9439
        %9441 = vmatmul.f32.gmra.mxu0 %v9210
        %v9442 = vpop.f32.mrf.mxu0
        %v9443 = vadd.f32 0.0, %v9442
        %9444 = vmatmul.f32.gmra.mxu0 %v9213
        %v9445 = vpop.f32.mrf.mxu0
        %v9446 = vadd.f32 0.0, %v9445
        %9447 = vmatmul.f32.gmra.mxu0 %v9216
        %v9448 = vpop.f32.mrf.mxu0
        %v9449 = vadd.f32 0.0, %v9448
        %9450 = vmatmul.f32.gmra.mxu0 %v9219
        %v9451 = vpop.f32.mrf.mxu0
        %v9452 = vadd.f32 0.0, %v9451
        %9453 = vmatmul.f32.gmra.mxu0 %v9222
        %v9454 = vpop.f32.mrf.mxu0
        %v9455 = vadd.f32 0.0, %v9454
        %9456 = vmatmul.f32.gmra.mxu0 %v9225
        %v9457 = vpop.f32.mrf.mxu0
        %v9458 = vadd.f32 0.0, %v9457
        %9459 = vmatmul.f32.gmra.mxu0 %v9228
        %v9460 = vpop.f32.mrf.mxu0
        %v9461 = vadd.f32 0.0, %v9460
        %9462 = vmatmul.f32.gmra.mxu0 %v9231
        %v9463 = vpop.f32.mrf.mxu0
        %v9464 = vadd.f32 0.0, %v9463
        %9465 = vmatmul.f32.gmra.mxu0 %v9234
        %v9466 = vpop.f32.mrf.mxu0
        %v9467 = vadd.f32 0.0, %v9466
        %9468 = vdwg.mxu0
        %v9469 = vadd.f32 %v8870, %v9254
        %v9470 = vadd.f32 %v8871, %v9257
        %v9471 = vadd.f32 %v8872, %v9260
        %v9472 = vadd.f32 %v8873, %v9263
        %v9473 = vadd.f32 %v8874, %v9266
        %v9474 = vadd.f32 %v8875, %v9269
        %v9475 = vadd.f32 %v8876, %v9272
        %v9476 = vadd.f32 %v8877, %v9275
        %v9477 = vadd.f32 %v8878, %v9278
        %v9478 = vadd.f32 %v8879, %v9281
        %v9479 = vadd.f32 %v8880, %v9284
        %v9480 = vadd.f32 %v8881, %v9287
        %v9481 = vadd.f32 %v8882, %v9290
        %v9482 = vadd.f32 %v8883, %v9293
        %v9483 = vadd.f32 %v8884, %v9296
        %v9484 = vadd.f32 %v8885, %v9299
        %v9485 = vadd.f32 %v8886, %v9302
        %v9486 = vadd.f32 %v8887, %v9305
        %v9487 = vadd.f32 %v8888, %v9308
        %v9488 = vadd.f32 %v8889, %v9311
        %v9489 = vadd.f32 %v8890, %v9314
        %v9490 = vadd.f32 %v8891, %v9317
        %v9491 = vadd.f32 %v8892, %v9320
        %v9492 = vadd.f32 %v8893, %v9323
        %v9493 = vadd.f32 %v8894, %v9326
        %v9494 = vadd.f32 %v8895, %v9329
        %v9495 = vadd.f32 %v8896, %v9332
        %v9496 = vadd.f32 %v8897, %v9335
        %v9497 = vadd.f32 %v8898, %v9338
        %v9498 = vadd.f32 %v8899, %v9341
        %v9499 = vadd.f32 %v8900, %v9344
        %v9500 = vadd.f32 %v8901, %v9347
        %v9501 = vadd.f32 %v8902, %v9350
        %v9502 = vadd.f32 %v8903, %v9353
        %v9503 = vadd.f32 %v8904, %v9356
        %v9504 = vadd.f32 %v8905, %v9359
        %v9505 = vadd.f32 %v8906, %v9362
        %v9506 = vadd.f32 %v8907, %v9365
        %v9507 = vadd.f32 %v8908, %v9368
        %v9508 = vadd.f32 %v8909, %v9371
        %v9509 = vadd.f32 %v8910, %v9374
        %v9510 = vadd.f32 %v8911, %v9377
        %v9511 = vadd.f32 %v8912, %v9380
        %v9512 = vadd.f32 %v8913, %v9383
        %v9513 = vadd.f32 %v8914, %v9386
        %v9514 = vadd.f32 %v8915, %v9389
        %v9515 = vadd.f32 %v8916, %v9392
        %v9516 = vadd.f32 %v8917, %v9395
        %v9517 = vadd.f32 %v8918, %v9398
        %v9518 = vadd.f32 %v8919, %v9401
        %v9519 = vadd.f32 %v8920, %v9404
        %v9520 = vadd.f32 %v8921, %v9407
        %v9521 = vadd.f32 %v8922, %v9410
        %v9522 = vadd.f32 %v8923, %v9413
        %v9523 = vadd.f32 %v8924, %v9416
        %v9524 = vadd.f32 %v8925, %v9419
        %v9525 = vadd.f32 %v8926, %v9422
        %v9526 = vadd.f32 %v8927, %v9425
        %v9527 = vadd.f32 %v8928, %v9428
        %v9528 = vadd.f32 %v8929, %v9431
        %v9529 = vadd.f32 %v8930, %v9434
        %v9530 = vadd.f32 %v8931, %v9437
        %v9531 = vadd.f32 %v8932, %v9440
        %v9532 = vadd.f32 %v8933, %v9443
        %v9533 = vadd.f32 %v8934, %v9446
        %v9534 = vadd.f32 %v8935, %v9449
        %v9535 = vadd.f32 %v8936, %v9452
        %v9536 = vadd.f32 %v8937, %v9455
        %v9537 = vadd.f32 %v8938, %v9458
        %v9538 = vadd.f32 %v8939, %v9461
        %v9539 = vadd.f32 %v8940, %v9464
        %v9540 = vadd.f32 %v8941, %v9467
        %v9541 = vld [vmem:[%s8942 + $0x1] sm:$0xff]
        %v9542 = vld [vmem:[%s8942 + $0x9] sm:$0xff]
        %v9543 = vld [vmem:[%s8942 + $0x11] sm:$0xff]
        %v9544 = vld [vmem:[%s8942 + $0x21] sm:$0xff]
        %v9545 = vld [vmem:[%s8942 + $0x29] sm:$0xff]
        %v9546 = vld [vmem:[%s8942 + $0x31] sm:$0xff]
        %v9547 = vld [vmem:[%s8942 + $0x41] sm:$0xff]
        %v9548 = vld [vmem:[%s8942 + $0x49] sm:$0xff]
        %v9549 = vld [vmem:[%s8942 + $0x51] sm:$0xff]
        %v9550 = vld [vmem:[%s8942 + $0x61] sm:$0xff]
        %v9551 = vld [vmem:[%s8942 + $0x69] sm:$0xff]
        %v9552 = vld [vmem:[%s8942 + $0x71] sm:$0xff]
        %v9553 = vld [vmem:[%s8942 + $0x81] sm:$0xff]
        %v9554 = vld [vmem:[%s8942 + $0x89] sm:$0xff]
        %v9555 = vld [vmem:[%s8942 + $0x91] sm:$0xff]
        %v9556 = vld [vmem:[%s8942 + $0xa1] sm:$0xff]
        %v9557 = vld [vmem:[%s8942 + $0xa9] sm:$0xff]
        %v9558 = vld [vmem:[%s8942 + $0xb1] sm:$0xff]
        %v9559 = vld [vmem:[%s8942 + $0xc1] sm:$0xff]
        %v9560 = vld [vmem:[%s8942 + $0xc9] sm:$0xff]
        %v9561 = vld [vmem:[%s8942 + $0xd1] sm:$0xff]
        %v9562 = vld [vmem:[%s8942 + $0xe1] sm:$0xff]
        %v9563 = vld [vmem:[%s8942 + $0xe9] sm:$0xff]
        %v9564 = vld [vmem:[%s8942 + $0xf1] sm:$0xff]
        %v9565 = vld [vmem:[%s8942 + $0x101] sm:$0xff]
        %v9566 = vld [vmem:[%s8942 + $0x109] sm:$0xff]
        %v9567 = vld [vmem:[%s8942 + $0x111] sm:$0xff]
        %v9568 = vld [vmem:[%s8942 + $0x121] sm:$0xff]
        %v9569 = vld [vmem:[%s8942 + $0x129] sm:$0xff]
        %v9570 = vld [vmem:[%s8942 + $0x131] sm:$0xff]
        %v9571 = vld [vmem:[%s8942 + $0x141] sm:$0xff]
        %v9572 = vld [vmem:[%s8942 + $0x149] sm:$0xff]
        %v9573 = vld [vmem:[%s8942 + $0x151] sm:$0xff]
        %v9574 = vld [vmem:[%s8942 + $0x161] sm:$0xff]
        %v9575 = vld [vmem:[%s8942 + $0x169] sm:$0xff]
        %v9576 = vld [vmem:[%s8942 + $0x171] sm:$0xff]
        %v9577 = vld [vmem:[%s8942 + $0x181] sm:$0xff]
        %v9578 = vld [vmem:[%s8942 + $0x189] sm:$0xff]
        %v9579 = vld [vmem:[%s8942 + $0x191] sm:$0xff]
        %v9580 = vld [vmem:[%s8942 + $0x1a1] sm:$0xff]
        %v9581 = vld [vmem:[%s8942 + $0x1a9] sm:$0xff]
        %v9582 = vld [vmem:[%s8942 + $0x1b1] sm:$0xff]
        %v9583 = vld [vmem:[%s8942 + $0x1c1] sm:$0xff]
        %v9584 = vld [vmem:[%s8942 + $0x1c9] sm:$0xff]
        %v9585 = vld [vmem:[%s8942 + $0x1d1] sm:$0xff]
        %v9586 = vld [vmem:[%s8942 + $0x1e1] sm:$0xff]
        %v9587 = vld [vmem:[%s8942 + $0x1e9] sm:$0xff]
        %v9588 = vld [vmem:[%s8942 + $0x1f1] sm:$0xff]
        %v9589 = vld [vmem:[%s8942 + $0x201] sm:$0xff]
        %v9590 = vld [vmem:[%s8942 + $0x209] sm:$0xff]
        %v9591 = vld [vmem:[%s8942 + $0x211] sm:$0xff]
        %v9592 = vld [vmem:[%s8942 + $0x221] sm:$0xff]
        %v9593 = vld [vmem:[%s8942 + $0x229] sm:$0xff]
        %v9594 = vld [vmem:[%s8942 + $0x231] sm:$0xff]
        %v9595 = vld [vmem:[%s8942 + $0x241] sm:$0xff]
        %v9596 = vld [vmem:[%s8942 + $0x249] sm:$0xff]
        %v9597 = vld [vmem:[%s8942 + $0x251] sm:$0xff]
        %v9598 = vld [vmem:[%s8942 + $0x261] sm:$0xff]
        %v9599 = vld [vmem:[%s8942 + $0x269] sm:$0xff]
        %v9600 = vld [vmem:[%s8942 + $0x271] sm:$0xff]
        %v9601 = vld [vmem:[%s8942 + $0x281] sm:$0xff]
        %v9602 = vld [vmem:[%s8942 + $0x289] sm:$0xff]
        %v9603 = vld [vmem:[%s8942 + $0x291] sm:$0xff]
        %v9604 = vld [vmem:[%s8942 + $0x2a1] sm:$0xff]
        %v9605 = vld [vmem:[%s8942 + $0x2a9] sm:$0xff]
        %v9606 = vld [vmem:[%s8942 + $0x2b1] sm:$0xff]
        %v9607 = vld [vmem:[%s8942 + $0x2c1] sm:$0xff]
        %v9608 = vld [vmem:[%s8942 + $0x2c9] sm:$0xff]
        %v9609 = vld [vmem:[%s8942 + $0x2d1] sm:$0xff]
        %v9610 = vld [vmem:[%s8942 + $0x2e1] sm:$0xff]
        %v9611 = vld [vmem:[%s8942 + $0x2e9] sm:$0xff]
        %v9612 = vld [vmem:[%s8942 + $0x2f1] sm:$0xff]
        %s9613 = scalar_lea.vmem [#allocation3], 224
        %v9614 = vld [vmem:[%s9613] sm:$0xff]
        %v9615 = vld [vmem:[%s9613 + $0x8] sm:$0xff]
        %v9616 = vld [vmem:[%s9613 + $0x10] sm:$0xff]
        %v9617 = vld [vmem:[%s9613 + $0x18] sm:$0xff]
        %v9619 = vsel %vm5392, %v9541, 0
        %v9622 = vsel %vm5392, %v9542, 0
        %v9625 = vsel %vm5392, %v9543, 0
        %v9628 = vsel %vm5392, %v9544, 0
        %v9631 = vsel %vm5392, %v9545, 0
        %v9634 = vsel %vm5392, %v9546, 0
        %v9637 = vsel %vm5392, %v9547, 0
        %v9640 = vsel %vm5392, %v9548, 0
        %v9643 = vsel %vm5392, %v9549, 0
        %v9646 = vsel %vm5392, %v9550, 0
        %v9649 = vsel %vm5392, %v9551, 0
        %v9652 = vsel %vm5392, %v9552, 0
        %v9655 = vsel %vm5392, %v9553, 0
        %v9658 = vsel %vm5392, %v9554, 0
        %v9661 = vsel %vm5392, %v9555, 0
        %v9664 = vsel %vm5392, %v9556, 0
        %v9667 = vsel %vm5392, %v9557, 0
        %v9670 = vsel %vm5392, %v9558, 0
        %v9673 = vsel %vm5392, %v9559, 0
        %v9676 = vsel %vm5392, %v9560, 0
        %v9679 = vsel %vm5392, %v9561, 0
        %v9682 = vsel %vm5392, %v9562, 0
        %v9685 = vsel %vm5392, %v9563, 0
        %v9688 = vsel %vm5392, %v9564, 0
        %v9691 = vsel %vm5392, %v9565, 0
        %v9694 = vsel %vm5392, %v9566, 0
        %v9697 = vsel %vm5392, %v9567, 0
        %v9700 = vsel %vm5392, %v9568, 0
        %v9703 = vsel %vm5392, %v9569, 0
        %v9706 = vsel %vm5392, %v9570, 0
        %v9709 = vsel %vm5392, %v9571, 0
        %v9712 = vsel %vm5392, %v9572, 0
        %v9715 = vsel %vm5392, %v9573, 0
        %v9718 = vsel %vm5392, %v9574, 0
        %v9721 = vsel %vm5392, %v9575, 0
        %v9724 = vsel %vm5392, %v9576, 0
        %v9727 = vsel %vm5392, %v9577, 0
        %v9730 = vsel %vm5392, %v9578, 0
        %v9733 = vsel %vm5392, %v9579, 0
        %v9736 = vsel %vm5392, %v9580, 0
        %v9739 = vsel %vm5392, %v9581, 0
        %v9742 = vsel %vm5392, %v9582, 0
        %v9745 = vsel %vm5392, %v9583, 0
        %v9748 = vsel %vm5392, %v9584, 0
        %v9751 = vsel %vm5392, %v9585, 0
        %v9754 = vsel %vm5392, %v9586, 0
        %v9757 = vsel %vm5392, %v9587, 0
        %v9760 = vsel %vm5392, %v9588, 0
        %v9763 = vsel %vm5392, %v9589, 0
        %v9766 = vsel %vm5392, %v9590, 0
        %v9769 = vsel %vm5392, %v9591, 0
        %v9772 = vsel %vm5392, %v9592, 0
        %v9775 = vsel %vm5392, %v9593, 0
        %v9778 = vsel %vm5392, %v9594, 0
        %v9781 = vsel %vm5392, %v9595, 0
        %v9784 = vsel %vm5392, %v9596, 0
        %v9787 = vsel %vm5392, %v9597, 0
        %v9790 = vsel %vm5392, %v9598, 0
        %v9793 = vsel %vm5392, %v9599, 0
        %v9796 = vsel %vm5392, %v9600, 0
        %v9799 = vsel %vm5392, %v9601, 0
        %v9802 = vsel %vm5392, %v9602, 0
        %v9805 = vsel %vm5392, %v9603, 0
        %v9808 = vsel %vm5392, %v9604, 0
        %v9811 = vsel %vm5392, %v9605, 0
        %v9814 = vsel %vm5392, %v9606, 0
        %v9817 = vsel %vm5392, %v9607, 0
        %v9820 = vsel %vm5392, %v9608, 0
        %v9823 = vsel %vm5392, %v9609, 0
        %v9826 = vsel %vm5392, %v9610, 0
        %v9829 = vsel %vm5392, %v9611, 0
        %v9832 = vsel %vm5392, %v9612, 0
        %9834 = vmatpush.msra.mxu0 0.0
        %9835 = vmatpush.msra.mxu0 0.0
        %9836 = vmatpush.msra.mxu0 0.0
        %9837 = vmatpush.msra.mxu0 0.0
        %9838 = vmatpush.msra.mxu0 0.0
        %9839 = vmatpush.msra.mxu0 0.0
        %9840 = vmatpush.msra.mxu0 0.0
        %9841 = vmatpush.msra.mxu0 0.0
        %9842 = vmatpush.msra.mxu0 0.0
        %9843 = vmatpush.msra.mxu0 0.0
        %9844 = vmatpush.msra.mxu0 0.0
        %9845 = vmatpush.msra.mxu0 0.0
        %9846 = vmatpush.msra.mxu0 %v9617
        %9847 = vmatpush.msra.mxu0 %v9616
        %9848 = vmatpush.msra.mxu0 %v9615
        %9849 = vmatpush.msra.mxu0 %v9614
        %9850 = vmatmul.f32.gmra.mxu0 %v9619
        %v9851 = vpop.f32.mrf.mxu0
        %v9852 = vadd.f32 0.0, %v9851
        %9853 = vmatmul.f32.gmra.mxu0 %v9622
        %v9854 = vpop.f32.mrf.mxu0
        %v9855 = vadd.f32 0.0, %v9854
        %9856 = vmatmul.f32.gmra.mxu0 %v9625
        %v9857 = vpop.f32.mrf.mxu0
        %v9858 = vadd.f32 0.0, %v9857
        %9859 = vmatmul.f32.gmra.mxu0 %v9628
        %v9860 = vpop.f32.mrf.mxu0
        %v9861 = vadd.f32 0.0, %v9860
        %9862 = vmatmul.f32.gmra.mxu0 %v9631
        %v9863 = vpop.f32.mrf.mxu0
        %v9864 = vadd.f32 0.0, %v9863
        %9865 = vmatmul.f32.gmra.mxu0 %v9634
        %v9866 = vpop.f32.mrf.mxu0
        %v9867 = vadd.f32 0.0, %v9866
        %9868 = vmatmul.f32.gmra.mxu0 %v9637
        %v9869 = vpop.f32.mrf.mxu0
        %v9870 = vadd.f32 0.0, %v9869
        %9871 = vmatmul.f32.gmra.mxu0 %v9640
        %v9872 = vpop.f32.mrf.mxu0
        %v9873 = vadd.f32 0.0, %v9872
        %9874 = vmatmul.f32.gmra.mxu0 %v9643
        %v9875 = vpop.f32.mrf.mxu0
        %v9876 = vadd.f32 0.0, %v9875
        %9877 = vmatmul.f32.gmra.mxu0 %v9646
        %v9878 = vpop.f32.mrf.mxu0
        %v9879 = vadd.f32 0.0, %v9878
        %9880 = vmatmul.f32.gmra.mxu0 %v9649
        %v9881 = vpop.f32.mrf.mxu0
        %v9882 = vadd.f32 0.0, %v9881
        %9883 = vmatmul.f32.gmra.mxu0 %v9652
        %v9884 = vpop.f32.mrf.mxu0
        %v9885 = vadd.f32 0.0, %v9884
        %9886 = vmatmul.f32.gmra.mxu0 %v9655
        %v9887 = vpop.f32.mrf.mxu0
        %v9888 = vadd.f32 0.0, %v9887
        %9889 = vmatmul.f32.gmra.mxu0 %v9658
        %v9890 = vpop.f32.mrf.mxu0
        %v9891 = vadd.f32 0.0, %v9890
        %9892 = vmatmul.f32.gmra.mxu0 %v9661
        %v9893 = vpop.f32.mrf.mxu0
        %v9894 = vadd.f32 0.0, %v9893
        %9895 = vmatmul.f32.gmra.mxu0 %v9664
        %v9896 = vpop.f32.mrf.mxu0
        %v9897 = vadd.f32 0.0, %v9896
        %9898 = vmatmul.f32.gmra.mxu0 %v9667
        %v9899 = vpop.f32.mrf.mxu0
        %v9900 = vadd.f32 0.0, %v9899
        %9901 = vmatmul.f32.gmra.mxu0 %v9670
        %v9902 = vpop.f32.mrf.mxu0
        %v9903 = vadd.f32 0.0, %v9902
        %9904 = vmatmul.f32.gmra.mxu0 %v9673
        %v9905 = vpop.f32.mrf.mxu0
        %v9906 = vadd.f32 0.0, %v9905
        %9907 = vmatmul.f32.gmra.mxu0 %v9676
        %v9908 = vpop.f32.mrf.mxu0
        %v9909 = vadd.f32 0.0, %v9908
        %9910 = vmatmul.f32.gmra.mxu0 %v9679
        %v9911 = vpop.f32.mrf.mxu0
        %v9912 = vadd.f32 0.0, %v9911
        %9913 = vmatmul.f32.gmra.mxu0 %v9682
        %v9914 = vpop.f32.mrf.mxu0
        %v9915 = vadd.f32 0.0, %v9914
        %9916 = vmatmul.f32.gmra.mxu0 %v9685
        %v9917 = vpop.f32.mrf.mxu0
        %v9918 = vadd.f32 0.0, %v9917
        %9919 = vmatmul.f32.gmra.mxu0 %v9688
        %v9920 = vpop.f32.mrf.mxu0
        %v9921 = vadd.f32 0.0, %v9920
        %9922 = vmatmul.f32.gmra.mxu0 %v9691
        %v9923 = vpop.f32.mrf.mxu0
        %v9924 = vadd.f32 0.0, %v9923
        %9925 = vmatmul.f32.gmra.mxu0 %v9694
        %v9926 = vpop.f32.mrf.mxu0
        %v9927 = vadd.f32 0.0, %v9926
        %9928 = vmatmul.f32.gmra.mxu0 %v9697
        %v9929 = vpop.f32.mrf.mxu0
        %v9930 = vadd.f32 0.0, %v9929
        %9931 = vmatmul.f32.gmra.mxu0 %v9700
        %v9932 = vpop.f32.mrf.mxu0
        %v9933 = vadd.f32 0.0, %v9932
        %9934 = vmatmul.f32.gmra.mxu0 %v9703
        %v9935 = vpop.f32.mrf.mxu0
        %v9936 = vadd.f32 0.0, %v9935
        %9937 = vmatmul.f32.gmra.mxu0 %v9706
        %v9938 = vpop.f32.mrf.mxu0
        %v9939 = vadd.f32 0.0, %v9938
        %9940 = vmatmul.f32.gmra.mxu0 %v9709
        %v9941 = vpop.f32.mrf.mxu0
        %v9942 = vadd.f32 0.0, %v9941
        %9943 = vmatmul.f32.gmra.mxu0 %v9712
        %v9944 = vpop.f32.mrf.mxu0
        %v9945 = vadd.f32 0.0, %v9944
        %9946 = vmatmul.f32.gmra.mxu0 %v9715
        %v9947 = vpop.f32.mrf.mxu0
        %v9948 = vadd.f32 0.0, %v9947
        %9949 = vmatmul.f32.gmra.mxu0 %v9718
        %v9950 = vpop.f32.mrf.mxu0
        %v9951 = vadd.f32 0.0, %v9950
        %9952 = vmatmul.f32.gmra.mxu0 %v9721
        %v9953 = vpop.f32.mrf.mxu0
        %v9954 = vadd.f32 0.0, %v9953
        %9955 = vmatmul.f32.gmra.mxu0 %v9724
        %v9956 = vpop.f32.mrf.mxu0
        %v9957 = vadd.f32 0.0, %v9956
        %9958 = vmatmul.f32.gmra.mxu0 %v9727
        %v9959 = vpop.f32.mrf.mxu0
        %v9960 = vadd.f32 0.0, %v9959
        %9961 = vmatmul.f32.gmra.mxu0 %v9730
        %v9962 = vpop.f32.mrf.mxu0
        %v9963 = vadd.f32 0.0, %v9962
        %9964 = vmatmul.f32.gmra.mxu0 %v9733
        %v9965 = vpop.f32.mrf.mxu0
        %v9966 = vadd.f32 0.0, %v9965
        %9967 = vmatmul.f32.gmra.mxu0 %v9736
        %v9968 = vpop.f32.mrf.mxu0
        %v9969 = vadd.f32 0.0, %v9968
        %9970 = vmatmul.f32.gmra.mxu0 %v9739
        %v9971 = vpop.f32.mrf.mxu0
        %v9972 = vadd.f32 0.0, %v9971
        %9973 = vmatmul.f32.gmra.mxu0 %v9742
        %v9974 = vpop.f32.mrf.mxu0
        %v9975 = vadd.f32 0.0, %v9974
        %9976 = vmatmul.f32.gmra.mxu0 %v9745
        %v9977 = vpop.f32.mrf.mxu0
        %v9978 = vadd.f32 0.0, %v9977
        %9979 = vmatmul.f32.gmra.mxu0 %v9748
        %v9980 = vpop.f32.mrf.mxu0
        %v9981 = vadd.f32 0.0, %v9980
        %9982 = vmatmul.f32.gmra.mxu0 %v9751
        %v9983 = vpop.f32.mrf.mxu0
        %v9984 = vadd.f32 0.0, %v9983
        %9985 = vmatmul.f32.gmra.mxu0 %v9754
        %v9986 = vpop.f32.mrf.mxu0
        %v9987 = vadd.f32 0.0, %v9986
        %9988 = vmatmul.f32.gmra.mxu0 %v9757
        %v9989 = vpop.f32.mrf.mxu0
        %v9990 = vadd.f32 0.0, %v9989
        %9991 = vmatmul.f32.gmra.mxu0 %v9760
        %v9992 = vpop.f32.mrf.mxu0
        %v9993 = vadd.f32 0.0, %v9992
        %9994 = vmatmul.f32.gmra.mxu0 %v9763
        %v9995 = vpop.f32.mrf.mxu0
        %v9996 = vadd.f32 0.0, %v9995
        %9997 = vmatmul.f32.gmra.mxu0 %v9766
        %v9998 = vpop.f32.mrf.mxu0
        %v9999 = vadd.f32 0.0, %v9998
        %10000 = vmatmul.f32.gmra.mxu0 %v9769
        %v10001 = vpop.f32.mrf.mxu0
        %v10002 = vadd.f32 0.0, %v10001
        %10003 = vmatmul.f32.gmra.mxu0 %v9772
        %v10004 = vpop.f32.mrf.mxu0
        %v10005 = vadd.f32 0.0, %v10004
        %10006 = vmatmul.f32.gmra.mxu0 %v9775
        %v10007 = vpop.f32.mrf.mxu0
        %v10008 = vadd.f32 0.0, %v10007
        %10009 = vmatmul.f32.gmra.mxu0 %v9778
        %v10010 = vpop.f32.mrf.mxu0
        %v10011 = vadd.f32 0.0, %v10010
        %10012 = vmatmul.f32.gmra.mxu0 %v9781
        %v10013 = vpop.f32.mrf.mxu0
        %v10014 = vadd.f32 0.0, %v10013
        %10015 = vmatmul.f32.gmra.mxu0 %v9784
        %v10016 = vpop.f32.mrf.mxu0
        %v10017 = vadd.f32 0.0, %v10016
        %10018 = vmatmul.f32.gmra.mxu0 %v9787
        %v10019 = vpop.f32.mrf.mxu0
        %v10020 = vadd.f32 0.0, %v10019
        %10021 = vmatmul.f32.gmra.mxu0 %v9790
        %v10022 = vpop.f32.mrf.mxu0
        %v10023 = vadd.f32 0.0, %v10022
        %10024 = vmatmul.f32.gmra.mxu0 %v9793
        %v10025 = vpop.f32.mrf.mxu0
        %v10026 = vadd.f32 0.0, %v10025
        %10027 = vmatmul.f32.gmra.mxu0 %v9796
        %v10028 = vpop.f32.mrf.mxu0
        %v10029 = vadd.f32 0.0, %v10028
        %10030 = vmatmul.f32.gmra.mxu0 %v9799
        %v10031 = vpop.f32.mrf.mxu0
        %v10032 = vadd.f32 0.0, %v10031
        %10033 = vmatmul.f32.gmra.mxu0 %v9802
        %v10034 = vpop.f32.mrf.mxu0
        %v10035 = vadd.f32 0.0, %v10034
        %10036 = vmatmul.f32.gmra.mxu0 %v9805
        %v10037 = vpop.f32.mrf.mxu0
        %v10038 = vadd.f32 0.0, %v10037
        %10039 = vmatmul.f32.gmra.mxu0 %v9808
        %v10040 = vpop.f32.mrf.mxu0
        %v10041 = vadd.f32 0.0, %v10040
        %10042 = vmatmul.f32.gmra.mxu0 %v9811
        %v10043 = vpop.f32.mrf.mxu0
        %v10044 = vadd.f32 0.0, %v10043
        %10045 = vmatmul.f32.gmra.mxu0 %v9814
        %v10046 = vpop.f32.mrf.mxu0
        %v10047 = vadd.f32 0.0, %v10046
        %10048 = vmatmul.f32.gmra.mxu0 %v9817
        %v10049 = vpop.f32.mrf.mxu0
        %v10050 = vadd.f32 0.0, %v10049
        %10051 = vmatmul.f32.gmra.mxu0 %v9820
        %v10052 = vpop.f32.mrf.mxu0
        %v10053 = vadd.f32 0.0, %v10052
        %10054 = vmatmul.f32.gmra.mxu0 %v9823
        %v10055 = vpop.f32.mrf.mxu0
        %v10056 = vadd.f32 0.0, %v10055
        %10057 = vmatmul.f32.gmra.mxu0 %v9826
        %v10058 = vpop.f32.mrf.mxu0
        %v10059 = vadd.f32 0.0, %v10058
        %10060 = vmatmul.f32.gmra.mxu0 %v9829
        %v10061 = vpop.f32.mrf.mxu0
        %v10062 = vadd.f32 0.0, %v10061
        %10063 = vmatmul.f32.gmra.mxu0 %v9832
        %v10064 = vpop.f32.mrf.mxu0
        %v10065 = vadd.f32 0.0, %v10064
        %10066 = vdwg.mxu0
        %v10067 = vadd.f32 %v9469, %v9852
        %v10068 = vadd.f32 %v9470, %v9855
        %v10069 = vadd.f32 %v9471, %v9858
        %v10070 = vadd.f32 %v9472, %v9861
        %v10071 = vadd.f32 %v9473, %v9864
        %v10072 = vadd.f32 %v9474, %v9867
        %v10073 = vadd.f32 %v9475, %v9870
        %v10074 = vadd.f32 %v9476, %v9873
        %v10075 = vadd.f32 %v9477, %v9876
        %v10076 = vadd.f32 %v9478, %v9879
        %v10077 = vadd.f32 %v9479, %v9882
        %v10078 = vadd.f32 %v9480, %v9885
        %v10079 = vadd.f32 %v9481, %v9888
        %v10080 = vadd.f32 %v9482, %v9891
        %v10081 = vadd.f32 %v9483, %v9894
        %v10082 = vadd.f32 %v9484, %v9897
        %v10083 = vadd.f32 %v9485, %v9900
        %v10084 = vadd.f32 %v9486, %v9903
        %v10085 = vadd.f32 %v9487, %v9906
        %v10086 = vadd.f32 %v9488, %v9909
        %v10087 = vadd.f32 %v9489, %v9912
        %v10088 = vadd.f32 %v9490, %v9915
        %v10089 = vadd.f32 %v9491, %v9918
        %v10090 = vadd.f32 %v9492, %v9921
        %v10091 = vadd.f32 %v9493, %v9924
        %v10092 = vadd.f32 %v9494, %v9927
        %v10093 = vadd.f32 %v9495, %v9930
        %v10094 = vadd.f32 %v9496, %v9933
        %v10095 = vadd.f32 %v9497, %v9936
        %v10096 = vadd.f32 %v9498, %v9939
        %v10097 = vadd.f32 %v9499, %v9942
        %v10098 = vadd.f32 %v9500, %v9945
        %v10099 = vadd.f32 %v9501, %v9948
        %v10100 = vadd.f32 %v9502, %v9951
        %v10101 = vadd.f32 %v9503, %v9954
        %v10102 = vadd.f32 %v9504, %v9957
        %v10103 = vadd.f32 %v9505, %v9960
        %v10104 = vadd.f32 %v9506, %v9963
        %v10105 = vadd.f32 %v9507, %v9966
        %v10106 = vadd.f32 %v9508, %v9969
        %v10107 = vadd.f32 %v9509, %v9972
        %v10108 = vadd.f32 %v9510, %v9975
        %v10109 = vadd.f32 %v9511, %v9978
        %v10110 = vadd.f32 %v9512, %v9981
        %v10111 = vadd.f32 %v9513, %v9984
        %v10112 = vadd.f32 %v9514, %v9987
        %v10113 = vadd.f32 %v9515, %v9990
        %v10114 = vadd.f32 %v9516, %v9993
        %v10115 = vadd.f32 %v9517, %v9996
        %v10116 = vadd.f32 %v9518, %v9999
        %v10117 = vadd.f32 %v9519, %v10002
        %v10118 = vadd.f32 %v9520, %v10005
        %v10119 = vadd.f32 %v9521, %v10008
        %v10120 = vadd.f32 %v9522, %v10011
        %v10121 = vadd.f32 %v9523, %v10014
        %v10122 = vadd.f32 %v9524, %v10017
        %v10123 = vadd.f32 %v9525, %v10020
        %v10124 = vadd.f32 %v9526, %v10023
        %v10125 = vadd.f32 %v9527, %v10026
        %v10126 = vadd.f32 %v9528, %v10029
        %v10127 = vadd.f32 %v9529, %v10032
        %v10128 = vadd.f32 %v9530, %v10035
        %v10129 = vadd.f32 %v9531, %v10038
        %v10130 = vadd.f32 %v9532, %v10041
        %v10131 = vadd.f32 %v9533, %v10044
        %v10132 = vadd.f32 %v9534, %v10047
        %v10133 = vadd.f32 %v9535, %v10050
        %v10134 = vadd.f32 %v9536, %v10053
        %v10135 = vadd.f32 %v9537, %v10056
        %v10136 = vadd.f32 %v9538, %v10059
        %v10137 = vadd.f32 %v9539, %v10062
        %v10138 = vadd.f32 %v9540, %v10065
        %v10139 = vld [vmem:[%s8942 + $0x2] sm:$0xff]
        %v10140 = vld [vmem:[%s8942 + $0xa] sm:$0xff]
        %v10141 = vld [vmem:[%s8942 + $0x12] sm:$0xff]
        %v10142 = vld [vmem:[%s8942 + $0x22] sm:$0xff]
        %v10143 = vld [vmem:[%s8942 + $0x2a] sm:$0xff]
        %v10144 = vld [vmem:[%s8942 + $0x32] sm:$0xff]
        %v10145 = vld [vmem:[%s8942 + $0x42] sm:$0xff]
        %v10146 = vld [vmem:[%s8942 + $0x4a] sm:$0xff]
        %v10147 = vld [vmem:[%s8942 + $0x52] sm:$0xff]
        %v10148 = vld [vmem:[%s8942 + $0x62] sm:$0xff]
        %v10149 = vld [vmem:[%s8942 + $0x6a] sm:$0xff]
        %v10150 = vld [vmem:[%s8942 + $0x72] sm:$0xff]
        %v10151 = vld [vmem:[%s8942 + $0x82] sm:$0xff]
        %v10152 = vld [vmem:[%s8942 + $0x8a] sm:$0xff]
        %v10153 = vld [vmem:[%s8942 + $0x92] sm:$0xff]
        %v10154 = vld [vmem:[%s8942 + $0xa2] sm:$0xff]
        %v10155 = vld [vmem:[%s8942 + $0xaa] sm:$0xff]
        %v10156 = vld [vmem:[%s8942 + $0xb2] sm:$0xff]
        %v10157 = vld [vmem:[%s8942 + $0xc2] sm:$0xff]
        %v10158 = vld [vmem:[%s8942 + $0xca] sm:$0xff]
        %v10159 = vld [vmem:[%s8942 + $0xd2] sm:$0xff]
        %v10160 = vld [vmem:[%s8942 + $0xe2] sm:$0xff]
        %v10161 = vld [vmem:[%s8942 + $0xea] sm:$0xff]
        %v10162 = vld [vmem:[%s8942 + $0xf2] sm:$0xff]
        %v10163 = vld [vmem:[%s8942 + $0x102] sm:$0xff]
        %v10164 = vld [vmem:[%s8942 + $0x10a] sm:$0xff]
        %v10165 = vld [vmem:[%s8942 + $0x112] sm:$0xff]
        %v10166 = vld [vmem:[%s8942 + $0x122] sm:$0xff]
        %v10167 = vld [vmem:[%s8942 + $0x12a] sm:$0xff]
        %v10168 = vld [vmem:[%s8942 + $0x132] sm:$0xff]
        %v10169 = vld [vmem:[%s8942 + $0x142] sm:$0xff]
        %v10170 = vld [vmem:[%s8942 + $0x14a] sm:$0xff]
        %v10171 = vld [vmem:[%s8942 + $0x152] sm:$0xff]
        %v10172 = vld [vmem:[%s8942 + $0x162] sm:$0xff]
        %v10173 = vld [vmem:[%s8942 + $0x16a] sm:$0xff]
        %v10174 = vld [vmem:[%s8942 + $0x172] sm:$0xff]
        %v10175 = vld [vmem:[%s8942 + $0x182] sm:$0xff]
        %v10176 = vld [vmem:[%s8942 + $0x18a] sm:$0xff]
        %v10177 = vld [vmem:[%s8942 + $0x192] sm:$0xff]
        %v10178 = vld [vmem:[%s8942 + $0x1a2] sm:$0xff]
        %v10179 = vld [vmem:[%s8942 + $0x1aa] sm:$0xff]
        %v10180 = vld [vmem:[%s8942 + $0x1b2] sm:$0xff]
        %v10181 = vld [vmem:[%s8942 + $0x1c2] sm:$0xff]
        %v10182 = vld [vmem:[%s8942 + $0x1ca] sm:$0xff]
        %v10183 = vld [vmem:[%s8942 + $0x1d2] sm:$0xff]
        %v10184 = vld [vmem:[%s8942 + $0x1e2] sm:$0xff]
        %v10185 = vld [vmem:[%s8942 + $0x1ea] sm:$0xff]
        %v10186 = vld [vmem:[%s8942 + $0x1f2] sm:$0xff]
        %v10187 = vld [vmem:[%s8942 + $0x202] sm:$0xff]
        %v10188 = vld [vmem:[%s8942 + $0x20a] sm:$0xff]
        %v10189 = vld [vmem:[%s8942 + $0x212] sm:$0xff]
        %v10190 = vld [vmem:[%s8942 + $0x222] sm:$0xff]
        %v10191 = vld [vmem:[%s8942 + $0x22a] sm:$0xff]
        %v10192 = vld [vmem:[%s8942 + $0x232] sm:$0xff]
        %v10193 = vld [vmem:[%s8942 + $0x242] sm:$0xff]
        %v10194 = vld [vmem:[%s8942 + $0x24a] sm:$0xff]
        %v10195 = vld [vmem:[%s8942 + $0x252] sm:$0xff]
        %v10196 = vld [vmem:[%s8942 + $0x262] sm:$0xff]
        %v10197 = vld [vmem:[%s8942 + $0x26a] sm:$0xff]
        %v10198 = vld [vmem:[%s8942 + $0x272] sm:$0xff]
        %v10199 = vld [vmem:[%s8942 + $0x282] sm:$0xff]
        %v10200 = vld [vmem:[%s8942 + $0x28a] sm:$0xff]
        %v10201 = vld [vmem:[%s8942 + $0x292] sm:$0xff]
        %v10202 = vld [vmem:[%s8942 + $0x2a2] sm:$0xff]
        %v10203 = vld [vmem:[%s8942 + $0x2aa] sm:$0xff]
        %v10204 = vld [vmem:[%s8942 + $0x2b2] sm:$0xff]
        %v10205 = vld [vmem:[%s8942 + $0x2c2] sm:$0xff]
        %v10206 = vld [vmem:[%s8942 + $0x2ca] sm:$0xff]
        %v10207 = vld [vmem:[%s8942 + $0x2d2] sm:$0xff]
        %v10208 = vld [vmem:[%s8942 + $0x2e2] sm:$0xff]
        %v10209 = vld [vmem:[%s8942 + $0x2ea] sm:$0xff]
        %v10210 = vld [vmem:[%s8942 + $0x2f2] sm:$0xff]
        %s10211 = scalar_lea.vmem [#allocation3], 256
        %v10212 = vld [vmem:[%s10211] sm:$0xff]
        %v10213 = vld [vmem:[%s10211 + $0x8] sm:$0xff]
        %v10214 = vld [vmem:[%s10211 + $0x10] sm:$0xff]
        %v10215 = vld [vmem:[%s10211 + $0x18] sm:$0xff]
        %v10217 = vsel %vm5392, %v10139, 0
        %v10220 = vsel %vm5392, %v10140, 0
        %v10223 = vsel %vm5392, %v10141, 0
        %v10226 = vsel %vm5392, %v10142, 0
        %v10229 = vsel %vm5392, %v10143, 0
        %v10232 = vsel %vm5392, %v10144, 0
        %v10235 = vsel %vm5392, %v10145, 0
        %v10238 = vsel %vm5392, %v10146, 0
        %v10241 = vsel %vm5392, %v10147, 0
        %v10244 = vsel %vm5392, %v10148, 0
        %v10247 = vsel %vm5392, %v10149, 0
        %v10250 = vsel %vm5392, %v10150, 0
        %v10253 = vsel %vm5392, %v10151, 0
        %v10256 = vsel %vm5392, %v10152, 0
        %v10259 = vsel %vm5392, %v10153, 0
        %v10262 = vsel %vm5392, %v10154, 0
        %v10265 = vsel %vm5392, %v10155, 0
        %v10268 = vsel %vm5392, %v10156, 0
        %v10271 = vsel %vm5392, %v10157, 0
        %v10274 = vsel %vm5392, %v10158, 0
        %v10277 = vsel %vm5392, %v10159, 0
        %v10280 = vsel %vm5392, %v10160, 0
        %v10283 = vsel %vm5392, %v10161, 0
        %v10286 = vsel %vm5392, %v10162, 0
        %v10289 = vsel %vm5392, %v10163, 0
        %v10292 = vsel %vm5392, %v10164, 0
        %v10295 = vsel %vm5392, %v10165, 0
        %v10298 = vsel %vm5392, %v10166, 0
        %v10301 = vsel %vm5392, %v10167, 0
        %v10304 = vsel %vm5392, %v10168, 0
        %v10307 = vsel %vm5392, %v10169, 0
        %v10310 = vsel %vm5392, %v10170, 0
        %v10313 = vsel %vm5392, %v10171, 0
        %v10316 = vsel %vm5392, %v10172, 0
        %v10319 = vsel %vm5392, %v10173, 0
        %v10322 = vsel %vm5392, %v10174, 0
        %v10325 = vsel %vm5392, %v10175, 0
        %v10328 = vsel %vm5392, %v10176, 0
        %v10331 = vsel %vm5392, %v10177, 0
        %v10334 = vsel %vm5392, %v10178, 0
        %v10337 = vsel %vm5392, %v10179, 0
        %v10340 = vsel %vm5392, %v10180, 0
        %v10343 = vsel %vm5392, %v10181, 0
        %v10346 = vsel %vm5392, %v10182, 0
        %v10349 = vsel %vm5392, %v10183, 0
        %v10352 = vsel %vm5392, %v10184, 0
        %v10355 = vsel %vm5392, %v10185, 0
        %v10358 = vsel %vm5392, %v10186, 0
        %v10361 = vsel %vm5392, %v10187, 0
        %v10364 = vsel %vm5392, %v10188, 0
        %v10367 = vsel %vm5392, %v10189, 0
        %v10370 = vsel %vm5392, %v10190, 0
        %v10373 = vsel %vm5392, %v10191, 0
        %v10376 = vsel %vm5392, %v10192, 0
        %v10379 = vsel %vm5392, %v10193, 0
        %v10382 = vsel %vm5392, %v10194, 0
        %v10385 = vsel %vm5392, %v10195, 0
        %v10388 = vsel %vm5392, %v10196, 0
        %v10391 = vsel %vm5392, %v10197, 0
        %v10394 = vsel %vm5392, %v10198, 0
        %v10397 = vsel %vm5392, %v10199, 0
        %v10400 = vsel %vm5392, %v10200, 0
        %v10403 = vsel %vm5392, %v10201, 0
        %v10406 = vsel %vm5392, %v10202, 0
        %v10409 = vsel %vm5392, %v10203, 0
        %v10412 = vsel %vm5392, %v10204, 0
        %v10415 = vsel %vm5392, %v10205, 0
        %v10418 = vsel %vm5392, %v10206, 0
        %v10421 = vsel %vm5392, %v10207, 0
        %v10424 = vsel %vm5392, %v10208, 0
        %v10427 = vsel %vm5392, %v10209, 0
        %v10430 = vsel %vm5392, %v10210, 0
        %10432 = vmatpush.msra.mxu0 0.0
        %10433 = vmatpush.msra.mxu0 0.0
        %10434 = vmatpush.msra.mxu0 0.0
        %10435 = vmatpush.msra.mxu0 0.0
        %10436 = vmatpush.msra.mxu0 0.0
        %10437 = vmatpush.msra.mxu0 0.0
        %10438 = vmatpush.msra.mxu0 0.0
        %10439 = vmatpush.msra.mxu0 0.0
        %10440 = vmatpush.msra.mxu0 0.0
        %10441 = vmatpush.msra.mxu0 0.0
        %10442 = vmatpush.msra.mxu0 0.0
        %10443 = vmatpush.msra.mxu0 0.0
        %10444 = vmatpush.msra.mxu0 %v10215
        %10445 = vmatpush.msra.mxu0 %v10214
        %10446 = vmatpush.msra.mxu0 %v10213
        %10447 = vmatpush.msra.mxu0 %v10212
        %10448 = vmatmul.f32.gmra.mxu0 %v10217
        %v10449 = vpop.f32.mrf.mxu0
        %v10450 = vadd.f32 0.0, %v10449
        %10451 = vmatmul.f32.gmra.mxu0 %v10220
        %v10452 = vpop.f32.mrf.mxu0
        %v10453 = vadd.f32 0.0, %v10452
        %10454 = vmatmul.f32.gmra.mxu0 %v10223
        %v10455 = vpop.f32.mrf.mxu0
        %v10456 = vadd.f32 0.0, %v10455
        %10457 = vmatmul.f32.gmra.mxu0 %v10226
        %v10458 = vpop.f32.mrf.mxu0
        %v10459 = vadd.f32 0.0, %v10458
        %10460 = vmatmul.f32.gmra.mxu0 %v10229
        %v10461 = vpop.f32.mrf.mxu0
        %v10462 = vadd.f32 0.0, %v10461
        %10463 = vmatmul.f32.gmra.mxu0 %v10232
        %v10464 = vpop.f32.mrf.mxu0
        %v10465 = vadd.f32 0.0, %v10464
        %10466 = vmatmul.f32.gmra.mxu0 %v10235
        %v10467 = vpop.f32.mrf.mxu0
        %v10468 = vadd.f32 0.0, %v10467
        %10469 = vmatmul.f32.gmra.mxu0 %v10238
        %v10470 = vpop.f32.mrf.mxu0
        %v10471 = vadd.f32 0.0, %v10470
        %10472 = vmatmul.f32.gmra.mxu0 %v10241
        %v10473 = vpop.f32.mrf.mxu0
        %v10474 = vadd.f32 0.0, %v10473
        %10475 = vmatmul.f32.gmra.mxu0 %v10244
        %v10476 = vpop.f32.mrf.mxu0
        %v10477 = vadd.f32 0.0, %v10476
        %10478 = vmatmul.f32.gmra.mxu0 %v10247
        %v10479 = vpop.f32.mrf.mxu0
        %v10480 = vadd.f32 0.0, %v10479
        %10481 = vmatmul.f32.gmra.mxu0 %v10250
        %v10482 = vpop.f32.mrf.mxu0
        %v10483 = vadd.f32 0.0, %v10482
        %10484 = vmatmul.f32.gmra.mxu0 %v10253
        %v10485 = vpop.f32.mrf.mxu0
        %v10486 = vadd.f32 0.0, %v10485
        %10487 = vmatmul.f32.gmra.mxu0 %v10256
        %v10488 = vpop.f32.mrf.mxu0
        %v10489 = vadd.f32 0.0, %v10488
        %10490 = vmatmul.f32.gmra.mxu0 %v10259
        %v10491 = vpop.f32.mrf.mxu0
        %v10492 = vadd.f32 0.0, %v10491
        %10493 = vmatmul.f32.gmra.mxu0 %v10262
        %v10494 = vpop.f32.mrf.mxu0
        %v10495 = vadd.f32 0.0, %v10494
        %10496 = vmatmul.f32.gmra.mxu0 %v10265
        %v10497 = vpop.f32.mrf.mxu0
        %v10498 = vadd.f32 0.0, %v10497
        %10499 = vmatmul.f32.gmra.mxu0 %v10268
        %v10500 = vpop.f32.mrf.mxu0
        %v10501 = vadd.f32 0.0, %v10500
        %10502 = vmatmul.f32.gmra.mxu0 %v10271
        %v10503 = vpop.f32.mrf.mxu0
        %v10504 = vadd.f32 0.0, %v10503
        %10505 = vmatmul.f32.gmra.mxu0 %v10274
        %v10506 = vpop.f32.mrf.mxu0
        %v10507 = vadd.f32 0.0, %v10506
        %10508 = vmatmul.f32.gmra.mxu0 %v10277
        %v10509 = vpop.f32.mrf.mxu0
        %v10510 = vadd.f32 0.0, %v10509
        %10511 = vmatmul.f32.gmra.mxu0 %v10280
        %v10512 = vpop.f32.mrf.mxu0
        %v10513 = vadd.f32 0.0, %v10512
        %10514 = vmatmul.f32.gmra.mxu0 %v10283
        %v10515 = vpop.f32.mrf.mxu0
        %v10516 = vadd.f32 0.0, %v10515
        %10517 = vmatmul.f32.gmra.mxu0 %v10286
        %v10518 = vpop.f32.mrf.mxu0
        %v10519 = vadd.f32 0.0, %v10518
        %10520 = vmatmul.f32.gmra.mxu0 %v10289
        %v10521 = vpop.f32.mrf.mxu0
        %v10522 = vadd.f32 0.0, %v10521
        %10523 = vmatmul.f32.gmra.mxu0 %v10292
        %v10524 = vpop.f32.mrf.mxu0
        %v10525 = vadd.f32 0.0, %v10524
        %10526 = vmatmul.f32.gmra.mxu0 %v10295
        %v10527 = vpop.f32.mrf.mxu0
        %v10528 = vadd.f32 0.0, %v10527
        %10529 = vmatmul.f32.gmra.mxu0 %v10298
        %v10530 = vpop.f32.mrf.mxu0
        %v10531 = vadd.f32 0.0, %v10530
        %10532 = vmatmul.f32.gmra.mxu0 %v10301
        %v10533 = vpop.f32.mrf.mxu0
        %v10534 = vadd.f32 0.0, %v10533
        %10535 = vmatmul.f32.gmra.mxu0 %v10304
        %v10536 = vpop.f32.mrf.mxu0
        %v10537 = vadd.f32 0.0, %v10536
        %10538 = vmatmul.f32.gmra.mxu0 %v10307
        %v10539 = vpop.f32.mrf.mxu0
        %v10540 = vadd.f32 0.0, %v10539
        %10541 = vmatmul.f32.gmra.mxu0 %v10310
        %v10542 = vpop.f32.mrf.mxu0
        %v10543 = vadd.f32 0.0, %v10542
        %10544 = vmatmul.f32.gmra.mxu0 %v10313
        %v10545 = vpop.f32.mrf.mxu0
        %v10546 = vadd.f32 0.0, %v10545
        %10547 = vmatmul.f32.gmra.mxu0 %v10316
        %v10548 = vpop.f32.mrf.mxu0
        %v10549 = vadd.f32 0.0, %v10548
        %10550 = vmatmul.f32.gmra.mxu0 %v10319
        %v10551 = vpop.f32.mrf.mxu0
        %v10552 = vadd.f32 0.0, %v10551
        %10553 = vmatmul.f32.gmra.mxu0 %v10322
        %v10554 = vpop.f32.mrf.mxu0
        %v10555 = vadd.f32 0.0, %v10554
        %10556 = vmatmul.f32.gmra.mxu0 %v10325
        %v10557 = vpop.f32.mrf.mxu0
        %v10558 = vadd.f32 0.0, %v10557
        %10559 = vmatmul.f32.gmra.mxu0 %v10328
        %v10560 = vpop.f32.mrf.mxu0
        %v10561 = vadd.f32 0.0, %v10560
        %10562 = vmatmul.f32.gmra.mxu0 %v10331
        %v10563 = vpop.f32.mrf.mxu0
        %v10564 = vadd.f32 0.0, %v10563
        %10565 = vmatmul.f32.gmra.mxu0 %v10334
        %v10566 = vpop.f32.mrf.mxu0
        %v10567 = vadd.f32 0.0, %v10566
        %10568 = vmatmul.f32.gmra.mxu0 %v10337
        %v10569 = vpop.f32.mrf.mxu0
        %v10570 = vadd.f32 0.0, %v10569
        %10571 = vmatmul.f32.gmra.mxu0 %v10340
        %v10572 = vpop.f32.mrf.mxu0
        %v10573 = vadd.f32 0.0, %v10572
        %10574 = vmatmul.f32.gmra.mxu0 %v10343
        %v10575 = vpop.f32.mrf.mxu0
        %v10576 = vadd.f32 0.0, %v10575
        %10577 = vmatmul.f32.gmra.mxu0 %v10346
        %v10578 = vpop.f32.mrf.mxu0
        %v10579 = vadd.f32 0.0, %v10578
        %10580 = vmatmul.f32.gmra.mxu0 %v10349
        %v10581 = vpop.f32.mrf.mxu0
        %v10582 = vadd.f32 0.0, %v10581
        %10583 = vmatmul.f32.gmra.mxu0 %v10352
        %v10584 = vpop.f32.mrf.mxu0
        %v10585 = vadd.f32 0.0, %v10584
        %10586 = vmatmul.f32.gmra.mxu0 %v10355
        %v10587 = vpop.f32.mrf.mxu0
        %v10588 = vadd.f32 0.0, %v10587
        %10589 = vmatmul.f32.gmra.mxu0 %v10358
        %v10590 = vpop.f32.mrf.mxu0
        %v10591 = vadd.f32 0.0, %v10590
        %10592 = vmatmul.f32.gmra.mxu0 %v10361
        %v10593 = vpop.f32.mrf.mxu0
        %v10594 = vadd.f32 0.0, %v10593
        %10595 = vmatmul.f32.gmra.mxu0 %v10364
        %v10596 = vpop.f32.mrf.mxu0
        %v10597 = vadd.f32 0.0, %v10596
        %10598 = vmatmul.f32.gmra.mxu0 %v10367
        %v10599 = vpop.f32.mrf.mxu0
        %v10600 = vadd.f32 0.0, %v10599
        %10601 = vmatmul.f32.gmra.mxu0 %v10370
        %v10602 = vpop.f32.mrf.mxu0
        %v10603 = vadd.f32 0.0, %v10602
        %10604 = vmatmul.f32.gmra.mxu0 %v10373
        %v10605 = vpop.f32.mrf.mxu0
        %v10606 = vadd.f32 0.0, %v10605
        %10607 = vmatmul.f32.gmra.mxu0 %v10376
        %v10608 = vpop.f32.mrf.mxu0
        %v10609 = vadd.f32 0.0, %v10608
        %10610 = vmatmul.f32.gmra.mxu0 %v10379
        %v10611 = vpop.f32.mrf.mxu0
        %v10612 = vadd.f32 0.0, %v10611
        %10613 = vmatmul.f32.gmra.mxu0 %v10382
        %v10614 = vpop.f32.mrf.mxu0
        %v10615 = vadd.f32 0.0, %v10614
        %10616 = vmatmul.f32.gmra.mxu0 %v10385
        %v10617 = vpop.f32.mrf.mxu0
        %v10618 = vadd.f32 0.0, %v10617
        %10619 = vmatmul.f32.gmra.mxu0 %v10388
        %v10620 = vpop.f32.mrf.mxu0
        %v10621 = vadd.f32 0.0, %v10620
        %10622 = vmatmul.f32.gmra.mxu0 %v10391
        %v10623 = vpop.f32.mrf.mxu0
        %v10624 = vadd.f32 0.0, %v10623
        %10625 = vmatmul.f32.gmra.mxu0 %v10394
        %v10626 = vpop.f32.mrf.mxu0
        %v10627 = vadd.f32 0.0, %v10626
        %10628 = vmatmul.f32.gmra.mxu0 %v10397
        %v10629 = vpop.f32.mrf.mxu0
        %v10630 = vadd.f32 0.0, %v10629
        %10631 = vmatmul.f32.gmra.mxu0 %v10400
        %v10632 = vpop.f32.mrf.mxu0
        %v10633 = vadd.f32 0.0, %v10632
        %10634 = vmatmul.f32.gmra.mxu0 %v10403
        %v10635 = vpop.f32.mrf.mxu0
        %v10636 = vadd.f32 0.0, %v10635
        %10637 = vmatmul.f32.gmra.mxu0 %v10406
        %v10638 = vpop.f32.mrf.mxu0
        %v10639 = vadd.f32 0.0, %v10638
        %10640 = vmatmul.f32.gmra.mxu0 %v10409
        %v10641 = vpop.f32.mrf.mxu0
        %v10642 = vadd.f32 0.0, %v10641
        %10643 = vmatmul.f32.gmra.mxu0 %v10412
        %v10644 = vpop.f32.mrf.mxu0
        %v10645 = vadd.f32 0.0, %v10644
        %10646 = vmatmul.f32.gmra.mxu0 %v10415
        %v10647 = vpop.f32.mrf.mxu0
        %v10648 = vadd.f32 0.0, %v10647
        %10649 = vmatmul.f32.gmra.mxu0 %v10418
        %v10650 = vpop.f32.mrf.mxu0
        %v10651 = vadd.f32 0.0, %v10650
        %10652 = vmatmul.f32.gmra.mxu0 %v10421
        %v10653 = vpop.f32.mrf.mxu0
        %v10654 = vadd.f32 0.0, %v10653
        %10655 = vmatmul.f32.gmra.mxu0 %v10424
        %v10656 = vpop.f32.mrf.mxu0
        %v10657 = vadd.f32 0.0, %v10656
        %10658 = vmatmul.f32.gmra.mxu0 %v10427
        %v10659 = vpop.f32.mrf.mxu0
        %v10660 = vadd.f32 0.0, %v10659
        %10661 = vmatmul.f32.gmra.mxu0 %v10430
        %v10662 = vpop.f32.mrf.mxu0
        %v10663 = vadd.f32 0.0, %v10662
        %10664 = vdwg.mxu0
        %v10665 = vadd.f32 %v10067, %v10450
        %v10666 = vadd.f32 %v10068, %v10453
        %v10667 = vadd.f32 %v10069, %v10456
        %v10668 = vadd.f32 %v10070, %v10459
        %v10669 = vadd.f32 %v10071, %v10462
        %v10670 = vadd.f32 %v10072, %v10465
        %v10671 = vadd.f32 %v10073, %v10468
        %v10672 = vadd.f32 %v10074, %v10471
        %v10673 = vadd.f32 %v10075, %v10474
        %v10674 = vadd.f32 %v10076, %v10477
        %v10675 = vadd.f32 %v10077, %v10480
        %v10676 = vadd.f32 %v10078, %v10483
        %v10677 = vadd.f32 %v10079, %v10486
        %v10678 = vadd.f32 %v10080, %v10489
        %v10679 = vadd.f32 %v10081, %v10492
        %v10680 = vadd.f32 %v10082, %v10495
        %v10681 = vadd.f32 %v10083, %v10498
        %v10682 = vadd.f32 %v10084, %v10501
        %v10683 = vadd.f32 %v10085, %v10504
        %v10684 = vadd.f32 %v10086, %v10507
        %v10685 = vadd.f32 %v10087, %v10510
        %v10686 = vadd.f32 %v10088, %v10513
        %v10687 = vadd.f32 %v10089, %v10516
        %v10688 = vadd.f32 %v10090, %v10519
        %v10689 = vadd.f32 %v10091, %v10522
        %v10690 = vadd.f32 %v10092, %v10525
        %v10691 = vadd.f32 %v10093, %v10528
        %v10692 = vadd.f32 %v10094, %v10531
        %v10693 = vadd.f32 %v10095, %v10534
        %v10694 = vadd.f32 %v10096, %v10537
        %v10695 = vadd.f32 %v10097, %v10540
        %v10696 = vadd.f32 %v10098, %v10543
        %v10697 = vadd.f32 %v10099, %v10546
        %v10698 = vadd.f32 %v10100, %v10549
        %v10699 = vadd.f32 %v10101, %v10552
        %v10700 = vadd.f32 %v10102, %v10555
        %v10701 = vadd.f32 %v10103, %v10558
        %v10702 = vadd.f32 %v10104, %v10561
        %v10703 = vadd.f32 %v10105, %v10564
        %v10704 = vadd.f32 %v10106, %v10567
        %v10705 = vadd.f32 %v10107, %v10570
        %v10706 = vadd.f32 %v10108, %v10573
        %v10707 = vadd.f32 %v10109, %v10576
        %v10708 = vadd.f32 %v10110, %v10579
        %v10709 = vadd.f32 %v10111, %v10582
        %v10710 = vadd.f32 %v10112, %v10585
        %v10711 = vadd.f32 %v10113, %v10588
        %v10712 = vadd.f32 %v10114, %v10591
        %v10713 = vadd.f32 %v10115, %v10594
        %v10714 = vadd.f32 %v10116, %v10597
        %v10715 = vadd.f32 %v10117, %v10600
        %v10716 = vadd.f32 %v10118, %v10603
        %v10717 = vadd.f32 %v10119, %v10606
        %v10718 = vadd.f32 %v10120, %v10609
        %v10719 = vadd.f32 %v10121, %v10612
        %v10720 = vadd.f32 %v10122, %v10615
        %v10721 = vadd.f32 %v10123, %v10618
        %v10722 = vadd.f32 %v10124, %v10621
        %v10723 = vadd.f32 %v10125, %v10624
        %v10724 = vadd.f32 %v10126, %v10627
        %v10725 = vadd.f32 %v10127, %v10630
        %v10726 = vadd.f32 %v10128, %v10633
        %v10727 = vadd.f32 %v10129, %v10636
        %v10728 = vadd.f32 %v10130, %v10639
        %v10729 = vadd.f32 %v10131, %v10642
        %v10730 = vadd.f32 %v10132, %v10645
        %v10731 = vadd.f32 %v10133, %v10648
        %v10732 = vadd.f32 %v10134, %v10651
        %v10733 = vadd.f32 %v10135, %v10654
        %v10734 = vadd.f32 %v10136, %v10657
        %v10735 = vadd.f32 %v10137, %v10660
        %v10736 = vadd.f32 %v10138, %v10663
        %v10737 = vld [vmem:[%s4] sm:$0x1]
        %v10739 = vperm.slane %v10737, 0
        %v10741 = vadd.f32 %v10665, %v10739
        %v10742 = vadd.f32 %v10666, %v10739
        %v10743 = vadd.f32 %v10667, %v10739
        %v10744 = vadd.f32 %v10668, %v10739
        %v10745 = vadd.f32 %v10669, %v10739
        %v10746 = vadd.f32 %v10670, %v10739
        %v10747 = vadd.f32 %v10671, %v10739
        %v10748 = vadd.f32 %v10672, %v10739
        %v10749 = vadd.f32 %v10673, %v10739
        %v10750 = vadd.f32 %v10674, %v10739
        %v10751 = vadd.f32 %v10675, %v10739
        %v10752 = vadd.f32 %v10676, %v10739
        %v10753 = vadd.f32 %v10677, %v10739
        %v10754 = vadd.f32 %v10678, %v10739
        %v10755 = vadd.f32 %v10679, %v10739
        %v10756 = vadd.f32 %v10680, %v10739
        %v10757 = vadd.f32 %v10681, %v10739
        %v10758 = vadd.f32 %v10682, %v10739
        %v10759 = vadd.f32 %v10683, %v10739
        %v10760 = vadd.f32 %v10684, %v10739
        %v10761 = vadd.f32 %v10685, %v10739
        %v10762 = vadd.f32 %v10686, %v10739
        %v10763 = vadd.f32 %v10687, %v10739
        %v10764 = vadd.f32 %v10688, %v10739
        %v10765 = vadd.f32 %v10689, %v10739
        %v10766 = vadd.f32 %v10690, %v10739
        %v10767 = vadd.f32 %v10691, %v10739
        %v10768 = vadd.f32 %v10692, %v10739
        %v10769 = vadd.f32 %v10693, %v10739
        %v10770 = vadd.f32 %v10694, %v10739
        %v10771 = vadd.f32 %v10695, %v10739
        %v10772 = vadd.f32 %v10696, %v10739
        %v10773 = vadd.f32 %v10697, %v10739
        %v10774 = vadd.f32 %v10698, %v10739
        %v10775 = vadd.f32 %v10699, %v10739
        %v10776 = vadd.f32 %v10700, %v10739
        %v10777 = vadd.f32 %v10701, %v10739
        %v10778 = vadd.f32 %v10702, %v10739
        %v10779 = vadd.f32 %v10703, %v10739
        %v10780 = vadd.f32 %v10704, %v10739
        %v10781 = vadd.f32 %v10705, %v10739
        %v10782 = vadd.f32 %v10706, %v10739
        %v10783 = vadd.f32 %v10707, %v10739
        %v10784 = vadd.f32 %v10708, %v10739
        %v10785 = vadd.f32 %v10709, %v10739
        %v10786 = vadd.f32 %v10710, %v10739
        %v10787 = vadd.f32 %v10711, %v10739
        %v10788 = vadd.f32 %v10712, %v10739
        %v10789 = vadd.f32 %v10713, %v10739
        %v10790 = vadd.f32 %v10714, %v10739
        %v10791 = vadd.f32 %v10715, %v10739
        %v10792 = vadd.f32 %v10716, %v10739
        %v10793 = vadd.f32 %v10717, %v10739
        %v10794 = vadd.f32 %v10718, %v10739
        %v10795 = vadd.f32 %v10719, %v10739
        %v10796 = vadd.f32 %v10720, %v10739
        %v10797 = vadd.f32 %v10721, %v10739
        %v10798 = vadd.f32 %v10722, %v10739
        %v10799 = vadd.f32 %v10723, %v10739
        %v10800 = vadd.f32 %v10724, %v10739
        %v10801 = vadd.f32 %v10725, %v10739
        %v10802 = vadd.f32 %v10726, %v10739
        %v10803 = vadd.f32 %v10727, %v10739
        %v10804 = vadd.f32 %v10728, %v10739
        %v10805 = vadd.f32 %v10729, %v10739
        %v10806 = vadd.f32 %v10730, %v10739
        %v10807 = vadd.f32 %v10731, %v10739
        %v10808 = vadd.f32 %v10732, %v10739
        %v10809 = vadd.f32 %v10733, %v10739
        %v10810 = vadd.f32 %v10734, %v10739
        %v10811 = vadd.f32 %v10735, %v10739
        %v10812 = vadd.f32 %v10736, %v10739
        %v10813 = vmax.f32 %v10741, 0.0
        %v10814 = vmax.f32 %v10742, 0.0
        %v10815 = vmax.f32 %v10743, 0.0
        %v10816 = vmax.f32 %v10744, 0.0
        %v10817 = vmax.f32 %v10745, 0.0
        %v10818 = vmax.f32 %v10746, 0.0
        %v10819 = vmax.f32 %v10747, 0.0
        %v10820 = vmax.f32 %v10748, 0.0
        %v10821 = vmax.f32 %v10749, 0.0
        %v10822 = vmax.f32 %v10750, 0.0
        %v10823 = vmax.f32 %v10751, 0.0
        %v10824 = vmax.f32 %v10752, 0.0
        %v10825 = vmax.f32 %v10753, 0.0
        %v10826 = vmax.f32 %v10754, 0.0
        %v10827 = vmax.f32 %v10755, 0.0
        %v10828 = vmax.f32 %v10756, 0.0
        %v10829 = vmax.f32 %v10757, 0.0
        %v10830 = vmax.f32 %v10758, 0.0
        %v10831 = vmax.f32 %v10759, 0.0
        %v10832 = vmax.f32 %v10760, 0.0
        %v10833 = vmax.f32 %v10761, 0.0
        %v10834 = vmax.f32 %v10762, 0.0
        %v10835 = vmax.f32 %v10763, 0.0
        %v10836 = vmax.f32 %v10764, 0.0
        %v10837 = vmax.f32 %v10765, 0.0
        %v10838 = vmax.f32 %v10766, 0.0
        %v10839 = vmax.f32 %v10767, 0.0
        %v10840 = vmax.f32 %v10768, 0.0
        %v10841 = vmax.f32 %v10769, 0.0
        %v10842 = vmax.f32 %v10770, 0.0
        %v10843 = vmax.f32 %v10771, 0.0
        %v10844 = vmax.f32 %v10772, 0.0
        %v10845 = vmax.f32 %v10773, 0.0
        %v10846 = vmax.f32 %v10774, 0.0
        %v10847 = vmax.f32 %v10775, 0.0
        %v10848 = vmax.f32 %v10776, 0.0
        %v10849 = vmax.f32 %v10777, 0.0
        %v10850 = vmax.f32 %v10778, 0.0
        %v10851 = vmax.f32 %v10779, 0.0
        %v10852 = vmax.f32 %v10780, 0.0
        %v10853 = vmax.f32 %v10781, 0.0
        %v10854 = vmax.f32 %v10782, 0.0
        %v10855 = vmax.f32 %v10783, 0.0
        %v10856 = vmax.f32 %v10784, 0.0
        %v10857 = vmax.f32 %v10785, 0.0
        %v10858 = vmax.f32 %v10786, 0.0
        %v10859 = vmax.f32 %v10787, 0.0
        %v10860 = vmax.f32 %v10788, 0.0
        %v10861 = vmax.f32 %v10789, 0.0
        %v10862 = vmax.f32 %v10790, 0.0
        %v10863 = vmax.f32 %v10791, 0.0
        %v10864 = vmax.f32 %v10792, 0.0
        %v10865 = vmax.f32 %v10793, 0.0
        %v10866 = vmax.f32 %v10794, 0.0
        %v10867 = vmax.f32 %v10795, 0.0
        %v10868 = vmax.f32 %v10796, 0.0
        %v10869 = vmax.f32 %v10797, 0.0
        %v10870 = vmax.f32 %v10798, 0.0
        %v10871 = vmax.f32 %v10799, 0.0
        %v10872 = vmax.f32 %v10800, 0.0
        %v10873 = vmax.f32 %v10801, 0.0
        %v10874 = vmax.f32 %v10802, 0.0
        %v10875 = vmax.f32 %v10803, 0.0
        %v10876 = vmax.f32 %v10804, 0.0
        %v10877 = vmax.f32 %v10805, 0.0
        %v10878 = vmax.f32 %v10806, 0.0
        %v10879 = vmax.f32 %v10807, 0.0
        %v10880 = vmax.f32 %v10808, 0.0
        %v10881 = vmax.f32 %v10809, 0.0
        %v10882 = vmax.f32 %v10810, 0.0
        %v10883 = vmax.f32 %v10811, 0.0
        %v10884 = vmax.f32 %v10812, 0.0
        %vm10885 = vcmask 523264
        %v10886 = vsel %vm10885, %v10813, -inf
        %v10887 = vsel %vm10885, %v10816, -inf
        %v10888 = vmax.f32 %v10886, %v10887
        %v10889 = vsel %vm10885, %v10814, -inf
        %v10890 = vsel %vm10885, %v10817, -inf
        %v10891 = vmax.f32 %v10889, %v10890
        %v10892 = vsel %vm10885, %v10815, -inf
        %v10893 = vsel %vm10885, %v10818, -inf
        %v10894 = vmax.f32 %v10892, %v10893
        %v10895 = vsel %vm10885, %v10819, -inf
        %v10896 = vsel %vm10885, %v10822, -inf
        %v10897 = vmax.f32 %v10895, %v10896
        %v10898 = vsel %vm10885, %v10820, -inf
        %v10899 = vsel %vm10885, %v10823, -inf
        %v10900 = vmax.f32 %v10898, %v10899
        %v10901 = vsel %vm10885, %v10821, -inf
        %v10902 = vsel %vm10885, %v10824, -inf
        %v10903 = vmax.f32 %v10901, %v10902
        %v10904 = vsel %vm10885, %v10825, -inf
        %v10905 = vsel %vm10885, %v10828, -inf
        %v10906 = vmax.f32 %v10904, %v10905
        %v10907 = vsel %vm10885, %v10826, -inf
        %v10908 = vsel %vm10885, %v10829, -inf
        %v10909 = vmax.f32 %v10907, %v10908
        %v10910 = vsel %vm10885, %v10827, -inf
        %v10911 = vsel %vm10885, %v10830, -inf
        %v10912 = vmax.f32 %v10910, %v10911
        %v10913 = vsel %vm10885, %v10831, -inf
        %v10914 = vsel %vm10885, %v10834, -inf
        %v10915 = vmax.f32 %v10913, %v10914
        %v10916 = vsel %vm10885, %v10832, -inf
        %v10917 = vsel %vm10885, %v10835, -inf
        %v10918 = vmax.f32 %v10916, %v10917
        %v10919 = vsel %vm10885, %v10833, -inf
        %v10920 = vsel %vm10885, %v10836, -inf
        %v10921 = vmax.f32 %v10919, %v10920
        %v10922 = vsel %vm10885, %v10837, -inf
        %v10923 = vsel %vm10885, %v10840, -inf
        %v10924 = vmax.f32 %v10922, %v10923
        %v10925 = vsel %vm10885, %v10838, -inf
        %v10926 = vsel %vm10885, %v10841, -inf
        %v10927 = vmax.f32 %v10925, %v10926
        %v10928 = vsel %vm10885, %v10839, -inf
        %v10929 = vsel %vm10885, %v10842, -inf
        %v10930 = vmax.f32 %v10928, %v10929
        %v10931 = vsel %vm10885, %v10843, -inf
        %v10932 = vsel %vm10885, %v10846, -inf
        %v10933 = vmax.f32 %v10931, %v10932
        %v10934 = vsel %vm10885, %v10844, -inf
        %v10935 = vsel %vm10885, %v10847, -inf
        %v10936 = vmax.f32 %v10934, %v10935
        %v10937 = vsel %vm10885, %v10845, -inf
        %v10938 = vsel %vm10885, %v10848, -inf
        %v10939 = vmax.f32 %v10937, %v10938
        %v10940 = vsel %vm10885, %v10849, -inf
        %v10941 = vsel %vm10885, %v10852, -inf
        %v10942 = vmax.f32 %v10940, %v10941
        %v10943 = vsel %vm10885, %v10850, -inf
        %v10944 = vsel %vm10885, %v10853, -inf
        %v10945 = vmax.f32 %v10943, %v10944
        %v10946 = vsel %vm10885, %v10851, -inf
        %v10947 = vsel %vm10885, %v10854, -inf
        %v10948 = vmax.f32 %v10946, %v10947
        %v10949 = vsel %vm10885, %v10855, -inf
        %v10950 = vsel %vm10885, %v10858, -inf
        %v10951 = vmax.f32 %v10949, %v10950
        %v10952 = vsel %vm10885, %v10856, -inf
        %v10953 = vsel %vm10885, %v10859, -inf
        %v10954 = vmax.f32 %v10952, %v10953
        %v10955 = vsel %vm10885, %v10857, -inf
        %v10956 = vsel %vm10885, %v10860, -inf
        %v10957 = vmax.f32 %v10955, %v10956
        %v10958 = vsel %vm10885, %v10861, -inf
        %v10959 = vsel %vm10885, %v10864, -inf
        %v10960 = vmax.f32 %v10958, %v10959
        %v10961 = vsel %vm10885, %v10862, -inf
        %v10962 = vsel %vm10885, %v10865, -inf
        %v10963 = vmax.f32 %v10961, %v10962
        %v10964 = vsel %vm10885, %v10863, -inf
        %v10965 = vsel %vm10885, %v10866, -inf
        %v10966 = vmax.f32 %v10964, %v10965
        %v10967 = vsel %vm10885, %v10867, -inf
        %v10968 = vsel %vm10885, %v10870, -inf
        %v10969 = vmax.f32 %v10967, %v10968
        %v10970 = vsel %vm10885, %v10868, -inf
        %v10971 = vsel %vm10885, %v10871, -inf
        %v10972 = vmax.f32 %v10970, %v10971
        %v10973 = vsel %vm10885, %v10869, -inf
        %v10974 = vsel %vm10885, %v10872, -inf
        %v10975 = vmax.f32 %v10973, %v10974
        %v10976 = vsel %vm10885, %v10873, -inf
        %v10977 = vsel %vm10885, %v10876, -inf
        %v10978 = vmax.f32 %v10976, %v10977
        %v10979 = vsel %vm10885, %v10874, -inf
        %v10980 = vsel %vm10885, %v10877, -inf
        %v10981 = vmax.f32 %v10979, %v10980
        %v10982 = vsel %vm10885, %v10875, -inf
        %v10983 = vsel %vm10885, %v10878, -inf
        %v10984 = vmax.f32 %v10982, %v10983
        %v10985 = vsel %vm10885, %v10879, -inf
        %v10986 = vsel %vm10885, %v10882, -inf
        %v10987 = vmax.f32 %v10985, %v10986
        %v10988 = vsel %vm10885, %v10880, -inf
        %v10989 = vsel %vm10885, %v10883, -inf
        %v10990 = vmax.f32 %v10988, %v10989
        %v10991 = vsel %vm10885, %v10881, -inf
        %v10992 = vsel %vm10885, %v10884, -inf
        %v10993 = vmax.f32 %v10991, %v10992
        %vm10994 = vcmask 517120
        %v10995 = vsel %vm10994, %v10888, -inf
        %v10996 = vrot.slane %v10995, 4
        %v10997 = vmax.f32 %v10995, %v10996
        %v10998 = vrot.slane %v10997, 2
        %v10999 = vmax.f32 %v10997, %v10998
        %v11000 = vrot.slane %v10999, 1
        %v11001 = vmax.f32 %v10999, %v11000
        %v11002 = vsel %vm10994, %v10897, -inf
        %v11003 = vrot.slane %v11002, 4
        %v11004 = vmax.f32 %v11002, %v11003
        %v11005 = vrot.slane %v11004, 2
        %v11006 = vmax.f32 %v11004, %v11005
        %v11007 = vrot.slane %v11006, 1
        %v11008 = vmax.f32 %v11006, %v11007
        %v11009 = vsel %vm10994, %v10906, -inf
        %v11010 = vrot.slane %v11009, 4
        %v11011 = vmax.f32 %v11009, %v11010
        %v11012 = vrot.slane %v11011, 2
        %v11013 = vmax.f32 %v11011, %v11012
        %v11014 = vrot.slane %v11013, 1
        %v11015 = vmax.f32 %v11013, %v11014
        %v11016 = vsel %vm10994, %v10915, -inf
        %v11017 = vrot.slane %v11016, 4
        %v11018 = vmax.f32 %v11016, %v11017
        %v11019 = vrot.slane %v11018, 2
        %v11020 = vmax.f32 %v11018, %v11019
        %v11021 = vrot.slane %v11020, 1
        %v11022 = vmax.f32 %v11020, %v11021
        %v11023 = vsel %vm10994, %v10924, -inf
        %v11024 = vrot.slane %v11023, 4
        %v11025 = vmax.f32 %v11023, %v11024
        %v11026 = vrot.slane %v11025, 2
        %v11027 = vmax.f32 %v11025, %v11026
        %v11028 = vrot.slane %v11027, 1
        %v11029 = vmax.f32 %v11027, %v11028
        %v11030 = vsel %vm10994, %v10933, -inf
        %v11031 = vrot.slane %v11030, 4
        %v11032 = vmax.f32 %v11030, %v11031
        %v11033 = vrot.slane %v11032, 2
        %v11034 = vmax.f32 %v11032, %v11033
        %v11035 = vrot.slane %v11034, 1
        %v11036 = vmax.f32 %v11034, %v11035
        %v11037 = vsel %vm10994, %v10942, -inf
        %v11038 = vrot.slane %v11037, 4
        %v11039 = vmax.f32 %v11037, %v11038
        %v11040 = vrot.slane %v11039, 2
        %v11041 = vmax.f32 %v11039, %v11040
        %v11042 = vrot.slane %v11041, 1
        %v11043 = vmax.f32 %v11041, %v11042
        %v11044 = vsel %vm10994, %v10951, -inf
        %v11045 = vrot.slane %v11044, 4
        %v11046 = vmax.f32 %v11044, %v11045
        %v11047 = vrot.slane %v11046, 2
        %v11048 = vmax.f32 %v11046, %v11047
        %v11049 = vrot.slane %v11048, 1
        %v11050 = vmax.f32 %v11048, %v11049
        %v11051 = vsel %vm10994, %v10960, -inf
        %v11052 = vrot.slane %v11051, 4
        %v11053 = vmax.f32 %v11051, %v11052
        %v11054 = vrot.slane %v11053, 2
        %v11055 = vmax.f32 %v11053, %v11054
        %v11056 = vrot.slane %v11055, 1
        %v11057 = vmax.f32 %v11055, %v11056
        %v11058 = vsel %vm10994, %v10969, -inf
        %v11059 = vrot.slane %v11058, 4
        %v11060 = vmax.f32 %v11058, %v11059
        %v11061 = vrot.slane %v11060, 2
        %v11062 = vmax.f32 %v11060, %v11061
        %v11063 = vrot.slane %v11062, 1
        %v11064 = vmax.f32 %v11062, %v11063
        %v11065 = vsel %vm10994, %v10978, -inf
        %v11066 = vrot.slane %v11065, 4
        %v11067 = vmax.f32 %v11065, %v11066
        %v11068 = vrot.slane %v11067, 2
        %v11069 = vmax.f32 %v11067, %v11068
        %v11070 = vrot.slane %v11069, 1
        %v11071 = vmax.f32 %v11069, %v11070
        %v11072 = vsel %vm10994, %v10987, -inf
        %v11073 = vrot.slane %v11072, 4
        %v11074 = vmax.f32 %v11072, %v11073
        %v11075 = vrot.slane %v11074, 2
        %v11076 = vmax.f32 %v11074, %v11075
        %v11077 = vrot.slane %v11076, 1
        %v11078 = vmax.f32 %v11076, %v11077
        %vm11079 = vcmask 516096
        %11080 = vst.msk [vmem:[%s241] sm:$0x1] %vm11079, %v11001
        %11081 = vst.msk [vmem:[%s241 + $0x10] sm:$0x1] %vm11079, %v11008
        %11082 = vst.msk [vmem:[%s241 + $0x20] sm:$0x1] %vm11079, %v11015
        %11083 = vst.msk [vmem:[%s241 + $0x30] sm:$0x1] %vm11079, %v11022
        %11084 = vst.msk [vmem:[%s241 + $0x40] sm:$0x1] %vm11079, %v11029
        %11085 = vst.msk [vmem:[%s241 + $0x50] sm:$0x1] %vm11079, %v11036
        %11086 = vst.msk [vmem:[%s241 + $0x60] sm:$0x1] %vm11079, %v11043
        %11087 = vst.msk [vmem:[%s241 + $0x70] sm:$0x1] %vm11079, %v11050
        %11088 = vst.msk [vmem:[%s241 + $0x80] sm:$0x1] %vm11079, %v11057
        %11089 = vst.msk [vmem:[%s241 + $0x90] sm:$0x1] %vm11079, %v11064
        %11090 = vst.msk [vmem:[%s241 + $0xa0] sm:$0x1] %vm11079, %v11071
        %11091 = vst.msk [vmem:[%s241 + $0xb0] sm:$0x1] %vm11079, %v11078
        %vm11092 = vcmask 519170
        %v11093 = vsel %vm11092, %v10888, -inf
        %v11094 = vrot.slane %v11093, 4
        %v11095 = vmax.f32 %v11093, %v11094
        %v11096 = vrot.slane %v11095, 2
        %v11097 = vmax.f32 %v11095, %v11096
        %v11098 = vrot.slane %v11097, 1
        %v11099 = vmax.f32 %v11097, %v11098
        %v11100 = vsel %vm11092, %v10897, -inf
        %v11101 = vrot.slane %v11100, 4
        %v11102 = vmax.f32 %v11100, %v11101
        %v11103 = vrot.slane %v11102, 2
        %v11104 = vmax.f32 %v11102, %v11103
        %v11105 = vrot.slane %v11104, 1
        %v11106 = vmax.f32 %v11104, %v11105
        %v11107 = vsel %vm11092, %v10906, -inf
        %v11108 = vrot.slane %v11107, 4
        %v11109 = vmax.f32 %v11107, %v11108
        %v11110 = vrot.slane %v11109, 2
        %v11111 = vmax.f32 %v11109, %v11110
        %v11112 = vrot.slane %v11111, 1
        %v11113 = vmax.f32 %v11111, %v11112
        %v11114 = vsel %vm11092, %v10915, -inf
        %v11115 = vrot.slane %v11114, 4
        %v11116 = vmax.f32 %v11114, %v11115
        %v11117 = vrot.slane %v11116, 2
        %v11118 = vmax.f32 %v11116, %v11117
        %v11119 = vrot.slane %v11118, 1
        %v11120 = vmax.f32 %v11118, %v11119
        %v11121 = vsel %vm11092, %v10924, -inf
        %v11122 = vrot.slane %v11121, 4
        %v11123 = vmax.f32 %v11121, %v11122
        %v11124 = vrot.slane %v11123, 2
        %v11125 = vmax.f32 %v11123, %v11124
        %v11126 = vrot.slane %v11125, 1
        %v11127 = vmax.f32 %v11125, %v11126
        %v11128 = vsel %vm11092, %v10933, -inf
        %v11129 = vrot.slane %v11128, 4
        %v11130 = vmax.f32 %v11128, %v11129
        %v11131 = vrot.slane %v11130, 2
        %v11132 = vmax.f32 %v11130, %v11131
        %v11133 = vrot.slane %v11132, 1
        %v11134 = vmax.f32 %v11132, %v11133
        %v11135 = vsel %vm11092, %v10942, -inf
        %v11136 = vrot.slane %v11135, 4
        %v11137 = vmax.f32 %v11135, %v11136
        %v11138 = vrot.slane %v11137, 2
        %v11139 = vmax.f32 %v11137, %v11138
        %v11140 = vrot.slane %v11139, 1
        %v11141 = vmax.f32 %v11139, %v11140
        %v11142 = vsel %vm11092, %v10951, -inf
        %v11143 = vrot.slane %v11142, 4
        %v11144 = vmax.f32 %v11142, %v11143
        %v11145 = vrot.slane %v11144, 2
        %v11146 = vmax.f32 %v11144, %v11145
        %v11147 = vrot.slane %v11146, 1
        %v11148 = vmax.f32 %v11146, %v11147
        %v11149 = vsel %vm11092, %v10960, -inf
        %v11150 = vrot.slane %v11149, 4
        %v11151 = vmax.f32 %v11149, %v11150
        %v11152 = vrot.slane %v11151, 2
        %v11153 = vmax.f32 %v11151, %v11152
        %v11154 = vrot.slane %v11153, 1
        %v11155 = vmax.f32 %v11153, %v11154
        %v11156 = vsel %vm11092, %v10969, -inf
        %v11157 = vrot.slane %v11156, 4
        %v11158 = vmax.f32 %v11156, %v11157
        %v11159 = vrot.slane %v11158, 2
        %v11160 = vmax.f32 %v11158, %v11159
        %v11161 = vrot.slane %v11160, 1
        %v11162 = vmax.f32 %v11160, %v11161
        %v11163 = vsel %vm11092, %v10978, -inf
        %v11164 = vrot.slane %v11163, 4
        %v11165 = vmax.f32 %v11163, %v11164
        %v11166 = vrot.slane %v11165, 2
        %v11167 = vmax.f32 %v11165, %v11166
        %v11168 = vrot.slane %v11167, 1
        %v11169 = vmax.f32 %v11167, %v11168
        %v11170 = vsel %vm11092, %v10987, -inf
        %v11171 = vrot.slane %v11170, 4
        %v11172 = vmax.f32 %v11170, %v11171
        %v11173 = vrot.slane %v11172, 2
        %v11174 = vmax.f32 %v11172, %v11173
        %v11175 = vrot.slane %v11174, 1
        %v11176 = vmax.f32 %v11174, %v11175
        %11177 = vst.msk [vmem:[%s241 + $0x1] sm:$0x1] %vm11079, %v11099
        %11178 = vst.msk [vmem:[%s241 + $0x11] sm:$0x1] %vm11079, %v11106
        %11179 = vst.msk [vmem:[%s241 + $0x21] sm:$0x1] %vm11079, %v11113
        %11180 = vst.msk [vmem:[%s241 + $0x31] sm:$0x1] %vm11079, %v11120
        %11181 = vst.msk [vmem:[%s241 + $0x41] sm:$0x1] %vm11079, %v11127
        %11182 = vst.msk [vmem:[%s241 + $0x51] sm:$0x1] %vm11079, %v11134
        %11183 = vst.msk [vmem:[%s241 + $0x61] sm:$0x1] %vm11079, %v11141
        %11184 = vst.msk [vmem:[%s241 + $0x71] sm:$0x1] %vm11079, %v11148
        %11185 = vst.msk [vmem:[%s241 + $0x81] sm:$0x1] %vm11079, %v11155
        %11186 = vst.msk [vmem:[%s241 + $0x91] sm:$0x1] %vm11079, %v11162
        %11187 = vst.msk [vmem:[%s241 + $0xa1] sm:$0x1] %vm11079, %v11169
        %11188 = vst.msk [vmem:[%s241 + $0xb1] sm:$0x1] %vm11079, %v11176
        %vm11189 = vcmask 521220
        %v11190 = vsel %vm11189, %v10888, -inf
        %v11191 = vrot.slane %v11190, 4
        %v11192 = vmax.f32 %v11190, %v11191
        %v11193 = vrot.slane %v11192, 2
        %v11194 = vmax.f32 %v11192, %v11193
        %v11195 = vrot.slane %v11194, 1
        %v11196 = vmax.f32 %v11194, %v11195
        %v11197 = vsel %vm11189, %v10897, -inf
        %v11198 = vrot.slane %v11197, 4
        %v11199 = vmax.f32 %v11197, %v11198
        %v11200 = vrot.slane %v11199, 2
        %v11201 = vmax.f32 %v11199, %v11200
        %v11202 = vrot.slane %v11201, 1
        %v11203 = vmax.f32 %v11201, %v11202
        %v11204 = vsel %vm11189, %v10906, -inf
        %v11205 = vrot.slane %v11204, 4
        %v11206 = vmax.f32 %v11204, %v11205
        %v11207 = vrot.slane %v11206, 2
        %v11208 = vmax.f32 %v11206, %v11207
        %v11209 = vrot.slane %v11208, 1
        %v11210 = vmax.f32 %v11208, %v11209
        %v11211 = vsel %vm11189, %v10915, -inf
        %v11212 = vrot.slane %v11211, 4
        %v11213 = vmax.f32 %v11211, %v11212
        %v11214 = vrot.slane %v11213, 2
        %v11215 = vmax.f32 %v11213, %v11214
        %v11216 = vrot.slane %v11215, 1
        %v11217 = vmax.f32 %v11215, %v11216
        %v11218 = vsel %vm11189, %v10924, -inf
        %v11219 = vrot.slane %v11218, 4
        %v11220 = vmax.f32 %v11218, %v11219
        %v11221 = vrot.slane %v11220, 2
        %v11222 = vmax.f32 %v11220, %v11221
        %v11223 = vrot.slane %v11222, 1
        %v11224 = vmax.f32 %v11222, %v11223
        %v11225 = vsel %vm11189, %v10933, -inf
        %v11226 = vrot.slane %v11225, 4
        %v11227 = vmax.f32 %v11225, %v11226
        %v11228 = vrot.slane %v11227, 2
        %v11229 = vmax.f32 %v11227, %v11228
        %v11230 = vrot.slane %v11229, 1
        %v11231 = vmax.f32 %v11229, %v11230
        %v11232 = vsel %vm11189, %v10942, -inf
        %v11233 = vrot.slane %v11232, 4
        %v11234 = vmax.f32 %v11232, %v11233
        %v11235 = vrot.slane %v11234, 2
        %v11236 = vmax.f32 %v11234, %v11235
        %v11237 = vrot.slane %v11236, 1
        %v11238 = vmax.f32 %v11236, %v11237
        %v11239 = vsel %vm11189, %v10951, -inf
        %v11240 = vrot.slane %v11239, 4
        %v11241 = vmax.f32 %v11239, %v11240
        %v11242 = vrot.slane %v11241, 2
        %v11243 = vmax.f32 %v11241, %v11242
        %v11244 = vrot.slane %v11243, 1
        %v11245 = vmax.f32 %v11243, %v11244
        %v11246 = vsel %vm11189, %v10960, -inf
        %v11247 = vrot.slane %v11246, 4
        %v11248 = vmax.f32 %v11246, %v11247
        %v11249 = vrot.slane %v11248, 2
        %v11250 = vmax.f32 %v11248, %v11249
        %v11251 = vrot.slane %v11250, 1
        %v11252 = vmax.f32 %v11250, %v11251
        %v11253 = vsel %vm11189, %v10969, -inf
        %v11254 = vrot.slane %v11253, 4
        %v11255 = vmax.f32 %v11253, %v11254
        %v11256 = vrot.slane %v11255, 2
        %v11257 = vmax.f32 %v11255, %v11256
        %v11258 = vrot.slane %v11257, 1
        %v11259 = vmax.f32 %v11257, %v11258
        %v11260 = vsel %vm11189, %v10978, -inf
        %v11261 = vrot.slane %v11260, 4
        %v11262 = vmax.f32 %v11260, %v11261
        %v11263 = vrot.slane %v11262, 2
        %v11264 = vmax.f32 %v11262, %v11263
        %v11265 = vrot.slane %v11264, 1
        %v11266 = vmax.f32 %v11264, %v11265
        %v11267 = vsel %vm11189, %v10987, -inf
        %v11268 = vrot.slane %v11267, 4
        %v11269 = vmax.f32 %v11267, %v11268
        %v11270 = vrot.slane %v11269, 2
        %v11271 = vmax.f32 %v11269, %v11270
        %v11272 = vrot.slane %v11271, 1
        %v11273 = vmax.f32 %v11271, %v11272
        %11274 = vst.msk [vmem:[%s241 + $0x2] sm:$0x1] %vm11079, %v11196
        %11275 = vst.msk [vmem:[%s241 + $0x12] sm:$0x1] %vm11079, %v11203
        %11276 = vst.msk [vmem:[%s241 + $0x22] sm:$0x1] %vm11079, %v11210
        %11277 = vst.msk [vmem:[%s241 + $0x32] sm:$0x1] %vm11079, %v11217
        %11278 = vst.msk [vmem:[%s241 + $0x42] sm:$0x1] %vm11079, %v11224
        %11279 = vst.msk [vmem:[%s241 + $0x52] sm:$0x1] %vm11079, %v11231
        %11280 = vst.msk [vmem:[%s241 + $0x62] sm:$0x1] %vm11079, %v11238
        %11281 = vst.msk [vmem:[%s241 + $0x72] sm:$0x1] %vm11079, %v11245
        %11282 = vst.msk [vmem:[%s241 + $0x82] sm:$0x1] %vm11079, %v11252
        %11283 = vst.msk [vmem:[%s241 + $0x92] sm:$0x1] %vm11079, %v11259
        %11284 = vst.msk [vmem:[%s241 + $0xa2] sm:$0x1] %vm11079, %v11266
        %11285 = vst.msk [vmem:[%s241 + $0xb2] sm:$0x1] %vm11079, %v11273
        %vm11286 = vcmask 523270
        %v11287 = vsel %vm11286, %v10888, -inf
        %v11288 = vrot.slane %v11287, 4
        %v11289 = vmax.f32 %v11287, %v11288
        %v11290 = vrot.slane %v11289, 2
        %v11291 = vmax.f32 %v11289, %v11290
        %v11292 = vrot.slane %v11291, 1
        %v11293 = vmax.f32 %v11291, %v11292
        %v11294 = vsel %vm11286, %v10897, -inf
        %v11295 = vrot.slane %v11294, 4
        %v11296 = vmax.f32 %v11294, %v11295
        %v11297 = vrot.slane %v11296, 2
        %v11298 = vmax.f32 %v11296, %v11297
        %v11299 = vrot.slane %v11298, 1
        %v11300 = vmax.f32 %v11298, %v11299
        %v11301 = vsel %vm11286, %v10906, -inf
        %v11302 = vrot.slane %v11301, 4
        %v11303 = vmax.f32 %v11301, %v11302
        %v11304 = vrot.slane %v11303, 2
        %v11305 = vmax.f32 %v11303, %v11304
        %v11306 = vrot.slane %v11305, 1
        %v11307 = vmax.f32 %v11305, %v11306
        %v11308 = vsel %vm11286, %v10915, -inf
        %v11309 = vrot.slane %v11308, 4
        %v11310 = vmax.f32 %v11308, %v11309
        %v11311 = vrot.slane %v11310, 2
        %v11312 = vmax.f32 %v11310, %v11311
        %v11313 = vrot.slane %v11312, 1
        %v11314 = vmax.f32 %v11312, %v11313
        %v11315 = vsel %vm11286, %v10924, -inf
        %v11316 = vrot.slane %v11315, 4
        %v11317 = vmax.f32 %v11315, %v11316
        %v11318 = vrot.slane %v11317, 2
        %v11319 = vmax.f32 %v11317, %v11318
        %v11320 = vrot.slane %v11319, 1
        %v11321 = vmax.f32 %v11319, %v11320
        %v11322 = vsel %vm11286, %v10933, -inf
        %v11323 = vrot.slane %v11322, 4
        %v11324 = vmax.f32 %v11322, %v11323
        %v11325 = vrot.slane %v11324, 2
        %v11326 = vmax.f32 %v11324, %v11325
        %v11327 = vrot.slane %v11326, 1
        %v11328 = vmax.f32 %v11326, %v11327
        %v11329 = vsel %vm11286, %v10942, -inf
        %v11330 = vrot.slane %v11329, 4
        %v11331 = vmax.f32 %v11329, %v11330
        %v11332 = vrot.slane %v11331, 2
        %v11333 = vmax.f32 %v11331, %v11332
        %v11334 = vrot.slane %v11333, 1
        %v11335 = vmax.f32 %v11333, %v11334
        %v11336 = vsel %vm11286, %v10951, -inf
        %v11337 = vrot.slane %v11336, 4
        %v11338 = vmax.f32 %v11336, %v11337
        %v11339 = vrot.slane %v11338, 2
        %v11340 = vmax.f32 %v11338, %v11339
        %v11341 = vrot.slane %v11340, 1
        %v11342 = vmax.f32 %v11340, %v11341
        %v11343 = vsel %vm11286, %v10960, -inf
        %v11344 = vrot.slane %v11343, 4
        %v11345 = vmax.f32 %v11343, %v11344
        %v11346 = vrot.slane %v11345, 2
        %v11347 = vmax.f32 %v11345, %v11346
        %v11348 = vrot.slane %v11347, 1
        %v11349 = vmax.f32 %v11347, %v11348
        %v11350 = vsel %vm11286, %v10969, -inf
        %v11351 = vrot.slane %v11350, 4
        %v11352 = vmax.f32 %v11350, %v11351
        %v11353 = vrot.slane %v11352, 2
        %v11354 = vmax.f32 %v11352, %v11353
        %v11355 = vrot.slane %v11354, 1
        %v11356 = vmax.f32 %v11354, %v11355
        %v11357 = vsel %vm11286, %v10978, -inf
        %v11358 = vrot.slane %v11357, 4
        %v11359 = vmax.f32 %v11357, %v11358
        %v11360 = vrot.slane %v11359, 2
        %v11361 = vmax.f32 %v11359, %v11360
        %v11362 = vrot.slane %v11361, 1
        %v11363 = vmax.f32 %v11361, %v11362
        %v11364 = vsel %vm11286, %v10987, -inf
        %v11365 = vrot.slane %v11364, 4
        %v11366 = vmax.f32 %v11364, %v11365
        %v11367 = vrot.slane %v11366, 2
        %v11368 = vmax.f32 %v11366, %v11367
        %v11369 = vrot.slane %v11368, 1
        %v11370 = vmax.f32 %v11368, %v11369
        %11371 = vst.msk [vmem:[%s241 + $0x3] sm:$0x1] %vm11079, %v11293
        %11372 = vst.msk [vmem:[%s241 + $0x13] sm:$0x1] %vm11079, %v11300
        %11373 = vst.msk [vmem:[%s241 + $0x23] sm:$0x1] %vm11079, %v11307
        %11374 = vst.msk [vmem:[%s241 + $0x33] sm:$0x1] %vm11079, %v11314
        %11375 = vst.msk [vmem:[%s241 + $0x43] sm:$0x1] %vm11079, %v11321
        %11376 = vst.msk [vmem:[%s241 + $0x53] sm:$0x1] %vm11079, %v11328
        %11377 = vst.msk [vmem:[%s241 + $0x63] sm:$0x1] %vm11079, %v11335
        %11378 = vst.msk [vmem:[%s241 + $0x73] sm:$0x1] %vm11079, %v11342
        %11379 = vst.msk [vmem:[%s241 + $0x83] sm:$0x1] %vm11079, %v11349
        %11380 = vst.msk [vmem:[%s241 + $0x93] sm:$0x1] %vm11079, %v11356
        %11381 = vst.msk [vmem:[%s241 + $0xa3] sm:$0x1] %vm11079, %v11363
        %11382 = vst.msk [vmem:[%s241 + $0xb3] sm:$0x1] %vm11079, %v11370
        %v11383 = vsel %vm10994, %v10891, -inf
        %v11384 = vrot.slane %v11383, 4
        %v11385 = vmax.f32 %v11383, %v11384
        %v11386 = vrot.slane %v11385, 2
        %v11387 = vmax.f32 %v11385, %v11386
        %v11388 = vrot.slane %v11387, 1
        %v11389 = vmax.f32 %v11387, %v11388
        %v11390 = vsel %vm10994, %v10900, -inf
        %v11391 = vrot.slane %v11390, 4
        %v11392 = vmax.f32 %v11390, %v11391
        %v11393 = vrot.slane %v11392, 2
        %v11394 = vmax.f32 %v11392, %v11393
        %v11395 = vrot.slane %v11394, 1
        %v11396 = vmax.f32 %v11394, %v11395
        %v11397 = vsel %vm10994, %v10909, -inf
        %v11398 = vrot.slane %v11397, 4
        %v11399 = vmax.f32 %v11397, %v11398
        %v11400 = vrot.slane %v11399, 2
        %v11401 = vmax.f32 %v11399, %v11400
        %v11402 = vrot.slane %v11401, 1
        %v11403 = vmax.f32 %v11401, %v11402
        %v11404 = vsel %vm10994, %v10918, -inf
        %v11405 = vrot.slane %v11404, 4
        %v11406 = vmax.f32 %v11404, %v11405
        %v11407 = vrot.slane %v11406, 2
        %v11408 = vmax.f32 %v11406, %v11407
        %v11409 = vrot.slane %v11408, 1
        %v11410 = vmax.f32 %v11408, %v11409
        %v11411 = vsel %vm10994, %v10927, -inf
        %v11412 = vrot.slane %v11411, 4
        %v11413 = vmax.f32 %v11411, %v11412
        %v11414 = vrot.slane %v11413, 2
        %v11415 = vmax.f32 %v11413, %v11414
        %v11416 = vrot.slane %v11415, 1
        %v11417 = vmax.f32 %v11415, %v11416
        %v11418 = vsel %vm10994, %v10936, -inf
        %v11419 = vrot.slane %v11418, 4
        %v11420 = vmax.f32 %v11418, %v11419
        %v11421 = vrot.slane %v11420, 2
        %v11422 = vmax.f32 %v11420, %v11421
        %v11423 = vrot.slane %v11422, 1
        %v11424 = vmax.f32 %v11422, %v11423
        %v11425 = vsel %vm10994, %v10945, -inf
        %v11426 = vrot.slane %v11425, 4
        %v11427 = vmax.f32 %v11425, %v11426
        %v11428 = vrot.slane %v11427, 2
        %v11429 = vmax.f32 %v11427, %v11428
        %v11430 = vrot.slane %v11429, 1
        %v11431 = vmax.f32 %v11429, %v11430
        %v11432 = vsel %vm10994, %v10954, -inf
        %v11433 = vrot.slane %v11432, 4
        %v11434 = vmax.f32 %v11432, %v11433
        %v11435 = vrot.slane %v11434, 2
        %v11436 = vmax.f32 %v11434, %v11435
        %v11437 = vrot.slane %v11436, 1
        %v11438 = vmax.f32 %v11436, %v11437
        %v11439 = vsel %vm10994, %v10963, -inf
        %v11440 = vrot.slane %v11439, 4
        %v11441 = vmax.f32 %v11439, %v11440
        %v11442 = vrot.slane %v11441, 2
        %v11443 = vmax.f32 %v11441, %v11442
        %v11444 = vrot.slane %v11443, 1
        %v11445 = vmax.f32 %v11443, %v11444
        %v11446 = vsel %vm10994, %v10972, -inf
        %v11447 = vrot.slane %v11446, 4
        %v11448 = vmax.f32 %v11446, %v11447
        %v11449 = vrot.slane %v11448, 2
        %v11450 = vmax.f32 %v11448, %v11449
        %v11451 = vrot.slane %v11450, 1
        %v11452 = vmax.f32 %v11450, %v11451
        %v11453 = vsel %vm10994, %v10981, -inf
        %v11454 = vrot.slane %v11453, 4
        %v11455 = vmax.f32 %v11453, %v11454
        %v11456 = vrot.slane %v11455, 2
        %v11457 = vmax.f32 %v11455, %v11456
        %v11458 = vrot.slane %v11457, 1
        %v11459 = vmax.f32 %v11457, %v11458
        %v11460 = vsel %vm10994, %v10990, -inf
        %v11461 = vrot.slane %v11460, 4
        %v11462 = vmax.f32 %v11460, %v11461
        %v11463 = vrot.slane %v11462, 2
        %v11464 = vmax.f32 %v11462, %v11463
        %v11465 = vrot.slane %v11464, 1
        %v11466 = vmax.f32 %v11464, %v11465
        %11467 = vst.msk [vmem:[%s241 + $0x4] sm:$0x1] %vm11079, %v11389
        %11468 = vst.msk [vmem:[%s241 + $0x14] sm:$0x1] %vm11079, %v11396
        %11469 = vst.msk [vmem:[%s241 + $0x24] sm:$0x1] %vm11079, %v11403
        %11470 = vst.msk [vmem:[%s241 + $0x34] sm:$0x1] %vm11079, %v11410
        %11471 = vst.msk [vmem:[%s241 + $0x44] sm:$0x1] %vm11079, %v11417
        %11472 = vst.msk [vmem:[%s241 + $0x54] sm:$0x1] %vm11079, %v11424
        %11473 = vst.msk [vmem:[%s241 + $0x64] sm:$0x1] %vm11079, %v11431
        %11474 = vst.msk [vmem:[%s241 + $0x74] sm:$0x1] %vm11079, %v11438
        %11475 = vst.msk [vmem:[%s241 + $0x84] sm:$0x1] %vm11079, %v11445
        %11476 = vst.msk [vmem:[%s241 + $0x94] sm:$0x1] %vm11079, %v11452
        %11477 = vst.msk [vmem:[%s241 + $0xa4] sm:$0x1] %vm11079, %v11459
        %11478 = vst.msk [vmem:[%s241 + $0xb4] sm:$0x1] %vm11079, %v11466
        %v11479 = vsel %vm11092, %v10891, -inf
        %v11480 = vrot.slane %v11479, 4
        %v11481 = vmax.f32 %v11479, %v11480
        %v11482 = vrot.slane %v11481, 2
        %v11483 = vmax.f32 %v11481, %v11482
        %v11484 = vrot.slane %v11483, 1
        %v11485 = vmax.f32 %v11483, %v11484
        %v11486 = vsel %vm11092, %v10900, -inf
        %v11487 = vrot.slane %v11486, 4
        %v11488 = vmax.f32 %v11486, %v11487
        %v11489 = vrot.slane %v11488, 2
        %v11490 = vmax.f32 %v11488, %v11489
        %v11491 = vrot.slane %v11490, 1
        %v11492 = vmax.f32 %v11490, %v11491
        %v11493 = vsel %vm11092, %v10909, -inf
        %v11494 = vrot.slane %v11493, 4
        %v11495 = vmax.f32 %v11493, %v11494
        %v11496 = vrot.slane %v11495, 2
        %v11497 = vmax.f32 %v11495, %v11496
        %v11498 = vrot.slane %v11497, 1
        %v11499 = vmax.f32 %v11497, %v11498
        %v11500 = vsel %vm11092, %v10918, -inf
        %v11501 = vrot.slane %v11500, 4
        %v11502 = vmax.f32 %v11500, %v11501
        %v11503 = vrot.slane %v11502, 2
        %v11504 = vmax.f32 %v11502, %v11503
        %v11505 = vrot.slane %v11504, 1
        %v11506 = vmax.f32 %v11504, %v11505
        %v11507 = vsel %vm11092, %v10927, -inf
        %v11508 = vrot.slane %v11507, 4
        %v11509 = vmax.f32 %v11507, %v11508
        %v11510 = vrot.slane %v11509, 2
        %v11511 = vmax.f32 %v11509, %v11510
        %v11512 = vrot.slane %v11511, 1
        %v11513 = vmax.f32 %v11511, %v11512
        %v11514 = vsel %vm11092, %v10936, -inf
        %v11515 = vrot.slane %v11514, 4
        %v11516 = vmax.f32 %v11514, %v11515
        %v11517 = vrot.slane %v11516, 2
        %v11518 = vmax.f32 %v11516, %v11517
        %v11519 = vrot.slane %v11518, 1
        %v11520 = vmax.f32 %v11518, %v11519
        %v11521 = vsel %vm11092, %v10945, -inf
        %v11522 = vrot.slane %v11521, 4
        %v11523 = vmax.f32 %v11521, %v11522
        %v11524 = vrot.slane %v11523, 2
        %v11525 = vmax.f32 %v11523, %v11524
        %v11526 = vrot.slane %v11525, 1
        %v11527 = vmax.f32 %v11525, %v11526
        %v11528 = vsel %vm11092, %v10954, -inf
        %v11529 = vrot.slane %v11528, 4
        %v11530 = vmax.f32 %v11528, %v11529
        %v11531 = vrot.slane %v11530, 2
        %v11532 = vmax.f32 %v11530, %v11531
        %v11533 = vrot.slane %v11532, 1
        %v11534 = vmax.f32 %v11532, %v11533
        %v11535 = vsel %vm11092, %v10963, -inf
        %v11536 = vrot.slane %v11535, 4
        %v11537 = vmax.f32 %v11535, %v11536
        %v11538 = vrot.slane %v11537, 2
        %v11539 = vmax.f32 %v11537, %v11538
        %v11540 = vrot.slane %v11539, 1
        %v11541 = vmax.f32 %v11539, %v11540
        %v11542 = vsel %vm11092, %v10972, -inf
        %v11543 = vrot.slane %v11542, 4
        %v11544 = vmax.f32 %v11542, %v11543
        %v11545 = vrot.slane %v11544, 2
        %v11546 = vmax.f32 %v11544, %v11545
        %v11547 = vrot.slane %v11546, 1
        %v11548 = vmax.f32 %v11546, %v11547
        %v11549 = vsel %vm11092, %v10981, -inf
        %v11550 = vrot.slane %v11549, 4
        %v11551 = vmax.f32 %v11549, %v11550
        %v11552 = vrot.slane %v11551, 2
        %v11553 = vmax.f32 %v11551, %v11552
        %v11554 = vrot.slane %v11553, 1
        %v11555 = vmax.f32 %v11553, %v11554
        %v11556 = vsel %vm11092, %v10990, -inf
        %v11557 = vrot.slane %v11556, 4
        %v11558 = vmax.f32 %v11556, %v11557
        %v11559 = vrot.slane %v11558, 2
        %v11560 = vmax.f32 %v11558, %v11559
        %v11561 = vrot.slane %v11560, 1
        %v11562 = vmax.f32 %v11560, %v11561
        %11563 = vst.msk [vmem:[%s241 + $0x5] sm:$0x1] %vm11079, %v11485
        %11564 = vst.msk [vmem:[%s241 + $0x15] sm:$0x1] %vm11079, %v11492
        %11565 = vst.msk [vmem:[%s241 + $0x25] sm:$0x1] %vm11079, %v11499
        %11566 = vst.msk [vmem:[%s241 + $0x35] sm:$0x1] %vm11079, %v11506
        %11567 = vst.msk [vmem:[%s241 + $0x45] sm:$0x1] %vm11079, %v11513
        %11568 = vst.msk [vmem:[%s241 + $0x55] sm:$0x1] %vm11079, %v11520
        %11569 = vst.msk [vmem:[%s241 + $0x65] sm:$0x1] %vm11079, %v11527
        %11570 = vst.msk [vmem:[%s241 + $0x75] sm:$0x1] %vm11079, %v11534
        %11571 = vst.msk [vmem:[%s241 + $0x85] sm:$0x1] %vm11079, %v11541
        %11572 = vst.msk [vmem:[%s241 + $0x95] sm:$0x1] %vm11079, %v11548
        %11573 = vst.msk [vmem:[%s241 + $0xa5] sm:$0x1] %vm11079, %v11555
        %11574 = vst.msk [vmem:[%s241 + $0xb5] sm:$0x1] %vm11079, %v11562
        %v11575 = vsel %vm11189, %v10891, -inf
        %v11576 = vrot.slane %v11575, 4
        %v11577 = vmax.f32 %v11575, %v11576
        %v11578 = vrot.slane %v11577, 2
        %v11579 = vmax.f32 %v11577, %v11578
        %v11580 = vrot.slane %v11579, 1
        %v11581 = vmax.f32 %v11579, %v11580
        %v11582 = vsel %vm11189, %v10900, -inf
        %v11583 = vrot.slane %v11582, 4
        %v11584 = vmax.f32 %v11582, %v11583
        %v11585 = vrot.slane %v11584, 2
        %v11586 = vmax.f32 %v11584, %v11585
        %v11587 = vrot.slane %v11586, 1
        %v11588 = vmax.f32 %v11586, %v11587
        %v11589 = vsel %vm11189, %v10909, -inf
        %v11590 = vrot.slane %v11589, 4
        %v11591 = vmax.f32 %v11589, %v11590
        %v11592 = vrot.slane %v11591, 2
        %v11593 = vmax.f32 %v11591, %v11592
        %v11594 = vrot.slane %v11593, 1
        %v11595 = vmax.f32 %v11593, %v11594
        %v11596 = vsel %vm11189, %v10918, -inf
        %v11597 = vrot.slane %v11596, 4
        %v11598 = vmax.f32 %v11596, %v11597
        %v11599 = vrot.slane %v11598, 2
        %v11600 = vmax.f32 %v11598, %v11599
        %v11601 = vrot.slane %v11600, 1
        %v11602 = vmax.f32 %v11600, %v11601
        %v11603 = vsel %vm11189, %v10927, -inf
        %v11604 = vrot.slane %v11603, 4
        %v11605 = vmax.f32 %v11603, %v11604
        %v11606 = vrot.slane %v11605, 2
        %v11607 = vmax.f32 %v11605, %v11606
        %v11608 = vrot.slane %v11607, 1
        %v11609 = vmax.f32 %v11607, %v11608
        %v11610 = vsel %vm11189, %v10936, -inf
        %v11611 = vrot.slane %v11610, 4
        %v11612 = vmax.f32 %v11610, %v11611
        %v11613 = vrot.slane %v11612, 2
        %v11614 = vmax.f32 %v11612, %v11613
        %v11615 = vrot.slane %v11614, 1
        %v11616 = vmax.f32 %v11614, %v11615
        %v11617 = vsel %vm11189, %v10945, -inf
        %v11618 = vrot.slane %v11617, 4
        %v11619 = vmax.f32 %v11617, %v11618
        %v11620 = vrot.slane %v11619, 2
        %v11621 = vmax.f32 %v11619, %v11620
        %v11622 = vrot.slane %v11621, 1
        %v11623 = vmax.f32 %v11621, %v11622
        %v11624 = vsel %vm11189, %v10954, -inf
        %v11625 = vrot.slane %v11624, 4
        %v11626 = vmax.f32 %v11624, %v11625
        %v11627 = vrot.slane %v11626, 2
        %v11628 = vmax.f32 %v11626, %v11627
        %v11629 = vrot.slane %v11628, 1
        %v11630 = vmax.f32 %v11628, %v11629
        %v11631 = vsel %vm11189, %v10963, -inf
        %v11632 = vrot.slane %v11631, 4
        %v11633 = vmax.f32 %v11631, %v11632
        %v11634 = vrot.slane %v11633, 2
        %v11635 = vmax.f32 %v11633, %v11634
        %v11636 = vrot.slane %v11635, 1
        %v11637 = vmax.f32 %v11635, %v11636
        %v11638 = vsel %vm11189, %v10972, -inf
        %v11639 = vrot.slane %v11638, 4
        %v11640 = vmax.f32 %v11638, %v11639
        %v11641 = vrot.slane %v11640, 2
        %v11642 = vmax.f32 %v11640, %v11641
        %v11643 = vrot.slane %v11642, 1
        %v11644 = vmax.f32 %v11642, %v11643
        %v11645 = vsel %vm11189, %v10981, -inf
        %v11646 = vrot.slane %v11645, 4
        %v11647 = vmax.f32 %v11645, %v11646
        %v11648 = vrot.slane %v11647, 2
        %v11649 = vmax.f32 %v11647, %v11648
        %v11650 = vrot.slane %v11649, 1
        %v11651 = vmax.f32 %v11649, %v11650
        %v11652 = vsel %vm11189, %v10990, -inf
        %v11653 = vrot.slane %v11652, 4
        %v11654 = vmax.f32 %v11652, %v11653
        %v11655 = vrot.slane %v11654, 2
        %v11656 = vmax.f32 %v11654, %v11655
        %v11657 = vrot.slane %v11656, 1
        %v11658 = vmax.f32 %v11656, %v11657
        %11659 = vst.msk [vmem:[%s241 + $0x6] sm:$0x1] %vm11079, %v11581
        %11660 = vst.msk [vmem:[%s241 + $0x16] sm:$0x1] %vm11079, %v11588
        %11661 = vst.msk [vmem:[%s241 + $0x26] sm:$0x1] %vm11079, %v11595
        %11662 = vst.msk [vmem:[%s241 + $0x36] sm:$0x1] %vm11079, %v11602
        %11663 = vst.msk [vmem:[%s241 + $0x46] sm:$0x1] %vm11079, %v11609
        %11664 = vst.msk [vmem:[%s241 + $0x56] sm:$0x1] %vm11079, %v11616
        %11665 = vst.msk [vmem:[%s241 + $0x66] sm:$0x1] %vm11079, %v11623
        %11666 = vst.msk [vmem:[%s241 + $0x76] sm:$0x1] %vm11079, %v11630
        %11667 = vst.msk [vmem:[%s241 + $0x86] sm:$0x1] %vm11079, %v11637
        %11668 = vst.msk [vmem:[%s241 + $0x96] sm:$0x1] %vm11079, %v11644
        %11669 = vst.msk [vmem:[%s241 + $0xa6] sm:$0x1] %vm11079, %v11651
        %11670 = vst.msk [vmem:[%s241 + $0xb6] sm:$0x1] %vm11079, %v11658
        %v11671 = vsel %vm11286, %v10891, -inf
        %v11672 = vrot.slane %v11671, 4
        %v11673 = vmax.f32 %v11671, %v11672
        %v11674 = vrot.slane %v11673, 2
        %v11675 = vmax.f32 %v11673, %v11674
        %v11676 = vrot.slane %v11675, 1
        %v11677 = vmax.f32 %v11675, %v11676
        %v11678 = vsel %vm11286, %v10900, -inf
        %v11679 = vrot.slane %v11678, 4
        %v11680 = vmax.f32 %v11678, %v11679
        %v11681 = vrot.slane %v11680, 2
        %v11682 = vmax.f32 %v11680, %v11681
        %v11683 = vrot.slane %v11682, 1
        %v11684 = vmax.f32 %v11682, %v11683
        %v11685 = vsel %vm11286, %v10909, -inf
        %v11686 = vrot.slane %v11685, 4
        %v11687 = vmax.f32 %v11685, %v11686
        %v11688 = vrot.slane %v11687, 2
        %v11689 = vmax.f32 %v11687, %v11688
        %v11690 = vrot.slane %v11689, 1
        %v11691 = vmax.f32 %v11689, %v11690
        %v11692 = vsel %vm11286, %v10918, -inf
        %v11693 = vrot.slane %v11692, 4
        %v11694 = vmax.f32 %v11692, %v11693
        %v11695 = vrot.slane %v11694, 2
        %v11696 = vmax.f32 %v11694, %v11695
        %v11697 = vrot.slane %v11696, 1
        %v11698 = vmax.f32 %v11696, %v11697
        %v11699 = vsel %vm11286, %v10927, -inf
        %v11700 = vrot.slane %v11699, 4
        %v11701 = vmax.f32 %v11699, %v11700
        %v11702 = vrot.slane %v11701, 2
        %v11703 = vmax.f32 %v11701, %v11702
        %v11704 = vrot.slane %v11703, 1
        %v11705 = vmax.f32 %v11703, %v11704
        %v11706 = vsel %vm11286, %v10936, -inf
        %v11707 = vrot.slane %v11706, 4
        %v11708 = vmax.f32 %v11706, %v11707
        %v11709 = vrot.slane %v11708, 2
        %v11710 = vmax.f32 %v11708, %v11709
        %v11711 = vrot.slane %v11710, 1
        %v11712 = vmax.f32 %v11710, %v11711
        %v11713 = vsel %vm11286, %v10945, -inf
        %v11714 = vrot.slane %v11713, 4
        %v11715 = vmax.f32 %v11713, %v11714
        %v11716 = vrot.slane %v11715, 2
        %v11717 = vmax.f32 %v11715, %v11716
        %v11718 = vrot.slane %v11717, 1
        %v11719 = vmax.f32 %v11717, %v11718
        %v11720 = vsel %vm11286, %v10954, -inf
        %v11721 = vrot.slane %v11720, 4
        %v11722 = vmax.f32 %v11720, %v11721
        %v11723 = vrot.slane %v11722, 2
        %v11724 = vmax.f32 %v11722, %v11723
        %v11725 = vrot.slane %v11724, 1
        %v11726 = vmax.f32 %v11724, %v11725
        %v11727 = vsel %vm11286, %v10963, -inf
        %v11728 = vrot.slane %v11727, 4
        %v11729 = vmax.f32 %v11727, %v11728
        %v11730 = vrot.slane %v11729, 2
        %v11731 = vmax.f32 %v11729, %v11730
        %v11732 = vrot.slane %v11731, 1
        %v11733 = vmax.f32 %v11731, %v11732
        %v11734 = vsel %vm11286, %v10972, -inf
        %v11735 = vrot.slane %v11734, 4
        %v11736 = vmax.f32 %v11734, %v11735
        %v11737 = vrot.slane %v11736, 2
        %v11738 = vmax.f32 %v11736, %v11737
        %v11739 = vrot.slane %v11738, 1
        %v11740 = vmax.f32 %v11738, %v11739
        %v11741 = vsel %vm11286, %v10981, -inf
        %v11742 = vrot.slane %v11741, 4
        %v11743 = vmax.f32 %v11741, %v11742
        %v11744 = vrot.slane %v11743, 2
        %v11745 = vmax.f32 %v11743, %v11744
        %v11746 = vrot.slane %v11745, 1
        %v11747 = vmax.f32 %v11745, %v11746
        %v11748 = vsel %vm11286, %v10990, -inf
        %v11749 = vrot.slane %v11748, 4
        %v11750 = vmax.f32 %v11748, %v11749
        %v11751 = vrot.slane %v11750, 2
        %v11752 = vmax.f32 %v11750, %v11751
        %v11753 = vrot.slane %v11752, 1
        %v11754 = vmax.f32 %v11752, %v11753
        %11755 = vst.msk [vmem:[%s241 + $0x7] sm:$0x1] %vm11079, %v11677
        %11756 = vst.msk [vmem:[%s241 + $0x17] sm:$0x1] %vm11079, %v11684
        %11757 = vst.msk [vmem:[%s241 + $0x27] sm:$0x1] %vm11079, %v11691
        %11758 = vst.msk [vmem:[%s241 + $0x37] sm:$0x1] %vm11079, %v11698
        %11759 = vst.msk [vmem:[%s241 + $0x47] sm:$0x1] %vm11079, %v11705
        %11760 = vst.msk [vmem:[%s241 + $0x57] sm:$0x1] %vm11079, %v11712
        %11761 = vst.msk [vmem:[%s241 + $0x67] sm:$0x1] %vm11079, %v11719
        %11762 = vst.msk [vmem:[%s241 + $0x77] sm:$0x1] %vm11079, %v11726
        %11763 = vst.msk [vmem:[%s241 + $0x87] sm:$0x1] %vm11079, %v11733
        %11764 = vst.msk [vmem:[%s241 + $0x97] sm:$0x1] %vm11079, %v11740
        %11765 = vst.msk [vmem:[%s241 + $0xa7] sm:$0x1] %vm11079, %v11747
        %11766 = vst.msk [vmem:[%s241 + $0xb7] sm:$0x1] %vm11079, %v11754
        %v11767 = vsel %vm10994, %v10894, -inf
        %v11768 = vrot.slane %v11767, 4
        %v11769 = vmax.f32 %v11767, %v11768
        %v11770 = vrot.slane %v11769, 2
        %v11771 = vmax.f32 %v11769, %v11770
        %v11772 = vrot.slane %v11771, 1
        %v11773 = vmax.f32 %v11771, %v11772
        %v11774 = vsel %vm10994, %v10903, -inf
        %v11775 = vrot.slane %v11774, 4
        %v11776 = vmax.f32 %v11774, %v11775
        %v11777 = vrot.slane %v11776, 2
        %v11778 = vmax.f32 %v11776, %v11777
        %v11779 = vrot.slane %v11778, 1
        %v11780 = vmax.f32 %v11778, %v11779
        %v11781 = vsel %vm10994, %v10912, -inf
        %v11782 = vrot.slane %v11781, 4
        %v11783 = vmax.f32 %v11781, %v11782
        %v11784 = vrot.slane %v11783, 2
        %v11785 = vmax.f32 %v11783, %v11784
        %v11786 = vrot.slane %v11785, 1
        %v11787 = vmax.f32 %v11785, %v11786
        %v11788 = vsel %vm10994, %v10921, -inf
        %v11789 = vrot.slane %v11788, 4
        %v11790 = vmax.f32 %v11788, %v11789
        %v11791 = vrot.slane %v11790, 2
        %v11792 = vmax.f32 %v11790, %v11791
        %v11793 = vrot.slane %v11792, 1
        %v11794 = vmax.f32 %v11792, %v11793
        %v11795 = vsel %vm10994, %v10930, -inf
        %v11796 = vrot.slane %v11795, 4
        %v11797 = vmax.f32 %v11795, %v11796
        %v11798 = vrot.slane %v11797, 2
        %v11799 = vmax.f32 %v11797, %v11798
        %v11800 = vrot.slane %v11799, 1
        %v11801 = vmax.f32 %v11799, %v11800
        %v11802 = vsel %vm10994, %v10939, -inf
        %v11803 = vrot.slane %v11802, 4
        %v11804 = vmax.f32 %v11802, %v11803
        %v11805 = vrot.slane %v11804, 2
        %v11806 = vmax.f32 %v11804, %v11805
        %v11807 = vrot.slane %v11806, 1
        %v11808 = vmax.f32 %v11806, %v11807
        %v11809 = vsel %vm10994, %v10948, -inf
        %v11810 = vrot.slane %v11809, 4
        %v11811 = vmax.f32 %v11809, %v11810
        %v11812 = vrot.slane %v11811, 2
        %v11813 = vmax.f32 %v11811, %v11812
        %v11814 = vrot.slane %v11813, 1
        %v11815 = vmax.f32 %v11813, %v11814
        %v11816 = vsel %vm10994, %v10957, -inf
        %v11817 = vrot.slane %v11816, 4
        %v11818 = vmax.f32 %v11816, %v11817
        %v11819 = vrot.slane %v11818, 2
        %v11820 = vmax.f32 %v11818, %v11819
        %v11821 = vrot.slane %v11820, 1
        %v11822 = vmax.f32 %v11820, %v11821
        %v11823 = vsel %vm10994, %v10966, -inf
        %v11824 = vrot.slane %v11823, 4
        %v11825 = vmax.f32 %v11823, %v11824
        %v11826 = vrot.slane %v11825, 2
        %v11827 = vmax.f32 %v11825, %v11826
        %v11828 = vrot.slane %v11827, 1
        %v11829 = vmax.f32 %v11827, %v11828
        %v11830 = vsel %vm10994, %v10975, -inf
        %v11831 = vrot.slane %v11830, 4
        %v11832 = vmax.f32 %v11830, %v11831
        %v11833 = vrot.slane %v11832, 2
        %v11834 = vmax.f32 %v11832, %v11833
        %v11835 = vrot.slane %v11834, 1
        %v11836 = vmax.f32 %v11834, %v11835
        %v11837 = vsel %vm10994, %v10984, -inf
        %v11838 = vrot.slane %v11837, 4
        %v11839 = vmax.f32 %v11837, %v11838
        %v11840 = vrot.slane %v11839, 2
        %v11841 = vmax.f32 %v11839, %v11840
        %v11842 = vrot.slane %v11841, 1
        %v11843 = vmax.f32 %v11841, %v11842
        %v11844 = vsel %vm10994, %v10993, -inf
        %v11845 = vrot.slane %v11844, 4
        %v11846 = vmax.f32 %v11844, %v11845
        %v11847 = vrot.slane %v11846, 2
        %v11848 = vmax.f32 %v11846, %v11847
        %v11849 = vrot.slane %v11848, 1
        %v11850 = vmax.f32 %v11848, %v11849
        %11851 = vst.msk [vmem:[%s241 + $0x8] sm:$0x1] %vm11079, %v11773
        %11852 = vst.msk [vmem:[%s241 + $0x18] sm:$0x1] %vm11079, %v11780
        %11853 = vst.msk [vmem:[%s241 + $0x28] sm:$0x1] %vm11079, %v11787
        %11854 = vst.msk [vmem:[%s241 + $0x38] sm:$0x1] %vm11079, %v11794
        %11855 = vst.msk [vmem:[%s241 + $0x48] sm:$0x1] %vm11079, %v11801
        %11856 = vst.msk [vmem:[%s241 + $0x58] sm:$0x1] %vm11079, %v11808
        %11857 = vst.msk [vmem:[%s241 + $0x68] sm:$0x1] %vm11079, %v11815
        %11858 = vst.msk [vmem:[%s241 + $0x78] sm:$0x1] %vm11079, %v11822
        %11859 = vst.msk [vmem:[%s241 + $0x88] sm:$0x1] %vm11079, %v11829
        %11860 = vst.msk [vmem:[%s241 + $0x98] sm:$0x1] %vm11079, %v11836
        %11861 = vst.msk [vmem:[%s241 + $0xa8] sm:$0x1] %vm11079, %v11843
        %11862 = vst.msk [vmem:[%s241 + $0xb8] sm:$0x1] %vm11079, %v11850
        %v11863 = vsel %vm11092, %v10894, -inf
        %v11864 = vrot.slane %v11863, 4
        %v11865 = vmax.f32 %v11863, %v11864
        %v11866 = vrot.slane %v11865, 2
        %v11867 = vmax.f32 %v11865, %v11866
        %v11868 = vrot.slane %v11867, 1
        %v11869 = vmax.f32 %v11867, %v11868
        %v11870 = vsel %vm11092, %v10903, -inf
        %v11871 = vrot.slane %v11870, 4
        %v11872 = vmax.f32 %v11870, %v11871
        %v11873 = vrot.slane %v11872, 2
        %v11874 = vmax.f32 %v11872, %v11873
        %v11875 = vrot.slane %v11874, 1
        %v11876 = vmax.f32 %v11874, %v11875
        %v11877 = vsel %vm11092, %v10912, -inf
        %v11878 = vrot.slane %v11877, 4
        %v11879 = vmax.f32 %v11877, %v11878
        %v11880 = vrot.slane %v11879, 2
        %v11881 = vmax.f32 %v11879, %v11880
        %v11882 = vrot.slane %v11881, 1
        %v11883 = vmax.f32 %v11881, %v11882
        %v11884 = vsel %vm11092, %v10921, -inf
        %v11885 = vrot.slane %v11884, 4
        %v11886 = vmax.f32 %v11884, %v11885
        %v11887 = vrot.slane %v11886, 2
        %v11888 = vmax.f32 %v11886, %v11887
        %v11889 = vrot.slane %v11888, 1
        %v11890 = vmax.f32 %v11888, %v11889
        %v11891 = vsel %vm11092, %v10930, -inf
        %v11892 = vrot.slane %v11891, 4
        %v11893 = vmax.f32 %v11891, %v11892
        %v11894 = vrot.slane %v11893, 2
        %v11895 = vmax.f32 %v11893, %v11894
        %v11896 = vrot.slane %v11895, 1
        %v11897 = vmax.f32 %v11895, %v11896
        %v11898 = vsel %vm11092, %v10939, -inf
        %v11899 = vrot.slane %v11898, 4
        %v11900 = vmax.f32 %v11898, %v11899
        %v11901 = vrot.slane %v11900, 2
        %v11902 = vmax.f32 %v11900, %v11901
        %v11903 = vrot.slane %v11902, 1
        %v11904 = vmax.f32 %v11902, %v11903
        %v11905 = vsel %vm11092, %v10948, -inf
        %v11906 = vrot.slane %v11905, 4
        %v11907 = vmax.f32 %v11905, %v11906
        %v11908 = vrot.slane %v11907, 2
        %v11909 = vmax.f32 %v11907, %v11908
        %v11910 = vrot.slane %v11909, 1
        %v11911 = vmax.f32 %v11909, %v11910
        %v11912 = vsel %vm11092, %v10957, -inf
        %v11913 = vrot.slane %v11912, 4
        %v11914 = vmax.f32 %v11912, %v11913
        %v11915 = vrot.slane %v11914, 2
        %v11916 = vmax.f32 %v11914, %v11915
        %v11917 = vrot.slane %v11916, 1
        %v11918 = vmax.f32 %v11916, %v11917
        %v11919 = vsel %vm11092, %v10966, -inf
        %v11920 = vrot.slane %v11919, 4
        %v11921 = vmax.f32 %v11919, %v11920
        %v11922 = vrot.slane %v11921, 2
        %v11923 = vmax.f32 %v11921, %v11922
        %v11924 = vrot.slane %v11923, 1
        %v11925 = vmax.f32 %v11923, %v11924
        %v11926 = vsel %vm11092, %v10975, -inf
        %v11927 = vrot.slane %v11926, 4
        %v11928 = vmax.f32 %v11926, %v11927
        %v11929 = vrot.slane %v11928, 2
        %v11930 = vmax.f32 %v11928, %v11929
        %v11931 = vrot.slane %v11930, 1
        %v11932 = vmax.f32 %v11930, %v11931
        %v11933 = vsel %vm11092, %v10984, -inf
        %v11934 = vrot.slane %v11933, 4
        %v11935 = vmax.f32 %v11933, %v11934
        %v11936 = vrot.slane %v11935, 2
        %v11937 = vmax.f32 %v11935, %v11936
        %v11938 = vrot.slane %v11937, 1
        %v11939 = vmax.f32 %v11937, %v11938
        %v11940 = vsel %vm11092, %v10993, -inf
        %v11941 = vrot.slane %v11940, 4
        %v11942 = vmax.f32 %v11940, %v11941
        %v11943 = vrot.slane %v11942, 2
        %v11944 = vmax.f32 %v11942, %v11943
        %v11945 = vrot.slane %v11944, 1
        %v11946 = vmax.f32 %v11944, %v11945
        %11947 = vst.msk [vmem:[%s241 + $0x9] sm:$0x1] %vm11079, %v11869
        %11948 = vst.msk [vmem:[%s241 + $0x19] sm:$0x1] %vm11079, %v11876
        %11949 = vst.msk [vmem:[%s241 + $0x29] sm:$0x1] %vm11079, %v11883
        %11950 = vst.msk [vmem:[%s241 + $0x39] sm:$0x1] %vm11079, %v11890
        %11951 = vst.msk [vmem:[%s241 + $0x49] sm:$0x1] %vm11079, %v11897
        %11952 = vst.msk [vmem:[%s241 + $0x59] sm:$0x1] %vm11079, %v11904
        %11953 = vst.msk [vmem:[%s241 + $0x69] sm:$0x1] %vm11079, %v11911
        %11954 = vst.msk [vmem:[%s241 + $0x79] sm:$0x1] %vm11079, %v11918
        %11955 = vst.msk [vmem:[%s241 + $0x89] sm:$0x1] %vm11079, %v11925
        %11956 = vst.msk [vmem:[%s241 + $0x99] sm:$0x1] %vm11079, %v11932
        %11957 = vst.msk [vmem:[%s241 + $0xa9] sm:$0x1] %vm11079, %v11939
        %11958 = vst.msk [vmem:[%s241 + $0xb9] sm:$0x1] %vm11079, %v11946
        %v11959 = vsel %vm11189, %v10894, -inf
        %v11960 = vrot.slane %v11959, 4
        %v11961 = vmax.f32 %v11959, %v11960
        %v11962 = vrot.slane %v11961, 2
        %v11963 = vmax.f32 %v11961, %v11962
        %v11964 = vrot.slane %v11963, 1
        %v11965 = vmax.f32 %v11963, %v11964
        %v11966 = vsel %vm11189, %v10903, -inf
        %v11967 = vrot.slane %v11966, 4
        %v11968 = vmax.f32 %v11966, %v11967
        %v11969 = vrot.slane %v11968, 2
        %v11970 = vmax.f32 %v11968, %v11969
        %v11971 = vrot.slane %v11970, 1
        %v11972 = vmax.f32 %v11970, %v11971
        %v11973 = vsel %vm11189, %v10912, -inf
        %v11974 = vrot.slane %v11973, 4
        %v11975 = vmax.f32 %v11973, %v11974
        %v11976 = vrot.slane %v11975, 2
        %v11977 = vmax.f32 %v11975, %v11976
        %v11978 = vrot.slane %v11977, 1
        %v11979 = vmax.f32 %v11977, %v11978
        %v11980 = vsel %vm11189, %v10921, -inf
        %v11981 = vrot.slane %v11980, 4
        %v11982 = vmax.f32 %v11980, %v11981
        %v11983 = vrot.slane %v11982, 2
        %v11984 = vmax.f32 %v11982, %v11983
        %v11985 = vrot.slane %v11984, 1
        %v11986 = vmax.f32 %v11984, %v11985
        %v11987 = vsel %vm11189, %v10930, -inf
        %v11988 = vrot.slane %v11987, 4
        %v11989 = vmax.f32 %v11987, %v11988
        %v11990 = vrot.slane %v11989, 2
        %v11991 = vmax.f32 %v11989, %v11990
        %v11992 = vrot.slane %v11991, 1
        %v11993 = vmax.f32 %v11991, %v11992
        %v11994 = vsel %vm11189, %v10939, -inf
        %v11995 = vrot.slane %v11994, 4
        %v11996 = vmax.f32 %v11994, %v11995
        %v11997 = vrot.slane %v11996, 2
        %v11998 = vmax.f32 %v11996, %v11997
        %v11999 = vrot.slane %v11998, 1
        %v12000 = vmax.f32 %v11998, %v11999
        %v12001 = vsel %vm11189, %v10948, -inf
        %v12002 = vrot.slane %v12001, 4
        %v12003 = vmax.f32 %v12001, %v12002
        %v12004 = vrot.slane %v12003, 2
        %v12005 = vmax.f32 %v12003, %v12004
        %v12006 = vrot.slane %v12005, 1
        %v12007 = vmax.f32 %v12005, %v12006
        %v12008 = vsel %vm11189, %v10957, -inf
        %v12009 = vrot.slane %v12008, 4
        %v12010 = vmax.f32 %v12008, %v12009
        %v12011 = vrot.slane %v12010, 2
        %v12012 = vmax.f32 %v12010, %v12011
        %v12013 = vrot.slane %v12012, 1
        %v12014 = vmax.f32 %v12012, %v12013
        %v12015 = vsel %vm11189, %v10966, -inf
        %v12016 = vrot.slane %v12015, 4
        %v12017 = vmax.f32 %v12015, %v12016
        %v12018 = vrot.slane %v12017, 2
        %v12019 = vmax.f32 %v12017, %v12018
        %v12020 = vrot.slane %v12019, 1
        %v12021 = vmax.f32 %v12019, %v12020
        %v12022 = vsel %vm11189, %v10975, -inf
        %v12023 = vrot.slane %v12022, 4
        %v12024 = vmax.f32 %v12022, %v12023
        %v12025 = vrot.slane %v12024, 2
        %v12026 = vmax.f32 %v12024, %v12025
        %v12027 = vrot.slane %v12026, 1
        %v12028 = vmax.f32 %v12026, %v12027
        %v12029 = vsel %vm11189, %v10984, -inf
        %v12030 = vrot.slane %v12029, 4
        %v12031 = vmax.f32 %v12029, %v12030
        %v12032 = vrot.slane %v12031, 2
        %v12033 = vmax.f32 %v12031, %v12032
        %v12034 = vrot.slane %v12033, 1
        %v12035 = vmax.f32 %v12033, %v12034
        %v12036 = vsel %vm11189, %v10993, -inf
        %v12037 = vrot.slane %v12036, 4
        %v12038 = vmax.f32 %v12036, %v12037
        %v12039 = vrot.slane %v12038, 2
        %v12040 = vmax.f32 %v12038, %v12039
        %v12041 = vrot.slane %v12040, 1
        %v12042 = vmax.f32 %v12040, %v12041
        %12043 = vst.msk [vmem:[%s241 + $0xa] sm:$0x1] %vm11079, %v11965
        %12044 = vst.msk [vmem:[%s241 + $0x1a] sm:$0x1] %vm11079, %v11972
        %12045 = vst.msk [vmem:[%s241 + $0x2a] sm:$0x1] %vm11079, %v11979
        %12046 = vst.msk [vmem:[%s241 + $0x3a] sm:$0x1] %vm11079, %v11986
        %12047 = vst.msk [vmem:[%s241 + $0x4a] sm:$0x1] %vm11079, %v11993
        %12048 = vst.msk [vmem:[%s241 + $0x5a] sm:$0x1] %vm11079, %v12000
        %12049 = vst.msk [vmem:[%s241 + $0x6a] sm:$0x1] %vm11079, %v12007
        %12050 = vst.msk [vmem:[%s241 + $0x7a] sm:$0x1] %vm11079, %v12014
        %12051 = vst.msk [vmem:[%s241 + $0x8a] sm:$0x1] %vm11079, %v12021
        %12052 = vst.msk [vmem:[%s241 + $0x9a] sm:$0x1] %vm11079, %v12028
        %12053 = vst.msk [vmem:[%s241 + $0xaa] sm:$0x1] %vm11079, %v12035
        %12054 = vst.msk [vmem:[%s241 + $0xba] sm:$0x1] %vm11079, %v12042
        %v12055 = vsel %vm11286, %v10894, -inf
        %v12056 = vrot.slane %v12055, 4
        %v12057 = vmax.f32 %v12055, %v12056
        %v12058 = vrot.slane %v12057, 2
        %v12059 = vmax.f32 %v12057, %v12058
        %v12060 = vrot.slane %v12059, 1
        %v12061 = vmax.f32 %v12059, %v12060
        %v12062 = vsel %vm11286, %v10903, -inf
        %v12063 = vrot.slane %v12062, 4
        %v12064 = vmax.f32 %v12062, %v12063
        %v12065 = vrot.slane %v12064, 2
        %v12066 = vmax.f32 %v12064, %v12065
        %v12067 = vrot.slane %v12066, 1
        %v12068 = vmax.f32 %v12066, %v12067
        %v12069 = vsel %vm11286, %v10912, -inf
        %v12070 = vrot.slane %v12069, 4
        %v12071 = vmax.f32 %v12069, %v12070
        %v12072 = vrot.slane %v12071, 2
        %v12073 = vmax.f32 %v12071, %v12072
        %v12074 = vrot.slane %v12073, 1
        %v12075 = vmax.f32 %v12073, %v12074
        %v12076 = vsel %vm11286, %v10921, -inf
        %v12077 = vrot.slane %v12076, 4
        %v12078 = vmax.f32 %v12076, %v12077
        %v12079 = vrot.slane %v12078, 2
        %v12080 = vmax.f32 %v12078, %v12079
        %v12081 = vrot.slane %v12080, 1
        %v12082 = vmax.f32 %v12080, %v12081
        %v12083 = vsel %vm11286, %v10930, -inf
        %v12084 = vrot.slane %v12083, 4
        %v12085 = vmax.f32 %v12083, %v12084
        %v12086 = vrot.slane %v12085, 2
        %v12087 = vmax.f32 %v12085, %v12086
        %v12088 = vrot.slane %v12087, 1
        %v12089 = vmax.f32 %v12087, %v12088
        %v12090 = vsel %vm11286, %v10939, -inf
        %v12091 = vrot.slane %v12090, 4
        %v12092 = vmax.f32 %v12090, %v12091
        %v12093 = vrot.slane %v12092, 2
        %v12094 = vmax.f32 %v12092, %v12093
        %v12095 = vrot.slane %v12094, 1
        %v12096 = vmax.f32 %v12094, %v12095
        %v12097 = vsel %vm11286, %v10948, -inf
        %v12098 = vrot.slane %v12097, 4
        %v12099 = vmax.f32 %v12097, %v12098
        %v12100 = vrot.slane %v12099, 2
        %v12101 = vmax.f32 %v12099, %v12100
        %v12102 = vrot.slane %v12101, 1
        %v12103 = vmax.f32 %v12101, %v12102
        %v12104 = vsel %vm11286, %v10957, -inf
        %v12105 = vrot.slane %v12104, 4
        %v12106 = vmax.f32 %v12104, %v12105
        %v12107 = vrot.slane %v12106, 2
        %v12108 = vmax.f32 %v12106, %v12107
        %v12109 = vrot.slane %v12108, 1
        %v12110 = vmax.f32 %v12108, %v12109
        %v12111 = vsel %vm11286, %v10966, -inf
        %v12112 = vrot.slane %v12111, 4
        %v12113 = vmax.f32 %v12111, %v12112
        %v12114 = vrot.slane %v12113, 2
        %v12115 = vmax.f32 %v12113, %v12114
        %v12116 = vrot.slane %v12115, 1
        %v12117 = vmax.f32 %v12115, %v12116
        %v12118 = vsel %vm11286, %v10975, -inf
        %v12119 = vrot.slane %v12118, 4
        %v12120 = vmax.f32 %v12118, %v12119
        %v12121 = vrot.slane %v12120, 2
        %v12122 = vmax.f32 %v12120, %v12121
        %v12123 = vrot.slane %v12122, 1
        %v12124 = vmax.f32 %v12122, %v12123
        %v12125 = vsel %vm11286, %v10984, -inf
        %v12126 = vrot.slane %v12125, 4
        %v12127 = vmax.f32 %v12125, %v12126
        %v12128 = vrot.slane %v12127, 2
        %v12129 = vmax.f32 %v12127, %v12128
        %v12130 = vrot.slane %v12129, 1
        %v12131 = vmax.f32 %v12129, %v12130
        %v12132 = vsel %vm11286, %v10993, -inf
        %v12133 = vrot.slane %v12132, 4
        %v12134 = vmax.f32 %v12132, %v12133
        %v12135 = vrot.slane %v12134, 2
        %v12136 = vmax.f32 %v12134, %v12135
        %v12137 = vrot.slane %v12136, 1
        %v12138 = vmax.f32 %v12136, %v12137
        %12139 = vst.msk [vmem:[%s241 + $0xb] sm:$0x1] %vm11079, %v12061
        %12140 = vst.msk [vmem:[%s241 + $0x1b] sm:$0x1] %vm11079, %v12068
        %12141 = vst.msk [vmem:[%s241 + $0x2b] sm:$0x1] %vm11079, %v12075
        %12142 = vst.msk [vmem:[%s241 + $0x3b] sm:$0x1] %vm11079, %v12082
        %12143 = vst.msk [vmem:[%s241 + $0x4b] sm:$0x1] %vm11079, %v12089
        %12144 = vst.msk [vmem:[%s241 + $0x5b] sm:$0x1] %vm11079, %v12096
        %12145 = vst.msk [vmem:[%s241 + $0x6b] sm:$0x1] %vm11079, %v12103
        %12146 = vst.msk [vmem:[%s241 + $0x7b] sm:$0x1] %vm11079, %v12110
        %12147 = vst.msk [vmem:[%s241 + $0x8b] sm:$0x1] %vm11079, %v12117
        %12148 = vst.msk [vmem:[%s241 + $0x9b] sm:$0x1] %vm11079, %v12124
        %12149 = vst.msk [vmem:[%s241 + $0xab] sm:$0x1] %vm11079, %v12131
        %12150 = vst.msk [vmem:[%s241 + $0xbb] sm:$0x1] %vm11079, %v12138
        %p12151 = scmp.lt.s32.totalorder %s17, 1
        %s12152 = scalar_select %p12151, %s17, 1
        %s12153 = smul.addr %s12152, 24
        %s12154 = smul.addr %s12153, 8
        %s12155 = scalar_lea.vmem %s5, %s12154
        // Predicated region
        $region45: #{tpu_custom_call.1} parent=39 // pred_check
          %p12156 = pneg %p145
        $region46: #{tpu_custom_call.1} parent=39 // pred_check_branch
          %12158 = sbr.rel (%p12156) target = $region48
        $region47: #{tpu_custom_call.1} parent=39 // pred_region
          _
        $region48: #{tpu_custom_call.1} parent=39 // pred_fallthru
          _
      $region40: #{tpu_custom_call.1} parent=5 // pred_fallthru
        _
      %p12159 = scmp.le.s32.totalorder 2, %s12
      // Predicated region
      $region49: #{tpu_custom_call.1} parent=5 // pred_check
        %p12160 = pneg %p12159
      $region50: #{tpu_custom_call.1} parent=5 // pred_check_branch
        %12162 = sbr.rel (%p12160) target = $region52
      $region51: #{tpu_custom_call.1} parent=5 // pred_region
        %s12163 = ssub.s32 %s12, 2
        // Predicated region
        $region53: #{tpu_custom_call.1} parent=51 // pred_check
          %p12164 = pneg %p151
        $region54: #{tpu_custom_call.1} parent=51 // pred_check_branch
          %12166 = sbr.rel (%p12164) target = $region56
        $region55: #{tpu_custom_call.1} parent=51 // pred_region
          %p12167 = scmp.lt.s32.totalorder %s18, 1
          %s12168 = scalar_select %p12167, %s18, 1
          %s12169 = smul.addr %s12168, 24
          %s12170 = smul.addr %s12169, 8
          %s12171 = scalar_lea.vmem %s5, %s12170
        $region56: #{tpu_custom_call.1} parent=51 // pred_fallthru
          _
      $region52: #{tpu_custom_call.1} parent=5 // pred_fallthru
        _
    $region6: #{tpu_custom_call.1} parent=1 // loop_footer
      %s16 = sadd.s32 1, %s12
    $region7: #{tpu_custom_call.1} parent=1 // loop_footer_branch
      %11 = sbr.rel target = $region3
    $region8: #{tpu_custom_call.1} parent=1 // loop_exit
      _
    %12172 = vsyncpa [#allocation4], 1
    %s12173 = scalar_lea.sflag [#allocation4], 1
    %12174 = vsyncpa %s12173, 1

</llo_original>
